<compile_context>
chip_gen: v6e
topology: v6e:2x2x1
jax: 0.10.0
libtpu: 0.0.40
codegen_flags: <defaults>
</compile_context>

<pallas_src>
import functools

import jax
import jax.numpy as jnp
from jax.experimental import pallas as pl
from jax.experimental.pallas import tpu as pltpu


# ---------------------------------------------------------------------------
# Pallas kernel: fused 3x3 conv (stride 1, pad 1) + bias (+ residual / 1x1 proj) + ReLU
# ---------------------------------------------------------------------------
def _fused_conv3x3_kernel(*refs, wp_in, n_rows, relu, res_mode):
    """One grid step = one image.

    x_ref   : (1, Hp*Wp, Cin)  bf16  padded image, rows flattened H-major
    w_ref   : (9, Cin, Cout)   bf16  per-tap weights (TBN scale pre-folded)
    b_ref   : (1, Cout)        f32   folded TBN bias
    res_mode 0: no residual
             1: r_ref  (1, n_rows, Cout)                     identity residual slab
             2: xs_ref (1, n_rows, Cin_sc), wsc_ref (Cin_sc, Cout)  fused 1x1 projection
    o_ref   : (1, n_rows, Cout)
    """
    if res_mode == 0:
        x_ref, w_ref, b_ref, o_ref = refs
    elif res_mode == 1:
        x_ref, w_ref, b_ref, r_ref, o_ref = refs
    else:
        x_ref, w_ref, b_ref, xs_ref, wsc_ref, o_ref = refs

    acc = None
    t = 0
    for dh in range(3):          # unrolled: 9 shifted-window MXU matmuls, f32 accumulate
        for dw in range(3):
            shift = dh * wp_in + dw
            xt = x_ref[0, shift:shift + n_rows, :]
            part = jnp.dot(xt, w_ref[t], preferred_element_type=jnp.float32)
            acc = part if acc is None else acc + part
            t += 1

    acc = acc + b_ref[...]
    if res_mode == 1:
        acc = acc + r_ref[0].astype(jnp.float32)
    elif res_mode == 2:
        acc = acc + jnp.dot(xs_ref[0], wsc_ref[...],
                            preferred_element_type=jnp.float32)
    if relu:
        acc = jnp.maximum(acc, 0.0)
    o_ref[0] = acc.astype(o_ref.dtype)


# ---------------------------------------------------------------------------
# pallas_call wrapper
# ---------------------------------------------------------------------------
def _conv3x3_tbn(x_nhwc, w_tap, bias, *, relu, out_dtype,
                 residual_slab=None, proj_slab=None, proj_w=None):
    """Fused stride-1 3x3 conv (padding=1) + bias (+ residual) + optional ReLU.

    Returns the *over-wide* output (N, H, W+2, Cout); columns [0, W) are the valid
    conv output, the last 2 columns are scratch and must be dropped by the caller.
    """
    N, H, W, Cin = x_nhwc.shape
    taps, _, Cout = w_tap.shape
    Wp = W + 2                    # padded width == over-wide output width
    Hp = H + 3                    # 1 top + 2 bottom pad rows keep all tap windows in-bounds
    n_rows = H * Wp               # over-wide output rows per image

    xp = jnp.pad(x_nhwc.astype(jnp.bfloat16), ((0, 0), (1, 2), (1, 1), (0, 0)))
    x_slab = xp.reshape(N, Hp * Wp, Cin)
    w_tap = w_tap.astype(jnp.bfloat16)
    bias = bias.astype(jnp.float32).reshape(1, Cout)

    inputs = [x_slab, w_tap, bias]
    in_specs = [
        pl.BlockSpec((1, Hp * Wp, Cin), lambda n: (n, 0, 0)),
        pl.BlockSpec((taps, Cin, Cout), lambda n: (0, 0, 0)),
        pl.BlockSpec((1, Cout), lambda n: (0, 0)),
    ]

    res_mode = 0
    extra_blk_bytes = 0
    extra_io_bytes = 0
    extra_flops = 0
    if residual_slab is not None:
        res_mode = 1
        r = residual_slab.astype(jnp.bfloat16)
        inputs.append(r)
        in_specs.append(pl.BlockSpec((1, n_rows, Cout), lambda n: (n, 0, 0)))
        extra_blk_bytes = n_rows * Cout * 2
        extra_io_bytes = r.size * 2
    elif proj_slab is not None:
        res_mode = 2
        xs = proj_slab.astype(jnp.bfloat16)
        wsc = proj_w.astype(jnp.bfloat16)
        cin_sc = xs.shape[-1]
        inputs += [xs, wsc]
        in_specs += [
            pl.BlockSpec((1, n_rows, cin_sc), lambda n: (n, 0, 0)),
            pl.BlockSpec((cin_sc, Cout), lambda n: (0, 0)),
        ]
        extra_blk_bytes = n_rows * cin_sc * 2 + cin_sc * Cout * 2
        extra_io_bytes = xs.size * 2 + wsc.size * 2
        extra_flops = 2 * N * n_rows * cin_sc * Cout

    out_itemsize = jnp.dtype(out_dtype).itemsize
    cost = pl.CostEstimate(
        flops=int(2 * N * n_rows * Cin * Cout * taps + extra_flops),
        transcendentals=0,
        bytes_accessed=int(x_slab.size * 2 + w_tap.size * 2 + bias.size * 4
                           + extra_io_bytes + N * n_rows * Cout * out_itemsize))

    # VMEM budget: double-buffered blocks + f32 accumulator + slack (capped < v7x physical).
    blk_bytes = (Hp * Wp * Cin * 2 + w_tap.size * 2 + Cout * 4
                 + extra_blk_bytes + n_rows * Cout * out_itemsize)
    vmem_need = 2 * blk_bytes + n_rows * Cout * 4 + (2 << 20)
    vmem_limit = int(min(max(vmem_need, 32 << 20), 48 << 20))

    kern = functools.partial(_fused_conv3x3_kernel, wp_in=Wp, n_rows=n_rows,
                             relu=relu, res_mode=res_mode)

    out = pl.pallas_call(
        kern,
        out_shape=jax.ShapeDtypeStruct((N, n_rows, Cout), out_dtype),
        grid=(N,),
        in_specs=in_specs,
        out_specs=pl.BlockSpec((1, n_rows, Cout), lambda n: (n, 0, 0)),
        compiler_params=pltpu.CompilerParams(
            dimension_semantics=("parallel",),
            vmem_limit_bytes=vmem_limit),
        cost_estimate=cost,
    )(*inputs)
    return out.reshape(N, H, Wp, Cout)


# ---------------------------------------------------------------------------
# Glue: TBN folding, weight layout, block forward
# ---------------------------------------------------------------------------
def tbn_affine(C, gamma=1.0, beta=0.0, alpha=0.2, delta=0.2):
    """Fold TrailingBatchNorm (fresh module, inference) into per-channel a, b."""
    running_mean = jnp.zeros((C,), jnp.float32)
    running_var = jnp.ones((C,), jnp.float32)
    denom = jnp.sqrt(running_var) * delta + (1.0 - delta)
    a = gamma / denom
    b = beta - gamma * alpha * running_mean / denom
    return a.reshape(1, C), b.reshape(1, C)


def _w_to_taps(w_oihw):
    """(Cout, Cin, 3, 3) -> (9, Cin, Cout), tap-major (dh outer, dw inner)."""
    cout, cin, kh, kw = w_oihw.shape
    return jnp.transpose(w_oihw, (2, 3, 1, 0)).reshape(kh * kw, cin, cout)


def basic_block_tbn_forward(x_nchw, params, *, stride):
    w1 = params["conv1"]   # (planes, in_planes, 3, 3)
    w2 = params["conv2"]   # (planes, planes, 3, 3)
    planes, in_planes = int(w1.shape[0]), int(w1.shape[1])

    x = jnp.transpose(x_nchw, (0, 2, 3, 1)).astype(jnp.float32)   # NHWC
    N, H, W, _ = x.shape

    # conv1 -> bn1 -> relu  (TBN scale folded into weights, bias in-kernel)
    a1, b1 = tbn_affine(planes)
    w1_tap = _w_to_taps(w1) * a1.reshape(1, 1, planes)
    out1_wide = _conv3x3_tbn(x, w1_tap, b1, relu=True, out_dtype=jnp.bfloat16)
    # TODO(synk): for stride != 1 conv1 is computed at stride 1 and subsampled here
    # (exact since bn/relu are elementwise, but ~stride^2 extra MXU work).
    out1 = out1_wide[:, ::stride, :W:stride, :]          # (N, Ho, Wo, planes)
    Ho, Wo = out1.shape[1], out1.shape[2]
    Wp2 = Wo + 2

    a2, b2 = tbn_affine(planes)
    w2_tap = _w_to_taps(w2) * a2.reshape(1, 1, planes)

    if stride != 1 or in_planes != planes:
        # projection shortcut (1x1 conv + TBN) fused into the conv2 kernel
        wsc = params["shortcut"]                         # (planes, in_planes, 1, 1)
        asc, bsc = tbn_affine(planes)
        wsc_mat = jnp.transpose(wsc, (2, 3, 1, 0)).reshape(in_planes, planes) * asc
        xs = x[:, ::stride, ::stride, :]                 # (N, Ho, Wo, in_planes)
        xs_slab = jnp.pad(xs, ((0, 0), (0, 0), (0, 2), (0, 0))
                          ).reshape(N, Ho * Wp2, in_planes)
        out2_wide = _conv3x3_tbn(out1, w2_tap, b2 + bsc, relu=True,
                                 out_dtype=jnp.float32,
                                 proj_slab=xs_slab, proj_w=wsc_mat)
    else:
        # identity shortcut added in-kernel
        res_slab = jnp.pad(x, ((0, 0), (0, 0), (0, 2), (0, 0))
                           ).reshape(N, Ho * Wp2, planes)
        out2_wide = _conv3x3_tbn(out1, w2_tap, b2, relu=True,
                                 out_dtype=jnp.float32,
                                 residual_slab=res_slab)

    out = out2_wide[:, :, :Wo, :]                        # drop over-wide scratch columns
    return jnp.transpose(out, (0, 3, 1, 2))              # back to NCHW


# ---------------------------------------------------------------------------
# Pure-JAX reference (NCHW, lax conv, f32) for a sanity check
# ---------------------------------------------------------------------------
def _ref_forward(x, params, *, stride):
    def conv(xx, w, s, pad):
        return jax.lax.conv_general_dilated(
            xx, w, window_strides=(s, s), padding=[(pad, pad), (pad, pad)],
            dimension_numbers=("NCHW", "OIHW", "NCHW"))

    def tbn(xx):
        C = xx.shape[1]
        a, b = tbn_affine(C)
        return xx * a.reshape(1, C, 1, 1) + b.reshape(1, C, 1, 1)

    planes, in_planes = params["conv1"].shape[0], params["conv1"].shape[1]
    out = jax.nn.relu(tbn(conv(x, params["conv1"], stride, 1)))
    out = tbn(conv(out, params["conv2"], 1, 1))
    if stride != 1 or in_planes != planes:
        short = tbn(conv(x, params["shortcut"], stride, 0))
    else:
        short = x
    return jax.nn.relu(out + short)


# ---------------------------------------------------------------------------
if __name__ == "__main__":
    key = jax.random.PRNGKey(0)
    k1, k2, k3, kx = jax.random.split(key, 4)

    N, H, W = 2, 16, 16
    configs = [
        dict(in_planes=4, planes=8, stride=1),   # projection shortcut (channel change)
        dict(in_planes=8, planes=8, stride=1),   # identity shortcut
        dict(in_planes=4, planes=8, stride=2),   # strided projection shortcut
    ]

    for cfg in configs:
        in_planes, planes, stride = cfg["in_planes"], cfg["planes"], cfg["stride"]
        params = {
            "conv1": 0.1 * jax.random.normal(k1, (planes, in_planes, 3, 3), jnp.float32),
            "conv2": 0.1 * jax.random.normal(k2, (planes, planes, 3, 3), jnp.float32),
        }
        if stride != 1 or in_planes != planes:
            params["shortcut"] = 0.1 * jax.random.normal(
                k3, (planes, in_planes, 1, 1), jnp.float32)
        x = jax.random.normal(kx, (N, in_planes, H, W), jnp.float32)

        fwd = jax.jit(functools.partial(basic_block_tbn_forward, stride=stride))
        out = fwd(x, params)
        jax.block_until_ready(out)

        Ho = (H + 2 - 3) // stride + 1
        assert out.shape == (N, planes, Ho, Ho), (cfg, out.shape)

        ref = _ref_forward(x, params, stride=stride)
        err = float(jnp.max(jnp.abs(out - ref)))
        assert err < 5e-2, (cfg, err)   # bf16 activations/weights vs f32 reference

    print("KERNEL_OK")
</pallas_src>

<mosaic_0001>
module attributes {stable_mosaic.version = 11 : i64} {
  func.func @_fused_conv3x3_kernel(%arg0: i32, %arg1: memref<1x342x4xbf16, #tpu.memory_space<vmem>>, %arg2: memref<9x4x8xbf16, #tpu.memory_space<vmem>>, %arg3: memref<1x8xf32, #tpu.memory_space<vmem>>, %arg4: memref<1x288x8xbf16, #tpu.memory_space<vmem>>) attributes {dimension_semantics = [#tpu.dimension_semantics<parallel>], iteration_bounds = array<i64: 2>, scalar_prefetch = 0 : i64, scratch_operands = 0 : i64, tpu.core_type = #tpu.core_type<tc>, window_params = [{transform_indices = @transform_0, window_bounds = array<i64: 1, 342, 4>}, {pipeline_mode = #tpu.pipeline_mode<synchronous>, transform_indices = @transform_1, window_bounds = array<i64: 9, 4, 8>}, {pipeline_mode = #tpu.pipeline_mode<synchronous>, transform_indices = @transform_2, window_bounds = array<i64: 1, 8>}, {transform_indices = @transform_3, window_bounds = array<i64: 1, 288, 8>}]} {
    %c0 = arith.constant 0 : index
    %c0_0 = arith.constant 0 : index
    %c0_1 = arith.constant 0 : index
    %0 = vector.load %arg1[%c0, %c0_0, %c0_1] : memref<1x342x4xbf16, #tpu.memory_space<vmem>>, vector<1x288x4xbf16>
    %1 = vector.shape_cast %0 : vector<1x288x4xbf16> to vector<288x4xbf16>
    %c0_2 = arith.constant 0 : index
    %c0_3 = arith.constant 0 : index
    %c0_4 = arith.constant 0 : index
    %2 = vector.load %arg2[%c0_2, %c0_3, %c0_4] : memref<9x4x8xbf16, #tpu.memory_space<vmem>>, vector<1x4x8xbf16>
    %3 = vector.shape_cast %2 : vector<1x4x8xbf16> to vector<4x8xbf16>
    %cst = arith.constant dense<0.000000e+00> : vector<288x8xf32>
    %4 = tpu.matmul %1, %3, %cst {dimension_numbers = #tpu.dot_dimension_numbers<[1], [0], [0], [1], [0, 0, 1, 1], [], []>} : vector<288x4xbf16>, vector<4x8xbf16>, vector<288x8xf32> -> vector<288x8xf32>
    %c0_5 = arith.constant 0 : index
    %c1 = arith.constant 1 : index
    %c0_6 = arith.constant 0 : index
    %5 = vector.load %arg1[%c0_5, %c1, %c0_6] : memref<1x342x4xbf16, #tpu.memory_space<vmem>>, vector<1x288x4xbf16>
    %6 = vector.shape_cast %5 : vector<1x288x4xbf16> to vector<288x4xbf16>
    %c1_7 = arith.constant 1 : index
    %c0_8 = arith.constant 0 : index
    %c0_9 = arith.constant 0 : index
    %7 = vector.load %arg2[%c1_7, %c0_8, %c0_9] : memref<9x4x8xbf16, #tpu.memory_space<vmem>>, vector<1x4x8xbf16>
    %8 = vector.shape_cast %7 : vector<1x4x8xbf16> to vector<4x8xbf16>
    %cst_10 = arith.constant dense<0.000000e+00> : vector<288x8xf32>
    %9 = tpu.matmul %6, %8, %cst_10 {dimension_numbers = #tpu.dot_dimension_numbers<[1], [0], [0], [1], [0, 0, 1, 1], [], []>} : vector<288x4xbf16>, vector<4x8xbf16>, vector<288x8xf32> -> vector<288x8xf32>
    %10 = arith.addf %4, %9 : vector<288x8xf32>
    %c0_11 = arith.constant 0 : index
    %c2 = arith.constant 2 : index
    %c0_12 = arith.constant 0 : index
    %11 = vector.load %arg1[%c0_11, %c2, %c0_12] : memref<1x342x4xbf16, #tpu.memory_space<vmem>>, vector<1x288x4xbf16>
    %12 = vector.shape_cast %11 : vector<1x288x4xbf16> to vector<288x4xbf16>
    %c2_13 = arith.constant 2 : index
    %c0_14 = arith.constant 0 : index
    %c0_15 = arith.constant 0 : index
    %13 = vector.load %arg2[%c2_13, %c0_14, %c0_15] : memref<9x4x8xbf16, #tpu.memory_space<vmem>>, vector<1x4x8xbf16>
    %14 = vector.shape_cast %13 : vector<1x4x8xbf16> to vector<4x8xbf16>
    %cst_16 = arith.constant dense<0.000000e+00> : vector<288x8xf32>
    %15 = tpu.matmul %12, %14, %cst_16 {dimension_numbers = #tpu.dot_dimension_numbers<[1], [0], [0], [1], [0, 0, 1, 1], [], []>} : vector<288x4xbf16>, vector<4x8xbf16>, vector<288x8xf32> -> vector<288x8xf32>
    %16 = arith.addf %10, %15 : vector<288x8xf32>
    %c0_17 = arith.constant 0 : index
    %c18 = arith.constant 18 : index
    %c0_18 = arith.constant 0 : index
    %17 = vector.load %arg1[%c0_17, %c18, %c0_18] : memref<1x342x4xbf16, #tpu.memory_space<vmem>>, vector<1x288x4xbf16>
    %18 = vector.shape_cast %17 : vector<1x288x4xbf16> to vector<288x4xbf16>
    %c3 = arith.constant 3 : index
    %c0_19 = arith.constant 0 : index
    %c0_20 = arith.constant 0 : index
    %19 = vector.load %arg2[%c3, %c0_19, %c0_20] : memref<9x4x8xbf16, #tpu.memory_space<vmem>>, vector<1x4x8xbf16>
    %20 = vector.shape_cast %19 : vector<1x4x8xbf16> to vector<4x8xbf16>
    %cst_21 = arith.constant dense<0.000000e+00> : vector<288x8xf32>
    %21 = tpu.matmul %18, %20, %cst_21 {dimension_numbers = #tpu.dot_dimension_numbers<[1], [0], [0], [1], [0, 0, 1, 1], [], []>} : vector<288x4xbf16>, vector<4x8xbf16>, vector<288x8xf32> -> vector<288x8xf32>
    %22 = arith.addf %16, %21 : vector<288x8xf32>
    %c0_22 = arith.constant 0 : index
    %c19 = arith.constant 19 : index
    %c0_23 = arith.constant 0 : index
    %23 = vector.load %arg1[%c0_22, %c19, %c0_23] : memref<1x342x4xbf16, #tpu.memory_space<vmem>>, vector<1x288x4xbf16>
    %24 = vector.shape_cast %23 : vector<1x288x4xbf16> to vector<288x4xbf16>
    %c4 = arith.constant 4 : index
    %c0_24 = arith.constant 0 : index
    %c0_25 = arith.constant 0 : index
    %25 = vector.load %arg2[%c4, %c0_24, %c0_25] : memref<9x4x8xbf16, #tpu.memory_space<vmem>>, vector<1x4x8xbf16>
    %26 = vector.shape_cast %25 : vector<1x4x8xbf16> to vector<4x8xbf16>
    %cst_26 = arith.constant dense<0.000000e+00> : vector<288x8xf32>
    %27 = tpu.matmul %24, %26, %cst_26 {dimension_numbers = #tpu.dot_dimension_numbers<[1], [0], [0], [1], [0, 0, 1, 1], [], []>} : vector<288x4xbf16>, vector<4x8xbf16>, vector<288x8xf32> -> vector<288x8xf32>
    %28 = arith.addf %22, %27 : vector<288x8xf32>
    %c0_27 = arith.constant 0 : index
    %c20 = arith.constant 20 : index
    %c0_28 = arith.constant 0 : index
    %29 = vector.load %arg1[%c0_27, %c20, %c0_28] : memref<1x342x4xbf16, #tpu.memory_space<vmem>>, vector<1x288x4xbf16>
    %30 = vector.shape_cast %29 : vector<1x288x4xbf16> to vector<288x4xbf16>
    %c5 = arith.constant 5 : index
    %c0_29 = arith.constant 0 : index
    %c0_30 = arith.constant 0 : index
    %31 = vector.load %arg2[%c5, %c0_29, %c0_30] : memref<9x4x8xbf16, #tpu.memory_space<vmem>>, vector<1x4x8xbf16>
    %32 = vector.shape_cast %31 : vector<1x4x8xbf16> to vector<4x8xbf16>
    %cst_31 = arith.constant dense<0.000000e+00> : vector<288x8xf32>
    %33 = tpu.matmul %30, %32, %cst_31 {dimension_numbers = #tpu.dot_dimension_numbers<[1], [0], [0], [1], [0, 0, 1, 1], [], []>} : vector<288x4xbf16>, vector<4x8xbf16>, vector<288x8xf32> -> vector<288x8xf32>
    %34 = arith.addf %28, %33 : vector<288x8xf32>
    %c0_32 = arith.constant 0 : index
    %c36 = arith.constant 36 : index
    %c0_33 = arith.constant 0 : index
    %35 = vector.load %arg1[%c0_32, %c36, %c0_33] : memref<1x342x4xbf16, #tpu.memory_space<vmem>>, vector<1x288x4xbf16>
    %36 = vector.shape_cast %35 : vector<1x288x4xbf16> to vector<288x4xbf16>
    %c6 = arith.constant 6 : index
    %c0_34 = arith.constant 0 : index
    %c0_35 = arith.constant 0 : index
    %37 = vector.load %arg2[%c6, %c0_34, %c0_35] : memref<9x4x8xbf16, #tpu.memory_space<vmem>>, vector<1x4x8xbf16>
    %38 = vector.shape_cast %37 : vector<1x4x8xbf16> to vector<4x8xbf16>
    %cst_36 = arith.constant dense<0.000000e+00> : vector<288x8xf32>
    %39 = tpu.matmul %36, %38, %cst_36 {dimension_numbers = #tpu.dot_dimension_numbers<[1], [0], [0], [1], [0, 0, 1, 1], [], []>} : vector<288x4xbf16>, vector<4x8xbf16>, vector<288x8xf32> -> vector<288x8xf32>
    %40 = arith.addf %34, %39 : vector<288x8xf32>
    %c0_37 = arith.constant 0 : index
    %c37 = arith.constant 37 : index
    %c0_38 = arith.constant 0 : index
    %41 = vector.load %arg1[%c0_37, %c37, %c0_38] : memref<1x342x4xbf16, #tpu.memory_space<vmem>>, vector<1x288x4xbf16>
    %42 = vector.shape_cast %41 : vector<1x288x4xbf16> to vector<288x4xbf16>
    %c7 = arith.constant 7 : index
    %c0_39 = arith.constant 0 : index
    %c0_40 = arith.constant 0 : index
    %43 = vector.load %arg2[%c7, %c0_39, %c0_40] : memref<9x4x8xbf16, #tpu.memory_space<vmem>>, vector<1x4x8xbf16>
    %44 = vector.shape_cast %43 : vector<1x4x8xbf16> to vector<4x8xbf16>
    %cst_41 = arith.constant dense<0.000000e+00> : vector<288x8xf32>
    %45 = tpu.matmul %42, %44, %cst_41 {dimension_numbers = #tpu.dot_dimension_numbers<[1], [0], [0], [1], [0, 0, 1, 1], [], []>} : vector<288x4xbf16>, vector<4x8xbf16>, vector<288x8xf32> -> vector<288x8xf32>
    %46 = arith.addf %40, %45 : vector<288x8xf32>
    %c0_42 = arith.constant 0 : index
    %c38 = arith.constant 38 : index
    %c0_43 = arith.constant 0 : index
    %47 = vector.load %arg1[%c0_42, %c38, %c0_43] : memref<1x342x4xbf16, #tpu.memory_space<vmem>>, vector<1x288x4xbf16>
    %48 = vector.shape_cast %47 : vector<1x288x4xbf16> to vector<288x4xbf16>
    %c8 = arith.constant 8 : index
    %c0_44 = arith.constant 0 : index
    %c0_45 = arith.constant 0 : index
    %49 = vector.load %arg2[%c8, %c0_44, %c0_45] : memref<9x4x8xbf16, #tpu.memory_space<vmem>>, vector<1x4x8xbf16>
    %50 = vector.shape_cast %49 : vector<1x4x8xbf16> to vector<4x8xbf16>
    %cst_46 = arith.constant dense<0.000000e+00> : vector<288x8xf32>
    %51 = tpu.matmul %48, %50, %cst_46 {dimension_numbers = #tpu.dot_dimension_numbers<[1], [0], [0], [1], [0, 0, 1, 1], [], []>} : vector<288x4xbf16>, vector<4x8xbf16>, vector<288x8xf32> -> vector<288x8xf32>
    %52 = arith.addf %46, %51 : vector<288x8xf32>
    %c0_47 = arith.constant 0 : index
    %c0_48 = arith.constant 0 : index
    %53 = vector.load %arg3[%c0_47, %c0_48] : memref<1x8xf32, #tpu.memory_space<vmem>>, vector<1x8xf32>
    %54 = vector.broadcast %53 : vector<1x8xf32> to vector<288x8xf32>
    %55 = arith.addf %52, %54 : vector<288x8xf32>
    %cst_49 = arith.constant 0.000000e+00 : f32
    %56 = vector.broadcast %cst_49 : f32 to vector<288x8xf32>
    %57 = arith.maximumf %55, %56 : vector<288x8xf32>
    %58 = arith.truncf %57 : vector<288x8xf32> to vector<288x8xbf16>
    %c0_50 = arith.constant 0 : index
    %c0_51 = arith.constant 0 : index
    %c0_52 = arith.constant 0 : index
    %59 = vector.load %arg4[%c0_50, %c0_51, %c0_52] : memref<1x288x8xbf16, #tpu.memory_space<vmem>>, vector<1x288x8xbf16>
    %60 = vector.shape_cast %59 : vector<1x288x8xbf16> to vector<288x8xbf16>
    %61 = vector.shape_cast %58 : vector<288x8xbf16> to vector<1x288x8xbf16>
    tpu.vector_store %arg4[%c0_50, %c0_51, %c0_52], %61 {strides = array<i32>} : memref<1x288x8xbf16, #tpu.memory_space<vmem>>, vector<1x288x8xbf16>,
    return
  }
  func.func @transform_0(%arg0: i32) -> (i32, i32, i32) {
    %c0_i32 = arith.constant 0 : i32
    %c0_i32_0 = arith.constant 0 : i32
    %c0_i32_1 = arith.constant 0 : i32
    return %arg0, %c0_i32, %c0_i32_0 : i32, i32, i32
  }
  func.func @transform_1(%arg0: i32) -> (i32, i32, i32) {
    %c0_i32 = arith.constant 0 : i32
    %c0_i32_0 = arith.constant 0 : i32
    %c0_i32_1 = arith.constant 0 : i32
    %c0_i32_2 = arith.constant 0 : i32
    return %c0_i32, %c0_i32_0, %c0_i32_1 : i32, i32, i32
  }
  func.func @transform_2(%arg0: i32) -> (i32, i32) {
    %c0_i32 = arith.constant 0 : i32
    %c0_i32_0 = arith.constant 0 : i32
    %c0_i32_1 = arith.constant 0 : i32
    return %c0_i32, %c0_i32_0 : i32, i32
  }
  func.func @transform_3(%arg0: i32) -> (i32, i32, i32) {
    %c0_i32 = arith.constant 0 : i32
    %c0_i32_0 = arith.constant 0 : i32
    %c0_i32_1 = arith.constant 0 : i32
    return %arg0, %c0_i32, %c0_i32_0 : i32, i32, i32
  }
}

module attributes {stable_mosaic.version = 11 : i64} {
  func.func @_fused_conv3x3_kernel(%arg0: i32, %arg1: memref<1x342x8xbf16, #tpu.memory_space<vmem>>, %arg2: memref<9x8x8xbf16, #tpu.memory_space<vmem>>, %arg3: memref<1x8xf32, #tpu.memory_space<vmem>>, %arg4: memref<1x288x4xbf16, #tpu.memory_space<vmem>>, %arg5: memref<4x8xbf16, #tpu.memory_space<vmem>>, %arg6: memref<1x288x8xf32, #tpu.memory_space<vmem>>) attributes {dimension_semantics = [#tpu.dimension_semantics<parallel>], iteration_bounds = array<i64: 2>, scalar_prefetch = 0 : i64, scratch_operands = 0 : i64, tpu.core_type = #tpu.core_type<tc>, window_params = [{transform_indices = @transform_0, window_bounds = array<i64: 1, 342, 8>}, {pipeline_mode = #tpu.pipeline_mode<synchronous>, transform_indices = @transform_1, window_bounds = array<i64: 9, 8, 8>}, {pipeline_mode = #tpu.pipeline_mode<synchronous>, transform_indices = @transform_2, window_bounds = array<i64: 1, 8>}, {transform_indices = @transform_3, window_bounds = array<i64: 1, 288, 4>}, {pipeline_mode = #tpu.pipeline_mode<synchronous>, transform_indices = @transform_4, window_bounds = array<i64: 4, 8>}, {transform_indices = @transform_5, window_bounds = array<i64: 1, 288, 8>}]} {
    %c0 = arith.constant 0 : index
    %c0_0 = arith.constant 0 : index
    %c0_1 = arith.constant 0 : index
    %0 = vector.load %arg1[%c0, %c0_0, %c0_1] : memref<1x342x8xbf16, #tpu.memory_space<vmem>>, vector<1x288x8xbf16>
    %1 = vector.shape_cast %0 : vector<1x288x8xbf16> to vector<288x8xbf16>
    %c0_2 = arith.constant 0 : index
    %c0_3 = arith.constant 0 : index
    %c0_4 = arith.constant 0 : index
    %2 = vector.load %arg2[%c0_2, %c0_3, %c0_4] : memref<9x8x8xbf16, #tpu.memory_space<vmem>>, vector<1x8x8xbf16>
    %3 = vector.shape_cast %2 : vector<1x8x8xbf16> to vector<8x8xbf16>
    %cst = arith.constant dense<0.000000e+00> : vector<288x8xf32>
    %4 = tpu.matmul %1, %3, %cst {dimension_numbers = #tpu.dot_dimension_numbers<[1], [0], [0], [1], [0, 0, 1, 1], [], []>} : vector<288x8xbf16>, vector<8x8xbf16>, vector<288x8xf32> -> vector<288x8xf32>
    %c0_5 = arith.constant 0 : index
    %c1 = arith.constant 1 : index
    %c0_6 = arith.constant 0 : index
    %5 = vector.load %arg1[%c0_5, %c1, %c0_6] : memref<1x342x8xbf16, #tpu.memory_space<vmem>>, vector<1x288x8xbf16>
    %6 = vector.shape_cast %5 : vector<1x288x8xbf16> to vector<288x8xbf16>
    %c1_7 = arith.constant 1 : index
    %c0_8 = arith.constant 0 : index
    %c0_9 = arith.constant 0 : index
    %7 = vector.load %arg2[%c1_7, %c0_8, %c0_9] : memref<9x8x8xbf16, #tpu.memory_space<vmem>>, vector<1x8x8xbf16>
    %8 = vector.shape_cast %7 : vector<1x8x8xbf16> to vector<8x8xbf16>
    %cst_10 = arith.constant dense<0.000000e+00> : vector<288x8xf32>
    %9 = tpu.matmul %6, %8, %cst_10 {dimension_numbers = #tpu.dot_dimension_numbers<[1], [0], [0], [1], [0, 0, 1, 1], [], []>} : vector<288x8xbf16>, vector<8x8xbf16>, vector<288x8xf32> -> vector<288x8xf32>
    %10 = arith.addf %4, %9 : vector<288x8xf32>
    %c0_11 = arith.constant 0 : index
    %c2 = arith.constant 2 : index
    %c0_12 = arith.constant 0 : index
    %11 = vector.load %arg1[%c0_11, %c2, %c0_12] : memref<1x342x8xbf16, #tpu.memory_space<vmem>>, vector<1x288x8xbf16>
    %12 = vector.shape_cast %11 : vector<1x288x8xbf16> to vector<288x8xbf16>
    %c2_13 = arith.constant 2 : index
    %c0_14 = arith.constant 0 : index
    %c0_15 = arith.constant 0 : index
    %13 = vector.load %arg2[%c2_13, %c0_14, %c0_15] : memref<9x8x8xbf16, #tpu.memory_space<vmem>>, vector<1x8x8xbf16>
    %14 = vector.shape_cast %13 : vector<1x8x8xbf16> to vector<8x8xbf16>
    %cst_16 = arith.constant dense<0.000000e+00> : vector<288x8xf32>
    %15 = tpu.matmul %12, %14, %cst_16 {dimension_numbers = #tpu.dot_dimension_numbers<[1], [0], [0], [1], [0, 0, 1, 1], [], []>} : vector<288x8xbf16>, vector<8x8xbf16>, vector<288x8xf32> -> vector<288x8xf32>
    %16 = arith.addf %10, %15 : vector<288x8xf32>
    %c0_17 = arith.constant 0 : index
    %c18 = arith.constant 18 : index
    %c0_18 = arith.constant 0 : index
    %17 = vector.load %arg1[%c0_17, %c18, %c0_18] : memref<1x342x8xbf16, #tpu.memory_space<vmem>>, vector<1x288x8xbf16>
    %18 = vector.shape_cast %17 : vector<1x288x8xbf16> to vector<288x8xbf16>
    %c3 = arith.constant 3 : index
    %c0_19 = arith.constant 0 : index
    %c0_20 = arith.constant 0 : index
    %19 = vector.load %arg2[%c3, %c0_19, %c0_20] : memref<9x8x8xbf16, #tpu.memory_space<vmem>>, vector<1x8x8xbf16>
    %20 = vector.shape_cast %19 : vector<1x8x8xbf16> to vector<8x8xbf16>
    %cst_21 = arith.constant dense<0.000000e+00> : vector<288x8xf32>
    %21 = tpu.matmul %18, %20, %cst_21 {dimension_numbers = #tpu.dot_dimension_numbers<[1], [0], [0], [1], [0, 0, 1, 1], [], []>} : vector<288x8xbf16>, vector<8x8xbf16>, vector<288x8xf32> -> vector<288x8xf32>
    %22 = arith.addf %16, %21 : vector<288x8xf32>
    %c0_22 = arith.constant 0 : index
    %c19 = arith.constant 19 : index
    %c0_23 = arith.constant 0 : index
    %23 = vector.load %arg1[%c0_22, %c19, %c0_23] : memref<1x342x8xbf16, #tpu.memory_space<vmem>>, vector<1x288x8xbf16>
    %24 = vector.shape_cast %23 : vector<1x288x8xbf16> to vector<288x8xbf16>
    %c4 = arith.constant 4 : index
    %c0_24 = arith.constant 0 : index
    %c0_25 = arith.constant 0 : index
    %25 = vector.load %arg2[%c4, %c0_24, %c0_25] : memref<9x8x8xbf16, #tpu.memory_space<vmem>>, vector<1x8x8xbf16>
    %26 = vector.shape_cast %25 : vector<1x8x8xbf16> to vector<8x8xbf16>
    %cst_26 = arith.constant dense<0.000000e+00> : vector<288x8xf32>
    %27 = tpu.matmul %24, %26, %cst_26 {dimension_numbers = #tpu.dot_dimension_numbers<[1], [0], [0], [1], [0, 0, 1, 1], [], []>} : vector<288x8xbf16>, vector<8x8xbf16>, vector<288x8xf32> -> vector<288x8xf32>
    %28 = arith.addf %22, %27 : vector<288x8xf32>
    %c0_27 = arith.constant 0 : index
    %c20 = arith.constant 20 : index
    %c0_28 = arith.constant 0 : index
    %29 = vector.load %arg1[%c0_27, %c20, %c0_28] : memref<1x342x8xbf16, #tpu.memory_space<vmem>>, vector<1x288x8xbf16>
    %30 = vector.shape_cast %29 : vector<1x288x8xbf16> to vector<288x8xbf16>
    %c5 = arith.constant 5 : index
    %c0_29 = arith.constant 0 : index
    %c0_30 = arith.constant 0 : index
    %31 = vector.load %arg2[%c5, %c0_29, %c0_30] : memref<9x8x8xbf16, #tpu.memory_space<vmem>>, vector<1x8x8xbf16>
    %32 = vector.shape_cast %31 : vector<1x8x8xbf16> to vector<8x8xbf16>
    %cst_31 = arith.constant dense<0.000000e+00> : vector<288x8xf32>
    %33 = tpu.matmul %30, %32, %cst_31 {dimension_numbers = #tpu.dot_dimension_numbers<[1], [0], [0], [1], [0, 0, 1, 1], [], []>} : vector<288x8xbf16>, vector<8x8xbf16>, vector<288x8xf32> -> vector<288x8xf32>
    %34 = arith.addf %28, %33 : vector<288x8xf32>
    %c0_32 = arith.constant 0 : index
    %c36 = arith.constant 36 : index
    %c0_33 = arith.constant 0 : index
    %35 = vector.load %arg1[%c0_32, %c36, %c0_33] : memref<1x342x8xbf16, #tpu.memory_space<vmem>>, vector<1x288x8xbf16>
    %36 = vector.shape_cast %35 : vector<1x288x8xbf16> to vector<288x8xbf16>
    %c6 = arith.constant 6 : index
    %c0_34 = arith.constant 0 : index
    %c0_35 = arith.constant 0 : index
    %37 = vector.load %arg2[%c6, %c0_34, %c0_35] : memref<9x8x8xbf16, #tpu.memory_space<vmem>>, vector<1x8x8xbf16>
    %38 = vector.shape_cast %37 : vector<1x8x8xbf16> to vector<8x8xbf16>
    %cst_36 = arith.constant dense<0.000000e+00> : vector<288x8xf32>
    %39 = tpu.matmul %36, %38, %cst_36 {dimension_numbers = #tpu.dot_dimension_numbers<[1], [0], [0], [1], [0, 0, 1, 1], [], []>} : vector<288x8xbf16>, vector<8x8xbf16>, vector<288x8xf32> -> vector<288x8xf32>
    %40 = arith.addf %34, %39 : vector<288x8xf32>
    %c0_37 = arith.constant 0 : index
    %c37 = arith.constant 37 : index
    %c0_38 = arith.constant 0 : index
    %41 = vector.load %arg1[%c0_37, %c37, %c0_38] : memref<1x342x8xbf16, #tpu.memory_space<vmem>>, vector<1x288x8xbf16>
    %42 = vector.shape_cast %41 : vector<1x288x8xbf16> to vector<288x8xbf16>
    %c7 = arith.constant 7 : index
    %c0_39 = arith.constant 0 : index
    %c0_40 = arith.constant 0 : index
    %43 = vector.load %arg2[%c7, %c0_39, %c0_40] : memref<9x8x8xbf16, #tpu.memory_space<vmem>>, vector<1x8x8xbf16>
    %44 = vector.shape_cast %43 : vector<1x8x8xbf16> to vector<8x8xbf16>
    %cst_41 = arith.constant dense<0.000000e+00> : vector<288x8xf32>
    %45 = tpu.matmul %42, %44, %cst_41 {dimension_numbers = #tpu.dot_dimension_numbers<[1], [0], [0], [1], [0, 0, 1, 1], [], []>} : vector<288x8xbf16>, vector<8x8xbf16>, vector<288x8xf32> -> vector<288x8xf32>
    %46 = arith.addf %40, %45 : vector<288x8xf32>
    %c0_42 = arith.constant 0 : index
    %c38 = arith.constant 38 : index
    %c0_43 = arith.constant 0 : index
    %47 = vector.load %arg1[%c0_42, %c38, %c0_43] : memref<1x342x8xbf16, #tpu.memory_space<vmem>>, vector<1x288x8xbf16>
    %48 = vector.shape_cast %47 : vector<1x288x8xbf16> to vector<288x8xbf16>
    %c8 = arith.constant 8 : index
    %c0_44 = arith.constant 0 : index
    %c0_45 = arith.constant 0 : index
    %49 = vector.load %arg2[%c8, %c0_44, %c0_45] : memref<9x8x8xbf16, #tpu.memory_space<vmem>>, vector<1x8x8xbf16>
    %50 = vector.shape_cast %49 : vector<1x8x8xbf16> to vector<8x8xbf16>
    %cst_46 = arith.constant dense<0.000000e+00> : vector<288x8xf32>
    %51 = tpu.matmul %48, %50, %cst_46 {dimension_numbers = #tpu.dot_dimension_numbers<[1], [0], [0], [1], [0, 0, 1, 1], [], []>} : vector<288x8xbf16>, vector<8x8xbf16>, vector<288x8xf32> -> vector<288x8xf32>
    %52 = arith.addf %46, %51 : vector<288x8xf32>
    %c0_47 = arith.constant 0 : index
    %c0_48 = arith.constant 0 : index
    %53 = vector.load %arg3[%c0_47, %c0_48] : memref<1x8xf32, #tpu.memory_space<vmem>>, vector<1x8xf32>
    %54 = vector.broadcast %53 : vector<1x8xf32> to vector<288x8xf32>
    %55 = arith.addf %52, %54 : vector<288x8xf32>
    %c0_49 = arith.constant 0 : index
    %c0_50 = arith.constant 0 : index
    %c0_51 = arith.constant 0 : index
    %56 = vector.load %arg4[%c0_49, %c0_50, %c0_51] : memref<1x288x4xbf16, #tpu.memory_space<vmem>>, vector<1x288x4xbf16>
    %57 = vector.shape_cast %56 : vector<1x288x4xbf16> to vector<288x4xbf16>
    %c0_52 = arith.constant 0 : index
    %c0_53 = arith.constant 0 : index
    %58 = vector.load %arg5[%c0_52, %c0_53] : memref<4x8xbf16, #tpu.memory_space<vmem>>, vector<4x8xbf16>
    %cst_54 = arith.constant dense<0.000000e+00> : vector<288x8xf32>
    %59 = tpu.matmul %57, %58, %cst_54 {dimension_numbers = #tpu.dot_dimension_numbers<[1], [0], [0], [1], [0, 0, 1, 1], [], []>} : vector<288x4xbf16>, vector<4x8xbf16>, vector<288x8xf32> -> vector<288x8xf32>
    %60 = arith.addf %55, %59 : vector<288x8xf32>
    %cst_55 = arith.constant 0.000000e+00 : f32
    %61 = vector.broadcast %cst_55 : f32 to vector<288x8xf32>
    %62 = arith.maximumf %60, %61 : vector<288x8xf32>
    %c0_56 = arith.constant 0 : index
    %c0_57 = arith.constant 0 : index
    %c0_58 = arith.constant 0 : index
    %63 = vector.load %arg6[%c0_56, %c0_57, %c0_58] : memref<1x288x8xf32, #tpu.memory_space<vmem>>, vector<1x288x8xf32>
    %64 = vector.shape_cast %63 : vector<1x288x8xf32> to vector<288x8xf32>
    %65 = vector.shape_cast %62 : vector<288x8xf32> to vector<1x288x8xf32>
    tpu.vector_store %arg6[%c0_56, %c0_57, %c0_58], %65 {strides = array<i32>} : memref<1x288x8xf32, #tpu.memory_space<vmem>>, vector<1x288x8xf32>,
    return
  }
  func.func @transform_0(%arg0: i32) -> (i32, i32, i32) {
    %c0_i32 = arith.constant 0 : i32
    %c0_i32_0 = arith.constant 0 : i32
    %c0_i32_1 = arith.constant 0 : i32
    return %arg0, %c0_i32, %c0_i32_0 : i32, i32, i32
  }
  func.func @transform_1(%arg0: i32) -> (i32, i32, i32) {
    %c0_i32 = arith.constant 0 : i32
    %c0_i32_0 = arith.constant 0 : i32
    %c0_i32_1 = arith.constant 0 : i32
    %c0_i32_2 = arith.constant 0 : i32
    return %c0_i32, %c0_i32_0, %c0_i32_1 : i32, i32, i32
  }
  func.func @transform_2(%arg0: i32) -> (i32, i32) {
    %c0_i32 = arith.constant 0 : i32
    %c0_i32_0 = arith.constant 0 : i32
    %c0_i32_1 = arith.constant 0 : i32
    return %c0_i32, %c0_i32_0 : i32, i32
  }
  func.func @transform_3(%arg0: i32) -> (i32, i32, i32) {
    %c0_i32 = arith.constant 0 : i32
    %c0_i32_0 = arith.constant 0 : i32
    %c0_i32_1 = arith.constant 0 : i32
    return %arg0, %c0_i32, %c0_i32_0 : i32, i32, i32
  }
  func.func @transform_4(%arg0: i32) -> (i32, i32) {
    %c0_i32 = arith.constant 0 : i32
    %c0_i32_0 = arith.constant 0 : i32
    %c0_i32_1 = arith.constant 0 : i32
    return %c0_i32, %c0_i32_0 : i32, i32
  }
  func.func @transform_5(%arg0: i32) -> (i32, i32, i32) {
    %c0_i32 = arith.constant 0 : i32
    %c0_i32_0 = arith.constant 0 : i32
    %c0_i32_1 = arith.constant 0 : i32
    return %arg0, %c0_i32, %c0_i32_0 : i32, i32, i32
  }
}

</mosaic_0001>

<llo_original>
// kernel: basic_block_tbn_forward.2
$region0: #{basic_block_tbn_forward.2}
  #allocation0 [shape = 'u32[]', space=smem, size = 0x4, offset = 0x4, fixed_abs, tag = 'smem constant byte address 0x4 - core index']
  #allocation1 [shape = 'u32[144,128]{1,0:T(1,128)}', space=vmem, size = 0x12000, scoped, tag = 'internal scratch']
  %s0 = inlined_call_operand.vmem [shape: bf16[2,342,4], index: 0, kind: input, shape index: {}]
  %s1 = inlined_call_operand.vmem [shape: bf16[9,4,8], index: 1, kind: input, shape index: {}]
  %s2 = inlined_call_operand.vmem [shape: f32[1,8], index: 2, kind: input, shape index: {}]
  %s3 = inlined_call_operand.vmem [shape: bf16[2,288,8], index: 3, kind: output, shape index: {}]
  %s4 = sld [smem:[#allocation0]]
  $region45: #{basic_block_tbn_forward.2} parent=0
    _
  %s6 = ssub.s32 1, %s4
  %s7 = scalar_select 0, %s6, %s4
  loop: start=0, step=1, limit=4
  $region2: #{basic_block_tbn_forward.2} parent=0 // loop_pre_header
    _
  $region3: #{basic_block_tbn_forward.2} parent=0 // loop_header
    %s9 = sphi 0, %s13
    %p10 = scmp.ge.s32.totalorder %s9, 4
    %s19 = sphi 0, %s21
    %s22 = sphi 0, %s19
    %s23 = sphi 0, %s22
    %s39 = sphi 0, %s23
    %s43 = sphi 0, %s43
    %s45 = sphi 0, %s43
    %s46 = sphi 0, %s45
    %s60 = sphi 0, %s46
    %s64 = sphi 0, %s64
    %s66 = sphi 0, %s64
    %s67 = sphi 0, %s66
    %s81 = sphi 0, %s67
    %s87 = sphi 0, %s89
    %s90 = sphi 0, %s87
    %s91 = sphi 0, %s90
    %s107 = sphi 0, %s91
  $region4: #{basic_block_tbn_forward.2} parent=0 // loop_header_branch
    %12 = sbr.rel (%p10) target = $region8
  $region5: #{basic_block_tbn_forward.2} parent=0 // loop_body
    %s14 = ssub.s32 %s9, 1
    %s15 = ssub.s32 %s9, 2
    %s16 = sadd.s32 %s9, 1
    %s17 = ssub.s32 %s9, %s16
    %p18 = scmp.eq.s32.totalorder %s17, 0
    %s20 = sadd.s32 %s19, 1
    %s21 = scalar_select %p18, %s19, %s20
    %p24 = pneg %p18
    %p25 = scmp.eq.s32.totalorder %s9, 1
    %p26 = por %p24, %p25
    %p27 = scmp.ne.s32.totalorder %s19, %s22
    %p28 = scmp.eq.s32.totalorder %s9, 0
    %p29 = por %p27, %p28
    %p30 = scmp.ne.s32.totalorder %s19, %s22
    %p31 = scmp.eq.s32.totalorder %s14, 1
    %p32 = por %p30, %p31
    %p33 = scmp.ne.s32.totalorder %s22, %s23
    %p34 = scmp.eq.s32.totalorder %s14, 0
    %p35 = por %p33, %p34
    %p36 = scmp.ne.s32.totalorder %s22, %s23
    %p37 = scmp.eq.s32.totalorder %s15, 1
    %p38 = por %p36, %p37
    %p40 = scmp.ne.s32.totalorder %s23, %s39
    %p41 = scmp.eq.s32.totalorder %s15, 0
    %p42 = por %p40, %p41
    %s44 = sadd.s32 %s43, 1
    %p47 = scmp.eq.s32.totalorder %s9, 1
    %p48 = scmp.ne.s32.totalorder %s43, %s45
    %p49 = scmp.eq.s32.totalorder %s9, 0
    %p50 = por %p48, %p49
    %p51 = scmp.ne.s32.totalorder %s43, %s45
    %p52 = scmp.eq.s32.totalorder %s14, 1
    %p53 = por %p51, %p52
    %p54 = scmp.ne.s32.totalorder %s45, %s46
    %p55 = scmp.eq.s32.totalorder %s14, 0
    %p56 = por %p54, %p55
    %p57 = scmp.ne.s32.totalorder %s45, %s46
    %p58 = scmp.eq.s32.totalorder %s15, 1
    %p59 = por %p57, %p58
    %p61 = scmp.ne.s32.totalorder %s46, %s60
    %p62 = scmp.eq.s32.totalorder %s15, 0
    %p63 = por %p61, %p62
    %s65 = sadd.s32 %s64, 1
    %p68 = scmp.eq.s32.totalorder %s9, 1
    %p69 = scmp.ne.s32.totalorder %s64, %s66
    %p70 = scmp.eq.s32.totalorder %s9, 0
    %p71 = por %p69, %p70
    %p72 = scmp.ne.s32.totalorder %s64, %s66
    %p73 = scmp.eq.s32.totalorder %s14, 1
    %p74 = por %p72, %p73
    %p75 = scmp.ne.s32.totalorder %s66, %s67
    %p76 = scmp.eq.s32.totalorder %s14, 0
    %p77 = por %p75, %p76
    %p78 = scmp.ne.s32.totalorder %s66, %s67
    %p79 = scmp.eq.s32.totalorder %s15, 1
    %p80 = por %p78, %p79
    %p82 = scmp.ne.s32.totalorder %s67, %s81
    %p83 = scmp.eq.s32.totalorder %s15, 0
    %p84 = por %p82, %p83
    %s85 = ssub.s32 %s9, %s16
    %p86 = scmp.eq.s32.totalorder %s85, 0
    %s88 = sadd.s32 %s87, 1
    %s89 = scalar_select %p86, %s87, %s88
    %p92 = pneg %p86
    %p93 = scmp.eq.s32.totalorder %s9, 1
    %p94 = por %p92, %p93
    %p95 = scmp.ne.s32.totalorder %s87, %s90
    %p96 = scmp.eq.s32.totalorder %s9, 0
    %p97 = por %p95, %p96
    %p98 = scmp.ne.s32.totalorder %s87, %s90
    %p99 = scmp.eq.s32.totalorder %s14, 1
    %p100 = por %p98, %p99
    %p101 = scmp.ne.s32.totalorder %s90, %s91
    %p102 = scmp.eq.s32.totalorder %s14, 0
    %p103 = por %p101, %p102
    %p104 = scmp.ne.s32.totalorder %s90, %s91
    %p105 = scmp.eq.s32.totalorder %s15, 1
    %p106 = por %p104, %p105
    %p108 = scmp.ne.s32.totalorder %s91, %s107
    %p109 = scmp.eq.s32.totalorder %s15, 0
    %p110 = por %p108, %p109
    %p111 = scmp.le.s32.totalorder 1, %s9
    %p112 = scmp.lt.s32.totalorder %s9, 3
    %p113 = pnand %p111, %p112
    %p114 = pneg %p113
    // Predicated region
    $region9: #{basic_block_tbn_forward.2} parent=5 // pred_check
      _
    $region10: #{basic_block_tbn_forward.2} parent=5 // pred_check_branch
      %116 = sbr.rel (%p113) target = $region12
    $region11: #{basic_block_tbn_forward.2} parent=5 // pred_region
      %s117 = ssub.s32 %s9, 1
      // Predicated region
      $region13: #{basic_block_tbn_forward.2} parent=11 // pred_check
        %p118 = pneg %p56
      $region14: #{basic_block_tbn_forward.2} parent=11 // pred_check_branch
        %120 = sbr.rel (%p118) target = $region16
      $region15: #{basic_block_tbn_forward.2} parent=11 // pred_region
        _
      $region16: #{basic_block_tbn_forward.2} parent=11 // pred_fallthru
        _
      // Predicated region
      $region17: #{basic_block_tbn_forward.2} parent=11 // pred_check
        %p121 = pneg %p77
      $region18: #{basic_block_tbn_forward.2} parent=11 // pred_check_branch
        %123 = sbr.rel (%p121) target = $region20
      $region19: #{basic_block_tbn_forward.2} parent=11 // pred_region
        _
      $region20: #{basic_block_tbn_forward.2} parent=11 // pred_fallthru
        _
    $region12: #{basic_block_tbn_forward.2} parent=5 // pred_fallthru
      _
    %p124 = scmp.lt.s32.totalorder %s9, 2
    // Predicated region
    $region21: #{basic_block_tbn_forward.2} parent=5 // pred_check
      %p125 = pneg %p124
    $region22: #{basic_block_tbn_forward.2} parent=5 // pred_check_branch
      %127 = sbr.rel (%p125) target = $region24
    $region23: #{basic_block_tbn_forward.2} parent=5 // pred_region
      // Predicated region
      $region25: #{basic_block_tbn_forward.2} parent=23 // pred_check
        %p128 = pneg %p29
      $region26: #{basic_block_tbn_forward.2} parent=23 // pred_check_branch
        %130 = sbr.rel (%p128) target = $region28
      $region27: #{basic_block_tbn_forward.2} parent=23 // pred_region
        %p131 = scmp.lt.s32.totalorder %s9, 1
        %s132 = scalar_select %p131, %s9, 1
        %s133 = smul.addr %s132, 43
        %s134 = smul.addr %s133, 4
        %s135 = scalar_lea.vmem %s0, %s134
      $region28: #{basic_block_tbn_forward.2} parent=23 // pred_fallthru
        _
    $region24: #{basic_block_tbn_forward.2} parent=5 // pred_fallthru
      _
    %p136 = scmp.le.s32.totalorder 1, %s9
    %p137 = scmp.lt.s32.totalorder %s9, 3
    %p138 = pnand %p136, %p137
    %p139 = pneg %p138
    // Predicated region
    $region29: #{basic_block_tbn_forward.2} parent=5 // pred_check
      _
    $region30: #{basic_block_tbn_forward.2} parent=5 // pred_check_branch
      %141 = sbr.rel (%p138) target = $region32
    $region31: #{basic_block_tbn_forward.2} parent=5 // pred_region
      %s142 = ssub.s32 %s9, 1
      %p143 = scmp.lt.s32.totalorder %s14, 1
      %s144 = scalar_select %p143, %s14, 1
      %s145 = smul.addr %s144, 43
      %s146 = smul.addr %s145, 4
      %s147 = scalar_lea.vmem %s0, %s146
      %p148 = pneg %p35
      %p149 = pneg %p32
      %p150 = pneg %p56
      %p151 = pneg %p53
      %p152 = pneg %p77
      %p153 = pneg %p74
      %p154 = pneg %p103
      %p155 = pneg %p100
      %p156 = scmp.lt.s32.totalorder %s14, 1
      %s157 = scalar_select %p156, %s14, 1
      %s158 = smul.addr %s157, 36
      %s159 = smul.addr %s158, 4
      %s160 = scalar_lea.vmem %s3, %s159
      %p161 = scmp.lt.s32.totalorder %s14, 1
      %s162 = scalar_select %p161, %s14, 1
      %s163 = smul.addr %s162, 43
      %s164 = smul.addr %s163, 4
      %s165 = scalar_lea.vmem %s0, %s164
      %p166 = scmp.lt.s32.totalorder %s14, 1
      %s167 = scalar_select %p166, %s14, 1
      %s168 = smul.addr %s167, 36
      %s169 = smul.addr %s168, 4
      %s170 = scalar_lea.vmem %s3, %s169
      %v172 = vld [vmem:[%s165] sm:$0xf]
      %v173 = vld [vmem:[%s165 + $0x4] sm:$0xf]
      %v174 = vld [vmem:[%s165 + $0x8] sm:$0xf]
      %v175 = vld [vmem:[%s165 + $0xc] sm:$0xf]
      %v176 = vld [vmem:[%s165 + $0x10] sm:$0xf]
      %v177 = vld [vmem:[%s165 + $0x14] sm:$0xf]
      %v178 = vld [vmem:[%s165 + $0x18] sm:$0xf]
      %v179 = vld [vmem:[%s165 + $0x1c] sm:$0xf]
      %v180 = vld [vmem:[%s165 + $0x20] sm:$0xf]
      %v181 = vld [vmem:[%s165 + $0x24] sm:$0xf]
      %v182 = vld [vmem:[%s165 + $0x28] sm:$0xf]
      %v183 = vld [vmem:[%s165 + $0x2c] sm:$0xf]
      %v184 = vld [vmem:[%s165 + $0x30] sm:$0xf]
      %v185 = vld [vmem:[%s165 + $0x34] sm:$0xf]
      %v186 = vld [vmem:[%s165 + $0x38] sm:$0xf]
      %v187 = vld [vmem:[%s165 + $0x3c] sm:$0xf]
      %v188 = vld [vmem:[%s165 + $0x40] sm:$0xf]
      %v189 = vld [vmem:[%s165 + $0x44] sm:$0xf]
      %v190 = vld [vmem:[%s165 + $0x48] sm:$0xf]
      %v191 = vld [vmem:[%s165 + $0x4c] sm:$0xf]
      %v192 = vld [vmem:[%s165 + $0x50] sm:$0xf]
      %v193 = vld [vmem:[%s165 + $0x54] sm:$0xf]
      %v194 = vld [vmem:[%s165 + $0x58] sm:$0xf]
      %v195 = vld [vmem:[%s165 + $0x5c] sm:$0xf]
      %v196 = vld [vmem:[%s165 + $0x60] sm:$0xf]
      %v197 = vld [vmem:[%s165 + $0x64] sm:$0xf]
      %v198 = vld [vmem:[%s165 + $0x68] sm:$0xf]
      %v199 = vld [vmem:[%s165 + $0x6c] sm:$0xf]
      %v200 = vld [vmem:[%s165 + $0x70] sm:$0xf]
      %v201 = vld [vmem:[%s165 + $0x74] sm:$0xf]
      %v202 = vld [vmem:[%s165 + $0x78] sm:$0xf]
      %v203 = vld [vmem:[%s165 + $0x7c] sm:$0xf]
      %v204 = vld [vmem:[%s165 + $0x80] sm:$0xf]
      %v205 = vld [vmem:[%s165 + $0x84] sm:$0xf]
      %v206 = vld [vmem:[%s165 + $0x88] sm:$0xf]
      %v207 = vld [vmem:[%s165 + $0x8c] sm:$0xf]
      %v208 = vld [vmem:[%s1] sm:$0x3]
      %v209 = vld [vmem:[%s165 + $0x90] sm:$0x1]
      %s210 = scalar_lea.vmem %s1, 2
      %v211 = vld [vmem:[%s210] sm:$0x3]
      %v249 = vunpack.c.l.b16 %v172
      %v250 = vunpack.c.l.b16 %v173
      %v251 = vunpack.c.l.b16 %v174
      %v252 = vunpack.c.l.b16 %v175
      %v253 = vunpack.c.l.b16 %v176
      %v254 = vunpack.c.l.b16 %v177
      %v255 = vunpack.c.l.b16 %v178
      %v256 = vunpack.c.l.b16 %v179
      %v257 = vunpack.c.l.b16 %v180
      %v258 = vunpack.c.l.b16 %v181
      %v259 = vunpack.c.l.b16 %v182
      %v260 = vunpack.c.l.b16 %v183
      %v261 = vunpack.c.l.b16 %v184
      %v262 = vunpack.c.l.b16 %v185
      %v263 = vunpack.c.l.b16 %v186
      %v264 = vunpack.c.l.b16 %v187
      %v265 = vunpack.c.l.b16 %v188
      %v266 = vunpack.c.l.b16 %v189
      %v267 = vunpack.c.l.b16 %v190
      %v268 = vunpack.c.l.b16 %v191
      %v269 = vunpack.c.l.b16 %v192
      %v270 = vunpack.c.l.b16 %v193
      %v271 = vunpack.c.l.b16 %v194
      %v272 = vunpack.c.l.b16 %v195
      %v273 = vunpack.c.l.b16 %v196
      %v274 = vunpack.c.l.b16 %v197
      %v275 = vunpack.c.l.b16 %v198
      %v276 = vunpack.c.l.b16 %v199
      %v277 = vunpack.c.l.b16 %v200
      %v278 = vunpack.c.l.b16 %v201
      %v279 = vunpack.c.l.b16 %v202
      %v280 = vunpack.c.l.b16 %v203
      %v281 = vunpack.c.l.b16 %v204
      %v282 = vunpack.c.l.b16 %v205
      %v283 = vunpack.c.l.b16 %v206
      %v284 = vunpack.c.l.b16 %v207
      %v285 = vunpack.c.l.b16 %v209
      %v286 = vpack.c.b16 %v250, %v249
      %v287 = vpack.c.b16 %v252, %v251
      %v288 = vpack.c.b16 %v254, %v253
      %v289 = vpack.c.b16 %v256, %v255
      %v290 = vpack.c.b16 %v258, %v257
      %v291 = vpack.c.b16 %v260, %v259
      %v292 = vpack.c.b16 %v262, %v261
      %v293 = vpack.c.b16 %v264, %v263
      %v294 = vpack.c.b16 %v266, %v265
      %v295 = vpack.c.b16 %v268, %v267
      %v296 = vpack.c.b16 %v270, %v269
      %v297 = vpack.c.b16 %v272, %v271
      %v298 = vpack.c.b16 %v274, %v273
      %v299 = vpack.c.b16 %v276, %v275
      %v300 = vpack.c.b16 %v278, %v277
      %v301 = vpack.c.b16 %v280, %v279
      %v302 = vpack.c.b16 %v282, %v281
      %v303 = vpack.c.b16 %v284, %v283
      %v304 = vpack.c.b16 %v285, %v285
      %vm305 = vsmask.f32 7424
      %v307 = vshrl.u32 %v286, 16
      %v309 = vshll.u32 %v286, 16
      %v311 = vrot.slane %v309, 1
      %v312 = vor.u32 %v307, %v311
      %v314 = vshll.u32 %v287, 16
      %v316 = vrot.slane %v314, 1
      %v317 = vsel %vm305, %v312, %v316
      %v318 = vshrl.u32 %v287, 16
      %v320 = vor.u32 %v318, %v316
      %v322 = vshll.u32 %v288, 16
      %v324 = vrot.slane %v322, 1
      %v325 = vsel %vm305, %v320, %v324
      %v326 = vshrl.u32 %v288, 16
      %v328 = vor.u32 %v326, %v324
      %v330 = vshll.u32 %v289, 16
      %v332 = vrot.slane %v330, 1
      %v333 = vsel %vm305, %v328, %v332
      %v334 = vshrl.u32 %v289, 16
      %v336 = vor.u32 %v334, %v332
      %v338 = vshll.u32 %v290, 16
      %v340 = vrot.slane %v338, 1
      %v341 = vsel %vm305, %v336, %v340
      %v342 = vshrl.u32 %v290, 16
      %v344 = vor.u32 %v342, %v340
      %v346 = vshll.u32 %v291, 16
      %v348 = vrot.slane %v346, 1
      %v349 = vsel %vm305, %v344, %v348
      %v350 = vshrl.u32 %v291, 16
      %v352 = vor.u32 %v350, %v348
      %v354 = vshll.u32 %v292, 16
      %v356 = vrot.slane %v354, 1
      %v357 = vsel %vm305, %v352, %v356
      %v358 = vshrl.u32 %v292, 16
      %v360 = vor.u32 %v358, %v356
      %v362 = vshll.u32 %v293, 16
      %v364 = vrot.slane %v362, 1
      %v365 = vsel %vm305, %v360, %v364
      %v366 = vshrl.u32 %v293, 16
      %v368 = vor.u32 %v366, %v364
      %v370 = vshll.u32 %v294, 16
      %v372 = vrot.slane %v370, 1
      %v373 = vsel %vm305, %v368, %v372
      %v374 = vshrl.u32 %v294, 16
      %v376 = vor.u32 %v374, %v372
      %v378 = vshll.u32 %v295, 16
      %v380 = vrot.slane %v378, 1
      %v381 = vsel %vm305, %v376, %v380
      %v382 = vshrl.u32 %v295, 16
      %v384 = vor.u32 %v382, %v380
      %v386 = vshll.u32 %v296, 16
      %v388 = vrot.slane %v386, 1
      %v389 = vsel %vm305, %v384, %v388
      %v390 = vshrl.u32 %v296, 16
      %v392 = vor.u32 %v390, %v388
      %v394 = vshll.u32 %v297, 16
      %v396 = vrot.slane %v394, 1
      %v397 = vsel %vm305, %v392, %v396
      %v398 = vshrl.u32 %v297, 16
      %v400 = vor.u32 %v398, %v396
      %v402 = vshll.u32 %v298, 16
      %v404 = vrot.slane %v402, 1
      %v405 = vsel %vm305, %v400, %v404
      %v406 = vshrl.u32 %v298, 16
      %v408 = vor.u32 %v406, %v404
      %v410 = vshll.u32 %v299, 16
      %v412 = vrot.slane %v410, 1
      %v413 = vsel %vm305, %v408, %v412
      %v414 = vshrl.u32 %v299, 16
      %v416 = vor.u32 %v414, %v412
      %v418 = vshll.u32 %v300, 16
      %v420 = vrot.slane %v418, 1
      %v421 = vsel %vm305, %v416, %v420
      %v422 = vshrl.u32 %v300, 16
      %v424 = vor.u32 %v422, %v420
      %v426 = vshll.u32 %v301, 16
      %v428 = vrot.slane %v426, 1
      %v429 = vsel %vm305, %v424, %v428
      %v430 = vshrl.u32 %v301, 16
      %v432 = vor.u32 %v430, %v428
      %v434 = vshll.u32 %v302, 16
      %v436 = vrot.slane %v434, 1
      %v437 = vsel %vm305, %v432, %v436
      %v438 = vshrl.u32 %v302, 16
      %v440 = vor.u32 %v438, %v436
      %v442 = vshll.u32 %v303, 16
      %v444 = vrot.slane %v442, 1
      %v445 = vsel %vm305, %v440, %v444
      %v446 = vshrl.u32 %v303, 16
      %v448 = vor.u32 %v446, %v444
      %v450 = vshll.u32 %v304, 16
      %v452 = vrot.slane %v450, 1
      %v453 = vsel %vm305, %v448, %v452
      %vm454 = vcmask 31744
      %v456 = vsel %vm454, %v317, 0
      %v459 = vsel %vm454, %v325, 0
      %v462 = vsel %vm454, %v333, 0
      %v465 = vsel %vm454, %v341, 0
      %v468 = vsel %vm454, %v349, 0
      %v471 = vsel %vm454, %v357, 0
      %v474 = vsel %vm454, %v365, 0
      %v477 = vsel %vm454, %v373, 0
      %v480 = vsel %vm454, %v381, 0
      %v483 = vsel %vm454, %v389, 0
      %v486 = vsel %vm454, %v397, 0
      %v489 = vsel %vm454, %v405, 0
      %v492 = vsel %vm454, %v413, 0
      %v495 = vsel %vm454, %v421, 0
      %v498 = vsel %vm454, %v429, 0
      %v501 = vsel %vm454, %v437, 0
      %v504 = vsel %vm454, %v445, 0
      %v507 = vsel %vm454, %v453, 0
      %vm509 = vcmask 1041408
      %v511 = vsel %vm509, %v211, 0
      %513 = vmatprep.subr.bf16.mxu0 0
      %514 = vmatpush1.bf16.msra.mxu0 0
      %515 = vmatprep.subr.bf16.mxu0 0
      %516 = vmatpush1.bf16.msra.mxu0 0
      %517 = vmatprep.subr.bf16.mxu0 0
      %518 = vmatpush1.bf16.msra.mxu0 0
      %519 = vmatprep.subr.bf16.mxu0 0
      %520 = vmatpush1.bf16.msra.mxu0 0
      %521 = vmatprep.subr.bf16.mxu0 0
      %522 = vmatpush1.bf16.msra.mxu0 0
      %523 = vmatprep.subr.bf16.mxu0 0
      %524 = vmatpush1.bf16.msra.mxu0 0
      %525 = vmatprep.subr.bf16.mxu0 0
      %526 = vmatpush1.bf16.msra.mxu0 0
      %527 = vmatprep.subr.bf16.mxu0 0
      %528 = vmatpush1.bf16.msra.mxu0 %v511
      %529 = vmatprep.subr.bf16.mxu0 0
      %530 = vmatpush2.bf16.msra.mxu0 0
      %531 = vmatprep.subr.bf16.mxu0 0
      %532 = vmatpush2.bf16.msra.mxu0 0
      %533 = vmatprep.subr.bf16.mxu0 0
      %534 = vmatpush2.bf16.msra.mxu0 0
      %535 = vmatprep.subr.bf16.mxu0 0
      %536 = vmatpush2.bf16.msra.mxu0 0
      %537 = vmatprep.subr.bf16.mxu0 0
      %538 = vmatpush2.bf16.msra.mxu0 0
      %539 = vmatprep.subr.bf16.mxu0 0
      %540 = vmatpush2.bf16.msra.mxu0 0
      %541 = vmatprep.subr.bf16.mxu0 0
      %542 = vmatpush2.bf16.msra.mxu0 0
      %543 = vmatprep.subr.bf16.mxu0 0
      %544 = vmatpush2.bf16.msra.mxu0 0
      %545 = vmatprep.mubr.bf16.mxu0 0
      %546 = vmatmul.mubr.bf16.gmra.mxu0 %v456
      %v547 = vpop.f32.mrf.mxu0
      %v548 = vadd.f32 0.0, %v547
      %v549 = vpop.f32.mrf.mxu0
      %v550 = vpop.f32.mrf.mxu0
      %v551 = vadd.f32 0.0, %v550
      %v552 = vpop.f32.mrf.mxu0
      %553 = vmatprep.mubr.bf16.mxu0 0
      %554 = vmatmul.mubr.bf16.gmra.mxu0 %v459
      %v555 = vpop.f32.mrf.mxu0
      %v556 = vadd.f32 0.0, %v555
      %v557 = vpop.f32.mrf.mxu0
      %v558 = vpop.f32.mrf.mxu0
      %v559 = vadd.f32 0.0, %v558
      %v560 = vpop.f32.mrf.mxu0
      %561 = vmatprep.mubr.bf16.mxu0 0
      %562 = vmatmul.mubr.bf16.gmra.mxu0 %v462
      %v563 = vpop.f32.mrf.mxu0
      %v564 = vadd.f32 0.0, %v563
      %v565 = vpop.f32.mrf.mxu0
      %v566 = vpop.f32.mrf.mxu0
      %v567 = vadd.f32 0.0, %v566
      %v568 = vpop.f32.mrf.mxu0
      %569 = vmatprep.mubr.bf16.mxu0 0
      %570 = vmatmul.mubr.bf16.gmra.mxu0 %v465
      %v571 = vpop.f32.mrf.mxu0
      %v572 = vadd.f32 0.0, %v571
      %v573 = vpop.f32.mrf.mxu0
      %v574 = vpop.f32.mrf.mxu0
      %v575 = vadd.f32 0.0, %v574
      %v576 = vpop.f32.mrf.mxu0
      %577 = vmatprep.mubr.bf16.mxu0 0
      %578 = vmatmul.mubr.bf16.gmra.mxu0 %v468
      %v579 = vpop.f32.mrf.mxu0
      %v580 = vadd.f32 0.0, %v579
      %v581 = vpop.f32.mrf.mxu0
      %v582 = vpop.f32.mrf.mxu0
      %v583 = vadd.f32 0.0, %v582
      %v584 = vpop.f32.mrf.mxu0
      %585 = vmatprep.mubr.bf16.mxu0 0
      %586 = vmatmul.mubr.bf16.gmra.mxu0 %v471
      %v587 = vpop.f32.mrf.mxu0
      %v588 = vadd.f32 0.0, %v587
      %v589 = vpop.f32.mrf.mxu0
      %v590 = vpop.f32.mrf.mxu0
      %v591 = vadd.f32 0.0, %v590
      %v592 = vpop.f32.mrf.mxu0
      %593 = vmatprep.mubr.bf16.mxu0 0
      %594 = vmatmul.mubr.bf16.gmra.mxu0 %v474
      %v595 = vpop.f32.mrf.mxu0
      %v596 = vadd.f32 0.0, %v595
      %v597 = vpop.f32.mrf.mxu0
      %v598 = vpop.f32.mrf.mxu0
      %v599 = vadd.f32 0.0, %v598
      %v600 = vpop.f32.mrf.mxu0
      %601 = vmatprep.mubr.bf16.mxu0 0
      %602 = vmatmul.mubr.bf16.gmra.mxu0 %v477
      %v603 = vpop.f32.mrf.mxu0
      %v604 = vadd.f32 0.0, %v603
      %v605 = vpop.f32.mrf.mxu0
      %v606 = vpop.f32.mrf.mxu0
      %v607 = vadd.f32 0.0, %v606
      %v608 = vpop.f32.mrf.mxu0
      %609 = vmatprep.mubr.bf16.mxu0 0
      %610 = vmatmul.mubr.bf16.gmra.mxu0 %v480
      %v611 = vpop.f32.mrf.mxu0
      %v612 = vadd.f32 0.0, %v611
      %v613 = vpop.f32.mrf.mxu0
      %v614 = vpop.f32.mrf.mxu0
      %v615 = vadd.f32 0.0, %v614
      %v616 = vpop.f32.mrf.mxu0
      %617 = vmatprep.mubr.bf16.mxu0 0
      %618 = vmatmul.mubr.bf16.gmra.mxu0 %v483
      %v619 = vpop.f32.mrf.mxu0
      %v620 = vadd.f32 0.0, %v619
      %v621 = vpop.f32.mrf.mxu0
      %v622 = vpop.f32.mrf.mxu0
      %v623 = vadd.f32 0.0, %v622
      %v624 = vpop.f32.mrf.mxu0
      %625 = vmatprep.mubr.bf16.mxu0 0
      %626 = vmatmul.mubr.bf16.gmra.mxu0 %v486
      %v627 = vpop.f32.mrf.mxu0
      %v628 = vadd.f32 0.0, %v627
      %v629 = vpop.f32.mrf.mxu0
      %v630 = vpop.f32.mrf.mxu0
      %v631 = vadd.f32 0.0, %v630
      %v632 = vpop.f32.mrf.mxu0
      %633 = vmatprep.mubr.bf16.mxu0 0
      %634 = vmatmul.mubr.bf16.gmra.mxu0 %v489
      %v635 = vpop.f32.mrf.mxu0
      %v636 = vadd.f32 0.0, %v635
      %v637 = vpop.f32.mrf.mxu0
      %v638 = vpop.f32.mrf.mxu0
      %v639 = vadd.f32 0.0, %v638
      %v640 = vpop.f32.mrf.mxu0
      %641 = vmatprep.mubr.bf16.mxu0 0
      %642 = vmatmul.mubr.bf16.gmra.mxu0 %v492
      %v643 = vpop.f32.mrf.mxu0
      %v644 = vadd.f32 0.0, %v643
      %v645 = vpop.f32.mrf.mxu0
      %v646 = vpop.f32.mrf.mxu0
      %v647 = vadd.f32 0.0, %v646
      %v648 = vpop.f32.mrf.mxu0
      %649 = vmatprep.mubr.bf16.mxu0 0
      %650 = vmatmul.mubr.bf16.gmra.mxu0 %v495
      %v651 = vpop.f32.mrf.mxu0
      %v652 = vadd.f32 0.0, %v651
      %v653 = vpop.f32.mrf.mxu0
      %v654 = vpop.f32.mrf.mxu0
      %v655 = vadd.f32 0.0, %v654
      %v656 = vpop.f32.mrf.mxu0
      %657 = vmatprep.mubr.bf16.mxu0 0
      %658 = vmatmul.mubr.bf16.gmra.mxu0 %v498
      %v659 = vpop.f32.mrf.mxu0
      %v660 = vadd.f32 0.0, %v659
      %v661 = vpop.f32.mrf.mxu0
      %v662 = vpop.f32.mrf.mxu0
      %v663 = vadd.f32 0.0, %v662
      %v664 = vpop.f32.mrf.mxu0
      %665 = vmatprep.mubr.bf16.mxu0 0
      %666 = vmatmul.mubr.bf16.gmra.mxu0 %v501
      %v667 = vpop.f32.mrf.mxu0
      %v668 = vadd.f32 0.0, %v667
      %v669 = vpop.f32.mrf.mxu0
      %v670 = vpop.f32.mrf.mxu0
      %v671 = vadd.f32 0.0, %v670
      %v672 = vpop.f32.mrf.mxu0
      %673 = vmatprep.mubr.bf16.mxu0 0
      %674 = vmatmul.mubr.bf16.gmra.mxu0 %v504
      %v675 = vpop.f32.mrf.mxu0
      %v676 = vadd.f32 0.0, %v675
      %v677 = vpop.f32.mrf.mxu0
      %v678 = vpop.f32.mrf.mxu0
      %v679 = vadd.f32 0.0, %v678
      %v680 = vpop.f32.mrf.mxu0
      %681 = vmatprep.mubr.bf16.mxu0 0
      %682 = vmatmul.mubr.bf16.gmra.mxu0 %v507
      %v683 = vpop.f32.mrf.mxu0
      %v684 = vadd.f32 0.0, %v683
      %v685 = vpop.f32.mrf.mxu0
      %v686 = vpop.f32.mrf.mxu0
      %v687 = vadd.f32 0.0, %v686
      %v688 = vpop.f32.mrf.mxu0
      %689 = vdwg.mxu0
      %v690 = vsel %vm454, %v286, 0
      %v692 = vsel %vm454, %v287, 0
      %v694 = vsel %vm454, %v288, 0
      %v696 = vsel %vm454, %v289, 0
      %v698 = vsel %vm454, %v290, 0
      %v700 = vsel %vm454, %v291, 0
      %v702 = vsel %vm454, %v292, 0
      %v704 = vsel %vm454, %v293, 0
      %v706 = vsel %vm454, %v294, 0
      %v708 = vsel %vm454, %v295, 0
      %v710 = vsel %vm454, %v296, 0
      %v712 = vsel %vm454, %v297, 0
      %v714 = vsel %vm454, %v298, 0
      %v716 = vsel %vm454, %v299, 0
      %v718 = vsel %vm454, %v300, 0
      %v720 = vsel %vm454, %v301, 0
      %v722 = vsel %vm454, %v302, 0
      %v724 = vsel %vm454, %v303, 0
      %v727 = vsel %vm509, %v208, 0
      %729 = vmatprep.subr.bf16.mxu0 0
      %730 = vmatpush1.bf16.msra.mxu0 0
      %731 = vmatprep.subr.bf16.mxu0 0
      %732 = vmatpush1.bf16.msra.mxu0 0
      %733 = vmatprep.subr.bf16.mxu0 0
      %734 = vmatpush1.bf16.msra.mxu0 0
      %735 = vmatprep.subr.bf16.mxu0 0
      %736 = vmatpush1.bf16.msra.mxu0 0
      %737 = vmatprep.subr.bf16.mxu0 0
      %738 = vmatpush1.bf16.msra.mxu0 0
      %739 = vmatprep.subr.bf16.mxu0 0
      %740 = vmatpush1.bf16.msra.mxu0 0
      %741 = vmatprep.subr.bf16.mxu0 0
      %742 = vmatpush1.bf16.msra.mxu0 0
      %743 = vmatprep.subr.bf16.mxu0 0
      %744 = vmatpush1.bf16.msra.mxu0 %v727
      %745 = vmatprep.subr.bf16.mxu0 0
      %746 = vmatpush2.bf16.msra.mxu0 0
      %747 = vmatprep.subr.bf16.mxu0 0
      %748 = vmatpush2.bf16.msra.mxu0 0
      %749 = vmatprep.subr.bf16.mxu0 0
      %750 = vmatpush2.bf16.msra.mxu0 0
      %751 = vmatprep.subr.bf16.mxu0 0
      %752 = vmatpush2.bf16.msra.mxu0 0
      %753 = vmatprep.subr.bf16.mxu0 0
      %754 = vmatpush2.bf16.msra.mxu0 0
      %755 = vmatprep.subr.bf16.mxu0 0
      %756 = vmatpush2.bf16.msra.mxu0 0
      %757 = vmatprep.subr.bf16.mxu0 0
      %758 = vmatpush2.bf16.msra.mxu0 0
      %759 = vmatprep.subr.bf16.mxu0 0
      %760 = vmatpush2.bf16.msra.mxu0 0
      %761 = vmatprep.mubr.bf16.mxu0 0
      %762 = vmatmul.mubr.bf16.gmra.mxu0 %v690
      %v763 = vpop.f32.mrf.mxu0
      %v764 = vadd.f32 %v548, %v763
      %v765 = vpop.f32.mrf.mxu0
      %v766 = vpop.f32.mrf.mxu0
      %v767 = vadd.f32 %v551, %v766
      %v768 = vpop.f32.mrf.mxu0
      %769 = vmatprep.mubr.bf16.mxu0 0
      %770 = vmatmul.mubr.bf16.gmra.mxu0 %v692
      %v771 = vpop.f32.mrf.mxu0
      %v772 = vadd.f32 %v556, %v771
      %v773 = vpop.f32.mrf.mxu0
      %v774 = vpop.f32.mrf.mxu0
      %v775 = vadd.f32 %v559, %v774
      %v776 = vpop.f32.mrf.mxu0
      %777 = vmatprep.mubr.bf16.mxu0 0
      %778 = vmatmul.mubr.bf16.gmra.mxu0 %v694
      %v779 = vpop.f32.mrf.mxu0
      %v780 = vadd.f32 %v564, %v779
      %v781 = vpop.f32.mrf.mxu0
      %v782 = vpop.f32.mrf.mxu0
      %v783 = vadd.f32 %v567, %v782
      %v784 = vpop.f32.mrf.mxu0
      %785 = vmatprep.mubr.bf16.mxu0 0
      %786 = vmatmul.mubr.bf16.gmra.mxu0 %v696
      %v787 = vpop.f32.mrf.mxu0
      %v788 = vadd.f32 %v572, %v787
      %v789 = vpop.f32.mrf.mxu0
      %v790 = vpop.f32.mrf.mxu0
      %v791 = vadd.f32 %v575, %v790
      %v792 = vpop.f32.mrf.mxu0
      %793 = vmatprep.mubr.bf16.mxu0 0
      %794 = vmatmul.mubr.bf16.gmra.mxu0 %v698
      %v795 = vpop.f32.mrf.mxu0
      %v796 = vadd.f32 %v580, %v795
      %v797 = vpop.f32.mrf.mxu0
      %v798 = vpop.f32.mrf.mxu0
      %v799 = vadd.f32 %v583, %v798
      %v800 = vpop.f32.mrf.mxu0
      %801 = vmatprep.mubr.bf16.mxu0 0
      %802 = vmatmul.mubr.bf16.gmra.mxu0 %v700
      %v803 = vpop.f32.mrf.mxu0
      %v804 = vadd.f32 %v588, %v803
      %v805 = vpop.f32.mrf.mxu0
      %v806 = vpop.f32.mrf.mxu0
      %v807 = vadd.f32 %v591, %v806
      %v808 = vpop.f32.mrf.mxu0
      %809 = vmatprep.mubr.bf16.mxu0 0
      %810 = vmatmul.mubr.bf16.gmra.mxu0 %v702
      %v811 = vpop.f32.mrf.mxu0
      %v812 = vadd.f32 %v596, %v811
      %v813 = vpop.f32.mrf.mxu0
      %v814 = vpop.f32.mrf.mxu0
      %v815 = vadd.f32 %v599, %v814
      %v816 = vpop.f32.mrf.mxu0
      %817 = vmatprep.mubr.bf16.mxu0 0
      %818 = vmatmul.mubr.bf16.gmra.mxu0 %v704
      %v819 = vpop.f32.mrf.mxu0
      %v820 = vadd.f32 %v604, %v819
      %v821 = vpop.f32.mrf.mxu0
      %v822 = vpop.f32.mrf.mxu0
      %v823 = vadd.f32 %v607, %v822
      %v824 = vpop.f32.mrf.mxu0
      %825 = vmatprep.mubr.bf16.mxu0 0
      %826 = vmatmul.mubr.bf16.gmra.mxu0 %v706
      %v827 = vpop.f32.mrf.mxu0
      %v828 = vadd.f32 %v612, %v827
      %v829 = vpop.f32.mrf.mxu0
      %v830 = vpop.f32.mrf.mxu0
      %v831 = vadd.f32 %v615, %v830
      %v832 = vpop.f32.mrf.mxu0
      %833 = vmatprep.mubr.bf16.mxu0 0
      %834 = vmatmul.mubr.bf16.gmra.mxu0 %v708
      %v835 = vpop.f32.mrf.mxu0
      %v836 = vadd.f32 %v620, %v835
      %v837 = vpop.f32.mrf.mxu0
      %v838 = vpop.f32.mrf.mxu0
      %v839 = vadd.f32 %v623, %v838
      %v840 = vpop.f32.mrf.mxu0
      %841 = vmatprep.mubr.bf16.mxu0 0
      %842 = vmatmul.mubr.bf16.gmra.mxu0 %v710
      %v843 = vpop.f32.mrf.mxu0
      %v844 = vadd.f32 %v628, %v843
      %v845 = vpop.f32.mrf.mxu0
      %v846 = vpop.f32.mrf.mxu0
      %v847 = vadd.f32 %v631, %v846
      %v848 = vpop.f32.mrf.mxu0
      %849 = vmatprep.mubr.bf16.mxu0 0
      %850 = vmatmul.mubr.bf16.gmra.mxu0 %v712
      %v851 = vpop.f32.mrf.mxu0
      %v852 = vadd.f32 %v636, %v851
      %v853 = vpop.f32.mrf.mxu0
      %v854 = vpop.f32.mrf.mxu0
      %v855 = vadd.f32 %v639, %v854
      %v856 = vpop.f32.mrf.mxu0
      %857 = vmatprep.mubr.bf16.mxu0 0
      %858 = vmatmul.mubr.bf16.gmra.mxu0 %v714
      %v859 = vpop.f32.mrf.mxu0
      %v860 = vadd.f32 %v644, %v859
      %v861 = vpop.f32.mrf.mxu0
      %v862 = vpop.f32.mrf.mxu0
      %v863 = vadd.f32 %v647, %v862
      %v864 = vpop.f32.mrf.mxu0
      %865 = vmatprep.mubr.bf16.mxu0 0
      %866 = vmatmul.mubr.bf16.gmra.mxu0 %v716
      %v867 = vpop.f32.mrf.mxu0
      %v868 = vadd.f32 %v652, %v867
      %v869 = vpop.f32.mrf.mxu0
      %v870 = vpop.f32.mrf.mxu0
      %v871 = vadd.f32 %v655, %v870
      %v872 = vpop.f32.mrf.mxu0
      %873 = vmatprep.mubr.bf16.mxu0 0
      %874 = vmatmul.mubr.bf16.gmra.mxu0 %v718
      %v875 = vpop.f32.mrf.mxu0
      %v876 = vadd.f32 %v660, %v875
      %v877 = vpop.f32.mrf.mxu0
      %v878 = vpop.f32.mrf.mxu0
      %v879 = vadd.f32 %v663, %v878
      %v880 = vpop.f32.mrf.mxu0
      %881 = vmatprep.mubr.bf16.mxu0 0
      %882 = vmatmul.mubr.bf16.gmra.mxu0 %v720
      %v883 = vpop.f32.mrf.mxu0
      %v884 = vadd.f32 %v668, %v883
      %v885 = vpop.f32.mrf.mxu0
      %v886 = vpop.f32.mrf.mxu0
      %v887 = vadd.f32 %v671, %v886
      %v888 = vpop.f32.mrf.mxu0
      %889 = vmatprep.mubr.bf16.mxu0 0
      %890 = vmatmul.mubr.bf16.gmra.mxu0 %v722
      %v891 = vpop.f32.mrf.mxu0
      %v892 = vadd.f32 %v676, %v891
      %v893 = vpop.f32.mrf.mxu0
      %v894 = vpop.f32.mrf.mxu0
      %v895 = vadd.f32 %v679, %v894
      %v896 = vpop.f32.mrf.mxu0
      %897 = vmatprep.mubr.bf16.mxu0 0
      %898 = vmatmul.mubr.bf16.gmra.mxu0 %v724
      %v899 = vpop.f32.mrf.mxu0
      %v900 = vadd.f32 %v684, %v899
      %v901 = vpop.f32.mrf.mxu0
      %v902 = vpop.f32.mrf.mxu0
      %v903 = vadd.f32 %v687, %v902
      %v904 = vpop.f32.mrf.mxu0
      %905 = vdwg.mxu0
      %v906 = vld [vmem:[%s165] sm:$0xe]
      %s907 = scalar_lea.vmem %s1, 4
      %v908 = vld [vmem:[%s907] sm:$0x3]
      %v910 = vunpack.c.l.b16 %v906
      %v911 = vpack.c.b16 %v250, %v910
      %vm912 = vcmask 1046528
      %v913 = vrot.slane %v911, 1
      %v914 = vrot.slane %v287, 1
      %v915 = vsel %vm912, %v913, %v914
      %v916 = vrot.slane %v288, 1
      %v917 = vsel %vm912, %v914, %v916
      %v918 = vrot.slane %v289, 1
      %v919 = vsel %vm912, %v916, %v918
      %v920 = vrot.slane %v290, 1
      %v921 = vsel %vm912, %v918, %v920
      %v922 = vrot.slane %v291, 1
      %v923 = vsel %vm912, %v920, %v922
      %v924 = vrot.slane %v292, 1
      %v925 = vsel %vm912, %v922, %v924
      %v926 = vrot.slane %v293, 1
      %v927 = vsel %vm912, %v924, %v926
      %v928 = vrot.slane %v294, 1
      %v929 = vsel %vm912, %v926, %v928
      %v930 = vrot.slane %v295, 1
      %v931 = vsel %vm912, %v928, %v930
      %v932 = vrot.slane %v296, 1
      %v933 = vsel %vm912, %v930, %v932
      %v934 = vrot.slane %v297, 1
      %v935 = vsel %vm912, %v932, %v934
      %v936 = vrot.slane %v298, 1
      %v937 = vsel %vm912, %v934, %v936
      %v938 = vrot.slane %v299, 1
      %v939 = vsel %vm912, %v936, %v938
      %v940 = vrot.slane %v300, 1
      %v941 = vsel %vm912, %v938, %v940
      %v942 = vrot.slane %v301, 1
      %v943 = vsel %vm912, %v940, %v942
      %v944 = vrot.slane %v302, 1
      %v945 = vsel %vm912, %v942, %v944
      %v946 = vrot.slane %v303, 1
      %v947 = vsel %vm912, %v944, %v946
      %v948 = vrot.slane %v304, 1
      %v949 = vsel %vm912, %v946, %v948
      %v951 = vsel %vm454, %v915, 0
      %v954 = vsel %vm454, %v917, 0
      %v957 = vsel %vm454, %v919, 0
      %v960 = vsel %vm454, %v921, 0
      %v963 = vsel %vm454, %v923, 0
      %v966 = vsel %vm454, %v925, 0
      %v969 = vsel %vm454, %v927, 0
      %v972 = vsel %vm454, %v929, 0
      %v975 = vsel %vm454, %v931, 0
      %v978 = vsel %vm454, %v933, 0
      %v981 = vsel %vm454, %v935, 0
      %v984 = vsel %vm454, %v937, 0
      %v987 = vsel %vm454, %v939, 0
      %v990 = vsel %vm454, %v941, 0
      %v993 = vsel %vm454, %v943, 0
      %v996 = vsel %vm454, %v945, 0
      %v999 = vsel %vm454, %v947, 0
      %v1002 = vsel %vm454, %v949, 0
      %v1005 = vsel %vm509, %v908, 0
      %1007 = vmatprep.subr.bf16.mxu0 0
      %1008 = vmatpush1.bf16.msra.mxu0 0
      %1009 = vmatprep.subr.bf16.mxu0 0
      %1010 = vmatpush1.bf16.msra.mxu0 0
      %1011 = vmatprep.subr.bf16.mxu0 0
      %1012 = vmatpush1.bf16.msra.mxu0 0
      %1013 = vmatprep.subr.bf16.mxu0 0
      %1014 = vmatpush1.bf16.msra.mxu0 0
      %1015 = vmatprep.subr.bf16.mxu0 0
      %1016 = vmatpush1.bf16.msra.mxu0 0
      %1017 = vmatprep.subr.bf16.mxu0 0
      %1018 = vmatpush1.bf16.msra.mxu0 0
      %1019 = vmatprep.subr.bf16.mxu0 0
      %1020 = vmatpush1.bf16.msra.mxu0 0
      %1021 = vmatprep.subr.bf16.mxu0 0
      %1022 = vmatpush1.bf16.msra.mxu0 %v1005
      %1023 = vmatprep.subr.bf16.mxu0 0
      %1024 = vmatpush2.bf16.msra.mxu0 0
      %1025 = vmatprep.subr.bf16.mxu0 0
      %1026 = vmatpush2.bf16.msra.mxu0 0
      %1027 = vmatprep.subr.bf16.mxu0 0
      %1028 = vmatpush2.bf16.msra.mxu0 0
      %1029 = vmatprep.subr.bf16.mxu0 0
      %1030 = vmatpush2.bf16.msra.mxu0 0
      %1031 = vmatprep.subr.bf16.mxu0 0
      %1032 = vmatpush2.bf16.msra.mxu0 0
      %1033 = vmatprep.subr.bf16.mxu0 0
      %1034 = vmatpush2.bf16.msra.mxu0 0
      %1035 = vmatprep.subr.bf16.mxu0 0
      %1036 = vmatpush2.bf16.msra.mxu0 0
      %1037 = vmatprep.subr.bf16.mxu0 0
      %1038 = vmatpush2.bf16.msra.mxu0 0
      %1039 = vmatprep.mubr.bf16.mxu0 0
      %1040 = vmatmul.mubr.bf16.gmra.mxu0 %v951
      %v1041 = vpop.f32.mrf.mxu0
      %v1042 = vadd.f32 0.0, %v1041
      %v1043 = vpop.f32.mrf.mxu0
      %v1044 = vpop.f32.mrf.mxu0
      %v1045 = vadd.f32 0.0, %v1044
      %v1046 = vpop.f32.mrf.mxu0
      %1047 = vmatprep.mubr.bf16.mxu0 0
      %1048 = vmatmul.mubr.bf16.gmra.mxu0 %v954
      %v1049 = vpop.f32.mrf.mxu0
      %v1050 = vadd.f32 0.0, %v1049
      %v1051 = vpop.f32.mrf.mxu0
      %v1052 = vpop.f32.mrf.mxu0
      %v1053 = vadd.f32 0.0, %v1052
      %v1054 = vpop.f32.mrf.mxu0
      %1055 = vmatprep.mubr.bf16.mxu0 0
      %1056 = vmatmul.mubr.bf16.gmra.mxu0 %v957
      %v1057 = vpop.f32.mrf.mxu0
      %v1058 = vadd.f32 0.0, %v1057
      %v1059 = vpop.f32.mrf.mxu0
      %v1060 = vpop.f32.mrf.mxu0
      %v1061 = vadd.f32 0.0, %v1060
      %v1062 = vpop.f32.mrf.mxu0
      %1063 = vmatprep.mubr.bf16.mxu0 0
      %1064 = vmatmul.mubr.bf16.gmra.mxu0 %v960
      %v1065 = vpop.f32.mrf.mxu0
      %v1066 = vadd.f32 0.0, %v1065
      %v1067 = vpop.f32.mrf.mxu0
      %v1068 = vpop.f32.mrf.mxu0
      %v1069 = vadd.f32 0.0, %v1068
      %v1070 = vpop.f32.mrf.mxu0
      %1071 = vmatprep.mubr.bf16.mxu0 0
      %1072 = vmatmul.mubr.bf16.gmra.mxu0 %v963
      %v1073 = vpop.f32.mrf.mxu0
      %v1074 = vadd.f32 0.0, %v1073
      %v1075 = vpop.f32.mrf.mxu0
      %v1076 = vpop.f32.mrf.mxu0
      %v1077 = vadd.f32 0.0, %v1076
      %v1078 = vpop.f32.mrf.mxu0
      %1079 = vmatprep.mubr.bf16.mxu0 0
      %1080 = vmatmul.mubr.bf16.gmra.mxu0 %v966
      %v1081 = vpop.f32.mrf.mxu0
      %v1082 = vadd.f32 0.0, %v1081
      %v1083 = vpop.f32.mrf.mxu0
      %v1084 = vpop.f32.mrf.mxu0
      %v1085 = vadd.f32 0.0, %v1084
      %v1086 = vpop.f32.mrf.mxu0
      %1087 = vmatprep.mubr.bf16.mxu0 0
      %1088 = vmatmul.mubr.bf16.gmra.mxu0 %v969
      %v1089 = vpop.f32.mrf.mxu0
      %v1090 = vadd.f32 0.0, %v1089
      %v1091 = vpop.f32.mrf.mxu0
      %v1092 = vpop.f32.mrf.mxu0
      %v1093 = vadd.f32 0.0, %v1092
      %v1094 = vpop.f32.mrf.mxu0
      %1095 = vmatprep.mubr.bf16.mxu0 0
      %1096 = vmatmul.mubr.bf16.gmra.mxu0 %v972
      %v1097 = vpop.f32.mrf.mxu0
      %v1098 = vadd.f32 0.0, %v1097
      %v1099 = vpop.f32.mrf.mxu0
      %v1100 = vpop.f32.mrf.mxu0
      %v1101 = vadd.f32 0.0, %v1100
      %v1102 = vpop.f32.mrf.mxu0
      %1103 = vmatprep.mubr.bf16.mxu0 0
      %1104 = vmatmul.mubr.bf16.gmra.mxu0 %v975
      %v1105 = vpop.f32.mrf.mxu0
      %v1106 = vadd.f32 0.0, %v1105
      %v1107 = vpop.f32.mrf.mxu0
      %v1108 = vpop.f32.mrf.mxu0
      %v1109 = vadd.f32 0.0, %v1108
      %v1110 = vpop.f32.mrf.mxu0
      %1111 = vmatprep.mubr.bf16.mxu0 0
      %1112 = vmatmul.mubr.bf16.gmra.mxu0 %v978
      %v1113 = vpop.f32.mrf.mxu0
      %v1114 = vadd.f32 0.0, %v1113
      %v1115 = vpop.f32.mrf.mxu0
      %v1116 = vpop.f32.mrf.mxu0
      %v1117 = vadd.f32 0.0, %v1116
      %v1118 = vpop.f32.mrf.mxu0
      %1119 = vmatprep.mubr.bf16.mxu0 0
      %1120 = vmatmul.mubr.bf16.gmra.mxu0 %v981
      %v1121 = vpop.f32.mrf.mxu0
      %v1122 = vadd.f32 0.0, %v1121
      %v1123 = vpop.f32.mrf.mxu0
      %v1124 = vpop.f32.mrf.mxu0
      %v1125 = vadd.f32 0.0, %v1124
      %v1126 = vpop.f32.mrf.mxu0
      %1127 = vmatprep.mubr.bf16.mxu0 0
      %1128 = vmatmul.mubr.bf16.gmra.mxu0 %v984
      %v1129 = vpop.f32.mrf.mxu0
      %v1130 = vadd.f32 0.0, %v1129
      %v1131 = vpop.f32.mrf.mxu0
      %v1132 = vpop.f32.mrf.mxu0
      %v1133 = vadd.f32 0.0, %v1132
      %v1134 = vpop.f32.mrf.mxu0
      %1135 = vmatprep.mubr.bf16.mxu0 0
      %1136 = vmatmul.mubr.bf16.gmra.mxu0 %v987
      %v1137 = vpop.f32.mrf.mxu0
      %v1138 = vadd.f32 0.0, %v1137
      %v1139 = vpop.f32.mrf.mxu0
      %v1140 = vpop.f32.mrf.mxu0
      %v1141 = vadd.f32 0.0, %v1140
      %v1142 = vpop.f32.mrf.mxu0
      %1143 = vmatprep.mubr.bf16.mxu0 0
      %1144 = vmatmul.mubr.bf16.gmra.mxu0 %v990
      %v1145 = vpop.f32.mrf.mxu0
      %v1146 = vadd.f32 0.0, %v1145
      %v1147 = vpop.f32.mrf.mxu0
      %v1148 = vpop.f32.mrf.mxu0
      %v1149 = vadd.f32 0.0, %v1148
      %v1150 = vpop.f32.mrf.mxu0
      %1151 = vmatprep.mubr.bf16.mxu0 0
      %1152 = vmatmul.mubr.bf16.gmra.mxu0 %v993
      %v1153 = vpop.f32.mrf.mxu0
      %v1154 = vadd.f32 0.0, %v1153
      %v1155 = vpop.f32.mrf.mxu0
      %v1156 = vpop.f32.mrf.mxu0
      %v1157 = vadd.f32 0.0, %v1156
      %v1158 = vpop.f32.mrf.mxu0
      %1159 = vmatprep.mubr.bf16.mxu0 0
      %1160 = vmatmul.mubr.bf16.gmra.mxu0 %v996
      %v1161 = vpop.f32.mrf.mxu0
      %v1162 = vadd.f32 0.0, %v1161
      %v1163 = vpop.f32.mrf.mxu0
      %v1164 = vpop.f32.mrf.mxu0
      %v1165 = vadd.f32 0.0, %v1164
      %v1166 = vpop.f32.mrf.mxu0
      %1167 = vmatprep.mubr.bf16.mxu0 0
      %1168 = vmatmul.mubr.bf16.gmra.mxu0 %v999
      %v1169 = vpop.f32.mrf.mxu0
      %v1170 = vadd.f32 0.0, %v1169
      %v1171 = vpop.f32.mrf.mxu0
      %v1172 = vpop.f32.mrf.mxu0
      %v1173 = vadd.f32 0.0, %v1172
      %v1174 = vpop.f32.mrf.mxu0
      %1175 = vmatprep.mubr.bf16.mxu0 0
      %1176 = vmatmul.mubr.bf16.gmra.mxu0 %v1002
      %v1177 = vpop.f32.mrf.mxu0
      %v1178 = vadd.f32 0.0, %v1177
      %v1179 = vpop.f32.mrf.mxu0
      %v1180 = vpop.f32.mrf.mxu0
      %v1181 = vadd.f32 0.0, %v1180
      %v1182 = vpop.f32.mrf.mxu0
      %1183 = vdwg.mxu0
      %v1184 = vadd.f32 %v764, %v1042
      %v1185 = vadd.f32 %v767, %v1045
      %v1186 = vadd.f32 %v772, %v1050
      %v1187 = vadd.f32 %v775, %v1053
      %v1188 = vadd.f32 %v780, %v1058
      %v1189 = vadd.f32 %v783, %v1061
      %v1190 = vadd.f32 %v788, %v1066
      %v1191 = vadd.f32 %v791, %v1069
      %v1192 = vadd.f32 %v796, %v1074
      %v1193 = vadd.f32 %v799, %v1077
      %v1194 = vadd.f32 %v804, %v1082
      %v1195 = vadd.f32 %v807, %v1085
      %v1196 = vadd.f32 %v812, %v1090
      %v1197 = vadd.f32 %v815, %v1093
      %v1198 = vadd.f32 %v820, %v1098
      %v1199 = vadd.f32 %v823, %v1101
      %v1200 = vadd.f32 %v828, %v1106
      %v1201 = vadd.f32 %v831, %v1109
      %v1202 = vadd.f32 %v836, %v1114
      %v1203 = vadd.f32 %v839, %v1117
      %v1204 = vadd.f32 %v844, %v1122
      %v1205 = vadd.f32 %v847, %v1125
      %v1206 = vadd.f32 %v852, %v1130
      %v1207 = vadd.f32 %v855, %v1133
      %v1208 = vadd.f32 %v860, %v1138
      %v1209 = vadd.f32 %v863, %v1141
      %v1210 = vadd.f32 %v868, %v1146
      %v1211 = vadd.f32 %v871, %v1149
      %v1212 = vadd.f32 %v876, %v1154
      %v1213 = vadd.f32 %v879, %v1157
      %v1214 = vadd.f32 %v884, %v1162
      %v1215 = vadd.f32 %v887, %v1165
      %v1216 = vadd.f32 %v892, %v1170
      %v1217 = vadd.f32 %v895, %v1173
      %v1218 = vadd.f32 %v900, %v1178
      %v1219 = vadd.f32 %v903, %v1181
      %v1220 = vld [vmem:[%s165 + $0x8] sm:$0xe]
      %v1221 = vld [vmem:[%s165 + $0xc] sm:$0xf]
      %v1222 = vld [vmem:[%s165 + $0x10] sm:$0xf]
      %v1223 = vld [vmem:[%s165 + $0x14] sm:$0xf]
      %v1224 = vld [vmem:[%s165 + $0x18] sm:$0xf]
      %v1225 = vld [vmem:[%s165 + $0x1c] sm:$0xf]
      %v1226 = vld [vmem:[%s165 + $0x20] sm:$0xf]
      %v1227 = vld [vmem:[%s165 + $0x24] sm:$0xf]
      %v1228 = vld [vmem:[%s165 + $0x28] sm:$0xf]
      %v1229 = vld [vmem:[%s165 + $0x2c] sm:$0xf]
      %v1230 = vld [vmem:[%s165 + $0x30] sm:$0xf]
      %v1231 = vld [vmem:[%s165 + $0x34] sm:$0xf]
      %v1232 = vld [vmem:[%s165 + $0x38] sm:$0xf]
      %v1233 = vld [vmem:[%s165 + $0x3c] sm:$0xf]
      %v1234 = vld [vmem:[%s165 + $0x40] sm:$0xf]
      %v1235 = vld [vmem:[%s165 + $0x44] sm:$0xf]
      %v1236 = vld [vmem:[%s165 + $0x48] sm:$0xf]
      %v1237 = vld [vmem:[%s165 + $0x4c] sm:$0xf]
      %v1238 = vld [vmem:[%s165 + $0x50] sm:$0xf]
      %v1239 = vld [vmem:[%s165 + $0x54] sm:$0xf]
      %v1240 = vld [vmem:[%s165 + $0x58] sm:$0xf]
      %v1241 = vld [vmem:[%s165 + $0x5c] sm:$0xf]
      %v1242 = vld [vmem:[%s165 + $0x60] sm:$0xf]
      %v1243 = vld [vmem:[%s165 + $0x64] sm:$0xf]
      %v1244 = vld [vmem:[%s165 + $0x68] sm:$0xf]
      %v1245 = vld [vmem:[%s165 + $0x6c] sm:$0xf]
      %v1246 = vld [vmem:[%s165 + $0x70] sm:$0xf]
      %v1247 = vld [vmem:[%s165 + $0x74] sm:$0xf]
      %v1248 = vld [vmem:[%s165 + $0x78] sm:$0xf]
      %v1249 = vld [vmem:[%s165 + $0x7c] sm:$0xf]
      %v1250 = vld [vmem:[%s165 + $0x80] sm:$0xf]
      %v1251 = vld [vmem:[%s165 + $0x84] sm:$0xf]
      %v1252 = vld [vmem:[%s165 + $0x88] sm:$0xf]
      %v1253 = vld [vmem:[%s165 + $0x8c] sm:$0xf]
      %v1254 = vld [vmem:[%s165 + $0x90] sm:$0xf]
      %v1255 = vld [vmem:[%s165 + $0x94] sm:$0xf]
      %v1256 = vld [vmem:[%s165 + $0x98] sm:$0x1]
      %s1257 = scalar_lea.vmem %s1, 6
      %v1258 = vld [vmem:[%s1257] sm:$0x3]
      %v1296 = vunpack.c.l.b16 %v1220
      %v1297 = vunpack.c.l.b16 %v1221
      %v1298 = vunpack.c.l.b16 %v1222
      %v1299 = vunpack.c.l.b16 %v1223
      %v1300 = vunpack.c.l.b16 %v1224
      %v1301 = vunpack.c.l.b16 %v1225
      %v1302 = vunpack.c.l.b16 %v1226
      %v1303 = vunpack.c.l.b16 %v1227
      %v1304 = vunpack.c.l.b16 %v1228
      %v1305 = vunpack.c.l.b16 %v1229
      %v1306 = vunpack.c.l.b16 %v1230
      %v1307 = vunpack.c.l.b16 %v1231
      %v1308 = vunpack.c.l.b16 %v1232
      %v1309 = vunpack.c.l.b16 %v1233
      %v1310 = vunpack.c.l.b16 %v1234
      %v1311 = vunpack.c.l.b16 %v1235
      %v1312 = vunpack.c.l.b16 %v1236
      %v1313 = vunpack.c.l.b16 %v1237
      %v1314 = vunpack.c.l.b16 %v1238
      %v1315 = vunpack.c.l.b16 %v1239
      %v1316 = vunpack.c.l.b16 %v1240
      %v1317 = vunpack.c.l.b16 %v1241
      %v1318 = vunpack.c.l.b16 %v1242
      %v1319 = vunpack.c.l.b16 %v1243
      %v1320 = vunpack.c.l.b16 %v1244
      %v1321 = vunpack.c.l.b16 %v1245
      %v1322 = vunpack.c.l.b16 %v1246
      %v1323 = vunpack.c.l.b16 %v1247
      %v1324 = vunpack.c.l.b16 %v1248
      %v1325 = vunpack.c.l.b16 %v1249
      %v1326 = vunpack.c.l.b16 %v1250
      %v1327 = vunpack.c.l.b16 %v1251
      %v1328 = vunpack.c.l.b16 %v1252
      %v1329 = vunpack.c.l.b16 %v1253
      %v1330 = vunpack.c.l.b16 %v1254
      %v1331 = vunpack.c.l.b16 %v1255
      %v1332 = vunpack.c.l.b16 %v1256
      %v1333 = vpack.c.b16 %v1297, %v1296
      %v1334 = vpack.c.b16 %v1299, %v1298
      %v1335 = vpack.c.b16 %v1301, %v1300
      %v1336 = vpack.c.b16 %v1303, %v1302
      %v1337 = vpack.c.b16 %v1305, %v1304
      %v1338 = vpack.c.b16 %v1307, %v1306
      %v1339 = vpack.c.b16 %v1309, %v1308
      %v1340 = vpack.c.b16 %v1311, %v1310
      %v1341 = vpack.c.b16 %v1313, %v1312
      %v1342 = vpack.c.b16 %v1315, %v1314
      %v1343 = vpack.c.b16 %v1317, %v1316
      %v1344 = vpack.c.b16 %v1319, %v1318
      %v1345 = vpack.c.b16 %v1321, %v1320
      %v1346 = vpack.c.b16 %v1323, %v1322
      %v1347 = vpack.c.b16 %v1325, %v1324
      %v1348 = vpack.c.b16 %v1327, %v1326
      %v1349 = vpack.c.b16 %v1329, %v1328
      %v1350 = vpack.c.b16 %v1331, %v1330
      %v1351 = vpack.c.b16 %v1332, %v1332
      %v1352 = vrot.slane %v1333, 1
      %v1353 = vrot.slane %v1334, 1
      %v1354 = vsel %vm912, %v1352, %v1353
      %v1355 = vrot.slane %v1335, 1
      %v1356 = vsel %vm912, %v1353, %v1355
      %v1357 = vrot.slane %v1336, 1
      %v1358 = vsel %vm912, %v1355, %v1357
      %v1359 = vrot.slane %v1337, 1
      %v1360 = vsel %vm912, %v1357, %v1359
      %v1361 = vrot.slane %v1338, 1
      %v1362 = vsel %vm912, %v1359, %v1361
      %v1363 = vrot.slane %v1339, 1
      %v1364 = vsel %vm912, %v1361, %v1363
      %v1365 = vrot.slane %v1340, 1
      %v1366 = vsel %vm912, %v1363, %v1365
      %v1367 = vrot.slane %v1341, 1
      %v1368 = vsel %vm912, %v1365, %v1367
      %v1369 = vrot.slane %v1342, 1
      %v1370 = vsel %vm912, %v1367, %v1369
      %v1371 = vrot.slane %v1343, 1
      %v1372 = vsel %vm912, %v1369, %v1371
      %v1373 = vrot.slane %v1344, 1
      %v1374 = vsel %vm912, %v1371, %v1373
      %v1375 = vrot.slane %v1345, 1
      %v1376 = vsel %vm912, %v1373, %v1375
      %v1377 = vrot.slane %v1346, 1
      %v1378 = vsel %vm912, %v1375, %v1377
      %v1379 = vrot.slane %v1347, 1
      %v1380 = vsel %vm912, %v1377, %v1379
      %v1381 = vrot.slane %v1348, 1
      %v1382 = vsel %vm912, %v1379, %v1381
      %v1383 = vrot.slane %v1349, 1
      %v1384 = vsel %vm912, %v1381, %v1383
      %v1385 = vrot.slane %v1350, 1
      %v1386 = vsel %vm912, %v1383, %v1385
      %v1387 = vrot.slane %v1351, 1
      %v1388 = vsel %vm912, %v1385, %v1387
      %v1390 = vsel %vm454, %v1354, 0
      %v1393 = vsel %vm454, %v1356, 0
      %v1396 = vsel %vm454, %v1358, 0
      %v1399 = vsel %vm454, %v1360, 0
      %v1402 = vsel %vm454, %v1362, 0
      %v1405 = vsel %vm454, %v1364, 0
      %v1408 = vsel %vm454, %v1366, 0
      %v1411 = vsel %vm454, %v1368, 0
      %v1414 = vsel %vm454, %v1370, 0
      %v1417 = vsel %vm454, %v1372, 0
      %v1420 = vsel %vm454, %v1374, 0
      %v1423 = vsel %vm454, %v1376, 0
      %v1426 = vsel %vm454, %v1378, 0
      %v1429 = vsel %vm454, %v1380, 0
      %v1432 = vsel %vm454, %v1382, 0
      %v1435 = vsel %vm454, %v1384, 0
      %v1438 = vsel %vm454, %v1386, 0
      %v1441 = vsel %vm454, %v1388, 0
      %v1444 = vsel %vm509, %v1258, 0
      %1446 = vmatprep.subr.bf16.mxu0 0
      %1447 = vmatpush1.bf16.msra.mxu0 0
      %1448 = vmatprep.subr.bf16.mxu0 0
      %1449 = vmatpush1.bf16.msra.mxu0 0
      %1450 = vmatprep.subr.bf16.mxu0 0
      %1451 = vmatpush1.bf16.msra.mxu0 0
      %1452 = vmatprep.subr.bf16.mxu0 0
      %1453 = vmatpush1.bf16.msra.mxu0 0
      %1454 = vmatprep.subr.bf16.mxu0 0
      %1455 = vmatpush1.bf16.msra.mxu0 0
      %1456 = vmatprep.subr.bf16.mxu0 0
      %1457 = vmatpush1.bf16.msra.mxu0 0
      %1458 = vmatprep.subr.bf16.mxu0 0
      %1459 = vmatpush1.bf16.msra.mxu0 0
      %1460 = vmatprep.subr.bf16.mxu0 0
      %1461 = vmatpush1.bf16.msra.mxu0 %v1444
      %1462 = vmatprep.subr.bf16.mxu0 0
      %1463 = vmatpush2.bf16.msra.mxu0 0
      %1464 = vmatprep.subr.bf16.mxu0 0
      %1465 = vmatpush2.bf16.msra.mxu0 0
      %1466 = vmatprep.subr.bf16.mxu0 0
      %1467 = vmatpush2.bf16.msra.mxu0 0
      %1468 = vmatprep.subr.bf16.mxu0 0
      %1469 = vmatpush2.bf16.msra.mxu0 0
      %1470 = vmatprep.subr.bf16.mxu0 0
      %1471 = vmatpush2.bf16.msra.mxu0 0
      %1472 = vmatprep.subr.bf16.mxu0 0
      %1473 = vmatpush2.bf16.msra.mxu0 0
      %1474 = vmatprep.subr.bf16.mxu0 0
      %1475 = vmatpush2.bf16.msra.mxu0 0
      %1476 = vmatprep.subr.bf16.mxu0 0
      %1477 = vmatpush2.bf16.msra.mxu0 0
      %1478 = vmatprep.mubr.bf16.mxu0 0
      %1479 = vmatmul.mubr.bf16.gmra.mxu0 %v1390
      %v1480 = vpop.f32.mrf.mxu0
      %v1481 = vadd.f32 0.0, %v1480
      %v1482 = vpop.f32.mrf.mxu0
      %v1483 = vpop.f32.mrf.mxu0
      %v1484 = vadd.f32 0.0, %v1483
      %v1485 = vpop.f32.mrf.mxu0
      %1486 = vmatprep.mubr.bf16.mxu0 0
      %1487 = vmatmul.mubr.bf16.gmra.mxu0 %v1393
      %v1488 = vpop.f32.mrf.mxu0
      %v1489 = vadd.f32 0.0, %v1488
      %v1490 = vpop.f32.mrf.mxu0
      %v1491 = vpop.f32.mrf.mxu0
      %v1492 = vadd.f32 0.0, %v1491
      %v1493 = vpop.f32.mrf.mxu0
      %1494 = vmatprep.mubr.bf16.mxu0 0
      %1495 = vmatmul.mubr.bf16.gmra.mxu0 %v1396
      %v1496 = vpop.f32.mrf.mxu0
      %v1497 = vadd.f32 0.0, %v1496
      %v1498 = vpop.f32.mrf.mxu0
      %v1499 = vpop.f32.mrf.mxu0
      %v1500 = vadd.f32 0.0, %v1499
      %v1501 = vpop.f32.mrf.mxu0
      %1502 = vmatprep.mubr.bf16.mxu0 0
      %1503 = vmatmul.mubr.bf16.gmra.mxu0 %v1399
      %v1504 = vpop.f32.mrf.mxu0
      %v1505 = vadd.f32 0.0, %v1504
      %v1506 = vpop.f32.mrf.mxu0
      %v1507 = vpop.f32.mrf.mxu0
      %v1508 = vadd.f32 0.0, %v1507
      %v1509 = vpop.f32.mrf.mxu0
      %1510 = vmatprep.mubr.bf16.mxu0 0
      %1511 = vmatmul.mubr.bf16.gmra.mxu0 %v1402
      %v1512 = vpop.f32.mrf.mxu0
      %v1513 = vadd.f32 0.0, %v1512
      %v1514 = vpop.f32.mrf.mxu0
      %v1515 = vpop.f32.mrf.mxu0
      %v1516 = vadd.f32 0.0, %v1515
      %v1517 = vpop.f32.mrf.mxu0
      %1518 = vmatprep.mubr.bf16.mxu0 0
      %1519 = vmatmul.mubr.bf16.gmra.mxu0 %v1405
      %v1520 = vpop.f32.mrf.mxu0
      %v1521 = vadd.f32 0.0, %v1520
      %v1522 = vpop.f32.mrf.mxu0
      %v1523 = vpop.f32.mrf.mxu0
      %v1524 = vadd.f32 0.0, %v1523
      %v1525 = vpop.f32.mrf.mxu0
      %1526 = vmatprep.mubr.bf16.mxu0 0
      %1527 = vmatmul.mubr.bf16.gmra.mxu0 %v1408
      %v1528 = vpop.f32.mrf.mxu0
      %v1529 = vadd.f32 0.0, %v1528
      %v1530 = vpop.f32.mrf.mxu0
      %v1531 = vpop.f32.mrf.mxu0
      %v1532 = vadd.f32 0.0, %v1531
      %v1533 = vpop.f32.mrf.mxu0
      %1534 = vmatprep.mubr.bf16.mxu0 0
      %1535 = vmatmul.mubr.bf16.gmra.mxu0 %v1411
      %v1536 = vpop.f32.mrf.mxu0
      %v1537 = vadd.f32 0.0, %v1536
      %v1538 = vpop.f32.mrf.mxu0
      %v1539 = vpop.f32.mrf.mxu0
      %v1540 = vadd.f32 0.0, %v1539
      %v1541 = vpop.f32.mrf.mxu0
      %1542 = vmatprep.mubr.bf16.mxu0 0
      %1543 = vmatmul.mubr.bf16.gmra.mxu0 %v1414
      %v1544 = vpop.f32.mrf.mxu0
      %v1545 = vadd.f32 0.0, %v1544
      %v1546 = vpop.f32.mrf.mxu0
      %v1547 = vpop.f32.mrf.mxu0
      %v1548 = vadd.f32 0.0, %v1547
      %v1549 = vpop.f32.mrf.mxu0
      %1550 = vmatprep.mubr.bf16.mxu0 0
      %1551 = vmatmul.mubr.bf16.gmra.mxu0 %v1417
      %v1552 = vpop.f32.mrf.mxu0
      %v1553 = vadd.f32 0.0, %v1552
      %v1554 = vpop.f32.mrf.mxu0
      %v1555 = vpop.f32.mrf.mxu0
      %v1556 = vadd.f32 0.0, %v1555
      %v1557 = vpop.f32.mrf.mxu0
      %1558 = vmatprep.mubr.bf16.mxu0 0
      %1559 = vmatmul.mubr.bf16.gmra.mxu0 %v1420
      %v1560 = vpop.f32.mrf.mxu0
      %v1561 = vadd.f32 0.0, %v1560
      %v1562 = vpop.f32.mrf.mxu0
      %v1563 = vpop.f32.mrf.mxu0
      %v1564 = vadd.f32 0.0, %v1563
      %v1565 = vpop.f32.mrf.mxu0
      %1566 = vmatprep.mubr.bf16.mxu0 0
      %1567 = vmatmul.mubr.bf16.gmra.mxu0 %v1423
      %v1568 = vpop.f32.mrf.mxu0
      %v1569 = vadd.f32 0.0, %v1568
      %v1570 = vpop.f32.mrf.mxu0
      %v1571 = vpop.f32.mrf.mxu0
      %v1572 = vadd.f32 0.0, %v1571
      %v1573 = vpop.f32.mrf.mxu0
      %1574 = vmatprep.mubr.bf16.mxu0 0
      %1575 = vmatmul.mubr.bf16.gmra.mxu0 %v1426
      %v1576 = vpop.f32.mrf.mxu0
      %v1577 = vadd.f32 0.0, %v1576
      %v1578 = vpop.f32.mrf.mxu0
      %v1579 = vpop.f32.mrf.mxu0
      %v1580 = vadd.f32 0.0, %v1579
      %v1581 = vpop.f32.mrf.mxu0
      %1582 = vmatprep.mubr.bf16.mxu0 0
      %1583 = vmatmul.mubr.bf16.gmra.mxu0 %v1429
      %v1584 = vpop.f32.mrf.mxu0
      %v1585 = vadd.f32 0.0, %v1584
      %v1586 = vpop.f32.mrf.mxu0
      %v1587 = vpop.f32.mrf.mxu0
      %v1588 = vadd.f32 0.0, %v1587
      %v1589 = vpop.f32.mrf.mxu0
      %1590 = vmatprep.mubr.bf16.mxu0 0
      %1591 = vmatmul.mubr.bf16.gmra.mxu0 %v1432
      %v1592 = vpop.f32.mrf.mxu0
      %v1593 = vadd.f32 0.0, %v1592
      %v1594 = vpop.f32.mrf.mxu0
      %v1595 = vpop.f32.mrf.mxu0
      %v1596 = vadd.f32 0.0, %v1595
      %v1597 = vpop.f32.mrf.mxu0
      %1598 = vmatprep.mubr.bf16.mxu0 0
      %1599 = vmatmul.mubr.bf16.gmra.mxu0 %v1435
      %v1600 = vpop.f32.mrf.mxu0
      %v1601 = vadd.f32 0.0, %v1600
      %v1602 = vpop.f32.mrf.mxu0
      %v1603 = vpop.f32.mrf.mxu0
      %v1604 = vadd.f32 0.0, %v1603
      %v1605 = vpop.f32.mrf.mxu0
      %1606 = vmatprep.mubr.bf16.mxu0 0
      %1607 = vmatmul.mubr.bf16.gmra.mxu0 %v1438
      %v1608 = vpop.f32.mrf.mxu0
      %v1609 = vadd.f32 0.0, %v1608
      %v1610 = vpop.f32.mrf.mxu0
      %v1611 = vpop.f32.mrf.mxu0
      %v1612 = vadd.f32 0.0, %v1611
      %v1613 = vpop.f32.mrf.mxu0
      %1614 = vmatprep.mubr.bf16.mxu0 0
      %1615 = vmatmul.mubr.bf16.gmra.mxu0 %v1441
      %v1616 = vpop.f32.mrf.mxu0
      %v1617 = vadd.f32 0.0, %v1616
      %v1618 = vpop.f32.mrf.mxu0
      %v1619 = vpop.f32.mrf.mxu0
      %v1620 = vadd.f32 0.0, %v1619
      %v1621 = vpop.f32.mrf.mxu0
      %1622 = vdwg.mxu0
      %v1623 = vadd.f32 %v1184, %v1481
      %v1624 = vadd.f32 %v1185, %v1484
      %v1625 = vadd.f32 %v1186, %v1489
      %v1626 = vadd.f32 %v1187, %v1492
      %v1627 = vadd.f32 %v1188, %v1497
      %v1628 = vadd.f32 %v1189, %v1500
      %v1629 = vadd.f32 %v1190, %v1505
      %v1630 = vadd.f32 %v1191, %v1508
      %v1631 = vadd.f32 %v1192, %v1513
      %v1632 = vadd.f32 %v1193, %v1516
      %v1633 = vadd.f32 %v1194, %v1521
      %v1634 = vadd.f32 %v1195, %v1524
      %v1635 = vadd.f32 %v1196, %v1529
      %v1636 = vadd.f32 %v1197, %v1532
      %v1637 = vadd.f32 %v1198, %v1537
      %v1638 = vadd.f32 %v1199, %v1540
      %v1639 = vadd.f32 %v1200, %v1545
      %v1640 = vadd.f32 %v1201, %v1548
      %v1641 = vadd.f32 %v1202, %v1553
      %v1642 = vadd.f32 %v1203, %v1556
      %v1643 = vadd.f32 %v1204, %v1561
      %v1644 = vadd.f32 %v1205, %v1564
      %v1645 = vadd.f32 %v1206, %v1569
      %v1646 = vadd.f32 %v1207, %v1572
      %v1647 = vadd.f32 %v1208, %v1577
      %v1648 = vadd.f32 %v1209, %v1580
      %v1649 = vadd.f32 %v1210, %v1585
      %v1650 = vadd.f32 %v1211, %v1588
      %v1651 = vadd.f32 %v1212, %v1593
      %v1652 = vadd.f32 %v1213, %v1596
      %v1653 = vadd.f32 %v1214, %v1601
      %v1654 = vadd.f32 %v1215, %v1604
      %v1655 = vadd.f32 %v1216, %v1609
      %v1656 = vadd.f32 %v1217, %v1612
      %v1657 = vadd.f32 %v1218, %v1617
      %v1658 = vadd.f32 %v1219, %v1620
      %v1659 = vld [vmem:[%s165 + $0x98] sm:$0x3]
      %s1660 = scalar_lea.vmem %s1, 8
      %v1661 = vld [vmem:[%s1660] sm:$0x3]
      %v1663 = vunpack.c.l.b16 %v1659
      %v1664 = vpack.c.b16 %v1663, %v1663
      %vm1665 = vsmask.f32 6400
      %v1667 = vshrl.u32 %v1333, 16
      %v1669 = vrot.slane %v1667, 1
      %v1670 = vshll.u32 %v1333, 16
      %v1672 = vrot.slane %v1670, 2
      %v1673 = vor.u32 %v1669, %v1672
      %v1675 = vshrl.u32 %v1334, 16
      %v1677 = vrot.slane %v1675, 1
      %v1678 = vshll.u32 %v1334, 16
      %v1680 = vrot.slane %v1678, 2
      %v1681 = vor.u32 %v1677, %v1680
      %v1682 = vsel %vm1665, %v1673, %v1681
      %v1684 = vshrl.u32 %v1335, 16
      %v1686 = vrot.slane %v1684, 1
      %v1687 = vshll.u32 %v1335, 16
      %v1689 = vrot.slane %v1687, 2
      %v1690 = vor.u32 %v1686, %v1689
      %v1691 = vsel %vm1665, %v1681, %v1690
      %v1693 = vshrl.u32 %v1336, 16
      %v1695 = vrot.slane %v1693, 1
      %v1696 = vshll.u32 %v1336, 16
      %v1698 = vrot.slane %v1696, 2
      %v1699 = vor.u32 %v1695, %v1698
      %v1700 = vsel %vm1665, %v1690, %v1699
      %v1702 = vshrl.u32 %v1337, 16
      %v1704 = vrot.slane %v1702, 1
      %v1705 = vshll.u32 %v1337, 16
      %v1707 = vrot.slane %v1705, 2
      %v1708 = vor.u32 %v1704, %v1707
      %v1709 = vsel %vm1665, %v1699, %v1708
      %v1711 = vshrl.u32 %v1338, 16
      %v1713 = vrot.slane %v1711, 1
      %v1714 = vshll.u32 %v1338, 16
      %v1716 = vrot.slane %v1714, 2
      %v1717 = vor.u32 %v1713, %v1716
      %v1718 = vsel %vm1665, %v1708, %v1717
      %v1720 = vshrl.u32 %v1339, 16
      %v1722 = vrot.slane %v1720, 1
      %v1723 = vshll.u32 %v1339, 16
      %v1725 = vrot.slane %v1723, 2
      %v1726 = vor.u32 %v1722, %v1725
      %v1727 = vsel %vm1665, %v1717, %v1726
      %v1729 = vshrl.u32 %v1340, 16
      %v1731 = vrot.slane %v1729, 1
      %v1732 = vshll.u32 %v1340, 16
      %v1734 = vrot.slane %v1732, 2
      %v1735 = vor.u32 %v1731, %v1734
      %v1736 = vsel %vm1665, %v1726, %v1735
      %v1738 = vshrl.u32 %v1341, 16
      %v1740 = vrot.slane %v1738, 1
      %v1741 = vshll.u32 %v1341, 16
      %v1743 = vrot.slane %v1741, 2
      %v1744 = vor.u32 %v1740, %v1743
      %v1745 = vsel %vm1665, %v1735, %v1744
      %v1747 = vshrl.u32 %v1342, 16
      %v1749 = vrot.slane %v1747, 1
      %v1750 = vshll.u32 %v1342, 16
      %v1752 = vrot.slane %v1750, 2
      %v1753 = vor.u32 %v1749, %v1752
      %v1754 = vsel %vm1665, %v1744, %v1753
      %v1756 = vshrl.u32 %v1343, 16
      %v1758 = vrot.slane %v1756, 1
      %v1759 = vshll.u32 %v1343, 16
      %v1761 = vrot.slane %v1759, 2
      %v1762 = vor.u32 %v1758, %v1761
      %v1763 = vsel %vm1665, %v1753, %v1762
      %v1765 = vshrl.u32 %v1344, 16
      %v1767 = vrot.slane %v1765, 1
      %v1768 = vshll.u32 %v1344, 16
      %v1770 = vrot.slane %v1768, 2
      %v1771 = vor.u32 %v1767, %v1770
      %v1772 = vsel %vm1665, %v1762, %v1771
      %v1774 = vshrl.u32 %v1345, 16
      %v1776 = vrot.slane %v1774, 1
      %v1777 = vshll.u32 %v1345, 16
      %v1779 = vrot.slane %v1777, 2
      %v1780 = vor.u32 %v1776, %v1779
      %v1781 = vsel %vm1665, %v1771, %v1780
      %v1783 = vshrl.u32 %v1346, 16
      %v1785 = vrot.slane %v1783, 1
      %v1786 = vshll.u32 %v1346, 16
      %v1788 = vrot.slane %v1786, 2
      %v1789 = vor.u32 %v1785, %v1788
      %v1790 = vsel %vm1665, %v1780, %v1789
      %v1792 = vshrl.u32 %v1347, 16
      %v1794 = vrot.slane %v1792, 1
      %v1795 = vshll.u32 %v1347, 16
      %v1797 = vrot.slane %v1795, 2
      %v1798 = vor.u32 %v1794, %v1797
      %v1799 = vsel %vm1665, %v1789, %v1798
      %v1801 = vshrl.u32 %v1348, 16
      %v1803 = vrot.slane %v1801, 1
      %v1804 = vshll.u32 %v1348, 16
      %v1806 = vrot.slane %v1804, 2
      %v1807 = vor.u32 %v1803, %v1806
      %v1808 = vsel %vm1665, %v1798, %v1807
      %v1810 = vshrl.u32 %v1349, 16
      %v1812 = vrot.slane %v1810, 1
      %v1813 = vshll.u32 %v1349, 16
      %v1815 = vrot.slane %v1813, 2
      %v1816 = vor.u32 %v1812, %v1815
      %v1817 = vsel %vm1665, %v1807, %v1816
      %v1819 = vshrl.u32 %v1350, 16
      %v1821 = vrot.slane %v1819, 1
      %v1822 = vshll.u32 %v1350, 16
      %v1824 = vrot.slane %v1822, 2
      %v1825 = vor.u32 %v1821, %v1824
      %v1826 = vsel %vm1665, %v1816, %v1825
      %v1828 = vshrl.u32 %v1664, 16
      %v1830 = vrot.slane %v1828, 1
      %v1831 = vshll.u32 %v1664, 16
      %v1833 = vrot.slane %v1831, 2
      %v1834 = vor.u32 %v1830, %v1833
      %v1835 = vsel %vm1665, %v1825, %v1834
      %v1837 = vsel %vm454, %v1682, 0
      %v1840 = vsel %vm454, %v1691, 0
      %v1843 = vsel %vm454, %v1700, 0
      %v1846 = vsel %vm454, %v1709, 0
      %v1849 = vsel %vm454, %v1718, 0
      %v1852 = vsel %vm454, %v1727, 0
      %v1855 = vsel %vm454, %v1736, 0
      %v1858 = vsel %vm454, %v1745, 0
      %v1861 = vsel %vm454, %v1754, 0
      %v1864 = vsel %vm454, %v1763, 0
      %v1867 = vsel %vm454, %v1772, 0
      %v1870 = vsel %vm454, %v1781, 0
      %v1873 = vsel %vm454, %v1790, 0
      %v1876 = vsel %vm454, %v1799, 0
      %v1879 = vsel %vm454, %v1808, 0
      %v1882 = vsel %vm454, %v1817, 0
      %v1885 = vsel %vm454, %v1826, 0
      %v1888 = vsel %vm454, %v1835, 0
      %v1891 = vsel %vm509, %v1661, 0
      %1893 = vmatprep.subr.bf16.mxu0 0
      %1894 = vmatpush1.bf16.msra.mxu0 0
      %1895 = vmatprep.subr.bf16.mxu0 0
      %1896 = vmatpush1.bf16.msra.mxu0 0
      %1897 = vmatprep.subr.bf16.mxu0 0
      %1898 = vmatpush1.bf16.msra.mxu0 0
      %1899 = vmatprep.subr.bf16.mxu0 0
      %1900 = vmatpush1.bf16.msra.mxu0 0
      %1901 = vmatprep.subr.bf16.mxu0 0
      %1902 = vmatpush1.bf16.msra.mxu0 0
      %1903 = vmatprep.subr.bf16.mxu0 0
      %1904 = vmatpush1.bf16.msra.mxu0 0
      %1905 = vmatprep.subr.bf16.mxu0 0
      %1906 = vmatpush1.bf16.msra.mxu0 0
      %1907 = vmatprep.subr.bf16.mxu0 0
      %1908 = vmatpush1.bf16.msra.mxu0 %v1891
      %1909 = vmatprep.subr.bf16.mxu0 0
      %1910 = vmatpush2.bf16.msra.mxu0 0
      %1911 = vmatprep.subr.bf16.mxu0 0
      %1912 = vmatpush2.bf16.msra.mxu0 0
      %1913 = vmatprep.subr.bf16.mxu0 0
      %1914 = vmatpush2.bf16.msra.mxu0 0
      %1915 = vmatprep.subr.bf16.mxu0 0
      %1916 = vmatpush2.bf16.msra.mxu0 0
      %1917 = vmatprep.subr.bf16.mxu0 0
      %1918 = vmatpush2.bf16.msra.mxu0 0
      %1919 = vmatprep.subr.bf16.mxu0 0
      %1920 = vmatpush2.bf16.msra.mxu0 0
      %1921 = vmatprep.subr.bf16.mxu0 0
      %1922 = vmatpush2.bf16.msra.mxu0 0
      %1923 = vmatprep.subr.bf16.mxu0 0
      %1924 = vmatpush2.bf16.msra.mxu0 0
      %1925 = vmatprep.mubr.bf16.mxu0 0
      %1926 = vmatmul.mubr.bf16.gmra.mxu0 %v1837
      %v1927 = vpop.f32.mrf.mxu0
      %v1928 = vadd.f32 0.0, %v1927
      %v1929 = vpop.f32.mrf.mxu0
      %v1930 = vpop.f32.mrf.mxu0
      %v1931 = vadd.f32 0.0, %v1930
      %v1932 = vpop.f32.mrf.mxu0
      %1933 = vmatprep.mubr.bf16.mxu0 0
      %1934 = vmatmul.mubr.bf16.gmra.mxu0 %v1840
      %v1935 = vpop.f32.mrf.mxu0
      %v1936 = vadd.f32 0.0, %v1935
      %v1937 = vpop.f32.mrf.mxu0
      %v1938 = vpop.f32.mrf.mxu0
      %v1939 = vadd.f32 0.0, %v1938
      %v1940 = vpop.f32.mrf.mxu0
      %1941 = vmatprep.mubr.bf16.mxu0 0
      %1942 = vmatmul.mubr.bf16.gmra.mxu0 %v1843
      %v1943 = vpop.f32.mrf.mxu0
      %v1944 = vadd.f32 0.0, %v1943
      %v1945 = vpop.f32.mrf.mxu0
      %v1946 = vpop.f32.mrf.mxu0
      %v1947 = vadd.f32 0.0, %v1946
      %v1948 = vpop.f32.mrf.mxu0
      %1949 = vmatprep.mubr.bf16.mxu0 0
      %1950 = vmatmul.mubr.bf16.gmra.mxu0 %v1846
      %v1951 = vpop.f32.mrf.mxu0
      %v1952 = vadd.f32 0.0, %v1951
      %v1953 = vpop.f32.mrf.mxu0
      %v1954 = vpop.f32.mrf.mxu0
      %v1955 = vadd.f32 0.0, %v1954
      %v1956 = vpop.f32.mrf.mxu0
      %1957 = vmatprep.mubr.bf16.mxu0 0
      %1958 = vmatmul.mubr.bf16.gmra.mxu0 %v1849
      %v1959 = vpop.f32.mrf.mxu0
      %v1960 = vadd.f32 0.0, %v1959
      %v1961 = vpop.f32.mrf.mxu0
      %v1962 = vpop.f32.mrf.mxu0
      %v1963 = vadd.f32 0.0, %v1962
      %v1964 = vpop.f32.mrf.mxu0
      %1965 = vmatprep.mubr.bf16.mxu0 0
      %1966 = vmatmul.mubr.bf16.gmra.mxu0 %v1852
      %v1967 = vpop.f32.mrf.mxu0
      %v1968 = vadd.f32 0.0, %v1967
      %v1969 = vpop.f32.mrf.mxu0
      %v1970 = vpop.f32.mrf.mxu0
      %v1971 = vadd.f32 0.0, %v1970
      %v1972 = vpop.f32.mrf.mxu0
      %1973 = vmatprep.mubr.bf16.mxu0 0
      %1974 = vmatmul.mubr.bf16.gmra.mxu0 %v1855
      %v1975 = vpop.f32.mrf.mxu0
      %v1976 = vadd.f32 0.0, %v1975
      %v1977 = vpop.f32.mrf.mxu0
      %v1978 = vpop.f32.mrf.mxu0
      %v1979 = vadd.f32 0.0, %v1978
      %v1980 = vpop.f32.mrf.mxu0
      %1981 = vmatprep.mubr.bf16.mxu0 0
      %1982 = vmatmul.mubr.bf16.gmra.mxu0 %v1858
      %v1983 = vpop.f32.mrf.mxu0
      %v1984 = vadd.f32 0.0, %v1983
      %v1985 = vpop.f32.mrf.mxu0
      %v1986 = vpop.f32.mrf.mxu0
      %v1987 = vadd.f32 0.0, %v1986
      %v1988 = vpop.f32.mrf.mxu0
      %1989 = vmatprep.mubr.bf16.mxu0 0
      %1990 = vmatmul.mubr.bf16.gmra.mxu0 %v1861
      %v1991 = vpop.f32.mrf.mxu0
      %v1992 = vadd.f32 0.0, %v1991
      %v1993 = vpop.f32.mrf.mxu0
      %v1994 = vpop.f32.mrf.mxu0
      %v1995 = vadd.f32 0.0, %v1994
      %v1996 = vpop.f32.mrf.mxu0
      %1997 = vmatprep.mubr.bf16.mxu0 0
      %1998 = vmatmul.mubr.bf16.gmra.mxu0 %v1864
      %v1999 = vpop.f32.mrf.mxu0
      %v2000 = vadd.f32 0.0, %v1999
      %v2001 = vpop.f32.mrf.mxu0
      %v2002 = vpop.f32.mrf.mxu0
      %v2003 = vadd.f32 0.0, %v2002
      %v2004 = vpop.f32.mrf.mxu0
      %2005 = vmatprep.mubr.bf16.mxu0 0
      %2006 = vmatmul.mubr.bf16.gmra.mxu0 %v1867
      %v2007 = vpop.f32.mrf.mxu0
      %v2008 = vadd.f32 0.0, %v2007
      %v2009 = vpop.f32.mrf.mxu0
      %v2010 = vpop.f32.mrf.mxu0
      %v2011 = vadd.f32 0.0, %v2010
      %v2012 = vpop.f32.mrf.mxu0
      %2013 = vmatprep.mubr.bf16.mxu0 0
      %2014 = vmatmul.mubr.bf16.gmra.mxu0 %v1870
      %v2015 = vpop.f32.mrf.mxu0
      %v2016 = vadd.f32 0.0, %v2015
      %v2017 = vpop.f32.mrf.mxu0
      %v2018 = vpop.f32.mrf.mxu0
      %v2019 = vadd.f32 0.0, %v2018
      %v2020 = vpop.f32.mrf.mxu0
      %2021 = vmatprep.mubr.bf16.mxu0 0
      %2022 = vmatmul.mubr.bf16.gmra.mxu0 %v1873
      %v2023 = vpop.f32.mrf.mxu0
      %v2024 = vadd.f32 0.0, %v2023
      %v2025 = vpop.f32.mrf.mxu0
      %v2026 = vpop.f32.mrf.mxu0
      %v2027 = vadd.f32 0.0, %v2026
      %v2028 = vpop.f32.mrf.mxu0
      %2029 = vmatprep.mubr.bf16.mxu0 0
      %2030 = vmatmul.mubr.bf16.gmra.mxu0 %v1876
      %v2031 = vpop.f32.mrf.mxu0
      %v2032 = vadd.f32 0.0, %v2031
      %v2033 = vpop.f32.mrf.mxu0
      %v2034 = vpop.f32.mrf.mxu0
      %v2035 = vadd.f32 0.0, %v2034
      %v2036 = vpop.f32.mrf.mxu0
      %2037 = vmatprep.mubr.bf16.mxu0 0
      %2038 = vmatmul.mubr.bf16.gmra.mxu0 %v1879
      %v2039 = vpop.f32.mrf.mxu0
      %v2040 = vadd.f32 0.0, %v2039
      %v2041 = vpop.f32.mrf.mxu0
      %v2042 = vpop.f32.mrf.mxu0
      %v2043 = vadd.f32 0.0, %v2042
      %v2044 = vpop.f32.mrf.mxu0
      %2045 = vmatprep.mubr.bf16.mxu0 0
      %2046 = vmatmul.mubr.bf16.gmra.mxu0 %v1882
      %v2047 = vpop.f32.mrf.mxu0
      %v2048 = vadd.f32 0.0, %v2047
      %v2049 = vpop.f32.mrf.mxu0
      %v2050 = vpop.f32.mrf.mxu0
      %v2051 = vadd.f32 0.0, %v2050
      %v2052 = vpop.f32.mrf.mxu0
      %2053 = vmatprep.mubr.bf16.mxu0 0
      %2054 = vmatmul.mubr.bf16.gmra.mxu0 %v1885
      %v2055 = vpop.f32.mrf.mxu0
      %v2056 = vadd.f32 0.0, %v2055
      %v2057 = vpop.f32.mrf.mxu0
      %v2058 = vpop.f32.mrf.mxu0
      %v2059 = vadd.f32 0.0, %v2058
      %v2060 = vpop.f32.mrf.mxu0
      %2061 = vmatprep.mubr.bf16.mxu0 0
      %2062 = vmatmul.mubr.bf16.gmra.mxu0 %v1888
      %v2063 = vpop.f32.mrf.mxu0
      %v2064 = vadd.f32 0.0, %v2063
      %v2065 = vpop.f32.mrf.mxu0
      %v2066 = vpop.f32.mrf.mxu0
      %v2067 = vadd.f32 0.0, %v2066
      %v2068 = vpop.f32.mrf.mxu0
      %2069 = vdwg.mxu0
      %v2070 = vadd.f32 %v1623, %v1928
      %v2071 = vadd.f32 %v1624, %v1931
      %v2072 = vadd.f32 %v1625, %v1936
      %v2073 = vadd.f32 %v1626, %v1939
      %v2074 = vadd.f32 %v1627, %v1944
      %v2075 = vadd.f32 %v1628, %v1947
      %v2076 = vadd.f32 %v1629, %v1952
      %v2077 = vadd.f32 %v1630, %v1955
      %v2078 = vadd.f32 %v1631, %v1960
      %v2079 = vadd.f32 %v1632, %v1963
      %v2080 = vadd.f32 %v1633, %v1968
      %v2081 = vadd.f32 %v1634, %v1971
      %v2082 = vadd.f32 %v1635, %v1976
      %v2083 = vadd.f32 %v1636, %v1979
      %v2084 = vadd.f32 %v1637, %v1984
      %v2085 = vadd.f32 %v1638, %v1987
      %v2086 = vadd.f32 %v1639, %v1992
      %v2087 = vadd.f32 %v1640, %v1995
      %v2088 = vadd.f32 %v1641, %v2000
      %v2089 = vadd.f32 %v1642, %v2003
      %v2090 = vadd.f32 %v1643, %v2008
      %v2091 = vadd.f32 %v1644, %v2011
      %v2092 = vadd.f32 %v1645, %v2016
      %v2093 = vadd.f32 %v1646, %v2019
      %v2094 = vadd.f32 %v1647, %v2024
      %v2095 = vadd.f32 %v1648, %v2027
      %v2096 = vadd.f32 %v1649, %v2032
      %v2097 = vadd.f32 %v1650, %v2035
      %v2098 = vadd.f32 %v1651, %v2040
      %v2099 = vadd.f32 %v1652, %v2043
      %v2100 = vadd.f32 %v1653, %v2048
      %v2101 = vadd.f32 %v1654, %v2051
      %v2102 = vadd.f32 %v1655, %v2056
      %v2103 = vadd.f32 %v1656, %v2059
      %v2104 = vadd.f32 %v1657, %v2064
      %v2105 = vadd.f32 %v1658, %v2067
      %v2106 = vld [vmem:[%s165 + $0x8] sm:$0xc]
      %s2107 = scalar_lea.vmem %s1, 10
      %v2108 = vld [vmem:[%s2107] sm:$0x3]
      %v2110 = vunpack.c.l.b16 %v2106
      %v2111 = vpack.c.b16 %v1297, %v2110
      %vm2112 = vcmask 1045504
      %v2113 = vrot.slane %v2111, 2
      %v2114 = vrot.slane %v1334, 2
      %v2115 = vsel %vm2112, %v2113, %v2114
      %v2116 = vrot.slane %v1335, 2
      %v2117 = vsel %vm2112, %v2114, %v2116
      %v2118 = vrot.slane %v1336, 2
      %v2119 = vsel %vm2112, %v2116, %v2118
      %v2120 = vrot.slane %v1337, 2
      %v2121 = vsel %vm2112, %v2118, %v2120
      %v2122 = vrot.slane %v1338, 2
      %v2123 = vsel %vm2112, %v2120, %v2122
      %v2124 = vrot.slane %v1339, 2
      %v2125 = vsel %vm2112, %v2122, %v2124
      %v2126 = vrot.slane %v1340, 2
      %v2127 = vsel %vm2112, %v2124, %v2126
      %v2128 = vrot.slane %v1341, 2
      %v2129 = vsel %vm2112, %v2126, %v2128
      %v2130 = vrot.slane %v1342, 2
      %v2131 = vsel %vm2112, %v2128, %v2130
      %v2132 = vrot.slane %v1343, 2
      %v2133 = vsel %vm2112, %v2130, %v2132
      %v2134 = vrot.slane %v1344, 2
      %v2135 = vsel %vm2112, %v2132, %v2134
      %v2136 = vrot.slane %v1345, 2
      %v2137 = vsel %vm2112, %v2134, %v2136
      %v2138 = vrot.slane %v1346, 2
      %v2139 = vsel %vm2112, %v2136, %v2138
      %v2140 = vrot.slane %v1347, 2
      %v2141 = vsel %vm2112, %v2138, %v2140
      %v2142 = vrot.slane %v1348, 2
      %v2143 = vsel %vm2112, %v2140, %v2142
      %v2144 = vrot.slane %v1349, 2
      %v2145 = vsel %vm2112, %v2142, %v2144
      %v2146 = vrot.slane %v1350, 2
      %v2147 = vsel %vm2112, %v2144, %v2146
      %v2148 = vrot.slane %v1664, 2
      %v2149 = vsel %vm2112, %v2146, %v2148
      %v2151 = vsel %vm454, %v2115, 0
      %v2154 = vsel %vm454, %v2117, 0
      %v2157 = vsel %vm454, %v2119, 0
      %v2160 = vsel %vm454, %v2121, 0
      %v2163 = vsel %vm454, %v2123, 0
      %v2166 = vsel %vm454, %v2125, 0
      %v2169 = vsel %vm454, %v2127, 0
      %v2172 = vsel %vm454, %v2129, 0
      %v2175 = vsel %vm454, %v2131, 0
      %v2178 = vsel %vm454, %v2133, 0
      %v2181 = vsel %vm454, %v2135, 0
      %v2184 = vsel %vm454, %v2137, 0
      %v2187 = vsel %vm454, %v2139, 0
      %v2190 = vsel %vm454, %v2141, 0
      %v2193 = vsel %vm454, %v2143, 0
      %v2196 = vsel %vm454, %v2145, 0
      %v2199 = vsel %vm454, %v2147, 0
      %v2202 = vsel %vm454, %v2149, 0
      %v2205 = vsel %vm509, %v2108, 0
      %2207 = vmatprep.subr.bf16.mxu0 0
      %2208 = vmatpush1.bf16.msra.mxu0 0
      %2209 = vmatprep.subr.bf16.mxu0 0
      %2210 = vmatpush1.bf16.msra.mxu0 0
      %2211 = vmatprep.subr.bf16.mxu0 0
      %2212 = vmatpush1.bf16.msra.mxu0 0
      %2213 = vmatprep.subr.bf16.mxu0 0
      %2214 = vmatpush1.bf16.msra.mxu0 0
      %2215 = vmatprep.subr.bf16.mxu0 0
      %2216 = vmatpush1.bf16.msra.mxu0 0
      %2217 = vmatprep.subr.bf16.mxu0 0
      %2218 = vmatpush1.bf16.msra.mxu0 0
      %2219 = vmatprep.subr.bf16.mxu0 0
      %2220 = vmatpush1.bf16.msra.mxu0 0
      %2221 = vmatprep.subr.bf16.mxu0 0
      %2222 = vmatpush1.bf16.msra.mxu0 %v2205
      %2223 = vmatprep.subr.bf16.mxu0 0
      %2224 = vmatpush2.bf16.msra.mxu0 0
      %2225 = vmatprep.subr.bf16.mxu0 0
      %2226 = vmatpush2.bf16.msra.mxu0 0
      %2227 = vmatprep.subr.bf16.mxu0 0
      %2228 = vmatpush2.bf16.msra.mxu0 0
      %2229 = vmatprep.subr.bf16.mxu0 0
      %2230 = vmatpush2.bf16.msra.mxu0 0
      %2231 = vmatprep.subr.bf16.mxu0 0
      %2232 = vmatpush2.bf16.msra.mxu0 0
      %2233 = vmatprep.subr.bf16.mxu0 0
      %2234 = vmatpush2.bf16.msra.mxu0 0
      %2235 = vmatprep.subr.bf16.mxu0 0
      %2236 = vmatpush2.bf16.msra.mxu0 0
      %2237 = vmatprep.subr.bf16.mxu0 0
      %2238 = vmatpush2.bf16.msra.mxu0 0
      %2239 = vmatprep.mubr.bf16.mxu0 0
      %2240 = vmatmul.mubr.bf16.gmra.mxu0 %v2151
      %v2241 = vpop.f32.mrf.mxu0
      %v2242 = vadd.f32 0.0, %v2241
      %v2243 = vpop.f32.mrf.mxu0
      %v2244 = vpop.f32.mrf.mxu0
      %v2245 = vadd.f32 0.0, %v2244
      %v2246 = vpop.f32.mrf.mxu0
      %2247 = vmatprep.mubr.bf16.mxu0 0
      %2248 = vmatmul.mubr.bf16.gmra.mxu0 %v2154
      %v2249 = vpop.f32.mrf.mxu0
      %v2250 = vadd.f32 0.0, %v2249
      %v2251 = vpop.f32.mrf.mxu0
      %v2252 = vpop.f32.mrf.mxu0
      %v2253 = vadd.f32 0.0, %v2252
      %v2254 = vpop.f32.mrf.mxu0
      %2255 = vmatprep.mubr.bf16.mxu0 0
      %2256 = vmatmul.mubr.bf16.gmra.mxu0 %v2157
      %v2257 = vpop.f32.mrf.mxu0
      %v2258 = vadd.f32 0.0, %v2257
      %v2259 = vpop.f32.mrf.mxu0
      %v2260 = vpop.f32.mrf.mxu0
      %v2261 = vadd.f32 0.0, %v2260
      %v2262 = vpop.f32.mrf.mxu0
      %2263 = vmatprep.mubr.bf16.mxu0 0
      %2264 = vmatmul.mubr.bf16.gmra.mxu0 %v2160
      %v2265 = vpop.f32.mrf.mxu0
      %v2266 = vadd.f32 0.0, %v2265
      %v2267 = vpop.f32.mrf.mxu0
      %v2268 = vpop.f32.mrf.mxu0
      %v2269 = vadd.f32 0.0, %v2268
      %v2270 = vpop.f32.mrf.mxu0
      %2271 = vmatprep.mubr.bf16.mxu0 0
      %2272 = vmatmul.mubr.bf16.gmra.mxu0 %v2163
      %v2273 = vpop.f32.mrf.mxu0
      %v2274 = vadd.f32 0.0, %v2273
      %v2275 = vpop.f32.mrf.mxu0
      %v2276 = vpop.f32.mrf.mxu0
      %v2277 = vadd.f32 0.0, %v2276
      %v2278 = vpop.f32.mrf.mxu0
      %2279 = vmatprep.mubr.bf16.mxu0 0
      %2280 = vmatmul.mubr.bf16.gmra.mxu0 %v2166
      %v2281 = vpop.f32.mrf.mxu0
      %v2282 = vadd.f32 0.0, %v2281
      %v2283 = vpop.f32.mrf.mxu0
      %v2284 = vpop.f32.mrf.mxu0
      %v2285 = vadd.f32 0.0, %v2284
      %v2286 = vpop.f32.mrf.mxu0
      %2287 = vmatprep.mubr.bf16.mxu0 0
      %2288 = vmatmul.mubr.bf16.gmra.mxu0 %v2169
      %v2289 = vpop.f32.mrf.mxu0
      %v2290 = vadd.f32 0.0, %v2289
      %v2291 = vpop.f32.mrf.mxu0
      %v2292 = vpop.f32.mrf.mxu0
      %v2293 = vadd.f32 0.0, %v2292
      %v2294 = vpop.f32.mrf.mxu0
      %2295 = vmatprep.mubr.bf16.mxu0 0
      %2296 = vmatmul.mubr.bf16.gmra.mxu0 %v2172
      %v2297 = vpop.f32.mrf.mxu0
      %v2298 = vadd.f32 0.0, %v2297
      %v2299 = vpop.f32.mrf.mxu0
      %v2300 = vpop.f32.mrf.mxu0
      %v2301 = vadd.f32 0.0, %v2300
      %v2302 = vpop.f32.mrf.mxu0
      %2303 = vmatprep.mubr.bf16.mxu0 0
      %2304 = vmatmul.mubr.bf16.gmra.mxu0 %v2175
      %v2305 = vpop.f32.mrf.mxu0
      %v2306 = vadd.f32 0.0, %v2305
      %v2307 = vpop.f32.mrf.mxu0
      %v2308 = vpop.f32.mrf.mxu0
      %v2309 = vadd.f32 0.0, %v2308
      %v2310 = vpop.f32.mrf.mxu0
      %2311 = vmatprep.mubr.bf16.mxu0 0
      %2312 = vmatmul.mubr.bf16.gmra.mxu0 %v2178
      %v2313 = vpop.f32.mrf.mxu0
      %v2314 = vadd.f32 0.0, %v2313
      %v2315 = vpop.f32.mrf.mxu0
      %v2316 = vpop.f32.mrf.mxu0
      %v2317 = vadd.f32 0.0, %v2316
      %v2318 = vpop.f32.mrf.mxu0
      %2319 = vmatprep.mubr.bf16.mxu0 0
      %2320 = vmatmul.mubr.bf16.gmra.mxu0 %v2181
      %v2321 = vpop.f32.mrf.mxu0
      %v2322 = vadd.f32 0.0, %v2321
      %v2323 = vpop.f32.mrf.mxu0
      %v2324 = vpop.f32.mrf.mxu0
      %v2325 = vadd.f32 0.0, %v2324
      %v2326 = vpop.f32.mrf.mxu0
      %2327 = vmatprep.mubr.bf16.mxu0 0
      %2328 = vmatmul.mubr.bf16.gmra.mxu0 %v2184
      %v2329 = vpop.f32.mrf.mxu0
      %v2330 = vadd.f32 0.0, %v2329
      %v2331 = vpop.f32.mrf.mxu0
      %v2332 = vpop.f32.mrf.mxu0
      %v2333 = vadd.f32 0.0, %v2332
      %v2334 = vpop.f32.mrf.mxu0
      %2335 = vmatprep.mubr.bf16.mxu0 0
      %2336 = vmatmul.mubr.bf16.gmra.mxu0 %v2187
      %v2337 = vpop.f32.mrf.mxu0
      %v2338 = vadd.f32 0.0, %v2337
      %v2339 = vpop.f32.mrf.mxu0
      %v2340 = vpop.f32.mrf.mxu0
      %v2341 = vadd.f32 0.0, %v2340
      %v2342 = vpop.f32.mrf.mxu0
      %2343 = vmatprep.mubr.bf16.mxu0 0
      %2344 = vmatmul.mubr.bf16.gmra.mxu0 %v2190
      %v2345 = vpop.f32.mrf.mxu0
      %v2346 = vadd.f32 0.0, %v2345
      %v2347 = vpop.f32.mrf.mxu0
      %v2348 = vpop.f32.mrf.mxu0
      %v2349 = vadd.f32 0.0, %v2348
      %v2350 = vpop.f32.mrf.mxu0
      %2351 = vmatprep.mubr.bf16.mxu0 0
      %2352 = vmatmul.mubr.bf16.gmra.mxu0 %v2193
      %v2353 = vpop.f32.mrf.mxu0
      %v2354 = vadd.f32 0.0, %v2353
      %v2355 = vpop.f32.mrf.mxu0
      %v2356 = vpop.f32.mrf.mxu0
      %v2357 = vadd.f32 0.0, %v2356
      %v2358 = vpop.f32.mrf.mxu0
      %2359 = vmatprep.mubr.bf16.mxu0 0
      %2360 = vmatmul.mubr.bf16.gmra.mxu0 %v2196
      %v2361 = vpop.f32.mrf.mxu0
      %v2362 = vadd.f32 0.0, %v2361
      %v2363 = vpop.f32.mrf.mxu0
      %v2364 = vpop.f32.mrf.mxu0
      %v2365 = vadd.f32 0.0, %v2364
      %v2366 = vpop.f32.mrf.mxu0
      %2367 = vmatprep.mubr.bf16.mxu0 0
      %2368 = vmatmul.mubr.bf16.gmra.mxu0 %v2199
      %v2369 = vpop.f32.mrf.mxu0
      %v2370 = vadd.f32 0.0, %v2369
      %v2371 = vpop.f32.mrf.mxu0
      %v2372 = vpop.f32.mrf.mxu0
      %v2373 = vadd.f32 0.0, %v2372
      %v2374 = vpop.f32.mrf.mxu0
      %2375 = vmatprep.mubr.bf16.mxu0 0
      %2376 = vmatmul.mubr.bf16.gmra.mxu0 %v2202
      %v2377 = vpop.f32.mrf.mxu0
      %v2378 = vadd.f32 0.0, %v2377
      %v2379 = vpop.f32.mrf.mxu0
      %v2380 = vpop.f32.mrf.mxu0
      %v2381 = vadd.f32 0.0, %v2380
      %v2382 = vpop.f32.mrf.mxu0
      %2383 = vdwg.mxu0
      %v2384 = vadd.f32 %v2070, %v2242
      %v2385 = vadd.f32 %v2071, %v2245
      %v2386 = vadd.f32 %v2072, %v2250
      %v2387 = vadd.f32 %v2073, %v2253
      %v2388 = vadd.f32 %v2074, %v2258
      %v2389 = vadd.f32 %v2075, %v2261
      %v2390 = vadd.f32 %v2076, %v2266
      %v2391 = vadd.f32 %v2077, %v2269
      %v2392 = vadd.f32 %v2078, %v2274
      %v2393 = vadd.f32 %v2079, %v2277
      %v2394 = vadd.f32 %v2080, %v2282
      %v2395 = vadd.f32 %v2081, %v2285
      %v2396 = vadd.f32 %v2082, %v2290
      %v2397 = vadd.f32 %v2083, %v2293
      %v2398 = vadd.f32 %v2084, %v2298
      %v2399 = vadd.f32 %v2085, %v2301
      %v2400 = vadd.f32 %v2086, %v2306
      %v2401 = vadd.f32 %v2087, %v2309
      %v2402 = vadd.f32 %v2088, %v2314
      %v2403 = vadd.f32 %v2089, %v2317
      %v2404 = vadd.f32 %v2090, %v2322
      %v2405 = vadd.f32 %v2091, %v2325
      %v2406 = vadd.f32 %v2092, %v2330
      %v2407 = vadd.f32 %v2093, %v2333
      %v2408 = vadd.f32 %v2094, %v2338
      %v2409 = vadd.f32 %v2095, %v2341
      %v2410 = vadd.f32 %v2096, %v2346
      %v2411 = vadd.f32 %v2097, %v2349
      %v2412 = vadd.f32 %v2098, %v2354
      %v2413 = vadd.f32 %v2099, %v2357
      %v2414 = vadd.f32 %v2100, %v2362
      %v2415 = vadd.f32 %v2101, %v2365
      %v2416 = vadd.f32 %v2102, %v2370
      %v2417 = vadd.f32 %v2103, %v2373
      %v2418 = vadd.f32 %v2104, %v2378
      %v2419 = vadd.f32 %v2105, %v2381
      %v2420 = vld [vmem:[%s165 + $0x10] sm:$0xc]
      %v2421 = vld [vmem:[%s165 + $0x14] sm:$0xf]
      %v2422 = vld [vmem:[%s165 + $0x18] sm:$0xf]
      %v2423 = vld [vmem:[%s165 + $0x1c] sm:$0xf]
      %v2424 = vld [vmem:[%s165 + $0x20] sm:$0xf]
      %v2425 = vld [vmem:[%s165 + $0x24] sm:$0xf]
      %v2426 = vld [vmem:[%s165 + $0x28] sm:$0xf]
      %v2427 = vld [vmem:[%s165 + $0x2c] sm:$0xf]
      %v2428 = vld [vmem:[%s165 + $0x30] sm:$0xf]
      %v2429 = vld [vmem:[%s165 + $0x34] sm:$0xf]
      %v2430 = vld [vmem:[%s165 + $0x38] sm:$0xf]
      %v2431 = vld [vmem:[%s165 + $0x3c] sm:$0xf]
      %v2432 = vld [vmem:[%s165 + $0x40] sm:$0xf]
      %v2433 = vld [vmem:[%s165 + $0x44] sm:$0xf]
      %v2434 = vld [vmem:[%s165 + $0x48] sm:$0xf]
      %v2435 = vld [vmem:[%s165 + $0x4c] sm:$0xf]
      %v2436 = vld [vmem:[%s165 + $0x50] sm:$0xf]
      %v2437 = vld [vmem:[%s165 + $0x54] sm:$0xf]
      %v2438 = vld [vmem:[%s165 + $0x58] sm:$0xf]
      %v2439 = vld [vmem:[%s165 + $0x5c] sm:$0xf]
      %v2440 = vld [vmem:[%s165 + $0x60] sm:$0xf]
      %v2441 = vld [vmem:[%s165 + $0x64] sm:$0xf]
      %v2442 = vld [vmem:[%s165 + $0x68] sm:$0xf]
      %v2443 = vld [vmem:[%s165 + $0x6c] sm:$0xf]
      %v2444 = vld [vmem:[%s165 + $0x70] sm:$0xf]
      %v2445 = vld [vmem:[%s165 + $0x74] sm:$0xf]
      %v2446 = vld [vmem:[%s165 + $0x78] sm:$0xf]
      %v2447 = vld [vmem:[%s165 + $0x7c] sm:$0xf]
      %v2448 = vld [vmem:[%s165 + $0x80] sm:$0xf]
      %v2449 = vld [vmem:[%s165 + $0x84] sm:$0xf]
      %v2450 = vld [vmem:[%s165 + $0x88] sm:$0xf]
      %v2451 = vld [vmem:[%s165 + $0x8c] sm:$0xf]
      %v2452 = vld [vmem:[%s165 + $0x90] sm:$0xf]
      %v2453 = vld [vmem:[%s165 + $0x94] sm:$0xf]
      %v2454 = vld [vmem:[%s165 + $0x98] sm:$0xf]
      %v2455 = vld [vmem:[%s165 + $0x9c] sm:$0xf]
      %v2456 = vld [vmem:[%s165 + $0xa0] sm:$0x3]
      %s2457 = scalar_lea.vmem %s1, 12
      %v2458 = vld [vmem:[%s2457] sm:$0x3]
      %v2496 = vunpack.c.l.b16 %v2420
      %v2497 = vunpack.c.l.b16 %v2421
      %v2498 = vunpack.c.l.b16 %v2422
      %v2499 = vunpack.c.l.b16 %v2423
      %v2500 = vunpack.c.l.b16 %v2424
      %v2501 = vunpack.c.l.b16 %v2425
      %v2502 = vunpack.c.l.b16 %v2426
      %v2503 = vunpack.c.l.b16 %v2427
      %v2504 = vunpack.c.l.b16 %v2428
      %v2505 = vunpack.c.l.b16 %v2429
      %v2506 = vunpack.c.l.b16 %v2430
      %v2507 = vunpack.c.l.b16 %v2431
      %v2508 = vunpack.c.l.b16 %v2432
      %v2509 = vunpack.c.l.b16 %v2433
      %v2510 = vunpack.c.l.b16 %v2434
      %v2511 = vunpack.c.l.b16 %v2435
      %v2512 = vunpack.c.l.b16 %v2436
      %v2513 = vunpack.c.l.b16 %v2437
      %v2514 = vunpack.c.l.b16 %v2438
      %v2515 = vunpack.c.l.b16 %v2439
      %v2516 = vunpack.c.l.b16 %v2440
      %v2517 = vunpack.c.l.b16 %v2441
      %v2518 = vunpack.c.l.b16 %v2442
      %v2519 = vunpack.c.l.b16 %v2443
      %v2520 = vunpack.c.l.b16 %v2444
      %v2521 = vunpack.c.l.b16 %v2445
      %v2522 = vunpack.c.l.b16 %v2446
      %v2523 = vunpack.c.l.b16 %v2447
      %v2524 = vunpack.c.l.b16 %v2448
      %v2525 = vunpack.c.l.b16 %v2449
      %v2526 = vunpack.c.l.b16 %v2450
      %v2527 = vunpack.c.l.b16 %v2451
      %v2528 = vunpack.c.l.b16 %v2452
      %v2529 = vunpack.c.l.b16 %v2453
      %v2530 = vunpack.c.l.b16 %v2454
      %v2531 = vunpack.c.l.b16 %v2455
      %v2532 = vunpack.c.l.b16 %v2456
      %v2533 = vpack.c.b16 %v2497, %v2496
      %v2534 = vpack.c.b16 %v2499, %v2498
      %v2535 = vpack.c.b16 %v2501, %v2500
      %v2536 = vpack.c.b16 %v2503, %v2502
      %v2537 = vpack.c.b16 %v2505, %v2504
      %v2538 = vpack.c.b16 %v2507, %v2506
      %v2539 = vpack.c.b16 %v2509, %v2508
      %v2540 = vpack.c.b16 %v2511, %v2510
      %v2541 = vpack.c.b16 %v2513, %v2512
      %v2542 = vpack.c.b16 %v2515, %v2514
      %v2543 = vpack.c.b16 %v2517, %v2516
      %v2544 = vpack.c.b16 %v2519, %v2518
      %v2545 = vpack.c.b16 %v2521, %v2520
      %v2546 = vpack.c.b16 %v2523, %v2522
      %v2547 = vpack.c.b16 %v2525, %v2524
      %v2548 = vpack.c.b16 %v2527, %v2526
      %v2549 = vpack.c.b16 %v2529, %v2528
      %v2550 = vpack.c.b16 %v2531, %v2530
      %v2551 = vpack.c.b16 %v2532, %v2532
      %v2552 = vrot.slane %v2533, 2
      %v2553 = vrot.slane %v2534, 2
      %v2554 = vsel %vm2112, %v2552, %v2553
      %v2555 = vrot.slane %v2535, 2
      %v2556 = vsel %vm2112, %v2553, %v2555
      %v2557 = vrot.slane %v2536, 2
      %v2558 = vsel %vm2112, %v2555, %v2557
      %v2559 = vrot.slane %v2537, 2
      %v2560 = vsel %vm2112, %v2557, %v2559
      %v2561 = vrot.slane %v2538, 2
      %v2562 = vsel %vm2112, %v2559, %v2561
      %v2563 = vrot.slane %v2539, 2
      %v2564 = vsel %vm2112, %v2561, %v2563
      %v2565 = vrot.slane %v2540, 2
      %v2566 = vsel %vm2112, %v2563, %v2565
      %v2567 = vrot.slane %v2541, 2
      %v2568 = vsel %vm2112, %v2565, %v2567
      %v2569 = vrot.slane %v2542, 2
      %v2570 = vsel %vm2112, %v2567, %v2569
      %v2571 = vrot.slane %v2543, 2
      %v2572 = vsel %vm2112, %v2569, %v2571
      %v2573 = vrot.slane %v2544, 2
      %v2574 = vsel %vm2112, %v2571, %v2573
      %v2575 = vrot.slane %v2545, 2
      %v2576 = vsel %vm2112, %v2573, %v2575
      %v2577 = vrot.slane %v2546, 2
      %v2578 = vsel %vm2112, %v2575, %v2577
      %v2579 = vrot.slane %v2547, 2
      %v2580 = vsel %vm2112, %v2577, %v2579
      %v2581 = vrot.slane %v2548, 2
      %v2582 = vsel %vm2112, %v2579, %v2581
      %v2583 = vrot.slane %v2549, 2
      %v2584 = vsel %vm2112, %v2581, %v2583
      %v2585 = vrot.slane %v2550, 2
      %v2586 = vsel %vm2112, %v2583, %v2585
      %v2587 = vrot.slane %v2551, 2
      %v2588 = vsel %vm2112, %v2585, %v2587
      %v2590 = vsel %vm454, %v2554, 0
      %v2593 = vsel %vm454, %v2556, 0
      %v2596 = vsel %vm454, %v2558, 0
      %v2599 = vsel %vm454, %v2560, 0
      %v2602 = vsel %vm454, %v2562, 0
      %v2605 = vsel %vm454, %v2564, 0
      %v2608 = vsel %vm454, %v2566, 0
      %v2611 = vsel %vm454, %v2568, 0
      %v2614 = vsel %vm454, %v2570, 0
      %v2617 = vsel %vm454, %v2572, 0
      %v2620 = vsel %vm454, %v2574, 0
      %v2623 = vsel %vm454, %v2576, 0
      %v2626 = vsel %vm454, %v2578, 0
      %v2629 = vsel %vm454, %v2580, 0
      %v2632 = vsel %vm454, %v2582, 0
      %v2635 = vsel %vm454, %v2584, 0
      %v2638 = vsel %vm454, %v2586, 0
      %v2641 = vsel %vm454, %v2588, 0
      %v2644 = vsel %vm509, %v2458, 0
      %2646 = vmatprep.subr.bf16.mxu0 0
      %2647 = vmatpush1.bf16.msra.mxu0 0
      %2648 = vmatprep.subr.bf16.mxu0 0
      %2649 = vmatpush1.bf16.msra.mxu0 0
      %2650 = vmatprep.subr.bf16.mxu0 0
      %2651 = vmatpush1.bf16.msra.mxu0 0
      %2652 = vmatprep.subr.bf16.mxu0 0
      %2653 = vmatpush1.bf16.msra.mxu0 0
      %2654 = vmatprep.subr.bf16.mxu0 0
      %2655 = vmatpush1.bf16.msra.mxu0 0
      %2656 = vmatprep.subr.bf16.mxu0 0
      %2657 = vmatpush1.bf16.msra.mxu0 0
      %2658 = vmatprep.subr.bf16.mxu0 0
      %2659 = vmatpush1.bf16.msra.mxu0 0
      %2660 = vmatprep.subr.bf16.mxu0 0
      %2661 = vmatpush1.bf16.msra.mxu0 %v2644
      %2662 = vmatprep.subr.bf16.mxu0 0
      %2663 = vmatpush2.bf16.msra.mxu0 0
      %2664 = vmatprep.subr.bf16.mxu0 0
      %2665 = vmatpush2.bf16.msra.mxu0 0
      %2666 = vmatprep.subr.bf16.mxu0 0
      %2667 = vmatpush2.bf16.msra.mxu0 0
      %2668 = vmatprep.subr.bf16.mxu0 0
      %2669 = vmatpush2.bf16.msra.mxu0 0
      %2670 = vmatprep.subr.bf16.mxu0 0
      %2671 = vmatpush2.bf16.msra.mxu0 0
      %2672 = vmatprep.subr.bf16.mxu0 0
      %2673 = vmatpush2.bf16.msra.mxu0 0
      %2674 = vmatprep.subr.bf16.mxu0 0
      %2675 = vmatpush2.bf16.msra.mxu0 0
      %2676 = vmatprep.subr.bf16.mxu0 0
      %2677 = vmatpush2.bf16.msra.mxu0 0
      %2678 = vmatprep.mubr.bf16.mxu0 0
      %2679 = vmatmul.mubr.bf16.gmra.mxu0 %v2590
      %v2680 = vpop.f32.mrf.mxu0
      %v2681 = vadd.f32 0.0, %v2680
      %v2682 = vpop.f32.mrf.mxu0
      %v2683 = vpop.f32.mrf.mxu0
      %v2684 = vadd.f32 0.0, %v2683
      %v2685 = vpop.f32.mrf.mxu0
      %2686 = vmatprep.mubr.bf16.mxu0 0
      %2687 = vmatmul.mubr.bf16.gmra.mxu0 %v2593
      %v2688 = vpop.f32.mrf.mxu0
      %v2689 = vadd.f32 0.0, %v2688
      %v2690 = vpop.f32.mrf.mxu0
      %v2691 = vpop.f32.mrf.mxu0
      %v2692 = vadd.f32 0.0, %v2691
      %v2693 = vpop.f32.mrf.mxu0
      %2694 = vmatprep.mubr.bf16.mxu0 0
      %2695 = vmatmul.mubr.bf16.gmra.mxu0 %v2596
      %v2696 = vpop.f32.mrf.mxu0
      %v2697 = vadd.f32 0.0, %v2696
      %v2698 = vpop.f32.mrf.mxu0
      %v2699 = vpop.f32.mrf.mxu0
      %v2700 = vadd.f32 0.0, %v2699
      %v2701 = vpop.f32.mrf.mxu0
      %2702 = vmatprep.mubr.bf16.mxu0 0
      %2703 = vmatmul.mubr.bf16.gmra.mxu0 %v2599
      %v2704 = vpop.f32.mrf.mxu0
      %v2705 = vadd.f32 0.0, %v2704
      %v2706 = vpop.f32.mrf.mxu0
      %v2707 = vpop.f32.mrf.mxu0
      %v2708 = vadd.f32 0.0, %v2707
      %v2709 = vpop.f32.mrf.mxu0
      %2710 = vmatprep.mubr.bf16.mxu0 0
      %2711 = vmatmul.mubr.bf16.gmra.mxu0 %v2602
      %v2712 = vpop.f32.mrf.mxu0
      %v2713 = vadd.f32 0.0, %v2712
      %v2714 = vpop.f32.mrf.mxu0
      %v2715 = vpop.f32.mrf.mxu0
      %v2716 = vadd.f32 0.0, %v2715
      %v2717 = vpop.f32.mrf.mxu0
      %2718 = vmatprep.mubr.bf16.mxu0 0
      %2719 = vmatmul.mubr.bf16.gmra.mxu0 %v2605
      %v2720 = vpop.f32.mrf.mxu0
      %v2721 = vadd.f32 0.0, %v2720
      %v2722 = vpop.f32.mrf.mxu0
      %v2723 = vpop.f32.mrf.mxu0
      %v2724 = vadd.f32 0.0, %v2723
      %v2725 = vpop.f32.mrf.mxu0
      %2726 = vmatprep.mubr.bf16.mxu0 0
      %2727 = vmatmul.mubr.bf16.gmra.mxu0 %v2608
      %v2728 = vpop.f32.mrf.mxu0
      %v2729 = vadd.f32 0.0, %v2728
      %v2730 = vpop.f32.mrf.mxu0
      %v2731 = vpop.f32.mrf.mxu0
      %v2732 = vadd.f32 0.0, %v2731
      %v2733 = vpop.f32.mrf.mxu0
      %2734 = vmatprep.mubr.bf16.mxu0 0
      %2735 = vmatmul.mubr.bf16.gmra.mxu0 %v2611
      %v2736 = vpop.f32.mrf.mxu0
      %v2737 = vadd.f32 0.0, %v2736
      %v2738 = vpop.f32.mrf.mxu0
      %v2739 = vpop.f32.mrf.mxu0
      %v2740 = vadd.f32 0.0, %v2739
      %v2741 = vpop.f32.mrf.mxu0
      %2742 = vmatprep.mubr.bf16.mxu0 0
      %2743 = vmatmul.mubr.bf16.gmra.mxu0 %v2614
      %v2744 = vpop.f32.mrf.mxu0
      %v2745 = vadd.f32 0.0, %v2744
      %v2746 = vpop.f32.mrf.mxu0
      %v2747 = vpop.f32.mrf.mxu0
      %v2748 = vadd.f32 0.0, %v2747
      %v2749 = vpop.f32.mrf.mxu0
      %2750 = vmatprep.mubr.bf16.mxu0 0
      %2751 = vmatmul.mubr.bf16.gmra.mxu0 %v2617
      %v2752 = vpop.f32.mrf.mxu0
      %v2753 = vadd.f32 0.0, %v2752
      %v2754 = vpop.f32.mrf.mxu0
      %v2755 = vpop.f32.mrf.mxu0
      %v2756 = vadd.f32 0.0, %v2755
      %v2757 = vpop.f32.mrf.mxu0
      %2758 = vmatprep.mubr.bf16.mxu0 0
      %2759 = vmatmul.mubr.bf16.gmra.mxu0 %v2620
      %v2760 = vpop.f32.mrf.mxu0
      %v2761 = vadd.f32 0.0, %v2760
      %v2762 = vpop.f32.mrf.mxu0
      %v2763 = vpop.f32.mrf.mxu0
      %v2764 = vadd.f32 0.0, %v2763
      %v2765 = vpop.f32.mrf.mxu0
      %2766 = vmatprep.mubr.bf16.mxu0 0
      %2767 = vmatmul.mubr.bf16.gmra.mxu0 %v2623
      %v2768 = vpop.f32.mrf.mxu0
      %v2769 = vadd.f32 0.0, %v2768
      %v2770 = vpop.f32.mrf.mxu0
      %v2771 = vpop.f32.mrf.mxu0
      %v2772 = vadd.f32 0.0, %v2771
      %v2773 = vpop.f32.mrf.mxu0
      %2774 = vmatprep.mubr.bf16.mxu0 0
      %2775 = vmatmul.mubr.bf16.gmra.mxu0 %v2626
      %v2776 = vpop.f32.mrf.mxu0
      %v2777 = vadd.f32 0.0, %v2776
      %v2778 = vpop.f32.mrf.mxu0
      %v2779 = vpop.f32.mrf.mxu0
      %v2780 = vadd.f32 0.0, %v2779
      %v2781 = vpop.f32.mrf.mxu0
      %2782 = vmatprep.mubr.bf16.mxu0 0
      %2783 = vmatmul.mubr.bf16.gmra.mxu0 %v2629
      %v2784 = vpop.f32.mrf.mxu0
      %v2785 = vadd.f32 0.0, %v2784
      %v2786 = vpop.f32.mrf.mxu0
      %v2787 = vpop.f32.mrf.mxu0
      %v2788 = vadd.f32 0.0, %v2787
      %v2789 = vpop.f32.mrf.mxu0
      %2790 = vmatprep.mubr.bf16.mxu0 0
      %2791 = vmatmul.mubr.bf16.gmra.mxu0 %v2632
      %v2792 = vpop.f32.mrf.mxu0
      %v2793 = vadd.f32 0.0, %v2792
      %v2794 = vpop.f32.mrf.mxu0
      %v2795 = vpop.f32.mrf.mxu0
      %v2796 = vadd.f32 0.0, %v2795
      %v2797 = vpop.f32.mrf.mxu0
      %2798 = vmatprep.mubr.bf16.mxu0 0
      %2799 = vmatmul.mubr.bf16.gmra.mxu0 %v2635
      %v2800 = vpop.f32.mrf.mxu0
      %v2801 = vadd.f32 0.0, %v2800
      %v2802 = vpop.f32.mrf.mxu0
      %v2803 = vpop.f32.mrf.mxu0
      %v2804 = vadd.f32 0.0, %v2803
      %v2805 = vpop.f32.mrf.mxu0
      %2806 = vmatprep.mubr.bf16.mxu0 0
      %2807 = vmatmul.mubr.bf16.gmra.mxu0 %v2638
      %v2808 = vpop.f32.mrf.mxu0
      %v2809 = vadd.f32 0.0, %v2808
      %v2810 = vpop.f32.mrf.mxu0
      %v2811 = vpop.f32.mrf.mxu0
      %v2812 = vadd.f32 0.0, %v2811
      %v2813 = vpop.f32.mrf.mxu0
      %2814 = vmatprep.mubr.bf16.mxu0 0
      %2815 = vmatmul.mubr.bf16.gmra.mxu0 %v2641
      %v2816 = vpop.f32.mrf.mxu0
      %v2817 = vadd.f32 0.0, %v2816
      %v2818 = vpop.f32.mrf.mxu0
      %v2819 = vpop.f32.mrf.mxu0
      %v2820 = vadd.f32 0.0, %v2819
      %v2821 = vpop.f32.mrf.mxu0
      %2822 = vdwg.mxu0
      %v2823 = vadd.f32 %v2384, %v2681
      %v2824 = vadd.f32 %v2385, %v2684
      %v2825 = vadd.f32 %v2386, %v2689
      %v2826 = vadd.f32 %v2387, %v2692
      %v2827 = vadd.f32 %v2388, %v2697
      %v2828 = vadd.f32 %v2389, %v2700
      %v2829 = vadd.f32 %v2390, %v2705
      %v2830 = vadd.f32 %v2391, %v2708
      %v2831 = vadd.f32 %v2392, %v2713
      %v2832 = vadd.f32 %v2393, %v2716
      %v2833 = vadd.f32 %v2394, %v2721
      %v2834 = vadd.f32 %v2395, %v2724
      %v2835 = vadd.f32 %v2396, %v2729
      %v2836 = vadd.f32 %v2397, %v2732
      %v2837 = vadd.f32 %v2398, %v2737
      %v2838 = vadd.f32 %v2399, %v2740
      %v2839 = vadd.f32 %v2400, %v2745
      %v2840 = vadd.f32 %v2401, %v2748
      %v2841 = vadd.f32 %v2402, %v2753
      %v2842 = vadd.f32 %v2403, %v2756
      %v2843 = vadd.f32 %v2404, %v2761
      %v2844 = vadd.f32 %v2405, %v2764
      %v2845 = vadd.f32 %v2406, %v2769
      %v2846 = vadd.f32 %v2407, %v2772
      %v2847 = vadd.f32 %v2408, %v2777
      %v2848 = vadd.f32 %v2409, %v2780
      %v2849 = vadd.f32 %v2410, %v2785
      %v2850 = vadd.f32 %v2411, %v2788
      %v2851 = vadd.f32 %v2412, %v2793
      %v2852 = vadd.f32 %v2413, %v2796
      %v2853 = vadd.f32 %v2414, %v2801
      %v2854 = vadd.f32 %v2415, %v2804
      %v2855 = vadd.f32 %v2416, %v2809
      %v2856 = vadd.f32 %v2417, %v2812
      %v2857 = vadd.f32 %v2418, %v2817
      %v2858 = vadd.f32 %v2419, %v2820
      %v2859 = vld [vmem:[%s165 + $0xa0] sm:$0x7]
      %s2860 = scalar_lea.vmem %s1, 14
      %v2861 = vld [vmem:[%s2860] sm:$0x3]
      %v2863 = vunpack.c.l.b16 %v2859
      %v2864 = vpack.c.b16 %v2863, %v2863
      %vm2865 = vsmask.f32 5376
      %v2867 = vshrl.u32 %v2533, 16
      %v2869 = vrot.slane %v2867, 2
      %v2870 = vshll.u32 %v2533, 16
      %v2872 = vrot.slane %v2870, 3
      %v2873 = vor.u32 %v2869, %v2872
      %v2875 = vshrl.u32 %v2534, 16
      %v2877 = vrot.slane %v2875, 2
      %v2878 = vshll.u32 %v2534, 16
      %v2880 = vrot.slane %v2878, 3
      %v2881 = vor.u32 %v2877, %v2880
      %v2882 = vsel %vm2865, %v2873, %v2881
      %v2884 = vshrl.u32 %v2535, 16
      %v2886 = vrot.slane %v2884, 2
      %v2887 = vshll.u32 %v2535, 16
      %v2889 = vrot.slane %v2887, 3
      %v2890 = vor.u32 %v2886, %v2889
      %v2891 = vsel %vm2865, %v2881, %v2890
      %v2893 = vshrl.u32 %v2536, 16
      %v2895 = vrot.slane %v2893, 2
      %v2896 = vshll.u32 %v2536, 16
      %v2898 = vrot.slane %v2896, 3
      %v2899 = vor.u32 %v2895, %v2898
      %v2900 = vsel %vm2865, %v2890, %v2899
      %v2902 = vshrl.u32 %v2537, 16
      %v2904 = vrot.slane %v2902, 2
      %v2905 = vshll.u32 %v2537, 16
      %v2907 = vrot.slane %v2905, 3
      %v2908 = vor.u32 %v2904, %v2907
      %v2909 = vsel %vm2865, %v2899, %v2908
      %v2911 = vshrl.u32 %v2538, 16
      %v2913 = vrot.slane %v2911, 2
      %v2914 = vshll.u32 %v2538, 16
      %v2916 = vrot.slane %v2914, 3
      %v2917 = vor.u32 %v2913, %v2916
      %v2918 = vsel %vm2865, %v2908, %v2917
      %v2920 = vshrl.u32 %v2539, 16
      %v2922 = vrot.slane %v2920, 2
      %v2923 = vshll.u32 %v2539, 16
      %v2925 = vrot.slane %v2923, 3
      %v2926 = vor.u32 %v2922, %v2925
      %v2927 = vsel %vm2865, %v2917, %v2926
      %v2929 = vshrl.u32 %v2540, 16
      %v2931 = vrot.slane %v2929, 2
      %v2932 = vshll.u32 %v2540, 16
      %v2934 = vrot.slane %v2932, 3
      %v2935 = vor.u32 %v2931, %v2934
      %v2936 = vsel %vm2865, %v2926, %v2935
      %v2938 = vshrl.u32 %v2541, 16
      %v2940 = vrot.slane %v2938, 2
      %v2941 = vshll.u32 %v2541, 16
      %v2943 = vrot.slane %v2941, 3
      %v2944 = vor.u32 %v2940, %v2943
      %v2945 = vsel %vm2865, %v2935, %v2944
      %v2947 = vshrl.u32 %v2542, 16
      %v2949 = vrot.slane %v2947, 2
      %v2950 = vshll.u32 %v2542, 16
      %v2952 = vrot.slane %v2950, 3
      %v2953 = vor.u32 %v2949, %v2952
      %v2954 = vsel %vm2865, %v2944, %v2953
      %v2956 = vshrl.u32 %v2543, 16
      %v2958 = vrot.slane %v2956, 2
      %v2959 = vshll.u32 %v2543, 16
      %v2961 = vrot.slane %v2959, 3
      %v2962 = vor.u32 %v2958, %v2961
      %v2963 = vsel %vm2865, %v2953, %v2962
      %v2965 = vshrl.u32 %v2544, 16
      %v2967 = vrot.slane %v2965, 2
      %v2968 = vshll.u32 %v2544, 16
      %v2970 = vrot.slane %v2968, 3
      %v2971 = vor.u32 %v2967, %v2970
      %v2972 = vsel %vm2865, %v2962, %v2971
      %v2974 = vshrl.u32 %v2545, 16
      %v2976 = vrot.slane %v2974, 2
      %v2977 = vshll.u32 %v2545, 16
      %v2979 = vrot.slane %v2977, 3
      %v2980 = vor.u32 %v2976, %v2979
      %v2981 = vsel %vm2865, %v2971, %v2980
      %v2983 = vshrl.u32 %v2546, 16
      %v2985 = vrot.slane %v2983, 2
      %v2986 = vshll.u32 %v2546, 16
      %v2988 = vrot.slane %v2986, 3
      %v2989 = vor.u32 %v2985, %v2988
      %v2990 = vsel %vm2865, %v2980, %v2989
      %v2992 = vshrl.u32 %v2547, 16
      %v2994 = vrot.slane %v2992, 2
      %v2995 = vshll.u32 %v2547, 16
      %v2997 = vrot.slane %v2995, 3
      %v2998 = vor.u32 %v2994, %v2997
      %v2999 = vsel %vm2865, %v2989, %v2998
      %v3001 = vshrl.u32 %v2548, 16
      %v3003 = vrot.slane %v3001, 2
      %v3004 = vshll.u32 %v2548, 16
      %v3006 = vrot.slane %v3004, 3
      %v3007 = vor.u32 %v3003, %v3006
      %v3008 = vsel %vm2865, %v2998, %v3007
      %v3010 = vshrl.u32 %v2549, 16
      %v3012 = vrot.slane %v3010, 2
      %v3013 = vshll.u32 %v2549, 16
      %v3015 = vrot.slane %v3013, 3
      %v3016 = vor.u32 %v3012, %v3015
      %v3017 = vsel %vm2865, %v3007, %v3016
      %v3019 = vshrl.u32 %v2550, 16
      %v3021 = vrot.slane %v3019, 2
      %v3022 = vshll.u32 %v2550, 16
      %v3024 = vrot.slane %v3022, 3
      %v3025 = vor.u32 %v3021, %v3024
      %v3026 = vsel %vm2865, %v3016, %v3025
      %v3028 = vshrl.u32 %v2864, 16
      %v3030 = vrot.slane %v3028, 2
      %v3031 = vshll.u32 %v2864, 16
      %v3033 = vrot.slane %v3031, 3
      %v3034 = vor.u32 %v3030, %v3033
      %v3035 = vsel %vm2865, %v3025, %v3034
      %v3037 = vsel %vm454, %v2882, 0
      %v3040 = vsel %vm454, %v2891, 0
      %v3043 = vsel %vm454, %v2900, 0
      %v3046 = vsel %vm454, %v2909, 0
      %v3049 = vsel %vm454, %v2918, 0
      %v3052 = vsel %vm454, %v2927, 0
      %v3055 = vsel %vm454, %v2936, 0
      %v3058 = vsel %vm454, %v2945, 0
      %v3061 = vsel %vm454, %v2954, 0
      %v3064 = vsel %vm454, %v2963, 0
      %v3067 = vsel %vm454, %v2972, 0
      %v3070 = vsel %vm454, %v2981, 0
      %v3073 = vsel %vm454, %v2990, 0
      %v3076 = vsel %vm454, %v2999, 0
      %v3079 = vsel %vm454, %v3008, 0
      %v3082 = vsel %vm454, %v3017, 0
      %v3085 = vsel %vm454, %v3026, 0
      %v3088 = vsel %vm454, %v3035, 0
      %v3091 = vsel %vm509, %v2861, 0
      %3093 = vmatprep.subr.bf16.mxu0 0
      %3094 = vmatpush1.bf16.msra.mxu0 0
      %3095 = vmatprep.subr.bf16.mxu0 0
      %3096 = vmatpush1.bf16.msra.mxu0 0
      %3097 = vmatprep.subr.bf16.mxu0 0
      %3098 = vmatpush1.bf16.msra.mxu0 0
      %3099 = vmatprep.subr.bf16.mxu0 0
      %3100 = vmatpush1.bf16.msra.mxu0 0
      %3101 = vmatprep.subr.bf16.mxu0 0
      %3102 = vmatpush1.bf16.msra.mxu0 0
      %3103 = vmatprep.subr.bf16.mxu0 0
      %3104 = vmatpush1.bf16.msra.mxu0 0
      %3105 = vmatprep.subr.bf16.mxu0 0
      %3106 = vmatpush1.bf16.msra.mxu0 0
      %3107 = vmatprep.subr.bf16.mxu0 0
      %3108 = vmatpush1.bf16.msra.mxu0 %v3091
      %3109 = vmatprep.subr.bf16.mxu0 0
      %3110 = vmatpush2.bf16.msra.mxu0 0
      %3111 = vmatprep.subr.bf16.mxu0 0
      %3112 = vmatpush2.bf16.msra.mxu0 0
      %3113 = vmatprep.subr.bf16.mxu0 0
      %3114 = vmatpush2.bf16.msra.mxu0 0
      %3115 = vmatprep.subr.bf16.mxu0 0
      %3116 = vmatpush2.bf16.msra.mxu0 0
      %3117 = vmatprep.subr.bf16.mxu0 0
      %3118 = vmatpush2.bf16.msra.mxu0 0
      %3119 = vmatprep.subr.bf16.mxu0 0
      %3120 = vmatpush2.bf16.msra.mxu0 0
      %3121 = vmatprep.subr.bf16.mxu0 0
      %3122 = vmatpush2.bf16.msra.mxu0 0
      %3123 = vmatprep.subr.bf16.mxu0 0
      %3124 = vmatpush2.bf16.msra.mxu0 0
      %3125 = vmatprep.mubr.bf16.mxu0 0
      %3126 = vmatmul.mubr.bf16.gmra.mxu0 %v3037
      %v3127 = vpop.f32.mrf.mxu0
      %v3128 = vadd.f32 0.0, %v3127
      %v3129 = vpop.f32.mrf.mxu0
      %v3130 = vpop.f32.mrf.mxu0
      %v3131 = vadd.f32 0.0, %v3130
      %v3132 = vpop.f32.mrf.mxu0
      %3133 = vmatprep.mubr.bf16.mxu0 0
      %3134 = vmatmul.mubr.bf16.gmra.mxu0 %v3040
      %v3135 = vpop.f32.mrf.mxu0
      %v3136 = vadd.f32 0.0, %v3135
      %v3137 = vpop.f32.mrf.mxu0
      %v3138 = vpop.f32.mrf.mxu0
      %v3139 = vadd.f32 0.0, %v3138
      %v3140 = vpop.f32.mrf.mxu0
      %3141 = vmatprep.mubr.bf16.mxu0 0
      %3142 = vmatmul.mubr.bf16.gmra.mxu0 %v3043
      %v3143 = vpop.f32.mrf.mxu0
      %v3144 = vadd.f32 0.0, %v3143
      %v3145 = vpop.f32.mrf.mxu0
      %v3146 = vpop.f32.mrf.mxu0
      %v3147 = vadd.f32 0.0, %v3146
      %v3148 = vpop.f32.mrf.mxu0
      %3149 = vmatprep.mubr.bf16.mxu0 0
      %3150 = vmatmul.mubr.bf16.gmra.mxu0 %v3046
      %v3151 = vpop.f32.mrf.mxu0
      %v3152 = vadd.f32 0.0, %v3151
      %v3153 = vpop.f32.mrf.mxu0
      %v3154 = vpop.f32.mrf.mxu0
      %v3155 = vadd.f32 0.0, %v3154
      %v3156 = vpop.f32.mrf.mxu0
      %3157 = vmatprep.mubr.bf16.mxu0 0
      %3158 = vmatmul.mubr.bf16.gmra.mxu0 %v3049
      %v3159 = vpop.f32.mrf.mxu0
      %v3160 = vadd.f32 0.0, %v3159
      %v3161 = vpop.f32.mrf.mxu0
      %v3162 = vpop.f32.mrf.mxu0
      %v3163 = vadd.f32 0.0, %v3162
      %v3164 = vpop.f32.mrf.mxu0
      %3165 = vmatprep.mubr.bf16.mxu0 0
      %3166 = vmatmul.mubr.bf16.gmra.mxu0 %v3052
      %v3167 = vpop.f32.mrf.mxu0
      %v3168 = vadd.f32 0.0, %v3167
      %v3169 = vpop.f32.mrf.mxu0
      %v3170 = vpop.f32.mrf.mxu0
      %v3171 = vadd.f32 0.0, %v3170
      %v3172 = vpop.f32.mrf.mxu0
      %3173 = vmatprep.mubr.bf16.mxu0 0
      %3174 = vmatmul.mubr.bf16.gmra.mxu0 %v3055
      %v3175 = vpop.f32.mrf.mxu0
      %v3176 = vadd.f32 0.0, %v3175
      %v3177 = vpop.f32.mrf.mxu0
      %v3178 = vpop.f32.mrf.mxu0
      %v3179 = vadd.f32 0.0, %v3178
      %v3180 = vpop.f32.mrf.mxu0
      %3181 = vmatprep.mubr.bf16.mxu0 0
      %3182 = vmatmul.mubr.bf16.gmra.mxu0 %v3058
      %v3183 = vpop.f32.mrf.mxu0
      %v3184 = vadd.f32 0.0, %v3183
      %v3185 = vpop.f32.mrf.mxu0
      %v3186 = vpop.f32.mrf.mxu0
      %v3187 = vadd.f32 0.0, %v3186
      %v3188 = vpop.f32.mrf.mxu0
      %3189 = vmatprep.mubr.bf16.mxu0 0
      %3190 = vmatmul.mubr.bf16.gmra.mxu0 %v3061
      %v3191 = vpop.f32.mrf.mxu0
      %v3192 = vadd.f32 0.0, %v3191
      %v3193 = vpop.f32.mrf.mxu0
      %v3194 = vpop.f32.mrf.mxu0
      %v3195 = vadd.f32 0.0, %v3194
      %v3196 = vpop.f32.mrf.mxu0
      %3197 = vmatprep.mubr.bf16.mxu0 0
      %3198 = vmatmul.mubr.bf16.gmra.mxu0 %v3064
      %v3199 = vpop.f32.mrf.mxu0
      %v3200 = vadd.f32 0.0, %v3199
      %v3201 = vpop.f32.mrf.mxu0
      %v3202 = vpop.f32.mrf.mxu0
      %v3203 = vadd.f32 0.0, %v3202
      %v3204 = vpop.f32.mrf.mxu0
      %3205 = vmatprep.mubr.bf16.mxu0 0
      %3206 = vmatmul.mubr.bf16.gmra.mxu0 %v3067
      %v3207 = vpop.f32.mrf.mxu0
      %v3208 = vadd.f32 0.0, %v3207
      %v3209 = vpop.f32.mrf.mxu0
      %v3210 = vpop.f32.mrf.mxu0
      %v3211 = vadd.f32 0.0, %v3210
      %v3212 = vpop.f32.mrf.mxu0
      %3213 = vmatprep.mubr.bf16.mxu0 0
      %3214 = vmatmul.mubr.bf16.gmra.mxu0 %v3070
      %v3215 = vpop.f32.mrf.mxu0
      %v3216 = vadd.f32 0.0, %v3215
      %v3217 = vpop.f32.mrf.mxu0
      %v3218 = vpop.f32.mrf.mxu0
      %v3219 = vadd.f32 0.0, %v3218
      %v3220 = vpop.f32.mrf.mxu0
      %3221 = vmatprep.mubr.bf16.mxu0 0
      %3222 = vmatmul.mubr.bf16.gmra.mxu0 %v3073
      %v3223 = vpop.f32.mrf.mxu0
      %v3224 = vadd.f32 0.0, %v3223
      %v3225 = vpop.f32.mrf.mxu0
      %v3226 = vpop.f32.mrf.mxu0
      %v3227 = vadd.f32 0.0, %v3226
      %v3228 = vpop.f32.mrf.mxu0
      %3229 = vmatprep.mubr.bf16.mxu0 0
      %3230 = vmatmul.mubr.bf16.gmra.mxu0 %v3076
      %v3231 = vpop.f32.mrf.mxu0
      %v3232 = vadd.f32 0.0, %v3231
      %v3233 = vpop.f32.mrf.mxu0
      %v3234 = vpop.f32.mrf.mxu0
      %v3235 = vadd.f32 0.0, %v3234
      %v3236 = vpop.f32.mrf.mxu0
      %3237 = vmatprep.mubr.bf16.mxu0 0
      %3238 = vmatmul.mubr.bf16.gmra.mxu0 %v3079
      %v3239 = vpop.f32.mrf.mxu0
      %v3240 = vadd.f32 0.0, %v3239
      %v3241 = vpop.f32.mrf.mxu0
      %v3242 = vpop.f32.mrf.mxu0
      %v3243 = vadd.f32 0.0, %v3242
      %v3244 = vpop.f32.mrf.mxu0
      %3245 = vmatprep.mubr.bf16.mxu0 0
      %3246 = vmatmul.mubr.bf16.gmra.mxu0 %v3082
      %v3247 = vpop.f32.mrf.mxu0
      %v3248 = vadd.f32 0.0, %v3247
      %v3249 = vpop.f32.mrf.mxu0
      %v3250 = vpop.f32.mrf.mxu0
      %v3251 = vadd.f32 0.0, %v3250
      %v3252 = vpop.f32.mrf.mxu0
      %3253 = vmatprep.mubr.bf16.mxu0 0
      %3254 = vmatmul.mubr.bf16.gmra.mxu0 %v3085
      %v3255 = vpop.f32.mrf.mxu0
      %v3256 = vadd.f32 0.0, %v3255
      %v3257 = vpop.f32.mrf.mxu0
      %v3258 = vpop.f32.mrf.mxu0
      %v3259 = vadd.f32 0.0, %v3258
      %v3260 = vpop.f32.mrf.mxu0
      %3261 = vmatprep.mubr.bf16.mxu0 0
      %3262 = vmatmul.mubr.bf16.gmra.mxu0 %v3088
      %v3263 = vpop.f32.mrf.mxu0
      %v3264 = vadd.f32 0.0, %v3263
      %v3265 = vpop.f32.mrf.mxu0
      %v3266 = vpop.f32.mrf.mxu0
      %v3267 = vadd.f32 0.0, %v3266
      %v3268 = vpop.f32.mrf.mxu0
      %3269 = vdwg.mxu0
      %v3270 = vadd.f32 %v2823, %v3128
      %v3271 = vadd.f32 %v2824, %v3131
      %v3272 = vadd.f32 %v2825, %v3136
      %v3273 = vadd.f32 %v2826, %v3139
      %v3274 = vadd.f32 %v2827, %v3144
      %v3275 = vadd.f32 %v2828, %v3147
      %v3276 = vadd.f32 %v2829, %v3152
      %v3277 = vadd.f32 %v2830, %v3155
      %v3278 = vadd.f32 %v2831, %v3160
      %v3279 = vadd.f32 %v2832, %v3163
      %v3280 = vadd.f32 %v2833, %v3168
      %v3281 = vadd.f32 %v2834, %v3171
      %v3282 = vadd.f32 %v2835, %v3176
      %v3283 = vadd.f32 %v2836, %v3179
      %v3284 = vadd.f32 %v2837, %v3184
      %v3285 = vadd.f32 %v2838, %v3187
      %v3286 = vadd.f32 %v2839, %v3192
      %v3287 = vadd.f32 %v2840, %v3195
      %v3288 = vadd.f32 %v2841, %v3200
      %v3289 = vadd.f32 %v2842, %v3203
      %v3290 = vadd.f32 %v2843, %v3208
      %v3291 = vadd.f32 %v2844, %v3211
      %v3292 = vadd.f32 %v2845, %v3216
      %v3293 = vadd.f32 %v2846, %v3219
      %v3294 = vadd.f32 %v2847, %v3224
      %v3295 = vadd.f32 %v2848, %v3227
      %v3296 = vadd.f32 %v2849, %v3232
      %v3297 = vadd.f32 %v2850, %v3235
      %v3298 = vadd.f32 %v2851, %v3240
      %v3299 = vadd.f32 %v2852, %v3243
      %v3300 = vadd.f32 %v2853, %v3248
      %v3301 = vadd.f32 %v2854, %v3251
      %v3302 = vadd.f32 %v2855, %v3256
      %v3303 = vadd.f32 %v2856, %v3259
      %v3304 = vadd.f32 %v2857, %v3264
      %v3305 = vadd.f32 %v2858, %v3267
      %v3306 = vld [vmem:[%s165 + $0x10] sm:$0x8]
      %s3307 = scalar_lea.vmem %s1, 16
      %v3308 = vld [vmem:[%s3307] sm:$0x3]
      %v3310 = vunpack.c.l.b16 %v3306
      %v3311 = vpack.c.b16 %v2497, %v3310
      %vm3312 = vcmask 1044480
      %v3313 = vrot.slane %v3311, 3
      %v3314 = vrot.slane %v2534, 3
      %v3315 = vsel %vm3312, %v3313, %v3314
      %v3316 = vrot.slane %v2535, 3
      %v3317 = vsel %vm3312, %v3314, %v3316
      %v3318 = vrot.slane %v2536, 3
      %v3319 = vsel %vm3312, %v3316, %v3318
      %v3320 = vrot.slane %v2537, 3
      %v3321 = vsel %vm3312, %v3318, %v3320
      %v3322 = vrot.slane %v2538, 3
      %v3323 = vsel %vm3312, %v3320, %v3322
      %v3324 = vrot.slane %v2539, 3
      %v3325 = vsel %vm3312, %v3322, %v3324
      %v3326 = vrot.slane %v2540, 3
      %v3327 = vsel %vm3312, %v3324, %v3326
      %v3328 = vrot.slane %v2541, 3
      %v3329 = vsel %vm3312, %v3326, %v3328
      %v3330 = vrot.slane %v2542, 3
      %v3331 = vsel %vm3312, %v3328, %v3330
      %v3332 = vrot.slane %v2543, 3
      %v3333 = vsel %vm3312, %v3330, %v3332
      %v3334 = vrot.slane %v2544, 3
      %v3335 = vsel %vm3312, %v3332, %v3334
      %v3336 = vrot.slane %v2545, 3
      %v3337 = vsel %vm3312, %v3334, %v3336
      %v3338 = vrot.slane %v2546, 3
      %v3339 = vsel %vm3312, %v3336, %v3338
      %v3340 = vrot.slane %v2547, 3
      %v3341 = vsel %vm3312, %v3338, %v3340
      %v3342 = vrot.slane %v2548, 3
      %v3343 = vsel %vm3312, %v3340, %v3342
      %v3344 = vrot.slane %v2549, 3
      %v3345 = vsel %vm3312, %v3342, %v3344
      %v3346 = vrot.slane %v2550, 3
      %v3347 = vsel %vm3312, %v3344, %v3346
      %v3348 = vrot.slane %v2864, 3
      %v3349 = vsel %vm3312, %v3346, %v3348
      %v3351 = vsel %vm454, %v3315, 0
      %v3354 = vsel %vm454, %v3317, 0
      %v3357 = vsel %vm454, %v3319, 0
      %v3360 = vsel %vm454, %v3321, 0
      %v3363 = vsel %vm454, %v3323, 0
      %v3366 = vsel %vm454, %v3325, 0
      %v3369 = vsel %vm454, %v3327, 0
      %v3372 = vsel %vm454, %v3329, 0
      %v3375 = vsel %vm454, %v3331, 0
      %v3378 = vsel %vm454, %v3333, 0
      %v3381 = vsel %vm454, %v3335, 0
      %v3384 = vsel %vm454, %v3337, 0
      %v3387 = vsel %vm454, %v3339, 0
      %v3390 = vsel %vm454, %v3341, 0
      %v3393 = vsel %vm454, %v3343, 0
      %v3396 = vsel %vm454, %v3345, 0
      %v3399 = vsel %vm454, %v3347, 0
      %v3402 = vsel %vm454, %v3349, 0
      %v3405 = vsel %vm509, %v3308, 0
      %3407 = vmatprep.subr.bf16.mxu0 0
      %3408 = vmatpush1.bf16.msra.mxu0 0
      %3409 = vmatprep.subr.bf16.mxu0 0
      %3410 = vmatpush1.bf16.msra.mxu0 0
      %3411 = vmatprep.subr.bf16.mxu0 0
      %3412 = vmatpush1.bf16.msra.mxu0 0
      %3413 = vmatprep.subr.bf16.mxu0 0
      %3414 = vmatpush1.bf16.msra.mxu0 0
      %3415 = vmatprep.subr.bf16.mxu0 0
      %3416 = vmatpush1.bf16.msra.mxu0 0
      %3417 = vmatprep.subr.bf16.mxu0 0
      %3418 = vmatpush1.bf16.msra.mxu0 0
      %3419 = vmatprep.subr.bf16.mxu0 0
      %3420 = vmatpush1.bf16.msra.mxu0 0
      %3421 = vmatprep.subr.bf16.mxu0 0
      %3422 = vmatpush1.bf16.msra.mxu0 %v3405
      %3423 = vmatprep.subr.bf16.mxu0 0
      %3424 = vmatpush2.bf16.msra.mxu0 0
      %3425 = vmatprep.subr.bf16.mxu0 0
      %3426 = vmatpush2.bf16.msra.mxu0 0
      %3427 = vmatprep.subr.bf16.mxu0 0
      %3428 = vmatpush2.bf16.msra.mxu0 0
      %3429 = vmatprep.subr.bf16.mxu0 0
      %3430 = vmatpush2.bf16.msra.mxu0 0
      %3431 = vmatprep.subr.bf16.mxu0 0
      %3432 = vmatpush2.bf16.msra.mxu0 0
      %3433 = vmatprep.subr.bf16.mxu0 0
      %3434 = vmatpush2.bf16.msra.mxu0 0
      %3435 = vmatprep.subr.bf16.mxu0 0
      %3436 = vmatpush2.bf16.msra.mxu0 0
      %3437 = vmatprep.subr.bf16.mxu0 0
      %3438 = vmatpush2.bf16.msra.mxu0 0
      %3439 = vmatprep.mubr.bf16.mxu0 0
      %3440 = vmatmul.mubr.bf16.gmra.mxu0 %v3351
      %v3441 = vpop.f32.mrf.mxu0
      %v3442 = vadd.f32 0.0, %v3441
      %v3443 = vpop.f32.mrf.mxu0
      %v3444 = vpop.f32.mrf.mxu0
      %v3445 = vadd.f32 0.0, %v3444
      %v3446 = vpop.f32.mrf.mxu0
      %3447 = vmatprep.mubr.bf16.mxu0 0
      %3448 = vmatmul.mubr.bf16.gmra.mxu0 %v3354
      %v3449 = vpop.f32.mrf.mxu0
      %v3450 = vadd.f32 0.0, %v3449
      %v3451 = vpop.f32.mrf.mxu0
      %v3452 = vpop.f32.mrf.mxu0
      %v3453 = vadd.f32 0.0, %v3452
      %v3454 = vpop.f32.mrf.mxu0
      %3455 = vmatprep.mubr.bf16.mxu0 0
      %3456 = vmatmul.mubr.bf16.gmra.mxu0 %v3357
      %v3457 = vpop.f32.mrf.mxu0
      %v3458 = vadd.f32 0.0, %v3457
      %v3459 = vpop.f32.mrf.mxu0
      %v3460 = vpop.f32.mrf.mxu0
      %v3461 = vadd.f32 0.0, %v3460
      %v3462 = vpop.f32.mrf.mxu0
      %3463 = vmatprep.mubr.bf16.mxu0 0
      %3464 = vmatmul.mubr.bf16.gmra.mxu0 %v3360
      %v3465 = vpop.f32.mrf.mxu0
      %v3466 = vadd.f32 0.0, %v3465
      %v3467 = vpop.f32.mrf.mxu0
      %v3468 = vpop.f32.mrf.mxu0
      %v3469 = vadd.f32 0.0, %v3468
      %v3470 = vpop.f32.mrf.mxu0
      %3471 = vmatprep.mubr.bf16.mxu0 0
      %3472 = vmatmul.mubr.bf16.gmra.mxu0 %v3363
      %v3473 = vpop.f32.mrf.mxu0
      %v3474 = vadd.f32 0.0, %v3473
      %v3475 = vpop.f32.mrf.mxu0
      %v3476 = vpop.f32.mrf.mxu0
      %v3477 = vadd.f32 0.0, %v3476
      %v3478 = vpop.f32.mrf.mxu0
      %3479 = vmatprep.mubr.bf16.mxu0 0
      %3480 = vmatmul.mubr.bf16.gmra.mxu0 %v3366
      %v3481 = vpop.f32.mrf.mxu0
      %v3482 = vadd.f32 0.0, %v3481
      %v3483 = vpop.f32.mrf.mxu0
      %v3484 = vpop.f32.mrf.mxu0
      %v3485 = vadd.f32 0.0, %v3484
      %v3486 = vpop.f32.mrf.mxu0
      %3487 = vmatprep.mubr.bf16.mxu0 0
      %3488 = vmatmul.mubr.bf16.gmra.mxu0 %v3369
      %v3489 = vpop.f32.mrf.mxu0
      %v3490 = vadd.f32 0.0, %v3489
      %v3491 = vpop.f32.mrf.mxu0
      %v3492 = vpop.f32.mrf.mxu0
      %v3493 = vadd.f32 0.0, %v3492
      %v3494 = vpop.f32.mrf.mxu0
      %3495 = vmatprep.mubr.bf16.mxu0 0
      %3496 = vmatmul.mubr.bf16.gmra.mxu0 %v3372
      %v3497 = vpop.f32.mrf.mxu0
      %v3498 = vadd.f32 0.0, %v3497
      %v3499 = vpop.f32.mrf.mxu0
      %v3500 = vpop.f32.mrf.mxu0
      %v3501 = vadd.f32 0.0, %v3500
      %v3502 = vpop.f32.mrf.mxu0
      %3503 = vmatprep.mubr.bf16.mxu0 0
      %3504 = vmatmul.mubr.bf16.gmra.mxu0 %v3375
      %v3505 = vpop.f32.mrf.mxu0
      %v3506 = vadd.f32 0.0, %v3505
      %v3507 = vpop.f32.mrf.mxu0
      %v3508 = vpop.f32.mrf.mxu0
      %v3509 = vadd.f32 0.0, %v3508
      %v3510 = vpop.f32.mrf.mxu0
      %3511 = vmatprep.mubr.bf16.mxu0 0
      %3512 = vmatmul.mubr.bf16.gmra.mxu0 %v3378
      %v3513 = vpop.f32.mrf.mxu0
      %v3514 = vadd.f32 0.0, %v3513
      %v3515 = vpop.f32.mrf.mxu0
      %v3516 = vpop.f32.mrf.mxu0
      %v3517 = vadd.f32 0.0, %v3516
      %v3518 = vpop.f32.mrf.mxu0
      %3519 = vmatprep.mubr.bf16.mxu0 0
      %3520 = vmatmul.mubr.bf16.gmra.mxu0 %v3381
      %v3521 = vpop.f32.mrf.mxu0
      %v3522 = vadd.f32 0.0, %v3521
      %v3523 = vpop.f32.mrf.mxu0
      %v3524 = vpop.f32.mrf.mxu0
      %v3525 = vadd.f32 0.0, %v3524
      %v3526 = vpop.f32.mrf.mxu0
      %3527 = vmatprep.mubr.bf16.mxu0 0
      %3528 = vmatmul.mubr.bf16.gmra.mxu0 %v3384
      %v3529 = vpop.f32.mrf.mxu0
      %v3530 = vadd.f32 0.0, %v3529
      %v3531 = vpop.f32.mrf.mxu0
      %v3532 = vpop.f32.mrf.mxu0
      %v3533 = vadd.f32 0.0, %v3532
      %v3534 = vpop.f32.mrf.mxu0
      %3535 = vmatprep.mubr.bf16.mxu0 0
      %3536 = vmatmul.mubr.bf16.gmra.mxu0 %v3387
      %v3537 = vpop.f32.mrf.mxu0
      %v3538 = vadd.f32 0.0, %v3537
      %v3539 = vpop.f32.mrf.mxu0
      %v3540 = vpop.f32.mrf.mxu0
      %v3541 = vadd.f32 0.0, %v3540
      %v3542 = vpop.f32.mrf.mxu0
      %3543 = vmatprep.mubr.bf16.mxu0 0
      %3544 = vmatmul.mubr.bf16.gmra.mxu0 %v3390
      %v3545 = vpop.f32.mrf.mxu0
      %v3546 = vadd.f32 0.0, %v3545
      %v3547 = vpop.f32.mrf.mxu0
      %v3548 = vpop.f32.mrf.mxu0
      %v3549 = vadd.f32 0.0, %v3548
      %v3550 = vpop.f32.mrf.mxu0
      %3551 = vmatprep.mubr.bf16.mxu0 0
      %3552 = vmatmul.mubr.bf16.gmra.mxu0 %v3393
      %v3553 = vpop.f32.mrf.mxu0
      %v3554 = vadd.f32 0.0, %v3553
      %v3555 = vpop.f32.mrf.mxu0
      %v3556 = vpop.f32.mrf.mxu0
      %v3557 = vadd.f32 0.0, %v3556
      %v3558 = vpop.f32.mrf.mxu0
      %3559 = vmatprep.mubr.bf16.mxu0 0
      %3560 = vmatmul.mubr.bf16.gmra.mxu0 %v3396
      %v3561 = vpop.f32.mrf.mxu0
      %v3562 = vadd.f32 0.0, %v3561
      %v3563 = vpop.f32.mrf.mxu0
      %v3564 = vpop.f32.mrf.mxu0
      %v3565 = vadd.f32 0.0, %v3564
      %v3566 = vpop.f32.mrf.mxu0
      %3567 = vmatprep.mubr.bf16.mxu0 0
      %3568 = vmatmul.mubr.bf16.gmra.mxu0 %v3399
      %v3569 = vpop.f32.mrf.mxu0
      %v3570 = vadd.f32 0.0, %v3569
      %v3571 = vpop.f32.mrf.mxu0
      %v3572 = vpop.f32.mrf.mxu0
      %v3573 = vadd.f32 0.0, %v3572
      %v3574 = vpop.f32.mrf.mxu0
      %3575 = vmatprep.mubr.bf16.mxu0 0
      %3576 = vmatmul.mubr.bf16.gmra.mxu0 %v3402
      %v3577 = vpop.f32.mrf.mxu0
      %v3578 = vadd.f32 0.0, %v3577
      %v3579 = vpop.f32.mrf.mxu0
      %v3580 = vpop.f32.mrf.mxu0
      %v3581 = vadd.f32 0.0, %v3580
      %v3582 = vpop.f32.mrf.mxu0
      %3583 = vdwg.mxu0
      %v3584 = vadd.f32 %v3270, %v3442
      %v3585 = vadd.f32 %v3271, %v3445
      %v3586 = vadd.f32 %v3272, %v3450
      %v3587 = vadd.f32 %v3273, %v3453
      %v3588 = vadd.f32 %v3274, %v3458
      %v3589 = vadd.f32 %v3275, %v3461
      %v3590 = vadd.f32 %v3276, %v3466
      %v3591 = vadd.f32 %v3277, %v3469
      %v3592 = vadd.f32 %v3278, %v3474
      %v3593 = vadd.f32 %v3279, %v3477
      %v3594 = vadd.f32 %v3280, %v3482
      %v3595 = vadd.f32 %v3281, %v3485
      %v3596 = vadd.f32 %v3282, %v3490
      %v3597 = vadd.f32 %v3283, %v3493
      %v3598 = vadd.f32 %v3284, %v3498
      %v3599 = vadd.f32 %v3285, %v3501
      %v3600 = vadd.f32 %v3286, %v3506
      %v3601 = vadd.f32 %v3287, %v3509
      %v3602 = vadd.f32 %v3288, %v3514
      %v3603 = vadd.f32 %v3289, %v3517
      %v3604 = vadd.f32 %v3290, %v3522
      %v3605 = vadd.f32 %v3291, %v3525
      %v3606 = vadd.f32 %v3292, %v3530
      %v3607 = vadd.f32 %v3293, %v3533
      %v3608 = vadd.f32 %v3294, %v3538
      %v3609 = vadd.f32 %v3295, %v3541
      %v3610 = vadd.f32 %v3296, %v3546
      %v3611 = vadd.f32 %v3297, %v3549
      %v3612 = vadd.f32 %v3298, %v3554
      %v3613 = vadd.f32 %v3299, %v3557
      %v3614 = vadd.f32 %v3300, %v3562
      %v3615 = vadd.f32 %v3301, %v3565
      %v3616 = vadd.f32 %v3302, %v3570
      %v3617 = vadd.f32 %v3303, %v3573
      %v3618 = vadd.f32 %v3304, %v3578
      %v3619 = vadd.f32 %v3305, %v3581
      %v3620 = vld [vmem:[%s2] sm:$0x1]
      %v3622 = vlaneseq
      %v3623 = vshrl.u32 %v3622, 7
      %v3624 = vsub.s32 0, %v3623
      %v3625 = vrot.slane %v3620, %v3624
      %v3627 = vadd.f32 %v3584, %v3625
      %v3628 = vadd.f32 %v3585, %v3625
      %v3629 = vadd.f32 %v3586, %v3625
      %v3630 = vadd.f32 %v3587, %v3625
      %v3631 = vadd.f32 %v3588, %v3625
      %v3632 = vadd.f32 %v3589, %v3625
      %v3633 = vadd.f32 %v3590, %v3625
      %v3634 = vadd.f32 %v3591, %v3625
      %v3635 = vadd.f32 %v3592, %v3625
      %v3636 = vadd.f32 %v3593, %v3625
      %v3637 = vadd.f32 %v3594, %v3625
      %v3638 = vadd.f32 %v3595, %v3625
      %v3639 = vadd.f32 %v3596, %v3625
      %v3640 = vadd.f32 %v3597, %v3625
      %v3641 = vadd.f32 %v3598, %v3625
      %v3642 = vadd.f32 %v3599, %v3625
      %v3643 = vadd.f32 %v3600, %v3625
      %v3644 = vadd.f32 %v3601, %v3625
      %v3645 = vadd.f32 %v3602, %v3625
      %v3646 = vadd.f32 %v3603, %v3625
      %v3647 = vadd.f32 %v3604, %v3625
      %v3648 = vadd.f32 %v3605, %v3625
      %v3649 = vadd.f32 %v3606, %v3625
      %v3650 = vadd.f32 %v3607, %v3625
      %v3651 = vadd.f32 %v3608, %v3625
      %v3652 = vadd.f32 %v3609, %v3625
      %v3653 = vadd.f32 %v3610, %v3625
      %v3654 = vadd.f32 %v3611, %v3625
      %v3655 = vadd.f32 %v3612, %v3625
      %v3656 = vadd.f32 %v3613, %v3625
      %v3657 = vadd.f32 %v3614, %v3625
      %v3658 = vadd.f32 %v3615, %v3625
      %v3659 = vadd.f32 %v3616, %v3625
      %v3660 = vadd.f32 %v3617, %v3625
      %v3661 = vadd.f32 %v3618, %v3625
      %v3662 = vadd.f32 %v3619, %v3625
      %v3663 = vmax.f32 %v3627, 0.0
      %v3664 = vmax.f32 %v3628, 0.0
      %v3665 = vmax.f32 %v3629, 0.0
      %v3666 = vmax.f32 %v3630, 0.0
      %v3667 = vmax.f32 %v3631, 0.0
      %v3668 = vmax.f32 %v3632, 0.0
      %v3669 = vmax.f32 %v3633, 0.0
      %v3670 = vmax.f32 %v3634, 0.0
      %v3671 = vmax.f32 %v3635, 0.0
      %v3672 = vmax.f32 %v3636, 0.0
      %v3673 = vmax.f32 %v3637, 0.0
      %v3674 = vmax.f32 %v3638, 0.0
      %v3675 = vmax.f32 %v3639, 0.0
      %v3676 = vmax.f32 %v3640, 0.0
      %v3677 = vmax.f32 %v3641, 0.0
      %v3678 = vmax.f32 %v3642, 0.0
      %v3679 = vmax.f32 %v3643, 0.0
      %v3680 = vmax.f32 %v3644, 0.0
      %v3681 = vmax.f32 %v3645, 0.0
      %v3682 = vmax.f32 %v3646, 0.0
      %v3683 = vmax.f32 %v3647, 0.0
      %v3684 = vmax.f32 %v3648, 0.0
      %v3685 = vmax.f32 %v3649, 0.0
      %v3686 = vmax.f32 %v3650, 0.0
      %v3687 = vmax.f32 %v3651, 0.0
      %v3688 = vmax.f32 %v3652, 0.0
      %v3689 = vmax.f32 %v3653, 0.0
      %v3690 = vmax.f32 %v3654, 0.0
      %v3691 = vmax.f32 %v3655, 0.0
      %v3692 = vmax.f32 %v3656, 0.0
      %v3693 = vmax.f32 %v3657, 0.0
      %v3694 = vmax.f32 %v3658, 0.0
      %v3695 = vmax.f32 %v3659, 0.0
      %v3696 = vmax.f32 %v3660, 0.0
      %v3697 = vmax.f32 %v3661, 0.0
      %v3698 = vmax.f32 %v3662, 0.0
      %v3699 = vpack.c.bf16 %v3664, %v3663
      %v3700 = vpack.c.bf16 %v3666, %v3665
      %v3701 = vpack.c.bf16 %v3668, %v3667
      %v3702 = vpack.c.bf16 %v3670, %v3669
      %v3703 = vpack.c.bf16 %v3672, %v3671
      %v3704 = vpack.c.bf16 %v3674, %v3673
      %v3705 = vpack.c.bf16 %v3676, %v3675
      %v3706 = vpack.c.bf16 %v3678, %v3677
      %v3707 = vpack.c.bf16 %v3680, %v3679
      %v3708 = vpack.c.bf16 %v3682, %v3681
      %v3709 = vpack.c.bf16 %v3684, %v3683
      %v3710 = vpack.c.bf16 %v3686, %v3685
      %v3711 = vpack.c.bf16 %v3688, %v3687
      %v3712 = vpack.c.bf16 %v3690, %v3689
      %v3713 = vpack.c.bf16 %v3692, %v3691
      %v3714 = vpack.c.bf16 %v3694, %v3693
      %v3715 = vpack.c.bf16 %v3696, %v3695
      %v3716 = vpack.c.bf16 %v3698, %v3697
      %v3735 = vunpack.c.l.b16 %v3699
      %v3736 = vunpack.c.h.b16 %v3699
      %v3737 = vunpack.c.l.b16 %v3700
      %v3738 = vunpack.c.h.b16 %v3700
      %v3739 = vunpack.c.l.b16 %v3701
      %v3740 = vunpack.c.h.b16 %v3701
      %v3741 = vunpack.c.l.b16 %v3702
      %v3742 = vunpack.c.h.b16 %v3702
      %v3743 = vunpack.c.l.b16 %v3703
      %v3744 = vunpack.c.h.b16 %v3703
      %v3745 = vunpack.c.l.b16 %v3704
      %v3746 = vunpack.c.h.b16 %v3704
      %v3747 = vunpack.c.l.b16 %v3705
      %v3748 = vunpack.c.h.b16 %v3705
      %v3749 = vunpack.c.l.b16 %v3706
      %v3750 = vunpack.c.h.b16 %v3706
      %v3751 = vunpack.c.l.b16 %v3707
      %v3752 = vunpack.c.h.b16 %v3707
      %v3753 = vunpack.c.l.b16 %v3708
      %v3754 = vunpack.c.h.b16 %v3708
      %v3755 = vunpack.c.l.b16 %v3709
      %v3756 = vunpack.c.h.b16 %v3709
      %v3757 = vunpack.c.l.b16 %v3710
      %v3758 = vunpack.c.h.b16 %v3710
      %v3759 = vunpack.c.l.b16 %v3711
      %v3760 = vunpack.c.h.b16 %v3711
      %v3761 = vunpack.c.l.b16 %v3712
      %v3762 = vunpack.c.h.b16 %v3712
      %v3763 = vunpack.c.l.b16 %v3713
      %v3764 = vunpack.c.h.b16 %v3713
      %v3765 = vunpack.c.l.b16 %v3714
      %v3766 = vunpack.c.h.b16 %v3714
      %v3767 = vunpack.c.l.b16 %v3715
      %v3768 = vunpack.c.h.b16 %v3715
      %v3769 = vunpack.c.l.b16 %v3716
      %v3770 = vunpack.c.h.b16 %v3716
      %v3771 = vpack.c.b16 %v3735, %v3735
      %v3772 = vpack.c.b16 %v3736, %v3736
      %v3773 = vpack.c.b16 %v3737, %v3737
      %v3774 = vpack.c.b16 %v3738, %v3738
      %v3775 = vpack.c.b16 %v3739, %v3739
      %v3776 = vpack.c.b16 %v3740, %v3740
      %v3777 = vpack.c.b16 %v3741, %v3741
      %v3778 = vpack.c.b16 %v3742, %v3742
      %v3779 = vpack.c.b16 %v3743, %v3743
      %v3780 = vpack.c.b16 %v3744, %v3744
      %v3781 = vpack.c.b16 %v3745, %v3745
      %v3782 = vpack.c.b16 %v3746, %v3746
      %v3783 = vpack.c.b16 %v3747, %v3747
      %v3784 = vpack.c.b16 %v3748, %v3748
      %v3785 = vpack.c.b16 %v3749, %v3749
      %v3786 = vpack.c.b16 %v3750, %v3750
      %v3787 = vpack.c.b16 %v3751, %v3751
      %v3788 = vpack.c.b16 %v3752, %v3752
      %v3789 = vpack.c.b16 %v3753, %v3753
      %v3790 = vpack.c.b16 %v3754, %v3754
      %v3791 = vpack.c.b16 %v3755, %v3755
      %v3792 = vpack.c.b16 %v3756, %v3756
      %v3793 = vpack.c.b16 %v3757, %v3757
      %v3794 = vpack.c.b16 %v3758, %v3758
      %v3795 = vpack.c.b16 %v3759, %v3759
      %v3796 = vpack.c.b16 %v3760, %v3760
      %v3797 = vpack.c.b16 %v3761, %v3761
      %v3798 = vpack.c.b16 %v3762, %v3762
      %v3799 = vpack.c.b16 %v3763, %v3763
      %v3800 = vpack.c.b16 %v3764, %v3764
      %v3801 = vpack.c.b16 %v3765, %v3765
      %v3802 = vpack.c.b16 %v3766, %v3766
      %v3803 = vpack.c.b16 %v3767, %v3767
      %v3804 = vpack.c.b16 %v3768, %v3768
      %v3805 = vpack.c.b16 %v3769, %v3769
      %v3806 = vpack.c.b16 %v3770, %v3770
      %vm3843 = vcmask 60416
      %3844 = vst.msk [vmem:[%s170] sm:$0xf] %vm3843, %v3771
      %3845 = vst.msk [vmem:[%s170 + $0x4] sm:$0xf] %vm3843, %v3772
      %3846 = vst.msk [vmem:[%s170 + $0x8] sm:$0xf] %vm3843, %v3773
      %3847 = vst.msk [vmem:[%s170 + $0xc] sm:$0xf] %vm3843, %v3774
      %3848 = vst.msk [vmem:[%s170 + $0x10] sm:$0xf] %vm3843, %v3775
      %3849 = vst.msk [vmem:[%s170 + $0x14] sm:$0xf] %vm3843, %v3776
      %3850 = vst.msk [vmem:[%s170 + $0x18] sm:$0xf] %vm3843, %v3777
      %3851 = vst.msk [vmem:[%s170 + $0x1c] sm:$0xf] %vm3843, %v3778
      %3852 = vst.msk [vmem:[%s170 + $0x20] sm:$0xf] %vm3843, %v3779
      %3853 = vst.msk [vmem:[%s170 + $0x24] sm:$0xf] %vm3843, %v3780
      %3854 = vst.msk [vmem:[%s170 + $0x28] sm:$0xf] %vm3843, %v3781
      %3855 = vst.msk [vmem:[%s170 + $0x2c] sm:$0xf] %vm3843, %v3782
      %3856 = vst.msk [vmem:[%s170 + $0x30] sm:$0xf] %vm3843, %v3783
      %3857 = vst.msk [vmem:[%s170 + $0x34] sm:$0xf] %vm3843, %v3784
      %3858 = vst.msk [vmem:[%s170 + $0x38] sm:$0xf] %vm3843, %v3785
      %3859 = vst.msk [vmem:[%s170 + $0x3c] sm:$0xf] %vm3843, %v3786
      %3860 = vst.msk [vmem:[%s170 + $0x40] sm:$0xf] %vm3843, %v3787
      %3861 = vst.msk [vmem:[%s170 + $0x44] sm:$0xf] %vm3843, %v3788
      %3862 = vst.msk [vmem:[%s170 + $0x48] sm:$0xf] %vm3843, %v3789
      %3863 = vst.msk [vmem:[%s170 + $0x4c] sm:$0xf] %vm3843, %v3790
      %3864 = vst.msk [vmem:[%s170 + $0x50] sm:$0xf] %vm3843, %v3791
      %3865 = vst.msk [vmem:[%s170 + $0x54] sm:$0xf] %vm3843, %v3792
      %3866 = vst.msk [vmem:[%s170 + $0x58] sm:$0xf] %vm3843, %v3793
      %3867 = vst.msk [vmem:[%s170 + $0x5c] sm:$0xf] %vm3843, %v3794
      %3868 = vst.msk [vmem:[%s170 + $0x60] sm:$0xf] %vm3843, %v3795
      %3869 = vst.msk [vmem:[%s170 + $0x64] sm:$0xf] %vm3843, %v3796
      %3870 = vst.msk [vmem:[%s170 + $0x68] sm:$0xf] %vm3843, %v3797
      %3871 = vst.msk [vmem:[%s170 + $0x6c] sm:$0xf] %vm3843, %v3798
      %3872 = vst.msk [vmem:[%s170 + $0x70] sm:$0xf] %vm3843, %v3799
      %3873 = vst.msk [vmem:[%s170 + $0x74] sm:$0xf] %vm3843, %v3800
      %3874 = vst.msk [vmem:[%s170 + $0x78] sm:$0xf] %vm3843, %v3801
      %3875 = vst.msk [vmem:[%s170 + $0x7c] sm:$0xf] %vm3843, %v3802
      %3876 = vst.msk [vmem:[%s170 + $0x80] sm:$0xf] %vm3843, %v3803
      %3877 = vst.msk [vmem:[%s170 + $0x84] sm:$0xf] %vm3843, %v3804
      %3878 = vst.msk [vmem:[%s170 + $0x88] sm:$0xf] %vm3843, %v3805
      %3879 = vst.msk [vmem:[%s170 + $0x8c] sm:$0xf] %vm3843, %v3806
      %p3880 = scmp.lt.s32.totalorder %s14, 1
      %s3881 = scalar_select %p3880, %s14, 1
      %s3882 = smul.addr %s3881, 36
      %s3883 = smul.addr %s3882, 4
      %s3884 = scalar_lea.vmem %s3, %s3883
      // Predicated region
      $region33: #{basic_block_tbn_forward.2} parent=31 // pred_check
        %p3885 = pneg %p100
      $region34: #{basic_block_tbn_forward.2} parent=31 // pred_check_branch
        %3887 = sbr.rel (%p3885) target = $region36
      $region35: #{basic_block_tbn_forward.2} parent=31 // pred_region
        _
      $region36: #{basic_block_tbn_forward.2} parent=31 // pred_fallthru
        _
    $region32: #{basic_block_tbn_forward.2} parent=5 // pred_fallthru
      _
    %p3888 = scmp.le.s32.totalorder 2, %s9
    // Predicated region
    $region37: #{basic_block_tbn_forward.2} parent=5 // pred_check
      %p3889 = pneg %p3888
    $region38: #{basic_block_tbn_forward.2} parent=5 // pred_check_branch
      %3891 = sbr.rel (%p3889) target = $region40
    $region39: #{basic_block_tbn_forward.2} parent=5 // pred_region
      %s3892 = ssub.s32 %s9, 2
      // Predicated region
      $region41: #{basic_block_tbn_forward.2} parent=39 // pred_check
        %p3893 = pneg %p106
      $region42: #{basic_block_tbn_forward.2} parent=39 // pred_check_branch
        %3895 = sbr.rel (%p3893) target = $region44
      $region43: #{basic_block_tbn_forward.2} parent=39 // pred_region
        %p3896 = scmp.lt.s32.totalorder %s15, 1
        %s3897 = scalar_select %p3896, %s15, 1
        %s3898 = smul.addr %s3897, 36
        %s3899 = smul.addr %s3898, 4
        %s3900 = scalar_lea.vmem %s3, %s3899
      $region44: #{basic_block_tbn_forward.2} parent=39 // pred_fallthru
        _
    $region40: #{basic_block_tbn_forward.2} parent=5 // pred_fallthru
      _
  $region6: #{basic_block_tbn_forward.2} parent=0 // loop_footer
    %s13 = sadd.s32 1, %s9
  $region7: #{basic_block_tbn_forward.2} parent=0 // loop_footer_branch
    %8 = sbr.rel target = $region3
  $region8: #{basic_block_tbn_forward.2} parent=0 // loop_exit
    _

// kernel: basic_block_tbn_forward.3
$region0: #{basic_block_tbn_forward.3}
  #allocation0 [shape = 'u32[]', space=smem, size = 0x4, offset = 0x4, fixed_abs, tag = 'smem constant byte address 0x4 - core index']
  #allocation1 [shape = 'u32[144,128]{1,0:T(1,128)}', space=vmem, size = 0x12000, scoped, tag = 'internal scratch']
  %s0 = inlined_call_operand.vmem [shape: bf16[2,342,8], index: 0, kind: input, shape index: {}]
  %s1 = inlined_call_operand.vmem [shape: bf16[9,8,8], index: 1, kind: input, shape index: {}]
  %s2 = inlined_call_operand.vmem [shape: f32[1,8], index: 2, kind: input, shape index: {}]
  %s3 = inlined_call_operand.vmem [shape: bf16[2,288,4], index: 3, kind: input, shape index: {}]
  %s4 = inlined_call_operand.vmem [shape: bf16[4,8], index: 4, kind: input, shape index: {}]
  %s5 = inlined_call_operand.vmem [shape: f32[2,288,8], index: 5, kind: output, shape index: {}]
  %s6 = sld [smem:[#allocation0]]
  $region53: #{basic_block_tbn_forward.3} parent=0
    _
  %s8 = ssub.s32 1, %s6
  %s9 = scalar_select 0, %s8, %s6
  loop: start=0, step=1, limit=4
  $region2: #{basic_block_tbn_forward.3} parent=0 // loop_pre_header
    _
  $region3: #{basic_block_tbn_forward.3} parent=0 // loop_header
    %s11 = sphi 0, %s15
    %p12 = scmp.ge.s32.totalorder %s11, 4
    %s21 = sphi 0, %s23
    %s24 = sphi 0, %s21
    %s25 = sphi 0, %s24
    %s41 = sphi 0, %s25
    %s45 = sphi 0, %s45
    %s47 = sphi 0, %s45
    %s48 = sphi 0, %s47
    %s62 = sphi 0, %s48
    %s66 = sphi 0, %s66
    %s68 = sphi 0, %s66
    %s69 = sphi 0, %s68
    %s83 = sphi 0, %s69
    %s89 = sphi 0, %s91
    %s92 = sphi 0, %s89
    %s93 = sphi 0, %s92
    %s109 = sphi 0, %s93
    %s113 = sphi 0, %s113
    %s115 = sphi 0, %s113
    %s116 = sphi 0, %s115
    %s130 = sphi 0, %s116
    %s136 = sphi 0, %s138
    %s139 = sphi 0, %s136
    %s140 = sphi 0, %s139
    %s156 = sphi 0, %s140
  $region4: #{basic_block_tbn_forward.3} parent=0 // loop_header_branch
    %14 = sbr.rel (%p12) target = $region8
  $region5: #{basic_block_tbn_forward.3} parent=0 // loop_body
    %s16 = ssub.s32 %s11, 1
    %s17 = ssub.s32 %s11, 2
    %s18 = sadd.s32 %s11, 1
    %s19 = ssub.s32 %s11, %s18
    %p20 = scmp.eq.s32.totalorder %s19, 0
    %s22 = sadd.s32 %s21, 1
    %s23 = scalar_select %p20, %s21, %s22
    %p26 = pneg %p20
    %p27 = scmp.eq.s32.totalorder %s11, 1
    %p28 = por %p26, %p27
    %p29 = scmp.ne.s32.totalorder %s21, %s24
    %p30 = scmp.eq.s32.totalorder %s11, 0
    %p31 = por %p29, %p30
    %p32 = scmp.ne.s32.totalorder %s21, %s24
    %p33 = scmp.eq.s32.totalorder %s16, 1
    %p34 = por %p32, %p33
    %p35 = scmp.ne.s32.totalorder %s24, %s25
    %p36 = scmp.eq.s32.totalorder %s16, 0
    %p37 = por %p35, %p36
    %p38 = scmp.ne.s32.totalorder %s24, %s25
    %p39 = scmp.eq.s32.totalorder %s17, 1
    %p40 = por %p38, %p39
    %p42 = scmp.ne.s32.totalorder %s25, %s41
    %p43 = scmp.eq.s32.totalorder %s17, 0
    %p44 = por %p42, %p43
    %s46 = sadd.s32 %s45, 1
    %p49 = scmp.eq.s32.totalorder %s11, 1
    %p50 = scmp.ne.s32.totalorder %s45, %s47
    %p51 = scmp.eq.s32.totalorder %s11, 0
    %p52 = por %p50, %p51
    %p53 = scmp.ne.s32.totalorder %s45, %s47
    %p54 = scmp.eq.s32.totalorder %s16, 1
    %p55 = por %p53, %p54
    %p56 = scmp.ne.s32.totalorder %s47, %s48
    %p57 = scmp.eq.s32.totalorder %s16, 0
    %p58 = por %p56, %p57
    %p59 = scmp.ne.s32.totalorder %s47, %s48
    %p60 = scmp.eq.s32.totalorder %s17, 1
    %p61 = por %p59, %p60
    %p63 = scmp.ne.s32.totalorder %s48, %s62
    %p64 = scmp.eq.s32.totalorder %s17, 0
    %p65 = por %p63, %p64
    %s67 = sadd.s32 %s66, 1
    %p70 = scmp.eq.s32.totalorder %s11, 1
    %p71 = scmp.ne.s32.totalorder %s66, %s68
    %p72 = scmp.eq.s32.totalorder %s11, 0
    %p73 = por %p71, %p72
    %p74 = scmp.ne.s32.totalorder %s66, %s68
    %p75 = scmp.eq.s32.totalorder %s16, 1
    %p76 = por %p74, %p75
    %p77 = scmp.ne.s32.totalorder %s68, %s69
    %p78 = scmp.eq.s32.totalorder %s16, 0
    %p79 = por %p77, %p78
    %p80 = scmp.ne.s32.totalorder %s68, %s69
    %p81 = scmp.eq.s32.totalorder %s17, 1
    %p82 = por %p80, %p81
    %p84 = scmp.ne.s32.totalorder %s69, %s83
    %p85 = scmp.eq.s32.totalorder %s17, 0
    %p86 = por %p84, %p85
    %s87 = ssub.s32 %s11, %s18
    %p88 = scmp.eq.s32.totalorder %s87, 0
    %s90 = sadd.s32 %s89, 1
    %s91 = scalar_select %p88, %s89, %s90
    %p94 = pneg %p88
    %p95 = scmp.eq.s32.totalorder %s11, 1
    %p96 = por %p94, %p95
    %p97 = scmp.ne.s32.totalorder %s89, %s92
    %p98 = scmp.eq.s32.totalorder %s11, 0
    %p99 = por %p97, %p98
    %p100 = scmp.ne.s32.totalorder %s89, %s92
    %p101 = scmp.eq.s32.totalorder %s16, 1
    %p102 = por %p100, %p101
    %p103 = scmp.ne.s32.totalorder %s92, %s93
    %p104 = scmp.eq.s32.totalorder %s16, 0
    %p105 = por %p103, %p104
    %p106 = scmp.ne.s32.totalorder %s92, %s93
    %p107 = scmp.eq.s32.totalorder %s17, 1
    %p108 = por %p106, %p107
    %p110 = scmp.ne.s32.totalorder %s93, %s109
    %p111 = scmp.eq.s32.totalorder %s17, 0
    %p112 = por %p110, %p111
    %s114 = sadd.s32 %s113, 1
    %p117 = scmp.eq.s32.totalorder %s11, 1
    %p118 = scmp.ne.s32.totalorder %s113, %s115
    %p119 = scmp.eq.s32.totalorder %s11, 0
    %p120 = por %p118, %p119
    %p121 = scmp.ne.s32.totalorder %s113, %s115
    %p122 = scmp.eq.s32.totalorder %s16, 1
    %p123 = por %p121, %p122
    %p124 = scmp.ne.s32.totalorder %s115, %s116
    %p125 = scmp.eq.s32.totalorder %s16, 0
    %p126 = por %p124, %p125
    %p127 = scmp.ne.s32.totalorder %s115, %s116
    %p128 = scmp.eq.s32.totalorder %s17, 1
    %p129 = por %p127, %p128
    %p131 = scmp.ne.s32.totalorder %s116, %s130
    %p132 = scmp.eq.s32.totalorder %s17, 0
    %p133 = por %p131, %p132
    %s134 = ssub.s32 %s11, %s18
    %p135 = scmp.eq.s32.totalorder %s134, 0
    %s137 = sadd.s32 %s136, 1
    %s138 = scalar_select %p135, %s136, %s137
    %p141 = pneg %p135
    %p142 = scmp.eq.s32.totalorder %s11, 1
    %p143 = por %p141, %p142
    %p144 = scmp.ne.s32.totalorder %s136, %s139
    %p145 = scmp.eq.s32.totalorder %s11, 0
    %p146 = por %p144, %p145
    %p147 = scmp.ne.s32.totalorder %s136, %s139
    %p148 = scmp.eq.s32.totalorder %s16, 1
    %p149 = por %p147, %p148
    %p150 = scmp.ne.s32.totalorder %s139, %s140
    %p151 = scmp.eq.s32.totalorder %s16, 0
    %p152 = por %p150, %p151
    %p153 = scmp.ne.s32.totalorder %s139, %s140
    %p154 = scmp.eq.s32.totalorder %s17, 1
    %p155 = por %p153, %p154
    %p157 = scmp.ne.s32.totalorder %s140, %s156
    %p158 = scmp.eq.s32.totalorder %s17, 0
    %p159 = por %p157, %p158
    %p160 = scmp.le.s32.totalorder 1, %s11
    %p161 = scmp.lt.s32.totalorder %s11, 3
    %p162 = pnand %p160, %p161
    %p163 = pneg %p162
    // Predicated region
    $region9: #{basic_block_tbn_forward.3} parent=5 // pred_check
      _
    $region10: #{basic_block_tbn_forward.3} parent=5 // pred_check_branch
      %165 = sbr.rel (%p162) target = $region12
    $region11: #{basic_block_tbn_forward.3} parent=5 // pred_region
      %s166 = ssub.s32 %s11, 1
      // Predicated region
      $region13: #{basic_block_tbn_forward.3} parent=11 // pred_check
        %p167 = pneg %p58
      $region14: #{basic_block_tbn_forward.3} parent=11 // pred_check_branch
        %169 = sbr.rel (%p167) target = $region16
      $region15: #{basic_block_tbn_forward.3} parent=11 // pred_region
        _
      $region16: #{basic_block_tbn_forward.3} parent=11 // pred_fallthru
        _
      // Predicated region
      $region17: #{basic_block_tbn_forward.3} parent=11 // pred_check
        %p170 = pneg %p79
      $region18: #{basic_block_tbn_forward.3} parent=11 // pred_check_branch
        %172 = sbr.rel (%p170) target = $region20
      $region19: #{basic_block_tbn_forward.3} parent=11 // pred_region
        _
      $region20: #{basic_block_tbn_forward.3} parent=11 // pred_fallthru
        _
      // Predicated region
      $region21: #{basic_block_tbn_forward.3} parent=11 // pred_check
        %p173 = pneg %p126
      $region22: #{basic_block_tbn_forward.3} parent=11 // pred_check_branch
        %175 = sbr.rel (%p173) target = $region24
      $region23: #{basic_block_tbn_forward.3} parent=11 // pred_region
        _
      $region24: #{basic_block_tbn_forward.3} parent=11 // pred_fallthru
        _
    $region12: #{basic_block_tbn_forward.3} parent=5 // pred_fallthru
      _
    %p176 = scmp.lt.s32.totalorder %s11, 2
    // Predicated region
    $region25: #{basic_block_tbn_forward.3} parent=5 // pred_check
      %p177 = pneg %p176
    $region26: #{basic_block_tbn_forward.3} parent=5 // pred_check_branch
      %179 = sbr.rel (%p177) target = $region28
    $region27: #{basic_block_tbn_forward.3} parent=5 // pred_region
      // Predicated region
      $region29: #{basic_block_tbn_forward.3} parent=27 // pred_check
        %p180 = pneg %p31
      $region30: #{basic_block_tbn_forward.3} parent=27 // pred_check_branch
        %182 = sbr.rel (%p180) target = $region32
      $region31: #{basic_block_tbn_forward.3} parent=27 // pred_region
        %p183 = scmp.lt.s32.totalorder %s11, 1
        %s184 = scalar_select %p183, %s11, 1
        %s185 = smul.addr %s184, 43
        %s186 = smul.addr %s185, 4
        %s187 = scalar_lea.vmem %s0, %s186
      $region32: #{basic_block_tbn_forward.3} parent=27 // pred_fallthru
        _
      // Predicated region
      $region33: #{basic_block_tbn_forward.3} parent=27 // pred_check
        %p188 = pneg %p99
      $region34: #{basic_block_tbn_forward.3} parent=27 // pred_check_branch
        %190 = sbr.rel (%p188) target = $region36
      $region35: #{basic_block_tbn_forward.3} parent=27 // pred_region
        %p191 = scmp.lt.s32.totalorder %s11, 1
        %s192 = scalar_select %p191, %s11, 1
        %s193 = smul.addr %s192, 36
        %s194 = smul.addr %s193, 4
        %s195 = scalar_lea.vmem %s3, %s194
      $region36: #{basic_block_tbn_forward.3} parent=27 // pred_fallthru
        _
    $region28: #{basic_block_tbn_forward.3} parent=5 // pred_fallthru
      _
    %p196 = scmp.le.s32.totalorder 1, %s11
    %p197 = scmp.lt.s32.totalorder %s11, 3
    %p198 = pnand %p196, %p197
    %p199 = pneg %p198
    // Predicated region
    $region37: #{basic_block_tbn_forward.3} parent=5 // pred_check
      _
    $region38: #{basic_block_tbn_forward.3} parent=5 // pred_check_branch
      %201 = sbr.rel (%p198) target = $region40
    $region39: #{basic_block_tbn_forward.3} parent=5 // pred_region
      %s202 = ssub.s32 %s11, 1
      %p203 = scmp.lt.s32.totalorder %s16, 1
      %s204 = scalar_select %p203, %s16, 1
      %s205 = smul.addr %s204, 43
      %s206 = smul.addr %s205, 4
      %s207 = scalar_lea.vmem %s0, %s206
      %p208 = pneg %p37
      %p209 = pneg %p34
      %p210 = pneg %p58
      %p211 = pneg %p55
      %p212 = pneg %p79
      %p213 = pneg %p76
      %p214 = scmp.lt.s32.totalorder %s16, 1
      %s215 = scalar_select %p214, %s16, 1
      %s216 = smul.addr %s215, 36
      %s217 = smul.addr %s216, 4
      %s218 = scalar_lea.vmem %s3, %s217
      %p219 = pneg %p105
      %p220 = pneg %p102
      %p221 = pneg %p126
      %p222 = pneg %p123
      %p223 = pneg %p152
      %p224 = pneg %p149
      %p225 = scmp.lt.s32.totalorder %s16, 1
      %s226 = scalar_select %p225, %s16, 1
      %s227 = smul.addr %s226, 36
      %s228 = smul.addr %s227, 8
      %s229 = scalar_lea.vmem %s5, %s228
      %p230 = scmp.lt.s32.totalorder %s16, 1
      %s231 = scalar_select %p230, %s16, 1
      %s232 = smul.addr %s231, 43
      %s233 = smul.addr %s232, 4
      %s234 = scalar_lea.vmem %s0, %s233
      %p235 = scmp.lt.s32.totalorder %s16, 1
      %s236 = scalar_select %p235, %s16, 1
      %s237 = smul.addr %s236, 36
      %s238 = smul.addr %s237, 4
      %s239 = scalar_lea.vmem %s3, %s238
      %p240 = scmp.lt.s32.totalorder %s16, 1
      %s241 = scalar_select %p240, %s16, 1
      %s242 = smul.addr %s241, 36
      %s243 = smul.addr %s242, 8
      %s244 = scalar_lea.vmem %s5, %s243
      %v246 = vld [vmem:[%s234] sm:$0xf]
      %v247 = vld [vmem:[%s234 + $0x4] sm:$0xf]
      %v248 = vld [vmem:[%s234 + $0x8] sm:$0xf]
      %v249 = vld [vmem:[%s234 + $0xc] sm:$0xf]
      %v250 = vld [vmem:[%s234 + $0x10] sm:$0xf]
      %v251 = vld [vmem:[%s234 + $0x14] sm:$0xf]
      %v252 = vld [vmem:[%s234 + $0x18] sm:$0xf]
      %v253 = vld [vmem:[%s234 + $0x1c] sm:$0xf]
      %v254 = vld [vmem:[%s234 + $0x20] sm:$0xf]
      %v255 = vld [vmem:[%s234 + $0x24] sm:$0xf]
      %v256 = vld [vmem:[%s234 + $0x28] sm:$0xf]
      %v257 = vld [vmem:[%s234 + $0x2c] sm:$0xf]
      %v258 = vld [vmem:[%s234 + $0x30] sm:$0xf]
      %v259 = vld [vmem:[%s234 + $0x34] sm:$0xf]
      %v260 = vld [vmem:[%s234 + $0x38] sm:$0xf]
      %v261 = vld [vmem:[%s234 + $0x3c] sm:$0xf]
      %v262 = vld [vmem:[%s234 + $0x40] sm:$0xf]
      %v263 = vld [vmem:[%s234 + $0x44] sm:$0xf]
      %v264 = vld [vmem:[%s234 + $0x48] sm:$0xf]
      %v265 = vld [vmem:[%s234 + $0x4c] sm:$0xf]
      %v266 = vld [vmem:[%s234 + $0x50] sm:$0xf]
      %v267 = vld [vmem:[%s234 + $0x54] sm:$0xf]
      %v268 = vld [vmem:[%s234 + $0x58] sm:$0xf]
      %v269 = vld [vmem:[%s234 + $0x5c] sm:$0xf]
      %v270 = vld [vmem:[%s234 + $0x60] sm:$0xf]
      %v271 = vld [vmem:[%s234 + $0x64] sm:$0xf]
      %v272 = vld [vmem:[%s234 + $0x68] sm:$0xf]
      %v273 = vld [vmem:[%s234 + $0x6c] sm:$0xf]
      %v274 = vld [vmem:[%s234 + $0x70] sm:$0xf]
      %v275 = vld [vmem:[%s234 + $0x74] sm:$0xf]
      %v276 = vld [vmem:[%s234 + $0x78] sm:$0xf]
      %v277 = vld [vmem:[%s234 + $0x7c] sm:$0xf]
      %v278 = vld [vmem:[%s234 + $0x80] sm:$0xf]
      %v279 = vld [vmem:[%s234 + $0x84] sm:$0xf]
      %v280 = vld [vmem:[%s234 + $0x88] sm:$0xf]
      %v281 = vld [vmem:[%s234 + $0x8c] sm:$0xf]
      %v282 = vld [vmem:[%s1] sm:$0xf]
      %v283 = vld [vmem:[%s234 + $0x90] sm:$0x1]
      %s284 = scalar_lea.vmem %s1, 4
      %v285 = vld [vmem:[%s284] sm:$0xf]
      %v323 = vunpack.c.l.b16 %v246
      %v324 = vunpack.c.l.b16 %v247
      %v325 = vunpack.c.l.b16 %v248
      %v326 = vunpack.c.l.b16 %v249
      %v327 = vunpack.c.l.b16 %v250
      %v328 = vunpack.c.l.b16 %v251
      %v329 = vunpack.c.l.b16 %v252
      %v330 = vunpack.c.l.b16 %v253
      %v331 = vunpack.c.l.b16 %v254
      %v332 = vunpack.c.l.b16 %v255
      %v333 = vunpack.c.l.b16 %v256
      %v334 = vunpack.c.l.b16 %v257
      %v335 = vunpack.c.l.b16 %v258
      %v336 = vunpack.c.l.b16 %v259
      %v337 = vunpack.c.l.b16 %v260
      %v338 = vunpack.c.l.b16 %v261
      %v339 = vunpack.c.l.b16 %v262
      %v340 = vunpack.c.l.b16 %v263
      %v341 = vunpack.c.l.b16 %v264
      %v342 = vunpack.c.l.b16 %v265
      %v343 = vunpack.c.l.b16 %v266
      %v344 = vunpack.c.l.b16 %v267
      %v345 = vunpack.c.l.b16 %v268
      %v346 = vunpack.c.l.b16 %v269
      %v347 = vunpack.c.l.b16 %v270
      %v348 = vunpack.c.l.b16 %v271
      %v349 = vunpack.c.l.b16 %v272
      %v350 = vunpack.c.l.b16 %v273
      %v351 = vunpack.c.l.b16 %v274
      %v352 = vunpack.c.l.b16 %v275
      %v353 = vunpack.c.l.b16 %v276
      %v354 = vunpack.c.l.b16 %v277
      %v355 = vunpack.c.l.b16 %v278
      %v356 = vunpack.c.l.b16 %v279
      %v357 = vunpack.c.l.b16 %v280
      %v358 = vunpack.c.l.b16 %v281
      %v359 = vunpack.c.l.b16 %v283
      %v360 = vpack.c.b16 %v324, %v323
      %v361 = vpack.c.b16 %v326, %v325
      %v362 = vpack.c.b16 %v328, %v327
      %v363 = vpack.c.b16 %v330, %v329
      %v364 = vpack.c.b16 %v332, %v331
      %v365 = vpack.c.b16 %v334, %v333
      %v366 = vpack.c.b16 %v336, %v335
      %v367 = vpack.c.b16 %v338, %v337
      %v368 = vpack.c.b16 %v340, %v339
      %v369 = vpack.c.b16 %v342, %v341
      %v370 = vpack.c.b16 %v344, %v343
      %v371 = vpack.c.b16 %v346, %v345
      %v372 = vpack.c.b16 %v348, %v347
      %v373 = vpack.c.b16 %v350, %v349
      %v374 = vpack.c.b16 %v352, %v351
      %v375 = vpack.c.b16 %v354, %v353
      %v376 = vpack.c.b16 %v356, %v355
      %v377 = vpack.c.b16 %v358, %v357
      %v378 = vpack.c.b16 %v359, %v359
      %vm379 = vsmask.f32 7424
      %v381 = vshrl.u32 %v360, 16
      %v383 = vshll.u32 %v360, 16
      %v385 = vrot.slane %v383, 1
      %v386 = vor.u32 %v381, %v385
      %v388 = vshll.u32 %v361, 16
      %v390 = vrot.slane %v388, 1
      %v391 = vsel %vm379, %v386, %v390
      %v392 = vshrl.u32 %v361, 16
      %v394 = vor.u32 %v392, %v390
      %v396 = vshll.u32 %v362, 16
      %v398 = vrot.slane %v396, 1
      %v399 = vsel %vm379, %v394, %v398
      %v400 = vshrl.u32 %v362, 16
      %v402 = vor.u32 %v400, %v398
      %v404 = vshll.u32 %v363, 16
      %v406 = vrot.slane %v404, 1
      %v407 = vsel %vm379, %v402, %v406
      %v408 = vshrl.u32 %v363, 16
      %v410 = vor.u32 %v408, %v406
      %v412 = vshll.u32 %v364, 16
      %v414 = vrot.slane %v412, 1
      %v415 = vsel %vm379, %v410, %v414
      %v416 = vshrl.u32 %v364, 16
      %v418 = vor.u32 %v416, %v414
      %v420 = vshll.u32 %v365, 16
      %v422 = vrot.slane %v420, 1
      %v423 = vsel %vm379, %v418, %v422
      %v424 = vshrl.u32 %v365, 16
      %v426 = vor.u32 %v424, %v422
      %v428 = vshll.u32 %v366, 16
      %v430 = vrot.slane %v428, 1
      %v431 = vsel %vm379, %v426, %v430
      %v432 = vshrl.u32 %v366, 16
      %v434 = vor.u32 %v432, %v430
      %v436 = vshll.u32 %v367, 16
      %v438 = vrot.slane %v436, 1
      %v439 = vsel %vm379, %v434, %v438
      %v440 = vshrl.u32 %v367, 16
      %v442 = vor.u32 %v440, %v438
      %v444 = vshll.u32 %v368, 16
      %v446 = vrot.slane %v444, 1
      %v447 = vsel %vm379, %v442, %v446
      %v448 = vshrl.u32 %v368, 16
      %v450 = vor.u32 %v448, %v446
      %v452 = vshll.u32 %v369, 16
      %v454 = vrot.slane %v452, 1
      %v455 = vsel %vm379, %v450, %v454
      %v456 = vshrl.u32 %v369, 16
      %v458 = vor.u32 %v456, %v454
      %v460 = vshll.u32 %v370, 16
      %v462 = vrot.slane %v460, 1
      %v463 = vsel %vm379, %v458, %v462
      %v464 = vshrl.u32 %v370, 16
      %v466 = vor.u32 %v464, %v462
      %v468 = vshll.u32 %v371, 16
      %v470 = vrot.slane %v468, 1
      %v471 = vsel %vm379, %v466, %v470
      %v472 = vshrl.u32 %v371, 16
      %v474 = vor.u32 %v472, %v470
      %v476 = vshll.u32 %v372, 16
      %v478 = vrot.slane %v476, 1
      %v479 = vsel %vm379, %v474, %v478
      %v480 = vshrl.u32 %v372, 16
      %v482 = vor.u32 %v480, %v478
      %v484 = vshll.u32 %v373, 16
      %v486 = vrot.slane %v484, 1
      %v487 = vsel %vm379, %v482, %v486
      %v488 = vshrl.u32 %v373, 16
      %v490 = vor.u32 %v488, %v486
      %v492 = vshll.u32 %v374, 16
      %v494 = vrot.slane %v492, 1
      %v495 = vsel %vm379, %v490, %v494
      %v496 = vshrl.u32 %v374, 16
      %v498 = vor.u32 %v496, %v494
      %v500 = vshll.u32 %v375, 16
      %v502 = vrot.slane %v500, 1
      %v503 = vsel %vm379, %v498, %v502
      %v504 = vshrl.u32 %v375, 16
      %v506 = vor.u32 %v504, %v502
      %v508 = vshll.u32 %v376, 16
      %v510 = vrot.slane %v508, 1
      %v511 = vsel %vm379, %v506, %v510
      %v512 = vshrl.u32 %v376, 16
      %v514 = vor.u32 %v512, %v510
      %v516 = vshll.u32 %v377, 16
      %v518 = vrot.slane %v516, 1
      %v519 = vsel %vm379, %v514, %v518
      %v520 = vshrl.u32 %v377, 16
      %v522 = vor.u32 %v520, %v518
      %v524 = vshll.u32 %v378, 16
      %v526 = vrot.slane %v524, 1
      %v527 = vsel %vm379, %v522, %v526
      %vm528 = vcmask 64512
      %v530 = vsel %vm528, %v391, 0
      %v533 = vsel %vm528, %v399, 0
      %v536 = vsel %vm528, %v407, 0
      %v539 = vsel %vm528, %v415, 0
      %v542 = vsel %vm528, %v423, 0
      %v545 = vsel %vm528, %v431, 0
      %v548 = vsel %vm528, %v439, 0
      %v551 = vsel %vm528, %v447, 0
      %v554 = vsel %vm528, %v455, 0
      %v557 = vsel %vm528, %v463, 0
      %v560 = vsel %vm528, %v471, 0
      %v563 = vsel %vm528, %v479, 0
      %v566 = vsel %vm528, %v487, 0
      %v569 = vsel %vm528, %v495, 0
      %v572 = vsel %vm528, %v503, 0
      %v575 = vsel %vm528, %v511, 0
      %v578 = vsel %vm528, %v519, 0
      %v581 = vsel %vm528, %v527, 0
      %vm583 = vcmask 1043456
      %v585 = vsel %vm583, %v285, 0
      %587 = vmatprep.subr.bf16.mxu0 0
      %588 = vmatpush1.bf16.msra.mxu0 0
      %589 = vmatprep.subr.bf16.mxu0 0
      %590 = vmatpush1.bf16.msra.mxu0 0
      %591 = vmatprep.subr.bf16.mxu0 0
      %592 = vmatpush1.bf16.msra.mxu0 0
      %593 = vmatprep.subr.bf16.mxu0 0
      %594 = vmatpush1.bf16.msra.mxu0 0
      %595 = vmatprep.subr.bf16.mxu0 0
      %596 = vmatpush1.bf16.msra.mxu0 0
      %597 = vmatprep.subr.bf16.mxu0 0
      %598 = vmatpush1.bf16.msra.mxu0 0
      %599 = vmatprep.subr.bf16.mxu0 0
      %600 = vmatpush1.bf16.msra.mxu0 0
      %601 = vmatprep.subr.bf16.mxu0 0
      %602 = vmatpush1.bf16.msra.mxu0 %v585
      %603 = vmatprep.subr.bf16.mxu0 0
      %604 = vmatpush2.bf16.msra.mxu0 0
      %605 = vmatprep.subr.bf16.mxu0 0
      %606 = vmatpush2.bf16.msra.mxu0 0
      %607 = vmatprep.subr.bf16.mxu0 0
      %608 = vmatpush2.bf16.msra.mxu0 0
      %609 = vmatprep.subr.bf16.mxu0 0
      %610 = vmatpush2.bf16.msra.mxu0 0
      %611 = vmatprep.subr.bf16.mxu0 0
      %612 = vmatpush2.bf16.msra.mxu0 0
      %613 = vmatprep.subr.bf16.mxu0 0
      %614 = vmatpush2.bf16.msra.mxu0 0
      %615 = vmatprep.subr.bf16.mxu0 0
      %616 = vmatpush2.bf16.msra.mxu0 0
      %617 = vmatprep.subr.bf16.mxu0 0
      %618 = vmatpush2.bf16.msra.mxu0 0
      %619 = vmatprep.mubr.bf16.mxu0 0
      %620 = vmatmul.mubr.bf16.gmra.mxu0 %v530
      %v621 = vpop.f32.mrf.mxu0
      %v622 = vadd.f32 0.0, %v621
      %v623 = vpop.f32.mrf.mxu0
      %v624 = vpop.f32.mrf.mxu0
      %v625 = vadd.f32 0.0, %v624
      %v626 = vpop.f32.mrf.mxu0
      %627 = vmatprep.mubr.bf16.mxu0 0
      %628 = vmatmul.mubr.bf16.gmra.mxu0 %v533
      %v629 = vpop.f32.mrf.mxu0
      %v630 = vadd.f32 0.0, %v629
      %v631 = vpop.f32.mrf.mxu0
      %v632 = vpop.f32.mrf.mxu0
      %v633 = vadd.f32 0.0, %v632
      %v634 = vpop.f32.mrf.mxu0
      %635 = vmatprep.mubr.bf16.mxu0 0
      %636 = vmatmul.mubr.bf16.gmra.mxu0 %v536
      %v637 = vpop.f32.mrf.mxu0
      %v638 = vadd.f32 0.0, %v637
      %v639 = vpop.f32.mrf.mxu0
      %v640 = vpop.f32.mrf.mxu0
      %v641 = vadd.f32 0.0, %v640
      %v642 = vpop.f32.mrf.mxu0
      %643 = vmatprep.mubr.bf16.mxu0 0
      %644 = vmatmul.mubr.bf16.gmra.mxu0 %v539
      %v645 = vpop.f32.mrf.mxu0
      %v646 = vadd.f32 0.0, %v645
      %v647 = vpop.f32.mrf.mxu0
      %v648 = vpop.f32.mrf.mxu0
      %v649 = vadd.f32 0.0, %v648
      %v650 = vpop.f32.mrf.mxu0
      %651 = vmatprep.mubr.bf16.mxu0 0
      %652 = vmatmul.mubr.bf16.gmra.mxu0 %v542
      %v653 = vpop.f32.mrf.mxu0
      %v654 = vadd.f32 0.0, %v653
      %v655 = vpop.f32.mrf.mxu0
      %v656 = vpop.f32.mrf.mxu0
      %v657 = vadd.f32 0.0, %v656
      %v658 = vpop.f32.mrf.mxu0
      %659 = vmatprep.mubr.bf16.mxu0 0
      %660 = vmatmul.mubr.bf16.gmra.mxu0 %v545
      %v661 = vpop.f32.mrf.mxu0
      %v662 = vadd.f32 0.0, %v661
      %v663 = vpop.f32.mrf.mxu0
      %v664 = vpop.f32.mrf.mxu0
      %v665 = vadd.f32 0.0, %v664
      %v666 = vpop.f32.mrf.mxu0
      %667 = vmatprep.mubr.bf16.mxu0 0
      %668 = vmatmul.mubr.bf16.gmra.mxu0 %v548
      %v669 = vpop.f32.mrf.mxu0
      %v670 = vadd.f32 0.0, %v669
      %v671 = vpop.f32.mrf.mxu0
      %v672 = vpop.f32.mrf.mxu0
      %v673 = vadd.f32 0.0, %v672
      %v674 = vpop.f32.mrf.mxu0
      %675 = vmatprep.mubr.bf16.mxu0 0
      %676 = vmatmul.mubr.bf16.gmra.mxu0 %v551
      %v677 = vpop.f32.mrf.mxu0
      %v678 = vadd.f32 0.0, %v677
      %v679 = vpop.f32.mrf.mxu0
      %v680 = vpop.f32.mrf.mxu0
      %v681 = vadd.f32 0.0, %v680
      %v682 = vpop.f32.mrf.mxu0
      %683 = vmatprep.mubr.bf16.mxu0 0
      %684 = vmatmul.mubr.bf16.gmra.mxu0 %v554
      %v685 = vpop.f32.mrf.mxu0
      %v686 = vadd.f32 0.0, %v685
      %v687 = vpop.f32.mrf.mxu0
      %v688 = vpop.f32.mrf.mxu0
      %v689 = vadd.f32 0.0, %v688
      %v690 = vpop.f32.mrf.mxu0
      %691 = vmatprep.mubr.bf16.mxu0 0
      %692 = vmatmul.mubr.bf16.gmra.mxu0 %v557
      %v693 = vpop.f32.mrf.mxu0
      %v694 = vadd.f32 0.0, %v693
      %v695 = vpop.f32.mrf.mxu0
      %v696 = vpop.f32.mrf.mxu0
      %v697 = vadd.f32 0.0, %v696
      %v698 = vpop.f32.mrf.mxu0
      %699 = vmatprep.mubr.bf16.mxu0 0
      %700 = vmatmul.mubr.bf16.gmra.mxu0 %v560
      %v701 = vpop.f32.mrf.mxu0
      %v702 = vadd.f32 0.0, %v701
      %v703 = vpop.f32.mrf.mxu0
      %v704 = vpop.f32.mrf.mxu0
      %v705 = vadd.f32 0.0, %v704
      %v706 = vpop.f32.mrf.mxu0
      %707 = vmatprep.mubr.bf16.mxu0 0
      %708 = vmatmul.mubr.bf16.gmra.mxu0 %v563
      %v709 = vpop.f32.mrf.mxu0
      %v710 = vadd.f32 0.0, %v709
      %v711 = vpop.f32.mrf.mxu0
      %v712 = vpop.f32.mrf.mxu0
      %v713 = vadd.f32 0.0, %v712
      %v714 = vpop.f32.mrf.mxu0
      %715 = vmatprep.mubr.bf16.mxu0 0
      %716 = vmatmul.mubr.bf16.gmra.mxu0 %v566
      %v717 = vpop.f32.mrf.mxu0
      %v718 = vadd.f32 0.0, %v717
      %v719 = vpop.f32.mrf.mxu0
      %v720 = vpop.f32.mrf.mxu0
      %v721 = vadd.f32 0.0, %v720
      %v722 = vpop.f32.mrf.mxu0
      %723 = vmatprep.mubr.bf16.mxu0 0
      %724 = vmatmul.mubr.bf16.gmra.mxu0 %v569
      %v725 = vpop.f32.mrf.mxu0
      %v726 = vadd.f32 0.0, %v725
      %v727 = vpop.f32.mrf.mxu0
      %v728 = vpop.f32.mrf.mxu0
      %v729 = vadd.f32 0.0, %v728
      %v730 = vpop.f32.mrf.mxu0
      %731 = vmatprep.mubr.bf16.mxu0 0
      %732 = vmatmul.mubr.bf16.gmra.mxu0 %v572
      %v733 = vpop.f32.mrf.mxu0
      %v734 = vadd.f32 0.0, %v733
      %v735 = vpop.f32.mrf.mxu0
      %v736 = vpop.f32.mrf.mxu0
      %v737 = vadd.f32 0.0, %v736
      %v738 = vpop.f32.mrf.mxu0
      %739 = vmatprep.mubr.bf16.mxu0 0
      %740 = vmatmul.mubr.bf16.gmra.mxu0 %v575
      %v741 = vpop.f32.mrf.mxu0
      %v742 = vadd.f32 0.0, %v741
      %v743 = vpop.f32.mrf.mxu0
      %v744 = vpop.f32.mrf.mxu0
      %v745 = vadd.f32 0.0, %v744
      %v746 = vpop.f32.mrf.mxu0
      %747 = vmatprep.mubr.bf16.mxu0 0
      %748 = vmatmul.mubr.bf16.gmra.mxu0 %v578
      %v749 = vpop.f32.mrf.mxu0
      %v750 = vadd.f32 0.0, %v749
      %v751 = vpop.f32.mrf.mxu0
      %v752 = vpop.f32.mrf.mxu0
      %v753 = vadd.f32 0.0, %v752
      %v754 = vpop.f32.mrf.mxu0
      %755 = vmatprep.mubr.bf16.mxu0 0
      %756 = vmatmul.mubr.bf16.gmra.mxu0 %v581
      %v757 = vpop.f32.mrf.mxu0
      %v758 = vadd.f32 0.0, %v757
      %v759 = vpop.f32.mrf.mxu0
      %v760 = vpop.f32.mrf.mxu0
      %v761 = vadd.f32 0.0, %v760
      %v762 = vpop.f32.mrf.mxu0
      %763 = vdwg.mxu0
      %v764 = vsel %vm528, %v360, 0
      %v766 = vsel %vm528, %v361, 0
      %v768 = vsel %vm528, %v362, 0
      %v770 = vsel %vm528, %v363, 0
      %v772 = vsel %vm528, %v364, 0
      %v774 = vsel %vm528, %v365, 0
      %v776 = vsel %vm528, %v366, 0
      %v778 = vsel %vm528, %v367, 0
      %v780 = vsel %vm528, %v368, 0
      %v782 = vsel %vm528, %v369, 0
      %v784 = vsel %vm528, %v370, 0
      %v786 = vsel %vm528, %v371, 0
      %v788 = vsel %vm528, %v372, 0
      %v790 = vsel %vm528, %v373, 0
      %v792 = vsel %vm528, %v374, 0
      %v794 = vsel %vm528, %v375, 0
      %v796 = vsel %vm528, %v376, 0
      %v798 = vsel %vm528, %v377, 0
      %v801 = vsel %vm583, %v282, 0
      %803 = vmatprep.subr.bf16.mxu0 0
      %804 = vmatpush1.bf16.msra.mxu0 0
      %805 = vmatprep.subr.bf16.mxu0 0
      %806 = vmatpush1.bf16.msra.mxu0 0
      %807 = vmatprep.subr.bf16.mxu0 0
      %808 = vmatpush1.bf16.msra.mxu0 0
      %809 = vmatprep.subr.bf16.mxu0 0
      %810 = vmatpush1.bf16.msra.mxu0 0
      %811 = vmatprep.subr.bf16.mxu0 0
      %812 = vmatpush1.bf16.msra.mxu0 0
      %813 = vmatprep.subr.bf16.mxu0 0
      %814 = vmatpush1.bf16.msra.mxu0 0
      %815 = vmatprep.subr.bf16.mxu0 0
      %816 = vmatpush1.bf16.msra.mxu0 0
      %817 = vmatprep.subr.bf16.mxu0 0
      %818 = vmatpush1.bf16.msra.mxu0 %v801
      %819 = vmatprep.subr.bf16.mxu0 0
      %820 = vmatpush2.bf16.msra.mxu0 0
      %821 = vmatprep.subr.bf16.mxu0 0
      %822 = vmatpush2.bf16.msra.mxu0 0
      %823 = vmatprep.subr.bf16.mxu0 0
      %824 = vmatpush2.bf16.msra.mxu0 0
      %825 = vmatprep.subr.bf16.mxu0 0
      %826 = vmatpush2.bf16.msra.mxu0 0
      %827 = vmatprep.subr.bf16.mxu0 0
      %828 = vmatpush2.bf16.msra.mxu0 0
      %829 = vmatprep.subr.bf16.mxu0 0
      %830 = vmatpush2.bf16.msra.mxu0 0
      %831 = vmatprep.subr.bf16.mxu0 0
      %832 = vmatpush2.bf16.msra.mxu0 0
      %833 = vmatprep.subr.bf16.mxu0 0
      %834 = vmatpush2.bf16.msra.mxu0 0
      %835 = vmatprep.mubr.bf16.mxu0 0
      %836 = vmatmul.mubr.bf16.gmra.mxu0 %v764
      %v837 = vpop.f32.mrf.mxu0
      %v838 = vadd.f32 %v622, %v837
      %v839 = vpop.f32.mrf.mxu0
      %v840 = vpop.f32.mrf.mxu0
      %v841 = vadd.f32 %v625, %v840
      %v842 = vpop.f32.mrf.mxu0
      %843 = vmatprep.mubr.bf16.mxu0 0
      %844 = vmatmul.mubr.bf16.gmra.mxu0 %v766
      %v845 = vpop.f32.mrf.mxu0
      %v846 = vadd.f32 %v630, %v845
      %v847 = vpop.f32.mrf.mxu0
      %v848 = vpop.f32.mrf.mxu0
      %v849 = vadd.f32 %v633, %v848
      %v850 = vpop.f32.mrf.mxu0
      %851 = vmatprep.mubr.bf16.mxu0 0
      %852 = vmatmul.mubr.bf16.gmra.mxu0 %v768
      %v853 = vpop.f32.mrf.mxu0
      %v854 = vadd.f32 %v638, %v853
      %v855 = vpop.f32.mrf.mxu0
      %v856 = vpop.f32.mrf.mxu0
      %v857 = vadd.f32 %v641, %v856
      %v858 = vpop.f32.mrf.mxu0
      %859 = vmatprep.mubr.bf16.mxu0 0
      %860 = vmatmul.mubr.bf16.gmra.mxu0 %v770
      %v861 = vpop.f32.mrf.mxu0
      %v862 = vadd.f32 %v646, %v861
      %v863 = vpop.f32.mrf.mxu0
      %v864 = vpop.f32.mrf.mxu0
      %v865 = vadd.f32 %v649, %v864
      %v866 = vpop.f32.mrf.mxu0
      %867 = vmatprep.mubr.bf16.mxu0 0
      %868 = vmatmul.mubr.bf16.gmra.mxu0 %v772
      %v869 = vpop.f32.mrf.mxu0
      %v870 = vadd.f32 %v654, %v869
      %v871 = vpop.f32.mrf.mxu0
      %v872 = vpop.f32.mrf.mxu0
      %v873 = vadd.f32 %v657, %v872
      %v874 = vpop.f32.mrf.mxu0
      %875 = vmatprep.mubr.bf16.mxu0 0
      %876 = vmatmul.mubr.bf16.gmra.mxu0 %v774
      %v877 = vpop.f32.mrf.mxu0
      %v878 = vadd.f32 %v662, %v877
      %v879 = vpop.f32.mrf.mxu0
      %v880 = vpop.f32.mrf.mxu0
      %v881 = vadd.f32 %v665, %v880
      %v882 = vpop.f32.mrf.mxu0
      %883 = vmatprep.mubr.bf16.mxu0 0
      %884 = vmatmul.mubr.bf16.gmra.mxu0 %v776
      %v885 = vpop.f32.mrf.mxu0
      %v886 = vadd.f32 %v670, %v885
      %v887 = vpop.f32.mrf.mxu0
      %v888 = vpop.f32.mrf.mxu0
      %v889 = vadd.f32 %v673, %v888
      %v890 = vpop.f32.mrf.mxu0
      %891 = vmatprep.mubr.bf16.mxu0 0
      %892 = vmatmul.mubr.bf16.gmra.mxu0 %v778
      %v893 = vpop.f32.mrf.mxu0
      %v894 = vadd.f32 %v678, %v893
      %v895 = vpop.f32.mrf.mxu0
      %v896 = vpop.f32.mrf.mxu0
      %v897 = vadd.f32 %v681, %v896
      %v898 = vpop.f32.mrf.mxu0
      %899 = vmatprep.mubr.bf16.mxu0 0
      %900 = vmatmul.mubr.bf16.gmra.mxu0 %v780
      %v901 = vpop.f32.mrf.mxu0
      %v902 = vadd.f32 %v686, %v901
      %v903 = vpop.f32.mrf.mxu0
      %v904 = vpop.f32.mrf.mxu0
      %v905 = vadd.f32 %v689, %v904
      %v906 = vpop.f32.mrf.mxu0
      %907 = vmatprep.mubr.bf16.mxu0 0
      %908 = vmatmul.mubr.bf16.gmra.mxu0 %v782
      %v909 = vpop.f32.mrf.mxu0
      %v910 = vadd.f32 %v694, %v909
      %v911 = vpop.f32.mrf.mxu0
      %v912 = vpop.f32.mrf.mxu0
      %v913 = vadd.f32 %v697, %v912
      %v914 = vpop.f32.mrf.mxu0
      %915 = vmatprep.mubr.bf16.mxu0 0
      %916 = vmatmul.mubr.bf16.gmra.mxu0 %v784
      %v917 = vpop.f32.mrf.mxu0
      %v918 = vadd.f32 %v702, %v917
      %v919 = vpop.f32.mrf.mxu0
      %v920 = vpop.f32.mrf.mxu0
      %v921 = vadd.f32 %v705, %v920
      %v922 = vpop.f32.mrf.mxu0
      %923 = vmatprep.mubr.bf16.mxu0 0
      %924 = vmatmul.mubr.bf16.gmra.mxu0 %v786
      %v925 = vpop.f32.mrf.mxu0
      %v926 = vadd.f32 %v710, %v925
      %v927 = vpop.f32.mrf.mxu0
      %v928 = vpop.f32.mrf.mxu0
      %v929 = vadd.f32 %v713, %v928
      %v930 = vpop.f32.mrf.mxu0
      %931 = vmatprep.mubr.bf16.mxu0 0
      %932 = vmatmul.mubr.bf16.gmra.mxu0 %v788
      %v933 = vpop.f32.mrf.mxu0
      %v934 = vadd.f32 %v718, %v933
      %v935 = vpop.f32.mrf.mxu0
      %v936 = vpop.f32.mrf.mxu0
      %v937 = vadd.f32 %v721, %v936
      %v938 = vpop.f32.mrf.mxu0
      %939 = vmatprep.mubr.bf16.mxu0 0
      %940 = vmatmul.mubr.bf16.gmra.mxu0 %v790
      %v941 = vpop.f32.mrf.mxu0
      %v942 = vadd.f32 %v726, %v941
      %v943 = vpop.f32.mrf.mxu0
      %v944 = vpop.f32.mrf.mxu0
      %v945 = vadd.f32 %v729, %v944
      %v946 = vpop.f32.mrf.mxu0
      %947 = vmatprep.mubr.bf16.mxu0 0
      %948 = vmatmul.mubr.bf16.gmra.mxu0 %v792
      %v949 = vpop.f32.mrf.mxu0
      %v950 = vadd.f32 %v734, %v949
      %v951 = vpop.f32.mrf.mxu0
      %v952 = vpop.f32.mrf.mxu0
      %v953 = vadd.f32 %v737, %v952
      %v954 = vpop.f32.mrf.mxu0
      %955 = vmatprep.mubr.bf16.mxu0 0
      %956 = vmatmul.mubr.bf16.gmra.mxu0 %v794
      %v957 = vpop.f32.mrf.mxu0
      %v958 = vadd.f32 %v742, %v957
      %v959 = vpop.f32.mrf.mxu0
      %v960 = vpop.f32.mrf.mxu0
      %v961 = vadd.f32 %v745, %v960
      %v962 = vpop.f32.mrf.mxu0
      %963 = vmatprep.mubr.bf16.mxu0 0
      %964 = vmatmul.mubr.bf16.gmra.mxu0 %v796
      %v965 = vpop.f32.mrf.mxu0
      %v966 = vadd.f32 %v750, %v965
      %v967 = vpop.f32.mrf.mxu0
      %v968 = vpop.f32.mrf.mxu0
      %v969 = vadd.f32 %v753, %v968
      %v970 = vpop.f32.mrf.mxu0
      %971 = vmatprep.mubr.bf16.mxu0 0
      %972 = vmatmul.mubr.bf16.gmra.mxu0 %v798
      %v973 = vpop.f32.mrf.mxu0
      %v974 = vadd.f32 %v758, %v973
      %v975 = vpop.f32.mrf.mxu0
      %v976 = vpop.f32.mrf.mxu0
      %v977 = vadd.f32 %v761, %v976
      %v978 = vpop.f32.mrf.mxu0
      %979 = vdwg.mxu0
      %v980 = vld [vmem:[%s234] sm:$0xe]
      %s981 = scalar_lea.vmem %s1, 8
      %v982 = vld [vmem:[%s981] sm:$0xf]
      %v984 = vunpack.c.l.b16 %v980
      %v985 = vpack.c.b16 %v324, %v984
      %vm986 = vcmask 1046528
      %v987 = vrot.slane %v985, 1
      %v988 = vrot.slane %v361, 1
      %v989 = vsel %vm986, %v987, %v988
      %v990 = vrot.slane %v362, 1
      %v991 = vsel %vm986, %v988, %v990
      %v992 = vrot.slane %v363, 1
      %v993 = vsel %vm986, %v990, %v992
      %v994 = vrot.slane %v364, 1
      %v995 = vsel %vm986, %v992, %v994
      %v996 = vrot.slane %v365, 1
      %v997 = vsel %vm986, %v994, %v996
      %v998 = vrot.slane %v366, 1
      %v999 = vsel %vm986, %v996, %v998
      %v1000 = vrot.slane %v367, 1
      %v1001 = vsel %vm986, %v998, %v1000
      %v1002 = vrot.slane %v368, 1
      %v1003 = vsel %vm986, %v1000, %v1002
      %v1004 = vrot.slane %v369, 1
      %v1005 = vsel %vm986, %v1002, %v1004
      %v1006 = vrot.slane %v370, 1
      %v1007 = vsel %vm986, %v1004, %v1006
      %v1008 = vrot.slane %v371, 1
      %v1009 = vsel %vm986, %v1006, %v1008
      %v1010 = vrot.slane %v372, 1
      %v1011 = vsel %vm986, %v1008, %v1010
      %v1012 = vrot.slane %v373, 1
      %v1013 = vsel %vm986, %v1010, %v1012
      %v1014 = vrot.slane %v374, 1
      %v1015 = vsel %vm986, %v1012, %v1014
      %v1016 = vrot.slane %v375, 1
      %v1017 = vsel %vm986, %v1014, %v1016
      %v1018 = vrot.slane %v376, 1
      %v1019 = vsel %vm986, %v1016, %v1018
      %v1020 = vrot.slane %v377, 1
      %v1021 = vsel %vm986, %v1018, %v1020
      %v1022 = vrot.slane %v378, 1
      %v1023 = vsel %vm986, %v1020, %v1022
      %v1025 = vsel %vm528, %v989, 0
      %v1028 = vsel %vm528, %v991, 0
      %v1031 = vsel %vm528, %v993, 0
      %v1034 = vsel %vm528, %v995, 0
      %v1037 = vsel %vm528, %v997, 0
      %v1040 = vsel %vm528, %v999, 0
      %v1043 = vsel %vm528, %v1001, 0
      %v1046 = vsel %vm528, %v1003, 0
      %v1049 = vsel %vm528, %v1005, 0
      %v1052 = vsel %vm528, %v1007, 0
      %v1055 = vsel %vm528, %v1009, 0
      %v1058 = vsel %vm528, %v1011, 0
      %v1061 = vsel %vm528, %v1013, 0
      %v1064 = vsel %vm528, %v1015, 0
      %v1067 = vsel %vm528, %v1017, 0
      %v1070 = vsel %vm528, %v1019, 0
      %v1073 = vsel %vm528, %v1021, 0
      %v1076 = vsel %vm528, %v1023, 0
      %v1079 = vsel %vm583, %v982, 0
      %1081 = vmatprep.subr.bf16.mxu0 0
      %1082 = vmatpush1.bf16.msra.mxu0 0
      %1083 = vmatprep.subr.bf16.mxu0 0
      %1084 = vmatpush1.bf16.msra.mxu0 0
      %1085 = vmatprep.subr.bf16.mxu0 0
      %1086 = vmatpush1.bf16.msra.mxu0 0
      %1087 = vmatprep.subr.bf16.mxu0 0
      %1088 = vmatpush1.bf16.msra.mxu0 0
      %1089 = vmatprep.subr.bf16.mxu0 0
      %1090 = vmatpush1.bf16.msra.mxu0 0
      %1091 = vmatprep.subr.bf16.mxu0 0
      %1092 = vmatpush1.bf16.msra.mxu0 0
      %1093 = vmatprep.subr.bf16.mxu0 0
      %1094 = vmatpush1.bf16.msra.mxu0 0
      %1095 = vmatprep.subr.bf16.mxu0 0
      %1096 = vmatpush1.bf16.msra.mxu0 %v1079
      %1097 = vmatprep.subr.bf16.mxu0 0
      %1098 = vmatpush2.bf16.msra.mxu0 0
      %1099 = vmatprep.subr.bf16.mxu0 0
      %1100 = vmatpush2.bf16.msra.mxu0 0
      %1101 = vmatprep.subr.bf16.mxu0 0
      %1102 = vmatpush2.bf16.msra.mxu0 0
      %1103 = vmatprep.subr.bf16.mxu0 0
      %1104 = vmatpush2.bf16.msra.mxu0 0
      %1105 = vmatprep.subr.bf16.mxu0 0
      %1106 = vmatpush2.bf16.msra.mxu0 0
      %1107 = vmatprep.subr.bf16.mxu0 0
      %1108 = vmatpush2.bf16.msra.mxu0 0
      %1109 = vmatprep.subr.bf16.mxu0 0
      %1110 = vmatpush2.bf16.msra.mxu0 0
      %1111 = vmatprep.subr.bf16.mxu0 0
      %1112 = vmatpush2.bf16.msra.mxu0 0
      %1113 = vmatprep.mubr.bf16.mxu0 0
      %1114 = vmatmul.mubr.bf16.gmra.mxu0 %v1025
      %v1115 = vpop.f32.mrf.mxu0
      %v1116 = vadd.f32 0.0, %v1115
      %v1117 = vpop.f32.mrf.mxu0
      %v1118 = vpop.f32.mrf.mxu0
      %v1119 = vadd.f32 0.0, %v1118
      %v1120 = vpop.f32.mrf.mxu0
      %1121 = vmatprep.mubr.bf16.mxu0 0
      %1122 = vmatmul.mubr.bf16.gmra.mxu0 %v1028
      %v1123 = vpop.f32.mrf.mxu0
      %v1124 = vadd.f32 0.0, %v1123
      %v1125 = vpop.f32.mrf.mxu0
      %v1126 = vpop.f32.mrf.mxu0
      %v1127 = vadd.f32 0.0, %v1126
      %v1128 = vpop.f32.mrf.mxu0
      %1129 = vmatprep.mubr.bf16.mxu0 0
      %1130 = vmatmul.mubr.bf16.gmra.mxu0 %v1031
      %v1131 = vpop.f32.mrf.mxu0
      %v1132 = vadd.f32 0.0, %v1131
      %v1133 = vpop.f32.mrf.mxu0
      %v1134 = vpop.f32.mrf.mxu0
      %v1135 = vadd.f32 0.0, %v1134
      %v1136 = vpop.f32.mrf.mxu0
      %1137 = vmatprep.mubr.bf16.mxu0 0
      %1138 = vmatmul.mubr.bf16.gmra.mxu0 %v1034
      %v1139 = vpop.f32.mrf.mxu0
      %v1140 = vadd.f32 0.0, %v1139
      %v1141 = vpop.f32.mrf.mxu0
      %v1142 = vpop.f32.mrf.mxu0
      %v1143 = vadd.f32 0.0, %v1142
      %v1144 = vpop.f32.mrf.mxu0
      %1145 = vmatprep.mubr.bf16.mxu0 0
      %1146 = vmatmul.mubr.bf16.gmra.mxu0 %v1037
      %v1147 = vpop.f32.mrf.mxu0
      %v1148 = vadd.f32 0.0, %v1147
      %v1149 = vpop.f32.mrf.mxu0
      %v1150 = vpop.f32.mrf.mxu0
      %v1151 = vadd.f32 0.0, %v1150
      %v1152 = vpop.f32.mrf.mxu0
      %1153 = vmatprep.mubr.bf16.mxu0 0
      %1154 = vmatmul.mubr.bf16.gmra.mxu0 %v1040
      %v1155 = vpop.f32.mrf.mxu0
      %v1156 = vadd.f32 0.0, %v1155
      %v1157 = vpop.f32.mrf.mxu0
      %v1158 = vpop.f32.mrf.mxu0
      %v1159 = vadd.f32 0.0, %v1158
      %v1160 = vpop.f32.mrf.mxu0
      %1161 = vmatprep.mubr.bf16.mxu0 0
      %1162 = vmatmul.mubr.bf16.gmra.mxu0 %v1043
      %v1163 = vpop.f32.mrf.mxu0
      %v1164 = vadd.f32 0.0, %v1163
      %v1165 = vpop.f32.mrf.mxu0
      %v1166 = vpop.f32.mrf.mxu0
      %v1167 = vadd.f32 0.0, %v1166
      %v1168 = vpop.f32.mrf.mxu0
      %1169 = vmatprep.mubr.bf16.mxu0 0
      %1170 = vmatmul.mubr.bf16.gmra.mxu0 %v1046
      %v1171 = vpop.f32.mrf.mxu0
      %v1172 = vadd.f32 0.0, %v1171
      %v1173 = vpop.f32.mrf.mxu0
      %v1174 = vpop.f32.mrf.mxu0
      %v1175 = vadd.f32 0.0, %v1174
      %v1176 = vpop.f32.mrf.mxu0
      %1177 = vmatprep.mubr.bf16.mxu0 0
      %1178 = vmatmul.mubr.bf16.gmra.mxu0 %v1049
      %v1179 = vpop.f32.mrf.mxu0
      %v1180 = vadd.f32 0.0, %v1179
      %v1181 = vpop.f32.mrf.mxu0
      %v1182 = vpop.f32.mrf.mxu0
      %v1183 = vadd.f32 0.0, %v1182
      %v1184 = vpop.f32.mrf.mxu0
      %1185 = vmatprep.mubr.bf16.mxu0 0
      %1186 = vmatmul.mubr.bf16.gmra.mxu0 %v1052
      %v1187 = vpop.f32.mrf.mxu0
      %v1188 = vadd.f32 0.0, %v1187
      %v1189 = vpop.f32.mrf.mxu0
      %v1190 = vpop.f32.mrf.mxu0
      %v1191 = vadd.f32 0.0, %v1190
      %v1192 = vpop.f32.mrf.mxu0
      %1193 = vmatprep.mubr.bf16.mxu0 0
      %1194 = vmatmul.mubr.bf16.gmra.mxu0 %v1055
      %v1195 = vpop.f32.mrf.mxu0
      %v1196 = vadd.f32 0.0, %v1195
      %v1197 = vpop.f32.mrf.mxu0
      %v1198 = vpop.f32.mrf.mxu0
      %v1199 = vadd.f32 0.0, %v1198
      %v1200 = vpop.f32.mrf.mxu0
      %1201 = vmatprep.mubr.bf16.mxu0 0
      %1202 = vmatmul.mubr.bf16.gmra.mxu0 %v1058
      %v1203 = vpop.f32.mrf.mxu0
      %v1204 = vadd.f32 0.0, %v1203
      %v1205 = vpop.f32.mrf.mxu0
      %v1206 = vpop.f32.mrf.mxu0
      %v1207 = vadd.f32 0.0, %v1206
      %v1208 = vpop.f32.mrf.mxu0
      %1209 = vmatprep.mubr.bf16.mxu0 0
      %1210 = vmatmul.mubr.bf16.gmra.mxu0 %v1061
      %v1211 = vpop.f32.mrf.mxu0
      %v1212 = vadd.f32 0.0, %v1211
      %v1213 = vpop.f32.mrf.mxu0
      %v1214 = vpop.f32.mrf.mxu0
      %v1215 = vadd.f32 0.0, %v1214
      %v1216 = vpop.f32.mrf.mxu0
      %1217 = vmatprep.mubr.bf16.mxu0 0
      %1218 = vmatmul.mubr.bf16.gmra.mxu0 %v1064
      %v1219 = vpop.f32.mrf.mxu0
      %v1220 = vadd.f32 0.0, %v1219
      %v1221 = vpop.f32.mrf.mxu0
      %v1222 = vpop.f32.mrf.mxu0
      %v1223 = vadd.f32 0.0, %v1222
      %v1224 = vpop.f32.mrf.mxu0
      %1225 = vmatprep.mubr.bf16.mxu0 0
      %1226 = vmatmul.mubr.bf16.gmra.mxu0 %v1067
      %v1227 = vpop.f32.mrf.mxu0
      %v1228 = vadd.f32 0.0, %v1227
      %v1229 = vpop.f32.mrf.mxu0
      %v1230 = vpop.f32.mrf.mxu0
      %v1231 = vadd.f32 0.0, %v1230
      %v1232 = vpop.f32.mrf.mxu0
      %1233 = vmatprep.mubr.bf16.mxu0 0
      %1234 = vmatmul.mubr.bf16.gmra.mxu0 %v1070
      %v1235 = vpop.f32.mrf.mxu0
      %v1236 = vadd.f32 0.0, %v1235
      %v1237 = vpop.f32.mrf.mxu0
      %v1238 = vpop.f32.mrf.mxu0
      %v1239 = vadd.f32 0.0, %v1238
      %v1240 = vpop.f32.mrf.mxu0
      %1241 = vmatprep.mubr.bf16.mxu0 0
      %1242 = vmatmul.mubr.bf16.gmra.mxu0 %v1073
      %v1243 = vpop.f32.mrf.mxu0
      %v1244 = vadd.f32 0.0, %v1243
      %v1245 = vpop.f32.mrf.mxu0
      %v1246 = vpop.f32.mrf.mxu0
      %v1247 = vadd.f32 0.0, %v1246
      %v1248 = vpop.f32.mrf.mxu0
      %1249 = vmatprep.mubr.bf16.mxu0 0
      %1250 = vmatmul.mubr.bf16.gmra.mxu0 %v1076
      %v1251 = vpop.f32.mrf.mxu0
      %v1252 = vadd.f32 0.0, %v1251
      %v1253 = vpop.f32.mrf.mxu0
      %v1254 = vpop.f32.mrf.mxu0
      %v1255 = vadd.f32 0.0, %v1254
      %v1256 = vpop.f32.mrf.mxu0
      %1257 = vdwg.mxu0
      %v1258 = vadd.f32 %v838, %v1116
      %v1259 = vadd.f32 %v841, %v1119
      %v1260 = vadd.f32 %v846, %v1124
      %v1261 = vadd.f32 %v849, %v1127
      %v1262 = vadd.f32 %v854, %v1132
      %v1263 = vadd.f32 %v857, %v1135
      %v1264 = vadd.f32 %v862, %v1140
      %v1265 = vadd.f32 %v865, %v1143
      %v1266 = vadd.f32 %v870, %v1148
      %v1267 = vadd.f32 %v873, %v1151
      %v1268 = vadd.f32 %v878, %v1156
      %v1269 = vadd.f32 %v881, %v1159
      %v1270 = vadd.f32 %v886, %v1164
      %v1271 = vadd.f32 %v889, %v1167
      %v1272 = vadd.f32 %v894, %v1172
      %v1273 = vadd.f32 %v897, %v1175
      %v1274 = vadd.f32 %v902, %v1180
      %v1275 = vadd.f32 %v905, %v1183
      %v1276 = vadd.f32 %v910, %v1188
      %v1277 = vadd.f32 %v913, %v1191
      %v1278 = vadd.f32 %v918, %v1196
      %v1279 = vadd.f32 %v921, %v1199
      %v1280 = vadd.f32 %v926, %v1204
      %v1281 = vadd.f32 %v929, %v1207
      %v1282 = vadd.f32 %v934, %v1212
      %v1283 = vadd.f32 %v937, %v1215
      %v1284 = vadd.f32 %v942, %v1220
      %v1285 = vadd.f32 %v945, %v1223
      %v1286 = vadd.f32 %v950, %v1228
      %v1287 = vadd.f32 %v953, %v1231
      %v1288 = vadd.f32 %v958, %v1236
      %v1289 = vadd.f32 %v961, %v1239
      %v1290 = vadd.f32 %v966, %v1244
      %v1291 = vadd.f32 %v969, %v1247
      %v1292 = vadd.f32 %v974, %v1252
      %v1293 = vadd.f32 %v977, %v1255
      %v1294 = vld [vmem:[%s234 + $0x8] sm:$0xe]
      %v1295 = vld [vmem:[%s234 + $0xc] sm:$0xf]
      %v1296 = vld [vmem:[%s234 + $0x10] sm:$0xf]
      %v1297 = vld [vmem:[%s234 + $0x14] sm:$0xf]
      %v1298 = vld [vmem:[%s234 + $0x18] sm:$0xf]
      %v1299 = vld [vmem:[%s234 + $0x1c] sm:$0xf]
      %v1300 = vld [vmem:[%s234 + $0x20] sm:$0xf]
      %v1301 = vld [vmem:[%s234 + $0x24] sm:$0xf]
      %v1302 = vld [vmem:[%s234 + $0x28] sm:$0xf]
      %v1303 = vld [vmem:[%s234 + $0x2c] sm:$0xf]
      %v1304 = vld [vmem:[%s234 + $0x30] sm:$0xf]
      %v1305 = vld [vmem:[%s234 + $0x34] sm:$0xf]
      %v1306 = vld [vmem:[%s234 + $0x38] sm:$0xf]
      %v1307 = vld [vmem:[%s234 + $0x3c] sm:$0xf]
      %v1308 = vld [vmem:[%s234 + $0x40] sm:$0xf]
      %v1309 = vld [vmem:[%s234 + $0x44] sm:$0xf]
      %v1310 = vld [vmem:[%s234 + $0x48] sm:$0xf]
      %v1311 = vld [vmem:[%s234 + $0x4c] sm:$0xf]
      %v1312 = vld [vmem:[%s234 + $0x50] sm:$0xf]
      %v1313 = vld [vmem:[%s234 + $0x54] sm:$0xf]
      %v1314 = vld [vmem:[%s234 + $0x58] sm:$0xf]
      %v1315 = vld [vmem:[%s234 + $0x5c] sm:$0xf]
      %v1316 = vld [vmem:[%s234 + $0x60] sm:$0xf]
      %v1317 = vld [vmem:[%s234 + $0x64] sm:$0xf]
      %v1318 = vld [vmem:[%s234 + $0x68] sm:$0xf]
      %v1319 = vld [vmem:[%s234 + $0x6c] sm:$0xf]
      %v1320 = vld [vmem:[%s234 + $0x70] sm:$0xf]
      %v1321 = vld [vmem:[%s234 + $0x74] sm:$0xf]
      %v1322 = vld [vmem:[%s234 + $0x78] sm:$0xf]
      %v1323 = vld [vmem:[%s234 + $0x7c] sm:$0xf]
      %v1324 = vld [vmem:[%s234 + $0x80] sm:$0xf]
      %v1325 = vld [vmem:[%s234 + $0x84] sm:$0xf]
      %v1326 = vld [vmem:[%s234 + $0x88] sm:$0xf]
      %v1327 = vld [vmem:[%s234 + $0x8c] sm:$0xf]
      %v1328 = vld [vmem:[%s234 + $0x90] sm:$0xf]
      %v1329 = vld [vmem:[%s234 + $0x94] sm:$0xf]
      %v1330 = vld [vmem:[%s234 + $0x98] sm:$0x1]
      %s1331 = scalar_lea.vmem %s1, 12
      %v1332 = vld [vmem:[%s1331] sm:$0xf]
      %v1370 = vunpack.c.l.b16 %v1294
      %v1371 = vunpack.c.l.b16 %v1295
      %v1372 = vunpack.c.l.b16 %v1296
      %v1373 = vunpack.c.l.b16 %v1297
      %v1374 = vunpack.c.l.b16 %v1298
      %v1375 = vunpack.c.l.b16 %v1299
      %v1376 = vunpack.c.l.b16 %v1300
      %v1377 = vunpack.c.l.b16 %v1301
      %v1378 = vunpack.c.l.b16 %v1302
      %v1379 = vunpack.c.l.b16 %v1303
      %v1380 = vunpack.c.l.b16 %v1304
      %v1381 = vunpack.c.l.b16 %v1305
      %v1382 = vunpack.c.l.b16 %v1306
      %v1383 = vunpack.c.l.b16 %v1307
      %v1384 = vunpack.c.l.b16 %v1308
      %v1385 = vunpack.c.l.b16 %v1309
      %v1386 = vunpack.c.l.b16 %v1310
      %v1387 = vunpack.c.l.b16 %v1311
      %v1388 = vunpack.c.l.b16 %v1312
      %v1389 = vunpack.c.l.b16 %v1313
      %v1390 = vunpack.c.l.b16 %v1314
      %v1391 = vunpack.c.l.b16 %v1315
      %v1392 = vunpack.c.l.b16 %v1316
      %v1393 = vunpack.c.l.b16 %v1317
      %v1394 = vunpack.c.l.b16 %v1318
      %v1395 = vunpack.c.l.b16 %v1319
      %v1396 = vunpack.c.l.b16 %v1320
      %v1397 = vunpack.c.l.b16 %v1321
      %v1398 = vunpack.c.l.b16 %v1322
      %v1399 = vunpack.c.l.b16 %v1323
      %v1400 = vunpack.c.l.b16 %v1324
      %v1401 = vunpack.c.l.b16 %v1325
      %v1402 = vunpack.c.l.b16 %v1326
      %v1403 = vunpack.c.l.b16 %v1327
      %v1404 = vunpack.c.l.b16 %v1328
      %v1405 = vunpack.c.l.b16 %v1329
      %v1406 = vunpack.c.l.b16 %v1330
      %v1407 = vpack.c.b16 %v1371, %v1370
      %v1408 = vpack.c.b16 %v1373, %v1372
      %v1409 = vpack.c.b16 %v1375, %v1374
      %v1410 = vpack.c.b16 %v1377, %v1376
      %v1411 = vpack.c.b16 %v1379, %v1378
      %v1412 = vpack.c.b16 %v1381, %v1380
      %v1413 = vpack.c.b16 %v1383, %v1382
      %v1414 = vpack.c.b16 %v1385, %v1384
      %v1415 = vpack.c.b16 %v1387, %v1386
      %v1416 = vpack.c.b16 %v1389, %v1388
      %v1417 = vpack.c.b16 %v1391, %v1390
      %v1418 = vpack.c.b16 %v1393, %v1392
      %v1419 = vpack.c.b16 %v1395, %v1394
      %v1420 = vpack.c.b16 %v1397, %v1396
      %v1421 = vpack.c.b16 %v1399, %v1398
      %v1422 = vpack.c.b16 %v1401, %v1400
      %v1423 = vpack.c.b16 %v1403, %v1402
      %v1424 = vpack.c.b16 %v1405, %v1404
      %v1425 = vpack.c.b16 %v1406, %v1406
      %v1426 = vrot.slane %v1407, 1
      %v1427 = vrot.slane %v1408, 1
      %v1428 = vsel %vm986, %v1426, %v1427
      %v1429 = vrot.slane %v1409, 1
      %v1430 = vsel %vm986, %v1427, %v1429
      %v1431 = vrot.slane %v1410, 1
      %v1432 = vsel %vm986, %v1429, %v1431
      %v1433 = vrot.slane %v1411, 1
      %v1434 = vsel %vm986, %v1431, %v1433
      %v1435 = vrot.slane %v1412, 1
      %v1436 = vsel %vm986, %v1433, %v1435
      %v1437 = vrot.slane %v1413, 1
      %v1438 = vsel %vm986, %v1435, %v1437
      %v1439 = vrot.slane %v1414, 1
      %v1440 = vsel %vm986, %v1437, %v1439
      %v1441 = vrot.slane %v1415, 1
      %v1442 = vsel %vm986, %v1439, %v1441
      %v1443 = vrot.slane %v1416, 1
      %v1444 = vsel %vm986, %v1441, %v1443
      %v1445 = vrot.slane %v1417, 1
      %v1446 = vsel %vm986, %v1443, %v1445
      %v1447 = vrot.slane %v1418, 1
      %v1448 = vsel %vm986, %v1445, %v1447
      %v1449 = vrot.slane %v1419, 1
      %v1450 = vsel %vm986, %v1447, %v1449
      %v1451 = vrot.slane %v1420, 1
      %v1452 = vsel %vm986, %v1449, %v1451
      %v1453 = vrot.slane %v1421, 1
      %v1454 = vsel %vm986, %v1451, %v1453
      %v1455 = vrot.slane %v1422, 1
      %v1456 = vsel %vm986, %v1453, %v1455
      %v1457 = vrot.slane %v1423, 1
      %v1458 = vsel %vm986, %v1455, %v1457
      %v1459 = vrot.slane %v1424, 1
      %v1460 = vsel %vm986, %v1457, %v1459
      %v1461 = vrot.slane %v1425, 1
      %v1462 = vsel %vm986, %v1459, %v1461
      %v1464 = vsel %vm528, %v1428, 0
      %v1467 = vsel %vm528, %v1430, 0
      %v1470 = vsel %vm528, %v1432, 0
      %v1473 = vsel %vm528, %v1434, 0
      %v1476 = vsel %vm528, %v1436, 0
      %v1479 = vsel %vm528, %v1438, 0
      %v1482 = vsel %vm528, %v1440, 0
      %v1485 = vsel %vm528, %v1442, 0
      %v1488 = vsel %vm528, %v1444, 0
      %v1491 = vsel %vm528, %v1446, 0
      %v1494 = vsel %vm528, %v1448, 0
      %v1497 = vsel %vm528, %v1450, 0
      %v1500 = vsel %vm528, %v1452, 0
      %v1503 = vsel %vm528, %v1454, 0
      %v1506 = vsel %vm528, %v1456, 0
      %v1509 = vsel %vm528, %v1458, 0
      %v1512 = vsel %vm528, %v1460, 0
      %v1515 = vsel %vm528, %v1462, 0
      %v1518 = vsel %vm583, %v1332, 0
      %1520 = vmatprep.subr.bf16.mxu0 0
      %1521 = vmatpush1.bf16.msra.mxu0 0
      %1522 = vmatprep.subr.bf16.mxu0 0
      %1523 = vmatpush1.bf16.msra.mxu0 0
      %1524 = vmatprep.subr.bf16.mxu0 0
      %1525 = vmatpush1.bf16.msra.mxu0 0
      %1526 = vmatprep.subr.bf16.mxu0 0
      %1527 = vmatpush1.bf16.msra.mxu0 0
      %1528 = vmatprep.subr.bf16.mxu0 0
      %1529 = vmatpush1.bf16.msra.mxu0 0
      %1530 = vmatprep.subr.bf16.mxu0 0
      %1531 = vmatpush1.bf16.msra.mxu0 0
      %1532 = vmatprep.subr.bf16.mxu0 0
      %1533 = vmatpush1.bf16.msra.mxu0 0
      %1534 = vmatprep.subr.bf16.mxu0 0
      %1535 = vmatpush1.bf16.msra.mxu0 %v1518
      %1536 = vmatprep.subr.bf16.mxu0 0
      %1537 = vmatpush2.bf16.msra.mxu0 0
      %1538 = vmatprep.subr.bf16.mxu0 0
      %1539 = vmatpush2.bf16.msra.mxu0 0
      %1540 = vmatprep.subr.bf16.mxu0 0
      %1541 = vmatpush2.bf16.msra.mxu0 0
      %1542 = vmatprep.subr.bf16.mxu0 0
      %1543 = vmatpush2.bf16.msra.mxu0 0
      %1544 = vmatprep.subr.bf16.mxu0 0
      %1545 = vmatpush2.bf16.msra.mxu0 0
      %1546 = vmatprep.subr.bf16.mxu0 0
      %1547 = vmatpush2.bf16.msra.mxu0 0
      %1548 = vmatprep.subr.bf16.mxu0 0
      %1549 = vmatpush2.bf16.msra.mxu0 0
      %1550 = vmatprep.subr.bf16.mxu0 0
      %1551 = vmatpush2.bf16.msra.mxu0 0
      %1552 = vmatprep.mubr.bf16.mxu0 0
      %1553 = vmatmul.mubr.bf16.gmra.mxu0 %v1464
      %v1554 = vpop.f32.mrf.mxu0
      %v1555 = vadd.f32 0.0, %v1554
      %v1556 = vpop.f32.mrf.mxu0
      %v1557 = vpop.f32.mrf.mxu0
      %v1558 = vadd.f32 0.0, %v1557
      %v1559 = vpop.f32.mrf.mxu0
      %1560 = vmatprep.mubr.bf16.mxu0 0
      %1561 = vmatmul.mubr.bf16.gmra.mxu0 %v1467
      %v1562 = vpop.f32.mrf.mxu0
      %v1563 = vadd.f32 0.0, %v1562
      %v1564 = vpop.f32.mrf.mxu0
      %v1565 = vpop.f32.mrf.mxu0
      %v1566 = vadd.f32 0.0, %v1565
      %v1567 = vpop.f32.mrf.mxu0
      %1568 = vmatprep.mubr.bf16.mxu0 0
      %1569 = vmatmul.mubr.bf16.gmra.mxu0 %v1470
      %v1570 = vpop.f32.mrf.mxu0
      %v1571 = vadd.f32 0.0, %v1570
      %v1572 = vpop.f32.mrf.mxu0
      %v1573 = vpop.f32.mrf.mxu0
      %v1574 = vadd.f32 0.0, %v1573
      %v1575 = vpop.f32.mrf.mxu0
      %1576 = vmatprep.mubr.bf16.mxu0 0
      %1577 = vmatmul.mubr.bf16.gmra.mxu0 %v1473
      %v1578 = vpop.f32.mrf.mxu0
      %v1579 = vadd.f32 0.0, %v1578
      %v1580 = vpop.f32.mrf.mxu0
      %v1581 = vpop.f32.mrf.mxu0
      %v1582 = vadd.f32 0.0, %v1581
      %v1583 = vpop.f32.mrf.mxu0
      %1584 = vmatprep.mubr.bf16.mxu0 0
      %1585 = vmatmul.mubr.bf16.gmra.mxu0 %v1476
      %v1586 = vpop.f32.mrf.mxu0
      %v1587 = vadd.f32 0.0, %v1586
      %v1588 = vpop.f32.mrf.mxu0
      %v1589 = vpop.f32.mrf.mxu0
      %v1590 = vadd.f32 0.0, %v1589
      %v1591 = vpop.f32.mrf.mxu0
      %1592 = vmatprep.mubr.bf16.mxu0 0
      %1593 = vmatmul.mubr.bf16.gmra.mxu0 %v1479
      %v1594 = vpop.f32.mrf.mxu0
      %v1595 = vadd.f32 0.0, %v1594
      %v1596 = vpop.f32.mrf.mxu0
      %v1597 = vpop.f32.mrf.mxu0
      %v1598 = vadd.f32 0.0, %v1597
      %v1599 = vpop.f32.mrf.mxu0
      %1600 = vmatprep.mubr.bf16.mxu0 0
      %1601 = vmatmul.mubr.bf16.gmra.mxu0 %v1482
      %v1602 = vpop.f32.mrf.mxu0
      %v1603 = vadd.f32 0.0, %v1602
      %v1604 = vpop.f32.mrf.mxu0
      %v1605 = vpop.f32.mrf.mxu0
      %v1606 = vadd.f32 0.0, %v1605
      %v1607 = vpop.f32.mrf.mxu0
      %1608 = vmatprep.mubr.bf16.mxu0 0
      %1609 = vmatmul.mubr.bf16.gmra.mxu0 %v1485
      %v1610 = vpop.f32.mrf.mxu0
      %v1611 = vadd.f32 0.0, %v1610
      %v1612 = vpop.f32.mrf.mxu0
      %v1613 = vpop.f32.mrf.mxu0
      %v1614 = vadd.f32 0.0, %v1613
      %v1615 = vpop.f32.mrf.mxu0
      %1616 = vmatprep.mubr.bf16.mxu0 0
      %1617 = vmatmul.mubr.bf16.gmra.mxu0 %v1488
      %v1618 = vpop.f32.mrf.mxu0
      %v1619 = vadd.f32 0.0, %v1618
      %v1620 = vpop.f32.mrf.mxu0
      %v1621 = vpop.f32.mrf.mxu0
      %v1622 = vadd.f32 0.0, %v1621
      %v1623 = vpop.f32.mrf.mxu0
      %1624 = vmatprep.mubr.bf16.mxu0 0
      %1625 = vmatmul.mubr.bf16.gmra.mxu0 %v1491
      %v1626 = vpop.f32.mrf.mxu0
      %v1627 = vadd.f32 0.0, %v1626
      %v1628 = vpop.f32.mrf.mxu0
      %v1629 = vpop.f32.mrf.mxu0
      %v1630 = vadd.f32 0.0, %v1629
      %v1631 = vpop.f32.mrf.mxu0
      %1632 = vmatprep.mubr.bf16.mxu0 0
      %1633 = vmatmul.mubr.bf16.gmra.mxu0 %v1494
      %v1634 = vpop.f32.mrf.mxu0
      %v1635 = vadd.f32 0.0, %v1634
      %v1636 = vpop.f32.mrf.mxu0
      %v1637 = vpop.f32.mrf.mxu0
      %v1638 = vadd.f32 0.0, %v1637
      %v1639 = vpop.f32.mrf.mxu0
      %1640 = vmatprep.mubr.bf16.mxu0 0
      %1641 = vmatmul.mubr.bf16.gmra.mxu0 %v1497
      %v1642 = vpop.f32.mrf.mxu0
      %v1643 = vadd.f32 0.0, %v1642
      %v1644 = vpop.f32.mrf.mxu0
      %v1645 = vpop.f32.mrf.mxu0
      %v1646 = vadd.f32 0.0, %v1645
      %v1647 = vpop.f32.mrf.mxu0
      %1648 = vmatprep.mubr.bf16.mxu0 0
      %1649 = vmatmul.mubr.bf16.gmra.mxu0 %v1500
      %v1650 = vpop.f32.mrf.mxu0
      %v1651 = vadd.f32 0.0, %v1650
      %v1652 = vpop.f32.mrf.mxu0
      %v1653 = vpop.f32.mrf.mxu0
      %v1654 = vadd.f32 0.0, %v1653
      %v1655 = vpop.f32.mrf.mxu0
      %1656 = vmatprep.mubr.bf16.mxu0 0
      %1657 = vmatmul.mubr.bf16.gmra.mxu0 %v1503
      %v1658 = vpop.f32.mrf.mxu0
      %v1659 = vadd.f32 0.0, %v1658
      %v1660 = vpop.f32.mrf.mxu0
      %v1661 = vpop.f32.mrf.mxu0
      %v1662 = vadd.f32 0.0, %v1661
      %v1663 = vpop.f32.mrf.mxu0
      %1664 = vmatprep.mubr.bf16.mxu0 0
      %1665 = vmatmul.mubr.bf16.gmra.mxu0 %v1506
      %v1666 = vpop.f32.mrf.mxu0
      %v1667 = vadd.f32 0.0, %v1666
      %v1668 = vpop.f32.mrf.mxu0
      %v1669 = vpop.f32.mrf.mxu0
      %v1670 = vadd.f32 0.0, %v1669
      %v1671 = vpop.f32.mrf.mxu0
      %1672 = vmatprep.mubr.bf16.mxu0 0
      %1673 = vmatmul.mubr.bf16.gmra.mxu0 %v1509
      %v1674 = vpop.f32.mrf.mxu0
      %v1675 = vadd.f32 0.0, %v1674
      %v1676 = vpop.f32.mrf.mxu0
      %v1677 = vpop.f32.mrf.mxu0
      %v1678 = vadd.f32 0.0, %v1677
      %v1679 = vpop.f32.mrf.mxu0
      %1680 = vmatprep.mubr.bf16.mxu0 0
      %1681 = vmatmul.mubr.bf16.gmra.mxu0 %v1512
      %v1682 = vpop.f32.mrf.mxu0
      %v1683 = vadd.f32 0.0, %v1682
      %v1684 = vpop.f32.mrf.mxu0
      %v1685 = vpop.f32.mrf.mxu0
      %v1686 = vadd.f32 0.0, %v1685
      %v1687 = vpop.f32.mrf.mxu0
      %1688 = vmatprep.mubr.bf16.mxu0 0
      %1689 = vmatmul.mubr.bf16.gmra.mxu0 %v1515
      %v1690 = vpop.f32.mrf.mxu0
      %v1691 = vadd.f32 0.0, %v1690
      %v1692 = vpop.f32.mrf.mxu0
      %v1693 = vpop.f32.mrf.mxu0
      %v1694 = vadd.f32 0.0, %v1693
      %v1695 = vpop.f32.mrf.mxu0
      %1696 = vdwg.mxu0
      %v1697 = vadd.f32 %v1258, %v1555
      %v1698 = vadd.f32 %v1259, %v1558
      %v1699 = vadd.f32 %v1260, %v1563
      %v1700 = vadd.f32 %v1261, %v1566
      %v1701 = vadd.f32 %v1262, %v1571
      %v1702 = vadd.f32 %v1263, %v1574
      %v1703 = vadd.f32 %v1264, %v1579
      %v1704 = vadd.f32 %v1265, %v1582
      %v1705 = vadd.f32 %v1266, %v1587
      %v1706 = vadd.f32 %v1267, %v1590
      %v1707 = vadd.f32 %v1268, %v1595
      %v1708 = vadd.f32 %v1269, %v1598
      %v1709 = vadd.f32 %v1270, %v1603
      %v1710 = vadd.f32 %v1271, %v1606
      %v1711 = vadd.f32 %v1272, %v1611
      %v1712 = vadd.f32 %v1273, %v1614
      %v1713 = vadd.f32 %v1274, %v1619
      %v1714 = vadd.f32 %v1275, %v1622
      %v1715 = vadd.f32 %v1276, %v1627
      %v1716 = vadd.f32 %v1277, %v1630
      %v1717 = vadd.f32 %v1278, %v1635
      %v1718 = vadd.f32 %v1279, %v1638
      %v1719 = vadd.f32 %v1280, %v1643
      %v1720 = vadd.f32 %v1281, %v1646
      %v1721 = vadd.f32 %v1282, %v1651
      %v1722 = vadd.f32 %v1283, %v1654
      %v1723 = vadd.f32 %v1284, %v1659
      %v1724 = vadd.f32 %v1285, %v1662
      %v1725 = vadd.f32 %v1286, %v1667
      %v1726 = vadd.f32 %v1287, %v1670
      %v1727 = vadd.f32 %v1288, %v1675
      %v1728 = vadd.f32 %v1289, %v1678
      %v1729 = vadd.f32 %v1290, %v1683
      %v1730 = vadd.f32 %v1291, %v1686
      %v1731 = vadd.f32 %v1292, %v1691
      %v1732 = vadd.f32 %v1293, %v1694
      %v1733 = vld [vmem:[%s234 + $0x98] sm:$0x3]
      %s1734 = scalar_lea.vmem %s1, 16
      %v1735 = vld [vmem:[%s1734] sm:$0xf]
      %v1737 = vunpack.c.l.b16 %v1733
      %v1738 = vpack.c.b16 %v1737, %v1737
      %vm1739 = vsmask.f32 6400
      %v1741 = vshrl.u32 %v1407, 16
      %v1743 = vrot.slane %v1741, 1
      %v1744 = vshll.u32 %v1407, 16
      %v1746 = vrot.slane %v1744, 2
      %v1747 = vor.u32 %v1743, %v1746
      %v1749 = vshrl.u32 %v1408, 16
      %v1751 = vrot.slane %v1749, 1
      %v1752 = vshll.u32 %v1408, 16
      %v1754 = vrot.slane %v1752, 2
      %v1755 = vor.u32 %v1751, %v1754
      %v1756 = vsel %vm1739, %v1747, %v1755
      %v1758 = vshrl.u32 %v1409, 16
      %v1760 = vrot.slane %v1758, 1
      %v1761 = vshll.u32 %v1409, 16
      %v1763 = vrot.slane %v1761, 2
      %v1764 = vor.u32 %v1760, %v1763
      %v1765 = vsel %vm1739, %v1755, %v1764
      %v1767 = vshrl.u32 %v1410, 16
      %v1769 = vrot.slane %v1767, 1
      %v1770 = vshll.u32 %v1410, 16
      %v1772 = vrot.slane %v1770, 2
      %v1773 = vor.u32 %v1769, %v1772
      %v1774 = vsel %vm1739, %v1764, %v1773
      %v1776 = vshrl.u32 %v1411, 16
      %v1778 = vrot.slane %v1776, 1
      %v1779 = vshll.u32 %v1411, 16
      %v1781 = vrot.slane %v1779, 2
      %v1782 = vor.u32 %v1778, %v1781
      %v1783 = vsel %vm1739, %v1773, %v1782
      %v1785 = vshrl.u32 %v1412, 16
      %v1787 = vrot.slane %v1785, 1
      %v1788 = vshll.u32 %v1412, 16
      %v1790 = vrot.slane %v1788, 2
      %v1791 = vor.u32 %v1787, %v1790
      %v1792 = vsel %vm1739, %v1782, %v1791
      %v1794 = vshrl.u32 %v1413, 16
      %v1796 = vrot.slane %v1794, 1
      %v1797 = vshll.u32 %v1413, 16
      %v1799 = vrot.slane %v1797, 2
      %v1800 = vor.u32 %v1796, %v1799
      %v1801 = vsel %vm1739, %v1791, %v1800
      %v1803 = vshrl.u32 %v1414, 16
      %v1805 = vrot.slane %v1803, 1
      %v1806 = vshll.u32 %v1414, 16
      %v1808 = vrot.slane %v1806, 2
      %v1809 = vor.u32 %v1805, %v1808
      %v1810 = vsel %vm1739, %v1800, %v1809
      %v1812 = vshrl.u32 %v1415, 16
      %v1814 = vrot.slane %v1812, 1
      %v1815 = vshll.u32 %v1415, 16
      %v1817 = vrot.slane %v1815, 2
      %v1818 = vor.u32 %v1814, %v1817
      %v1819 = vsel %vm1739, %v1809, %v1818
      %v1821 = vshrl.u32 %v1416, 16
      %v1823 = vrot.slane %v1821, 1
      %v1824 = vshll.u32 %v1416, 16
      %v1826 = vrot.slane %v1824, 2
      %v1827 = vor.u32 %v1823, %v1826
      %v1828 = vsel %vm1739, %v1818, %v1827
      %v1830 = vshrl.u32 %v1417, 16
      %v1832 = vrot.slane %v1830, 1
      %v1833 = vshll.u32 %v1417, 16
      %v1835 = vrot.slane %v1833, 2
      %v1836 = vor.u32 %v1832, %v1835
      %v1837 = vsel %vm1739, %v1827, %v1836
      %v1839 = vshrl.u32 %v1418, 16
      %v1841 = vrot.slane %v1839, 1
      %v1842 = vshll.u32 %v1418, 16
      %v1844 = vrot.slane %v1842, 2
      %v1845 = vor.u32 %v1841, %v1844
      %v1846 = vsel %vm1739, %v1836, %v1845
      %v1848 = vshrl.u32 %v1419, 16
      %v1850 = vrot.slane %v1848, 1
      %v1851 = vshll.u32 %v1419, 16
      %v1853 = vrot.slane %v1851, 2
      %v1854 = vor.u32 %v1850, %v1853
      %v1855 = vsel %vm1739, %v1845, %v1854
      %v1857 = vshrl.u32 %v1420, 16
      %v1859 = vrot.slane %v1857, 1
      %v1860 = vshll.u32 %v1420, 16
      %v1862 = vrot.slane %v1860, 2
      %v1863 = vor.u32 %v1859, %v1862
      %v1864 = vsel %vm1739, %v1854, %v1863
      %v1866 = vshrl.u32 %v1421, 16
      %v1868 = vrot.slane %v1866, 1
      %v1869 = vshll.u32 %v1421, 16
      %v1871 = vrot.slane %v1869, 2
      %v1872 = vor.u32 %v1868, %v1871
      %v1873 = vsel %vm1739, %v1863, %v1872
      %v1875 = vshrl.u32 %v1422, 16
      %v1877 = vrot.slane %v1875, 1
      %v1878 = vshll.u32 %v1422, 16
      %v1880 = vrot.slane %v1878, 2
      %v1881 = vor.u32 %v1877, %v1880
      %v1882 = vsel %vm1739, %v1872, %v1881
      %v1884 = vshrl.u32 %v1423, 16
      %v1886 = vrot.slane %v1884, 1
      %v1887 = vshll.u32 %v1423, 16
      %v1889 = vrot.slane %v1887, 2
      %v1890 = vor.u32 %v1886, %v1889
      %v1891 = vsel %vm1739, %v1881, %v1890
      %v1893 = vshrl.u32 %v1424, 16
      %v1895 = vrot.slane %v1893, 1
      %v1896 = vshll.u32 %v1424, 16
      %v1898 = vrot.slane %v1896, 2
      %v1899 = vor.u32 %v1895, %v1898
      %v1900 = vsel %vm1739, %v1890, %v1899
      %v1902 = vshrl.u32 %v1738, 16
      %v1904 = vrot.slane %v1902, 1
      %v1905 = vshll.u32 %v1738, 16
      %v1907 = vrot.slane %v1905, 2
      %v1908 = vor.u32 %v1904, %v1907
      %v1909 = vsel %vm1739, %v1899, %v1908
      %v1911 = vsel %vm528, %v1756, 0
      %v1914 = vsel %vm528, %v1765, 0
      %v1917 = vsel %vm528, %v1774, 0
      %v1920 = vsel %vm528, %v1783, 0
      %v1923 = vsel %vm528, %v1792, 0
      %v1926 = vsel %vm528, %v1801, 0
      %v1929 = vsel %vm528, %v1810, 0
      %v1932 = vsel %vm528, %v1819, 0
      %v1935 = vsel %vm528, %v1828, 0
      %v1938 = vsel %vm528, %v1837, 0
      %v1941 = vsel %vm528, %v1846, 0
      %v1944 = vsel %vm528, %v1855, 0
      %v1947 = vsel %vm528, %v1864, 0
      %v1950 = vsel %vm528, %v1873, 0
      %v1953 = vsel %vm528, %v1882, 0
      %v1956 = vsel %vm528, %v1891, 0
      %v1959 = vsel %vm528, %v1900, 0
      %v1962 = vsel %vm528, %v1909, 0
      %v1965 = vsel %vm583, %v1735, 0
      %1967 = vmatprep.subr.bf16.mxu0 0
      %1968 = vmatpush1.bf16.msra.mxu0 0
      %1969 = vmatprep.subr.bf16.mxu0 0
      %1970 = vmatpush1.bf16.msra.mxu0 0
      %1971 = vmatprep.subr.bf16.mxu0 0
      %1972 = vmatpush1.bf16.msra.mxu0 0
      %1973 = vmatprep.subr.bf16.mxu0 0
      %1974 = vmatpush1.bf16.msra.mxu0 0
      %1975 = vmatprep.subr.bf16.mxu0 0
      %1976 = vmatpush1.bf16.msra.mxu0 0
      %1977 = vmatprep.subr.bf16.mxu0 0
      %1978 = vmatpush1.bf16.msra.mxu0 0
      %1979 = vmatprep.subr.bf16.mxu0 0
      %1980 = vmatpush1.bf16.msra.mxu0 0
      %1981 = vmatprep.subr.bf16.mxu0 0
      %1982 = vmatpush1.bf16.msra.mxu0 %v1965
      %1983 = vmatprep.subr.bf16.mxu0 0
      %1984 = vmatpush2.bf16.msra.mxu0 0
      %1985 = vmatprep.subr.bf16.mxu0 0
      %1986 = vmatpush2.bf16.msra.mxu0 0
      %1987 = vmatprep.subr.bf16.mxu0 0
      %1988 = vmatpush2.bf16.msra.mxu0 0
      %1989 = vmatprep.subr.bf16.mxu0 0
      %1990 = vmatpush2.bf16.msra.mxu0 0
      %1991 = vmatprep.subr.bf16.mxu0 0
      %1992 = vmatpush2.bf16.msra.mxu0 0
      %1993 = vmatprep.subr.bf16.mxu0 0
      %1994 = vmatpush2.bf16.msra.mxu0 0
      %1995 = vmatprep.subr.bf16.mxu0 0
      %1996 = vmatpush2.bf16.msra.mxu0 0
      %1997 = vmatprep.subr.bf16.mxu0 0
      %1998 = vmatpush2.bf16.msra.mxu0 0
      %1999 = vmatprep.mubr.bf16.mxu0 0
      %2000 = vmatmul.mubr.bf16.gmra.mxu0 %v1911
      %v2001 = vpop.f32.mrf.mxu0
      %v2002 = vadd.f32 0.0, %v2001
      %v2003 = vpop.f32.mrf.mxu0
      %v2004 = vpop.f32.mrf.mxu0
      %v2005 = vadd.f32 0.0, %v2004
      %v2006 = vpop.f32.mrf.mxu0
      %2007 = vmatprep.mubr.bf16.mxu0 0
      %2008 = vmatmul.mubr.bf16.gmra.mxu0 %v1914
      %v2009 = vpop.f32.mrf.mxu0
      %v2010 = vadd.f32 0.0, %v2009
      %v2011 = vpop.f32.mrf.mxu0
      %v2012 = vpop.f32.mrf.mxu0
      %v2013 = vadd.f32 0.0, %v2012
      %v2014 = vpop.f32.mrf.mxu0
      %2015 = vmatprep.mubr.bf16.mxu0 0
      %2016 = vmatmul.mubr.bf16.gmra.mxu0 %v1917
      %v2017 = vpop.f32.mrf.mxu0
      %v2018 = vadd.f32 0.0, %v2017
      %v2019 = vpop.f32.mrf.mxu0
      %v2020 = vpop.f32.mrf.mxu0
      %v2021 = vadd.f32 0.0, %v2020
      %v2022 = vpop.f32.mrf.mxu0
      %2023 = vmatprep.mubr.bf16.mxu0 0
      %2024 = vmatmul.mubr.bf16.gmra.mxu0 %v1920
      %v2025 = vpop.f32.mrf.mxu0
      %v2026 = vadd.f32 0.0, %v2025
      %v2027 = vpop.f32.mrf.mxu0
      %v2028 = vpop.f32.mrf.mxu0
      %v2029 = vadd.f32 0.0, %v2028
      %v2030 = vpop.f32.mrf.mxu0
      %2031 = vmatprep.mubr.bf16.mxu0 0
      %2032 = vmatmul.mubr.bf16.gmra.mxu0 %v1923
      %v2033 = vpop.f32.mrf.mxu0
      %v2034 = vadd.f32 0.0, %v2033
      %v2035 = vpop.f32.mrf.mxu0
      %v2036 = vpop.f32.mrf.mxu0
      %v2037 = vadd.f32 0.0, %v2036
      %v2038 = vpop.f32.mrf.mxu0
      %2039 = vmatprep.mubr.bf16.mxu0 0
      %2040 = vmatmul.mubr.bf16.gmra.mxu0 %v1926
      %v2041 = vpop.f32.mrf.mxu0
      %v2042 = vadd.f32 0.0, %v2041
      %v2043 = vpop.f32.mrf.mxu0
      %v2044 = vpop.f32.mrf.mxu0
      %v2045 = vadd.f32 0.0, %v2044
      %v2046 = vpop.f32.mrf.mxu0
      %2047 = vmatprep.mubr.bf16.mxu0 0
      %2048 = vmatmul.mubr.bf16.gmra.mxu0 %v1929
      %v2049 = vpop.f32.mrf.mxu0
      %v2050 = vadd.f32 0.0, %v2049
      %v2051 = vpop.f32.mrf.mxu0
      %v2052 = vpop.f32.mrf.mxu0
      %v2053 = vadd.f32 0.0, %v2052
      %v2054 = vpop.f32.mrf.mxu0
      %2055 = vmatprep.mubr.bf16.mxu0 0
      %2056 = vmatmul.mubr.bf16.gmra.mxu0 %v1932
      %v2057 = vpop.f32.mrf.mxu0
      %v2058 = vadd.f32 0.0, %v2057
      %v2059 = vpop.f32.mrf.mxu0
      %v2060 = vpop.f32.mrf.mxu0
      %v2061 = vadd.f32 0.0, %v2060
      %v2062 = vpop.f32.mrf.mxu0
      %2063 = vmatprep.mubr.bf16.mxu0 0
      %2064 = vmatmul.mubr.bf16.gmra.mxu0 %v1935
      %v2065 = vpop.f32.mrf.mxu0
      %v2066 = vadd.f32 0.0, %v2065
      %v2067 = vpop.f32.mrf.mxu0
      %v2068 = vpop.f32.mrf.mxu0
      %v2069 = vadd.f32 0.0, %v2068
      %v2070 = vpop.f32.mrf.mxu0
      %2071 = vmatprep.mubr.bf16.mxu0 0
      %2072 = vmatmul.mubr.bf16.gmra.mxu0 %v1938
      %v2073 = vpop.f32.mrf.mxu0
      %v2074 = vadd.f32 0.0, %v2073
      %v2075 = vpop.f32.mrf.mxu0
      %v2076 = vpop.f32.mrf.mxu0
      %v2077 = vadd.f32 0.0, %v2076
      %v2078 = vpop.f32.mrf.mxu0
      %2079 = vmatprep.mubr.bf16.mxu0 0
      %2080 = vmatmul.mubr.bf16.gmra.mxu0 %v1941
      %v2081 = vpop.f32.mrf.mxu0
      %v2082 = vadd.f32 0.0, %v2081
      %v2083 = vpop.f32.mrf.mxu0
      %v2084 = vpop.f32.mrf.mxu0
      %v2085 = vadd.f32 0.0, %v2084
      %v2086 = vpop.f32.mrf.mxu0
      %2087 = vmatprep.mubr.bf16.mxu0 0
      %2088 = vmatmul.mubr.bf16.gmra.mxu0 %v1944
      %v2089 = vpop.f32.mrf.mxu0
      %v2090 = vadd.f32 0.0, %v2089
      %v2091 = vpop.f32.mrf.mxu0
      %v2092 = vpop.f32.mrf.mxu0
      %v2093 = vadd.f32 0.0, %v2092
      %v2094 = vpop.f32.mrf.mxu0
      %2095 = vmatprep.mubr.bf16.mxu0 0
      %2096 = vmatmul.mubr.bf16.gmra.mxu0 %v1947
      %v2097 = vpop.f32.mrf.mxu0
      %v2098 = vadd.f32 0.0, %v2097
      %v2099 = vpop.f32.mrf.mxu0
      %v2100 = vpop.f32.mrf.mxu0
      %v2101 = vadd.f32 0.0, %v2100
      %v2102 = vpop.f32.mrf.mxu0
      %2103 = vmatprep.mubr.bf16.mxu0 0
      %2104 = vmatmul.mubr.bf16.gmra.mxu0 %v1950
      %v2105 = vpop.f32.mrf.mxu0
      %v2106 = vadd.f32 0.0, %v2105
      %v2107 = vpop.f32.mrf.mxu0
      %v2108 = vpop.f32.mrf.mxu0
      %v2109 = vadd.f32 0.0, %v2108
      %v2110 = vpop.f32.mrf.mxu0
      %2111 = vmatprep.mubr.bf16.mxu0 0
      %2112 = vmatmul.mubr.bf16.gmra.mxu0 %v1953
      %v2113 = vpop.f32.mrf.mxu0
      %v2114 = vadd.f32 0.0, %v2113
      %v2115 = vpop.f32.mrf.mxu0
      %v2116 = vpop.f32.mrf.mxu0
      %v2117 = vadd.f32 0.0, %v2116
      %v2118 = vpop.f32.mrf.mxu0
      %2119 = vmatprep.mubr.bf16.mxu0 0
      %2120 = vmatmul.mubr.bf16.gmra.mxu0 %v1956
      %v2121 = vpop.f32.mrf.mxu0
      %v2122 = vadd.f32 0.0, %v2121
      %v2123 = vpop.f32.mrf.mxu0
      %v2124 = vpop.f32.mrf.mxu0
      %v2125 = vadd.f32 0.0, %v2124
      %v2126 = vpop.f32.mrf.mxu0
      %2127 = vmatprep.mubr.bf16.mxu0 0
      %2128 = vmatmul.mubr.bf16.gmra.mxu0 %v1959
      %v2129 = vpop.f32.mrf.mxu0
      %v2130 = vadd.f32 0.0, %v2129
      %v2131 = vpop.f32.mrf.mxu0
      %v2132 = vpop.f32.mrf.mxu0
      %v2133 = vadd.f32 0.0, %v2132
      %v2134 = vpop.f32.mrf.mxu0
      %2135 = vmatprep.mubr.bf16.mxu0 0
      %2136 = vmatmul.mubr.bf16.gmra.mxu0 %v1962
      %v2137 = vpop.f32.mrf.mxu0
      %v2138 = vadd.f32 0.0, %v2137
      %v2139 = vpop.f32.mrf.mxu0
      %v2140 = vpop.f32.mrf.mxu0
      %v2141 = vadd.f32 0.0, %v2140
      %v2142 = vpop.f32.mrf.mxu0
      %2143 = vdwg.mxu0
      %v2144 = vadd.f32 %v1697, %v2002
      %v2145 = vadd.f32 %v1698, %v2005
      %v2146 = vadd.f32 %v1699, %v2010
      %v2147 = vadd.f32 %v1700, %v2013
      %v2148 = vadd.f32 %v1701, %v2018
      %v2149 = vadd.f32 %v1702, %v2021
      %v2150 = vadd.f32 %v1703, %v2026
      %v2151 = vadd.f32 %v1704, %v2029
      %v2152 = vadd.f32 %v1705, %v2034
      %v2153 = vadd.f32 %v1706, %v2037
      %v2154 = vadd.f32 %v1707, %v2042
      %v2155 = vadd.f32 %v1708, %v2045
      %v2156 = vadd.f32 %v1709, %v2050
      %v2157 = vadd.f32 %v1710, %v2053
      %v2158 = vadd.f32 %v1711, %v2058
      %v2159 = vadd.f32 %v1712, %v2061
      %v2160 = vadd.f32 %v1713, %v2066
      %v2161 = vadd.f32 %v1714, %v2069
      %v2162 = vadd.f32 %v1715, %v2074
      %v2163 = vadd.f32 %v1716, %v2077
      %v2164 = vadd.f32 %v1717, %v2082
      %v2165 = vadd.f32 %v1718, %v2085
      %v2166 = vadd.f32 %v1719, %v2090
      %v2167 = vadd.f32 %v1720, %v2093
      %v2168 = vadd.f32 %v1721, %v2098
      %v2169 = vadd.f32 %v1722, %v2101
      %v2170 = vadd.f32 %v1723, %v2106
      %v2171 = vadd.f32 %v1724, %v2109
      %v2172 = vadd.f32 %v1725, %v2114
      %v2173 = vadd.f32 %v1726, %v2117
      %v2174 = vadd.f32 %v1727, %v2122
      %v2175 = vadd.f32 %v1728, %v2125
      %v2176 = vadd.f32 %v1729, %v2130
      %v2177 = vadd.f32 %v1730, %v2133
      %v2178 = vadd.f32 %v1731, %v2138
      %v2179 = vadd.f32 %v1732, %v2141
      %v2180 = vld [vmem:[%s234 + $0x8] sm:$0xc]
      %s2181 = scalar_lea.vmem %s1, 20
      %v2182 = vld [vmem:[%s2181] sm:$0xf]
      %v2184 = vunpack.c.l.b16 %v2180
      %v2185 = vpack.c.b16 %v1371, %v2184
      %vm2186 = vcmask 1045504
      %v2187 = vrot.slane %v2185, 2
      %v2188 = vrot.slane %v1408, 2
      %v2189 = vsel %vm2186, %v2187, %v2188
      %v2190 = vrot.slane %v1409, 2
      %v2191 = vsel %vm2186, %v2188, %v2190
      %v2192 = vrot.slane %v1410, 2
      %v2193 = vsel %vm2186, %v2190, %v2192
      %v2194 = vrot.slane %v1411, 2
      %v2195 = vsel %vm2186, %v2192, %v2194
      %v2196 = vrot.slane %v1412, 2
      %v2197 = vsel %vm2186, %v2194, %v2196
      %v2198 = vrot.slane %v1413, 2
      %v2199 = vsel %vm2186, %v2196, %v2198
      %v2200 = vrot.slane %v1414, 2
      %v2201 = vsel %vm2186, %v2198, %v2200
      %v2202 = vrot.slane %v1415, 2
      %v2203 = vsel %vm2186, %v2200, %v2202
      %v2204 = vrot.slane %v1416, 2
      %v2205 = vsel %vm2186, %v2202, %v2204
      %v2206 = vrot.slane %v1417, 2
      %v2207 = vsel %vm2186, %v2204, %v2206
      %v2208 = vrot.slane %v1418, 2
      %v2209 = vsel %vm2186, %v2206, %v2208
      %v2210 = vrot.slane %v1419, 2
      %v2211 = vsel %vm2186, %v2208, %v2210
      %v2212 = vrot.slane %v1420, 2
      %v2213 = vsel %vm2186, %v2210, %v2212
      %v2214 = vrot.slane %v1421, 2
      %v2215 = vsel %vm2186, %v2212, %v2214
      %v2216 = vrot.slane %v1422, 2
      %v2217 = vsel %vm2186, %v2214, %v2216
      %v2218 = vrot.slane %v1423, 2
      %v2219 = vsel %vm2186, %v2216, %v2218
      %v2220 = vrot.slane %v1424, 2
      %v2221 = vsel %vm2186, %v2218, %v2220
      %v2222 = vrot.slane %v1738, 2
      %v2223 = vsel %vm2186, %v2220, %v2222
      %v2225 = vsel %vm528, %v2189, 0
      %v2228 = vsel %vm528, %v2191, 0
      %v2231 = vsel %vm528, %v2193, 0
      %v2234 = vsel %vm528, %v2195, 0
      %v2237 = vsel %vm528, %v2197, 0
      %v2240 = vsel %vm528, %v2199, 0
      %v2243 = vsel %vm528, %v2201, 0
      %v2246 = vsel %vm528, %v2203, 0
      %v2249 = vsel %vm528, %v2205, 0
      %v2252 = vsel %vm528, %v2207, 0
      %v2255 = vsel %vm528, %v2209, 0
      %v2258 = vsel %vm528, %v2211, 0
      %v2261 = vsel %vm528, %v2213, 0
      %v2264 = vsel %vm528, %v2215, 0
      %v2267 = vsel %vm528, %v2217, 0
      %v2270 = vsel %vm528, %v2219, 0
      %v2273 = vsel %vm528, %v2221, 0
      %v2276 = vsel %vm528, %v2223, 0
      %v2279 = vsel %vm583, %v2182, 0
      %2281 = vmatprep.subr.bf16.mxu0 0
      %2282 = vmatpush1.bf16.msra.mxu0 0
      %2283 = vmatprep.subr.bf16.mxu0 0
      %2284 = vmatpush1.bf16.msra.mxu0 0
      %2285 = vmatprep.subr.bf16.mxu0 0
      %2286 = vmatpush1.bf16.msra.mxu0 0
      %2287 = vmatprep.subr.bf16.mxu0 0
      %2288 = vmatpush1.bf16.msra.mxu0 0
      %2289 = vmatprep.subr.bf16.mxu0 0
      %2290 = vmatpush1.bf16.msra.mxu0 0
      %2291 = vmatprep.subr.bf16.mxu0 0
      %2292 = vmatpush1.bf16.msra.mxu0 0
      %2293 = vmatprep.subr.bf16.mxu0 0
      %2294 = vmatpush1.bf16.msra.mxu0 0
      %2295 = vmatprep.subr.bf16.mxu0 0
      %2296 = vmatpush1.bf16.msra.mxu0 %v2279
      %2297 = vmatprep.subr.bf16.mxu0 0
      %2298 = vmatpush2.bf16.msra.mxu0 0
      %2299 = vmatprep.subr.bf16.mxu0 0
      %2300 = vmatpush2.bf16.msra.mxu0 0
      %2301 = vmatprep.subr.bf16.mxu0 0
      %2302 = vmatpush2.bf16.msra.mxu0 0
      %2303 = vmatprep.subr.bf16.mxu0 0
      %2304 = vmatpush2.bf16.msra.mxu0 0
      %2305 = vmatprep.subr.bf16.mxu0 0
      %2306 = vmatpush2.bf16.msra.mxu0 0
      %2307 = vmatprep.subr.bf16.mxu0 0
      %2308 = vmatpush2.bf16.msra.mxu0 0
      %2309 = vmatprep.subr.bf16.mxu0 0
      %2310 = vmatpush2.bf16.msra.mxu0 0
      %2311 = vmatprep.subr.bf16.mxu0 0
      %2312 = vmatpush2.bf16.msra.mxu0 0
      %2313 = vmatprep.mubr.bf16.mxu0 0
      %2314 = vmatmul.mubr.bf16.gmra.mxu0 %v2225
      %v2315 = vpop.f32.mrf.mxu0
      %v2316 = vadd.f32 0.0, %v2315
      %v2317 = vpop.f32.mrf.mxu0
      %v2318 = vpop.f32.mrf.mxu0
      %v2319 = vadd.f32 0.0, %v2318
      %v2320 = vpop.f32.mrf.mxu0
      %2321 = vmatprep.mubr.bf16.mxu0 0
      %2322 = vmatmul.mubr.bf16.gmra.mxu0 %v2228
      %v2323 = vpop.f32.mrf.mxu0
      %v2324 = vadd.f32 0.0, %v2323
      %v2325 = vpop.f32.mrf.mxu0
      %v2326 = vpop.f32.mrf.mxu0
      %v2327 = vadd.f32 0.0, %v2326
      %v2328 = vpop.f32.mrf.mxu0
      %2329 = vmatprep.mubr.bf16.mxu0 0
      %2330 = vmatmul.mubr.bf16.gmra.mxu0 %v2231
      %v2331 = vpop.f32.mrf.mxu0
      %v2332 = vadd.f32 0.0, %v2331
      %v2333 = vpop.f32.mrf.mxu0
      %v2334 = vpop.f32.mrf.mxu0
      %v2335 = vadd.f32 0.0, %v2334
      %v2336 = vpop.f32.mrf.mxu0
      %2337 = vmatprep.mubr.bf16.mxu0 0
      %2338 = vmatmul.mubr.bf16.gmra.mxu0 %v2234
      %v2339 = vpop.f32.mrf.mxu0
      %v2340 = vadd.f32 0.0, %v2339
      %v2341 = vpop.f32.mrf.mxu0
      %v2342 = vpop.f32.mrf.mxu0
      %v2343 = vadd.f32 0.0, %v2342
      %v2344 = vpop.f32.mrf.mxu0
      %2345 = vmatprep.mubr.bf16.mxu0 0
      %2346 = vmatmul.mubr.bf16.gmra.mxu0 %v2237
      %v2347 = vpop.f32.mrf.mxu0
      %v2348 = vadd.f32 0.0, %v2347
      %v2349 = vpop.f32.mrf.mxu0
      %v2350 = vpop.f32.mrf.mxu0
      %v2351 = vadd.f32 0.0, %v2350
      %v2352 = vpop.f32.mrf.mxu0
      %2353 = vmatprep.mubr.bf16.mxu0 0
      %2354 = vmatmul.mubr.bf16.gmra.mxu0 %v2240
      %v2355 = vpop.f32.mrf.mxu0
      %v2356 = vadd.f32 0.0, %v2355
      %v2357 = vpop.f32.mrf.mxu0
      %v2358 = vpop.f32.mrf.mxu0
      %v2359 = vadd.f32 0.0, %v2358
      %v2360 = vpop.f32.mrf.mxu0
      %2361 = vmatprep.mubr.bf16.mxu0 0
      %2362 = vmatmul.mubr.bf16.gmra.mxu0 %v2243
      %v2363 = vpop.f32.mrf.mxu0
      %v2364 = vadd.f32 0.0, %v2363
      %v2365 = vpop.f32.mrf.mxu0
      %v2366 = vpop.f32.mrf.mxu0
      %v2367 = vadd.f32 0.0, %v2366
      %v2368 = vpop.f32.mrf.mxu0
      %2369 = vmatprep.mubr.bf16.mxu0 0
      %2370 = vmatmul.mubr.bf16.gmra.mxu0 %v2246
      %v2371 = vpop.f32.mrf.mxu0
      %v2372 = vadd.f32 0.0, %v2371
      %v2373 = vpop.f32.mrf.mxu0
      %v2374 = vpop.f32.mrf.mxu0
      %v2375 = vadd.f32 0.0, %v2374
      %v2376 = vpop.f32.mrf.mxu0
      %2377 = vmatprep.mubr.bf16.mxu0 0
      %2378 = vmatmul.mubr.bf16.gmra.mxu0 %v2249
      %v2379 = vpop.f32.mrf.mxu0
      %v2380 = vadd.f32 0.0, %v2379
      %v2381 = vpop.f32.mrf.mxu0
      %v2382 = vpop.f32.mrf.mxu0
      %v2383 = vadd.f32 0.0, %v2382
      %v2384 = vpop.f32.mrf.mxu0
      %2385 = vmatprep.mubr.bf16.mxu0 0
      %2386 = vmatmul.mubr.bf16.gmra.mxu0 %v2252
      %v2387 = vpop.f32.mrf.mxu0
      %v2388 = vadd.f32 0.0, %v2387
      %v2389 = vpop.f32.mrf.mxu0
      %v2390 = vpop.f32.mrf.mxu0
      %v2391 = vadd.f32 0.0, %v2390
      %v2392 = vpop.f32.mrf.mxu0
      %2393 = vmatprep.mubr.bf16.mxu0 0
      %2394 = vmatmul.mubr.bf16.gmra.mxu0 %v2255
      %v2395 = vpop.f32.mrf.mxu0
      %v2396 = vadd.f32 0.0, %v2395
      %v2397 = vpop.f32.mrf.mxu0
      %v2398 = vpop.f32.mrf.mxu0
      %v2399 = vadd.f32 0.0, %v2398
      %v2400 = vpop.f32.mrf.mxu0
      %2401 = vmatprep.mubr.bf16.mxu0 0
      %2402 = vmatmul.mubr.bf16.gmra.mxu0 %v2258
      %v2403 = vpop.f32.mrf.mxu0
      %v2404 = vadd.f32 0.0, %v2403
      %v2405 = vpop.f32.mrf.mxu0
      %v2406 = vpop.f32.mrf.mxu0
      %v2407 = vadd.f32 0.0, %v2406
      %v2408 = vpop.f32.mrf.mxu0
      %2409 = vmatprep.mubr.bf16.mxu0 0
      %2410 = vmatmul.mubr.bf16.gmra.mxu0 %v2261
      %v2411 = vpop.f32.mrf.mxu0
      %v2412 = vadd.f32 0.0, %v2411
      %v2413 = vpop.f32.mrf.mxu0
      %v2414 = vpop.f32.mrf.mxu0
      %v2415 = vadd.f32 0.0, %v2414
      %v2416 = vpop.f32.mrf.mxu0
      %2417 = vmatprep.mubr.bf16.mxu0 0
      %2418 = vmatmul.mubr.bf16.gmra.mxu0 %v2264
      %v2419 = vpop.f32.mrf.mxu0
      %v2420 = vadd.f32 0.0, %v2419
      %v2421 = vpop.f32.mrf.mxu0
      %v2422 = vpop.f32.mrf.mxu0
      %v2423 = vadd.f32 0.0, %v2422
      %v2424 = vpop.f32.mrf.mxu0
      %2425 = vmatprep.mubr.bf16.mxu0 0
      %2426 = vmatmul.mubr.bf16.gmra.mxu0 %v2267
      %v2427 = vpop.f32.mrf.mxu0
      %v2428 = vadd.f32 0.0, %v2427
      %v2429 = vpop.f32.mrf.mxu0
      %v2430 = vpop.f32.mrf.mxu0
      %v2431 = vadd.f32 0.0, %v2430
      %v2432 = vpop.f32.mrf.mxu0
      %2433 = vmatprep.mubr.bf16.mxu0 0
      %2434 = vmatmul.mubr.bf16.gmra.mxu0 %v2270
      %v2435 = vpop.f32.mrf.mxu0
      %v2436 = vadd.f32 0.0, %v2435
      %v2437 = vpop.f32.mrf.mxu0
      %v2438 = vpop.f32.mrf.mxu0
      %v2439 = vadd.f32 0.0, %v2438
      %v2440 = vpop.f32.mrf.mxu0
      %2441 = vmatprep.mubr.bf16.mxu0 0
      %2442 = vmatmul.mubr.bf16.gmra.mxu0 %v2273
      %v2443 = vpop.f32.mrf.mxu0
      %v2444 = vadd.f32 0.0, %v2443
      %v2445 = vpop.f32.mrf.mxu0
      %v2446 = vpop.f32.mrf.mxu0
      %v2447 = vadd.f32 0.0, %v2446
      %v2448 = vpop.f32.mrf.mxu0
      %2449 = vmatprep.mubr.bf16.mxu0 0
      %2450 = vmatmul.mubr.bf16.gmra.mxu0 %v2276
      %v2451 = vpop.f32.mrf.mxu0
      %v2452 = vadd.f32 0.0, %v2451
      %v2453 = vpop.f32.mrf.mxu0
      %v2454 = vpop.f32.mrf.mxu0
      %v2455 = vadd.f32 0.0, %v2454
      %v2456 = vpop.f32.mrf.mxu0
      %2457 = vdwg.mxu0
      %v2458 = vadd.f32 %v2144, %v2316
      %v2459 = vadd.f32 %v2145, %v2319
      %v2460 = vadd.f32 %v2146, %v2324
      %v2461 = vadd.f32 %v2147, %v2327
      %v2462 = vadd.f32 %v2148, %v2332
      %v2463 = vadd.f32 %v2149, %v2335
      %v2464 = vadd.f32 %v2150, %v2340
      %v2465 = vadd.f32 %v2151, %v2343
      %v2466 = vadd.f32 %v2152, %v2348
      %v2467 = vadd.f32 %v2153, %v2351
      %v2468 = vadd.f32 %v2154, %v2356
      %v2469 = vadd.f32 %v2155, %v2359
      %v2470 = vadd.f32 %v2156, %v2364
      %v2471 = vadd.f32 %v2157, %v2367
      %v2472 = vadd.f32 %v2158, %v2372
      %v2473 = vadd.f32 %v2159, %v2375
      %v2474 = vadd.f32 %v2160, %v2380
      %v2475 = vadd.f32 %v2161, %v2383
      %v2476 = vadd.f32 %v2162, %v2388
      %v2477 = vadd.f32 %v2163, %v2391
      %v2478 = vadd.f32 %v2164, %v2396
      %v2479 = vadd.f32 %v2165, %v2399
      %v2480 = vadd.f32 %v2166, %v2404
      %v2481 = vadd.f32 %v2167, %v2407
      %v2482 = vadd.f32 %v2168, %v2412
      %v2483 = vadd.f32 %v2169, %v2415
      %v2484 = vadd.f32 %v2170, %v2420
      %v2485 = vadd.f32 %v2171, %v2423
      %v2486 = vadd.f32 %v2172, %v2428
      %v2487 = vadd.f32 %v2173, %v2431
      %v2488 = vadd.f32 %v2174, %v2436
      %v2489 = vadd.f32 %v2175, %v2439
      %v2490 = vadd.f32 %v2176, %v2444
      %v2491 = vadd.f32 %v2177, %v2447
      %v2492 = vadd.f32 %v2178, %v2452
      %v2493 = vadd.f32 %v2179, %v2455
      %v2494 = vld [vmem:[%s234 + $0x10] sm:$0xc]
      %v2495 = vld [vmem:[%s234 + $0x14] sm:$0xf]
      %v2496 = vld [vmem:[%s234 + $0x18] sm:$0xf]
      %v2497 = vld [vmem:[%s234 + $0x1c] sm:$0xf]
      %v2498 = vld [vmem:[%s234 + $0x20] sm:$0xf]
      %v2499 = vld [vmem:[%s234 + $0x24] sm:$0xf]
      %v2500 = vld [vmem:[%s234 + $0x28] sm:$0xf]
      %v2501 = vld [vmem:[%s234 + $0x2c] sm:$0xf]
      %v2502 = vld [vmem:[%s234 + $0x30] sm:$0xf]
      %v2503 = vld [vmem:[%s234 + $0x34] sm:$0xf]
      %v2504 = vld [vmem:[%s234 + $0x38] sm:$0xf]
      %v2505 = vld [vmem:[%s234 + $0x3c] sm:$0xf]
      %v2506 = vld [vmem:[%s234 + $0x40] sm:$0xf]
      %v2507 = vld [vmem:[%s234 + $0x44] sm:$0xf]
      %v2508 = vld [vmem:[%s234 + $0x48] sm:$0xf]
      %v2509 = vld [vmem:[%s234 + $0x4c] sm:$0xf]
      %v2510 = vld [vmem:[%s234 + $0x50] sm:$0xf]
      %v2511 = vld [vmem:[%s234 + $0x54] sm:$0xf]
      %v2512 = vld [vmem:[%s234 + $0x58] sm:$0xf]
      %v2513 = vld [vmem:[%s234 + $0x5c] sm:$0xf]
      %v2514 = vld [vmem:[%s234 + $0x60] sm:$0xf]
      %v2515 = vld [vmem:[%s234 + $0x64] sm:$0xf]
      %v2516 = vld [vmem:[%s234 + $0x68] sm:$0xf]
      %v2517 = vld [vmem:[%s234 + $0x6c] sm:$0xf]
      %v2518 = vld [vmem:[%s234 + $0x70] sm:$0xf]
      %v2519 = vld [vmem:[%s234 + $0x74] sm:$0xf]
      %v2520 = vld [vmem:[%s234 + $0x78] sm:$0xf]
      %v2521 = vld [vmem:[%s234 + $0x7c] sm:$0xf]
      %v2522 = vld [vmem:[%s234 + $0x80] sm:$0xf]
      %v2523 = vld [vmem:[%s234 + $0x84] sm:$0xf]
      %v2524 = vld [vmem:[%s234 + $0x88] sm:$0xf]
      %v2525 = vld [vmem:[%s234 + $0x8c] sm:$0xf]
      %v2526 = vld [vmem:[%s234 + $0x90] sm:$0xf]
      %v2527 = vld [vmem:[%s234 + $0x94] sm:$0xf]
      %v2528 = vld [vmem:[%s234 + $0x98] sm:$0xf]
      %v2529 = vld [vmem:[%s234 + $0x9c] sm:$0xf]
      %v2530 = vld [vmem:[%s234 + $0xa0] sm:$0x3]
      %s2531 = scalar_lea.vmem %s1, 24
      %v2532 = vld [vmem:[%s2531] sm:$0xf]
      %v2570 = vunpack.c.l.b16 %v2494
      %v2571 = vunpack.c.l.b16 %v2495
      %v2572 = vunpack.c.l.b16 %v2496
      %v2573 = vunpack.c.l.b16 %v2497
      %v2574 = vunpack.c.l.b16 %v2498
      %v2575 = vunpack.c.l.b16 %v2499
      %v2576 = vunpack.c.l.b16 %v2500
      %v2577 = vunpack.c.l.b16 %v2501
      %v2578 = vunpack.c.l.b16 %v2502
      %v2579 = vunpack.c.l.b16 %v2503
      %v2580 = vunpack.c.l.b16 %v2504
      %v2581 = vunpack.c.l.b16 %v2505
      %v2582 = vunpack.c.l.b16 %v2506
      %v2583 = vunpack.c.l.b16 %v2507
      %v2584 = vunpack.c.l.b16 %v2508
      %v2585 = vunpack.c.l.b16 %v2509
      %v2586 = vunpack.c.l.b16 %v2510
      %v2587 = vunpack.c.l.b16 %v2511
      %v2588 = vunpack.c.l.b16 %v2512
      %v2589 = vunpack.c.l.b16 %v2513
      %v2590 = vunpack.c.l.b16 %v2514
      %v2591 = vunpack.c.l.b16 %v2515
      %v2592 = vunpack.c.l.b16 %v2516
      %v2593 = vunpack.c.l.b16 %v2517
      %v2594 = vunpack.c.l.b16 %v2518
      %v2595 = vunpack.c.l.b16 %v2519
      %v2596 = vunpack.c.l.b16 %v2520
      %v2597 = vunpack.c.l.b16 %v2521
      %v2598 = vunpack.c.l.b16 %v2522
      %v2599 = vunpack.c.l.b16 %v2523
      %v2600 = vunpack.c.l.b16 %v2524
      %v2601 = vunpack.c.l.b16 %v2525
      %v2602 = vunpack.c.l.b16 %v2526
      %v2603 = vunpack.c.l.b16 %v2527
      %v2604 = vunpack.c.l.b16 %v2528
      %v2605 = vunpack.c.l.b16 %v2529
      %v2606 = vunpack.c.l.b16 %v2530
      %v2607 = vpack.c.b16 %v2571, %v2570
      %v2608 = vpack.c.b16 %v2573, %v2572
      %v2609 = vpack.c.b16 %v2575, %v2574
      %v2610 = vpack.c.b16 %v2577, %v2576
      %v2611 = vpack.c.b16 %v2579, %v2578
      %v2612 = vpack.c.b16 %v2581, %v2580
      %v2613 = vpack.c.b16 %v2583, %v2582
      %v2614 = vpack.c.b16 %v2585, %v2584
      %v2615 = vpack.c.b16 %v2587, %v2586
      %v2616 = vpack.c.b16 %v2589, %v2588
      %v2617 = vpack.c.b16 %v2591, %v2590
      %v2618 = vpack.c.b16 %v2593, %v2592
      %v2619 = vpack.c.b16 %v2595, %v2594
      %v2620 = vpack.c.b16 %v2597, %v2596
      %v2621 = vpack.c.b16 %v2599, %v2598
      %v2622 = vpack.c.b16 %v2601, %v2600
      %v2623 = vpack.c.b16 %v2603, %v2602
      %v2624 = vpack.c.b16 %v2605, %v2604
      %v2625 = vpack.c.b16 %v2606, %v2606
      %v2626 = vrot.slane %v2607, 2
      %v2627 = vrot.slane %v2608, 2
      %v2628 = vsel %vm2186, %v2626, %v2627
      %v2629 = vrot.slane %v2609, 2
      %v2630 = vsel %vm2186, %v2627, %v2629
      %v2631 = vrot.slane %v2610, 2
      %v2632 = vsel %vm2186, %v2629, %v2631
      %v2633 = vrot.slane %v2611, 2
      %v2634 = vsel %vm2186, %v2631, %v2633
      %v2635 = vrot.slane %v2612, 2
      %v2636 = vsel %vm2186, %v2633, %v2635
      %v2637 = vrot.slane %v2613, 2
      %v2638 = vsel %vm2186, %v2635, %v2637
      %v2639 = vrot.slane %v2614, 2
      %v2640 = vsel %vm2186, %v2637, %v2639
      %v2641 = vrot.slane %v2615, 2
      %v2642 = vsel %vm2186, %v2639, %v2641
      %v2643 = vrot.slane %v2616, 2
      %v2644 = vsel %vm2186, %v2641, %v2643
      %v2645 = vrot.slane %v2617, 2
      %v2646 = vsel %vm2186, %v2643, %v2645
      %v2647 = vrot.slane %v2618, 2
      %v2648 = vsel %vm2186, %v2645, %v2647
      %v2649 = vrot.slane %v2619, 2
      %v2650 = vsel %vm2186, %v2647, %v2649
      %v2651 = vrot.slane %v2620, 2
      %v2652 = vsel %vm2186, %v2649, %v2651
      %v2653 = vrot.slane %v2621, 2
      %v2654 = vsel %vm2186, %v2651, %v2653
      %v2655 = vrot.slane %v2622, 2
      %v2656 = vsel %vm2186, %v2653, %v2655
      %v2657 = vrot.slane %v2623, 2
      %v2658 = vsel %vm2186, %v2655, %v2657
      %v2659 = vrot.slane %v2624, 2
      %v2660 = vsel %vm2186, %v2657, %v2659
      %v2661 = vrot.slane %v2625, 2
      %v2662 = vsel %vm2186, %v2659, %v2661
      %v2664 = vsel %vm528, %v2628, 0
      %v2667 = vsel %vm528, %v2630, 0
      %v2670 = vsel %vm528, %v2632, 0
      %v2673 = vsel %vm528, %v2634, 0
      %v2676 = vsel %vm528, %v2636, 0
      %v2679 = vsel %vm528, %v2638, 0
      %v2682 = vsel %vm528, %v2640, 0
      %v2685 = vsel %vm528, %v2642, 0
      %v2688 = vsel %vm528, %v2644, 0
      %v2691 = vsel %vm528, %v2646, 0
      %v2694 = vsel %vm528, %v2648, 0
      %v2697 = vsel %vm528, %v2650, 0
      %v2700 = vsel %vm528, %v2652, 0
      %v2703 = vsel %vm528, %v2654, 0
      %v2706 = vsel %vm528, %v2656, 0
      %v2709 = vsel %vm528, %v2658, 0
      %v2712 = vsel %vm528, %v2660, 0
      %v2715 = vsel %vm528, %v2662, 0
      %v2718 = vsel %vm583, %v2532, 0
      %2720 = vmatprep.subr.bf16.mxu0 0
      %2721 = vmatpush1.bf16.msra.mxu0 0
      %2722 = vmatprep.subr.bf16.mxu0 0
      %2723 = vmatpush1.bf16.msra.mxu0 0
      %2724 = vmatprep.subr.bf16.mxu0 0
      %2725 = vmatpush1.bf16.msra.mxu0 0
      %2726 = vmatprep.subr.bf16.mxu0 0
      %2727 = vmatpush1.bf16.msra.mxu0 0
      %2728 = vmatprep.subr.bf16.mxu0 0
      %2729 = vmatpush1.bf16.msra.mxu0 0
      %2730 = vmatprep.subr.bf16.mxu0 0
      %2731 = vmatpush1.bf16.msra.mxu0 0
      %2732 = vmatprep.subr.bf16.mxu0 0
      %2733 = vmatpush1.bf16.msra.mxu0 0
      %2734 = vmatprep.subr.bf16.mxu0 0
      %2735 = vmatpush1.bf16.msra.mxu0 %v2718
      %2736 = vmatprep.subr.bf16.mxu0 0
      %2737 = vmatpush2.bf16.msra.mxu0 0
      %2738 = vmatprep.subr.bf16.mxu0 0
      %2739 = vmatpush2.bf16.msra.mxu0 0
      %2740 = vmatprep.subr.bf16.mxu0 0
      %2741 = vmatpush2.bf16.msra.mxu0 0
      %2742 = vmatprep.subr.bf16.mxu0 0
      %2743 = vmatpush2.bf16.msra.mxu0 0
      %2744 = vmatprep.subr.bf16.mxu0 0
      %2745 = vmatpush2.bf16.msra.mxu0 0
      %2746 = vmatprep.subr.bf16.mxu0 0
      %2747 = vmatpush2.bf16.msra.mxu0 0
      %2748 = vmatprep.subr.bf16.mxu0 0
      %2749 = vmatpush2.bf16.msra.mxu0 0
      %2750 = vmatprep.subr.bf16.mxu0 0
      %2751 = vmatpush2.bf16.msra.mxu0 0
      %2752 = vmatprep.mubr.bf16.mxu0 0
      %2753 = vmatmul.mubr.bf16.gmra.mxu0 %v2664
      %v2754 = vpop.f32.mrf.mxu0
      %v2755 = vadd.f32 0.0, %v2754
      %v2756 = vpop.f32.mrf.mxu0
      %v2757 = vpop.f32.mrf.mxu0
      %v2758 = vadd.f32 0.0, %v2757
      %v2759 = vpop.f32.mrf.mxu0
      %2760 = vmatprep.mubr.bf16.mxu0 0
      %2761 = vmatmul.mubr.bf16.gmra.mxu0 %v2667
      %v2762 = vpop.f32.mrf.mxu0
      %v2763 = vadd.f32 0.0, %v2762
      %v2764 = vpop.f32.mrf.mxu0
      %v2765 = vpop.f32.mrf.mxu0
      %v2766 = vadd.f32 0.0, %v2765
      %v2767 = vpop.f32.mrf.mxu0
      %2768 = vmatprep.mubr.bf16.mxu0 0
      %2769 = vmatmul.mubr.bf16.gmra.mxu0 %v2670
      %v2770 = vpop.f32.mrf.mxu0
      %v2771 = vadd.f32 0.0, %v2770
      %v2772 = vpop.f32.mrf.mxu0
      %v2773 = vpop.f32.mrf.mxu0
      %v2774 = vadd.f32 0.0, %v2773
      %v2775 = vpop.f32.mrf.mxu0
      %2776 = vmatprep.mubr.bf16.mxu0 0
      %2777 = vmatmul.mubr.bf16.gmra.mxu0 %v2673
      %v2778 = vpop.f32.mrf.mxu0
      %v2779 = vadd.f32 0.0, %v2778
      %v2780 = vpop.f32.mrf.mxu0
      %v2781 = vpop.f32.mrf.mxu0
      %v2782 = vadd.f32 0.0, %v2781
      %v2783 = vpop.f32.mrf.mxu0
      %2784 = vmatprep.mubr.bf16.mxu0 0
      %2785 = vmatmul.mubr.bf16.gmra.mxu0 %v2676
      %v2786 = vpop.f32.mrf.mxu0
      %v2787 = vadd.f32 0.0, %v2786
      %v2788 = vpop.f32.mrf.mxu0
      %v2789 = vpop.f32.mrf.mxu0
      %v2790 = vadd.f32 0.0, %v2789
      %v2791 = vpop.f32.mrf.mxu0
      %2792 = vmatprep.mubr.bf16.mxu0 0
      %2793 = vmatmul.mubr.bf16.gmra.mxu0 %v2679
      %v2794 = vpop.f32.mrf.mxu0
      %v2795 = vadd.f32 0.0, %v2794
      %v2796 = vpop.f32.mrf.mxu0
      %v2797 = vpop.f32.mrf.mxu0
      %v2798 = vadd.f32 0.0, %v2797
      %v2799 = vpop.f32.mrf.mxu0
      %2800 = vmatprep.mubr.bf16.mxu0 0
      %2801 = vmatmul.mubr.bf16.gmra.mxu0 %v2682
      %v2802 = vpop.f32.mrf.mxu0
      %v2803 = vadd.f32 0.0, %v2802
      %v2804 = vpop.f32.mrf.mxu0
      %v2805 = vpop.f32.mrf.mxu0
      %v2806 = vadd.f32 0.0, %v2805
      %v2807 = vpop.f32.mrf.mxu0
      %2808 = vmatprep.mubr.bf16.mxu0 0
      %2809 = vmatmul.mubr.bf16.gmra.mxu0 %v2685
      %v2810 = vpop.f32.mrf.mxu0
      %v2811 = vadd.f32 0.0, %v2810
      %v2812 = vpop.f32.mrf.mxu0
      %v2813 = vpop.f32.mrf.mxu0
      %v2814 = vadd.f32 0.0, %v2813
      %v2815 = vpop.f32.mrf.mxu0
      %2816 = vmatprep.mubr.bf16.mxu0 0
      %2817 = vmatmul.mubr.bf16.gmra.mxu0 %v2688
      %v2818 = vpop.f32.mrf.mxu0
      %v2819 = vadd.f32 0.0, %v2818
      %v2820 = vpop.f32.mrf.mxu0
      %v2821 = vpop.f32.mrf.mxu0
      %v2822 = vadd.f32 0.0, %v2821
      %v2823 = vpop.f32.mrf.mxu0
      %2824 = vmatprep.mubr.bf16.mxu0 0
      %2825 = vmatmul.mubr.bf16.gmra.mxu0 %v2691
      %v2826 = vpop.f32.mrf.mxu0
      %v2827 = vadd.f32 0.0, %v2826
      %v2828 = vpop.f32.mrf.mxu0
      %v2829 = vpop.f32.mrf.mxu0
      %v2830 = vadd.f32 0.0, %v2829
      %v2831 = vpop.f32.mrf.mxu0
      %2832 = vmatprep.mubr.bf16.mxu0 0
      %2833 = vmatmul.mubr.bf16.gmra.mxu0 %v2694
      %v2834 = vpop.f32.mrf.mxu0
      %v2835 = vadd.f32 0.0, %v2834
      %v2836 = vpop.f32.mrf.mxu0
      %v2837 = vpop.f32.mrf.mxu0
      %v2838 = vadd.f32 0.0, %v2837
      %v2839 = vpop.f32.mrf.mxu0
      %2840 = vmatprep.mubr.bf16.mxu0 0
      %2841 = vmatmul.mubr.bf16.gmra.mxu0 %v2697
      %v2842 = vpop.f32.mrf.mxu0
      %v2843 = vadd.f32 0.0, %v2842
      %v2844 = vpop.f32.mrf.mxu0
      %v2845 = vpop.f32.mrf.mxu0
      %v2846 = vadd.f32 0.0, %v2845
      %v2847 = vpop.f32.mrf.mxu0
      %2848 = vmatprep.mubr.bf16.mxu0 0
      %2849 = vmatmul.mubr.bf16.gmra.mxu0 %v2700
      %v2850 = vpop.f32.mrf.mxu0
      %v2851 = vadd.f32 0.0, %v2850
      %v2852 = vpop.f32.mrf.mxu0
      %v2853 = vpop.f32.mrf.mxu0
      %v2854 = vadd.f32 0.0, %v2853
      %v2855 = vpop.f32.mrf.mxu0
      %2856 = vmatprep.mubr.bf16.mxu0 0
      %2857 = vmatmul.mubr.bf16.gmra.mxu0 %v2703
      %v2858 = vpop.f32.mrf.mxu0
      %v2859 = vadd.f32 0.0, %v2858
      %v2860 = vpop.f32.mrf.mxu0
      %v2861 = vpop.f32.mrf.mxu0
      %v2862 = vadd.f32 0.0, %v2861
      %v2863 = vpop.f32.mrf.mxu0
      %2864 = vmatprep.mubr.bf16.mxu0 0
      %2865 = vmatmul.mubr.bf16.gmra.mxu0 %v2706
      %v2866 = vpop.f32.mrf.mxu0
      %v2867 = vadd.f32 0.0, %v2866
      %v2868 = vpop.f32.mrf.mxu0
      %v2869 = vpop.f32.mrf.mxu0
      %v2870 = vadd.f32 0.0, %v2869
      %v2871 = vpop.f32.mrf.mxu0
      %2872 = vmatprep.mubr.bf16.mxu0 0
      %2873 = vmatmul.mubr.bf16.gmra.mxu0 %v2709
      %v2874 = vpop.f32.mrf.mxu0
      %v2875 = vadd.f32 0.0, %v2874
      %v2876 = vpop.f32.mrf.mxu0
      %v2877 = vpop.f32.mrf.mxu0
      %v2878 = vadd.f32 0.0, %v2877
      %v2879 = vpop.f32.mrf.mxu0
      %2880 = vmatprep.mubr.bf16.mxu0 0
      %2881 = vmatmul.mubr.bf16.gmra.mxu0 %v2712
      %v2882 = vpop.f32.mrf.mxu0
      %v2883 = vadd.f32 0.0, %v2882
      %v2884 = vpop.f32.mrf.mxu0
      %v2885 = vpop.f32.mrf.mxu0
      %v2886 = vadd.f32 0.0, %v2885
      %v2887 = vpop.f32.mrf.mxu0
      %2888 = vmatprep.mubr.bf16.mxu0 0
      %2889 = vmatmul.mubr.bf16.gmra.mxu0 %v2715
      %v2890 = vpop.f32.mrf.mxu0
      %v2891 = vadd.f32 0.0, %v2890
      %v2892 = vpop.f32.mrf.mxu0
      %v2893 = vpop.f32.mrf.mxu0
      %v2894 = vadd.f32 0.0, %v2893
      %v2895 = vpop.f32.mrf.mxu0
      %2896 = vdwg.mxu0
      %v2897 = vadd.f32 %v2458, %v2755
      %v2898 = vadd.f32 %v2459, %v2758
      %v2899 = vadd.f32 %v2460, %v2763
      %v2900 = vadd.f32 %v2461, %v2766
      %v2901 = vadd.f32 %v2462, %v2771
      %v2902 = vadd.f32 %v2463, %v2774
      %v2903 = vadd.f32 %v2464, %v2779
      %v2904 = vadd.f32 %v2465, %v2782
      %v2905 = vadd.f32 %v2466, %v2787
      %v2906 = vadd.f32 %v2467, %v2790
      %v2907 = vadd.f32 %v2468, %v2795
      %v2908 = vadd.f32 %v2469, %v2798
      %v2909 = vadd.f32 %v2470, %v2803
      %v2910 = vadd.f32 %v2471, %v2806
      %v2911 = vadd.f32 %v2472, %v2811
      %v2912 = vadd.f32 %v2473, %v2814
      %v2913 = vadd.f32 %v2474, %v2819
      %v2914 = vadd.f32 %v2475, %v2822
      %v2915 = vadd.f32 %v2476, %v2827
      %v2916 = vadd.f32 %v2477, %v2830
      %v2917 = vadd.f32 %v2478, %v2835
      %v2918 = vadd.f32 %v2479, %v2838
      %v2919 = vadd.f32 %v2480, %v2843
      %v2920 = vadd.f32 %v2481, %v2846
      %v2921 = vadd.f32 %v2482, %v2851
      %v2922 = vadd.f32 %v2483, %v2854
      %v2923 = vadd.f32 %v2484, %v2859
      %v2924 = vadd.f32 %v2485, %v2862
      %v2925 = vadd.f32 %v2486, %v2867
      %v2926 = vadd.f32 %v2487, %v2870
      %v2927 = vadd.f32 %v2488, %v2875
      %v2928 = vadd.f32 %v2489, %v2878
      %v2929 = vadd.f32 %v2490, %v2883
      %v2930 = vadd.f32 %v2491, %v2886
      %v2931 = vadd.f32 %v2492, %v2891
      %v2932 = vadd.f32 %v2493, %v2894
      %v2933 = vld [vmem:[%s234 + $0xa0] sm:$0x7]
      %s2934 = scalar_lea.vmem %s1, 28
      %v2935 = vld [vmem:[%s2934] sm:$0xf]
      %v2937 = vunpack.c.l.b16 %v2933
      %v2938 = vpack.c.b16 %v2937, %v2937
      %vm2939 = vsmask.f32 5376
      %v2941 = vshrl.u32 %v2607, 16
      %v2943 = vrot.slane %v2941, 2
      %v2944 = vshll.u32 %v2607, 16
      %v2946 = vrot.slane %v2944, 3
      %v2947 = vor.u32 %v2943, %v2946
      %v2949 = vshrl.u32 %v2608, 16
      %v2951 = vrot.slane %v2949, 2
      %v2952 = vshll.u32 %v2608, 16
      %v2954 = vrot.slane %v2952, 3
      %v2955 = vor.u32 %v2951, %v2954
      %v2956 = vsel %vm2939, %v2947, %v2955
      %v2958 = vshrl.u32 %v2609, 16
      %v2960 = vrot.slane %v2958, 2
      %v2961 = vshll.u32 %v2609, 16
      %v2963 = vrot.slane %v2961, 3
      %v2964 = vor.u32 %v2960, %v2963
      %v2965 = vsel %vm2939, %v2955, %v2964
      %v2967 = vshrl.u32 %v2610, 16
      %v2969 = vrot.slane %v2967, 2
      %v2970 = vshll.u32 %v2610, 16
      %v2972 = vrot.slane %v2970, 3
      %v2973 = vor.u32 %v2969, %v2972
      %v2974 = vsel %vm2939, %v2964, %v2973
      %v2976 = vshrl.u32 %v2611, 16
      %v2978 = vrot.slane %v2976, 2
      %v2979 = vshll.u32 %v2611, 16
      %v2981 = vrot.slane %v2979, 3
      %v2982 = vor.u32 %v2978, %v2981
      %v2983 = vsel %vm2939, %v2973, %v2982
      %v2985 = vshrl.u32 %v2612, 16
      %v2987 = vrot.slane %v2985, 2
      %v2988 = vshll.u32 %v2612, 16
      %v2990 = vrot.slane %v2988, 3
      %v2991 = vor.u32 %v2987, %v2990
      %v2992 = vsel %vm2939, %v2982, %v2991
      %v2994 = vshrl.u32 %v2613, 16
      %v2996 = vrot.slane %v2994, 2
      %v2997 = vshll.u32 %v2613, 16
      %v2999 = vrot.slane %v2997, 3
      %v3000 = vor.u32 %v2996, %v2999
      %v3001 = vsel %vm2939, %v2991, %v3000
      %v3003 = vshrl.u32 %v2614, 16
      %v3005 = vrot.slane %v3003, 2
      %v3006 = vshll.u32 %v2614, 16
      %v3008 = vrot.slane %v3006, 3
      %v3009 = vor.u32 %v3005, %v3008
      %v3010 = vsel %vm2939, %v3000, %v3009
      %v3012 = vshrl.u32 %v2615, 16
      %v3014 = vrot.slane %v3012, 2
      %v3015 = vshll.u32 %v2615, 16
      %v3017 = vrot.slane %v3015, 3
      %v3018 = vor.u32 %v3014, %v3017
      %v3019 = vsel %vm2939, %v3009, %v3018
      %v3021 = vshrl.u32 %v2616, 16
      %v3023 = vrot.slane %v3021, 2
      %v3024 = vshll.u32 %v2616, 16
      %v3026 = vrot.slane %v3024, 3
      %v3027 = vor.u32 %v3023, %v3026
      %v3028 = vsel %vm2939, %v3018, %v3027
      %v3030 = vshrl.u32 %v2617, 16
      %v3032 = vrot.slane %v3030, 2
      %v3033 = vshll.u32 %v2617, 16
      %v3035 = vrot.slane %v3033, 3
      %v3036 = vor.u32 %v3032, %v3035
      %v3037 = vsel %vm2939, %v3027, %v3036
      %v3039 = vshrl.u32 %v2618, 16
      %v3041 = vrot.slane %v3039, 2
      %v3042 = vshll.u32 %v2618, 16
      %v3044 = vrot.slane %v3042, 3
      %v3045 = vor.u32 %v3041, %v3044
      %v3046 = vsel %vm2939, %v3036, %v3045
      %v3048 = vshrl.u32 %v2619, 16
      %v3050 = vrot.slane %v3048, 2
      %v3051 = vshll.u32 %v2619, 16
      %v3053 = vrot.slane %v3051, 3
      %v3054 = vor.u32 %v3050, %v3053
      %v3055 = vsel %vm2939, %v3045, %v3054
      %v3057 = vshrl.u32 %v2620, 16
      %v3059 = vrot.slane %v3057, 2
      %v3060 = vshll.u32 %v2620, 16
      %v3062 = vrot.slane %v3060, 3
      %v3063 = vor.u32 %v3059, %v3062
      %v3064 = vsel %vm2939, %v3054, %v3063
      %v3066 = vshrl.u32 %v2621, 16
      %v3068 = vrot.slane %v3066, 2
      %v3069 = vshll.u32 %v2621, 16
      %v3071 = vrot.slane %v3069, 3
      %v3072 = vor.u32 %v3068, %v3071
      %v3073 = vsel %vm2939, %v3063, %v3072
      %v3075 = vshrl.u32 %v2622, 16
      %v3077 = vrot.slane %v3075, 2
      %v3078 = vshll.u32 %v2622, 16
      %v3080 = vrot.slane %v3078, 3
      %v3081 = vor.u32 %v3077, %v3080
      %v3082 = vsel %vm2939, %v3072, %v3081
      %v3084 = vshrl.u32 %v2623, 16
      %v3086 = vrot.slane %v3084, 2
      %v3087 = vshll.u32 %v2623, 16
      %v3089 = vrot.slane %v3087, 3
      %v3090 = vor.u32 %v3086, %v3089
      %v3091 = vsel %vm2939, %v3081, %v3090
      %v3093 = vshrl.u32 %v2624, 16
      %v3095 = vrot.slane %v3093, 2
      %v3096 = vshll.u32 %v2624, 16
      %v3098 = vrot.slane %v3096, 3
      %v3099 = vor.u32 %v3095, %v3098
      %v3100 = vsel %vm2939, %v3090, %v3099
      %v3102 = vshrl.u32 %v2938, 16
      %v3104 = vrot.slane %v3102, 2
      %v3105 = vshll.u32 %v2938, 16
      %v3107 = vrot.slane %v3105, 3
      %v3108 = vor.u32 %v3104, %v3107
      %v3109 = vsel %vm2939, %v3099, %v3108
      %v3111 = vsel %vm528, %v2956, 0
      %v3114 = vsel %vm528, %v2965, 0
      %v3117 = vsel %vm528, %v2974, 0
      %v3120 = vsel %vm528, %v2983, 0
      %v3123 = vsel %vm528, %v2992, 0
      %v3126 = vsel %vm528, %v3001, 0
      %v3129 = vsel %vm528, %v3010, 0
      %v3132 = vsel %vm528, %v3019, 0
      %v3135 = vsel %vm528, %v3028, 0
      %v3138 = vsel %vm528, %v3037, 0
      %v3141 = vsel %vm528, %v3046, 0
      %v3144 = vsel %vm528, %v3055, 0
      %v3147 = vsel %vm528, %v3064, 0
      %v3150 = vsel %vm528, %v3073, 0
      %v3153 = vsel %vm528, %v3082, 0
      %v3156 = vsel %vm528, %v3091, 0
      %v3159 = vsel %vm528, %v3100, 0
      %v3162 = vsel %vm528, %v3109, 0
      %v3165 = vsel %vm583, %v2935, 0
      %3167 = vmatprep.subr.bf16.mxu0 0
      %3168 = vmatpush1.bf16.msra.mxu0 0
      %3169 = vmatprep.subr.bf16.mxu0 0
      %3170 = vmatpush1.bf16.msra.mxu0 0
      %3171 = vmatprep.subr.bf16.mxu0 0
      %3172 = vmatpush1.bf16.msra.mxu0 0
      %3173 = vmatprep.subr.bf16.mxu0 0
      %3174 = vmatpush1.bf16.msra.mxu0 0
      %3175 = vmatprep.subr.bf16.mxu0 0
      %3176 = vmatpush1.bf16.msra.mxu0 0
      %3177 = vmatprep.subr.bf16.mxu0 0
      %3178 = vmatpush1.bf16.msra.mxu0 0
      %3179 = vmatprep.subr.bf16.mxu0 0
      %3180 = vmatpush1.bf16.msra.mxu0 0
      %3181 = vmatprep.subr.bf16.mxu0 0
      %3182 = vmatpush1.bf16.msra.mxu0 %v3165
      %3183 = vmatprep.subr.bf16.mxu0 0
      %3184 = vmatpush2.bf16.msra.mxu0 0
      %3185 = vmatprep.subr.bf16.mxu0 0
      %3186 = vmatpush2.bf16.msra.mxu0 0
      %3187 = vmatprep.subr.bf16.mxu0 0
      %3188 = vmatpush2.bf16.msra.mxu0 0
      %3189 = vmatprep.subr.bf16.mxu0 0
      %3190 = vmatpush2.bf16.msra.mxu0 0
      %3191 = vmatprep.subr.bf16.mxu0 0
      %3192 = vmatpush2.bf16.msra.mxu0 0
      %3193 = vmatprep.subr.bf16.mxu0 0
      %3194 = vmatpush2.bf16.msra.mxu0 0
      %3195 = vmatprep.subr.bf16.mxu0 0
      %3196 = vmatpush2.bf16.msra.mxu0 0
      %3197 = vmatprep.subr.bf16.mxu0 0
      %3198 = vmatpush2.bf16.msra.mxu0 0
      %3199 = vmatprep.mubr.bf16.mxu0 0
      %3200 = vmatmul.mubr.bf16.gmra.mxu0 %v3111
      %v3201 = vpop.f32.mrf.mxu0
      %v3202 = vadd.f32 0.0, %v3201
      %v3203 = vpop.f32.mrf.mxu0
      %v3204 = vpop.f32.mrf.mxu0
      %v3205 = vadd.f32 0.0, %v3204
      %v3206 = vpop.f32.mrf.mxu0
      %3207 = vmatprep.mubr.bf16.mxu0 0
      %3208 = vmatmul.mubr.bf16.gmra.mxu0 %v3114
      %v3209 = vpop.f32.mrf.mxu0
      %v3210 = vadd.f32 0.0, %v3209
      %v3211 = vpop.f32.mrf.mxu0
      %v3212 = vpop.f32.mrf.mxu0
      %v3213 = vadd.f32 0.0, %v3212
      %v3214 = vpop.f32.mrf.mxu0
      %3215 = vmatprep.mubr.bf16.mxu0 0
      %3216 = vmatmul.mubr.bf16.gmra.mxu0 %v3117
      %v3217 = vpop.f32.mrf.mxu0
      %v3218 = vadd.f32 0.0, %v3217
      %v3219 = vpop.f32.mrf.mxu0
      %v3220 = vpop.f32.mrf.mxu0
      %v3221 = vadd.f32 0.0, %v3220
      %v3222 = vpop.f32.mrf.mxu0
      %3223 = vmatprep.mubr.bf16.mxu0 0
      %3224 = vmatmul.mubr.bf16.gmra.mxu0 %v3120
      %v3225 = vpop.f32.mrf.mxu0
      %v3226 = vadd.f32 0.0, %v3225
      %v3227 = vpop.f32.mrf.mxu0
      %v3228 = vpop.f32.mrf.mxu0
      %v3229 = vadd.f32 0.0, %v3228
      %v3230 = vpop.f32.mrf.mxu0
      %3231 = vmatprep.mubr.bf16.mxu0 0
      %3232 = vmatmul.mubr.bf16.gmra.mxu0 %v3123
      %v3233 = vpop.f32.mrf.mxu0
      %v3234 = vadd.f32 0.0, %v3233
      %v3235 = vpop.f32.mrf.mxu0
      %v3236 = vpop.f32.mrf.mxu0
      %v3237 = vadd.f32 0.0, %v3236
      %v3238 = vpop.f32.mrf.mxu0
      %3239 = vmatprep.mubr.bf16.mxu0 0
      %3240 = vmatmul.mubr.bf16.gmra.mxu0 %v3126
      %v3241 = vpop.f32.mrf.mxu0
      %v3242 = vadd.f32 0.0, %v3241
      %v3243 = vpop.f32.mrf.mxu0
      %v3244 = vpop.f32.mrf.mxu0
      %v3245 = vadd.f32 0.0, %v3244
      %v3246 = vpop.f32.mrf.mxu0
      %3247 = vmatprep.mubr.bf16.mxu0 0
      %3248 = vmatmul.mubr.bf16.gmra.mxu0 %v3129
      %v3249 = vpop.f32.mrf.mxu0
      %v3250 = vadd.f32 0.0, %v3249
      %v3251 = vpop.f32.mrf.mxu0
      %v3252 = vpop.f32.mrf.mxu0
      %v3253 = vadd.f32 0.0, %v3252
      %v3254 = vpop.f32.mrf.mxu0
      %3255 = vmatprep.mubr.bf16.mxu0 0
      %3256 = vmatmul.mubr.bf16.gmra.mxu0 %v3132
      %v3257 = vpop.f32.mrf.mxu0
      %v3258 = vadd.f32 0.0, %v3257
      %v3259 = vpop.f32.mrf.mxu0
      %v3260 = vpop.f32.mrf.mxu0
      %v3261 = vadd.f32 0.0, %v3260
      %v3262 = vpop.f32.mrf.mxu0
      %3263 = vmatprep.mubr.bf16.mxu0 0
      %3264 = vmatmul.mubr.bf16.gmra.mxu0 %v3135
      %v3265 = vpop.f32.mrf.mxu0
      %v3266 = vadd.f32 0.0, %v3265
      %v3267 = vpop.f32.mrf.mxu0
      %v3268 = vpop.f32.mrf.mxu0
      %v3269 = vadd.f32 0.0, %v3268
      %v3270 = vpop.f32.mrf.mxu0
      %3271 = vmatprep.mubr.bf16.mxu0 0
      %3272 = vmatmul.mubr.bf16.gmra.mxu0 %v3138
      %v3273 = vpop.f32.mrf.mxu0
      %v3274 = vadd.f32 0.0, %v3273
      %v3275 = vpop.f32.mrf.mxu0
      %v3276 = vpop.f32.mrf.mxu0
      %v3277 = vadd.f32 0.0, %v3276
      %v3278 = vpop.f32.mrf.mxu0
      %3279 = vmatprep.mubr.bf16.mxu0 0
      %3280 = vmatmul.mubr.bf16.gmra.mxu0 %v3141
      %v3281 = vpop.f32.mrf.mxu0
      %v3282 = vadd.f32 0.0, %v3281
      %v3283 = vpop.f32.mrf.mxu0
      %v3284 = vpop.f32.mrf.mxu0
      %v3285 = vadd.f32 0.0, %v3284
      %v3286 = vpop.f32.mrf.mxu0
      %3287 = vmatprep.mubr.bf16.mxu0 0
      %3288 = vmatmul.mubr.bf16.gmra.mxu0 %v3144
      %v3289 = vpop.f32.mrf.mxu0
      %v3290 = vadd.f32 0.0, %v3289
      %v3291 = vpop.f32.mrf.mxu0
      %v3292 = vpop.f32.mrf.mxu0
      %v3293 = vadd.f32 0.0, %v3292
      %v3294 = vpop.f32.mrf.mxu0
      %3295 = vmatprep.mubr.bf16.mxu0 0
      %3296 = vmatmul.mubr.bf16.gmra.mxu0 %v3147
      %v3297 = vpop.f32.mrf.mxu0
      %v3298 = vadd.f32 0.0, %v3297
      %v3299 = vpop.f32.mrf.mxu0
      %v3300 = vpop.f32.mrf.mxu0
      %v3301 = vadd.f32 0.0, %v3300
      %v3302 = vpop.f32.mrf.mxu0
      %3303 = vmatprep.mubr.bf16.mxu0 0
      %3304 = vmatmul.mubr.bf16.gmra.mxu0 %v3150
      %v3305 = vpop.f32.mrf.mxu0
      %v3306 = vadd.f32 0.0, %v3305
      %v3307 = vpop.f32.mrf.mxu0
      %v3308 = vpop.f32.mrf.mxu0
      %v3309 = vadd.f32 0.0, %v3308
      %v3310 = vpop.f32.mrf.mxu0
      %3311 = vmatprep.mubr.bf16.mxu0 0
      %3312 = vmatmul.mubr.bf16.gmra.mxu0 %v3153
      %v3313 = vpop.f32.mrf.mxu0
      %v3314 = vadd.f32 0.0, %v3313
      %v3315 = vpop.f32.mrf.mxu0
      %v3316 = vpop.f32.mrf.mxu0
      %v3317 = vadd.f32 0.0, %v3316
      %v3318 = vpop.f32.mrf.mxu0
      %3319 = vmatprep.mubr.bf16.mxu0 0
      %3320 = vmatmul.mubr.bf16.gmra.mxu0 %v3156
      %v3321 = vpop.f32.mrf.mxu0
      %v3322 = vadd.f32 0.0, %v3321
      %v3323 = vpop.f32.mrf.mxu0
      %v3324 = vpop.f32.mrf.mxu0
      %v3325 = vadd.f32 0.0, %v3324
      %v3326 = vpop.f32.mrf.mxu0
      %3327 = vmatprep.mubr.bf16.mxu0 0
      %3328 = vmatmul.mubr.bf16.gmra.mxu0 %v3159
      %v3329 = vpop.f32.mrf.mxu0
      %v3330 = vadd.f32 0.0, %v3329
      %v3331 = vpop.f32.mrf.mxu0
      %v3332 = vpop.f32.mrf.mxu0
      %v3333 = vadd.f32 0.0, %v3332
      %v3334 = vpop.f32.mrf.mxu0
      %3335 = vmatprep.mubr.bf16.mxu0 0
      %3336 = vmatmul.mubr.bf16.gmra.mxu0 %v3162
      %v3337 = vpop.f32.mrf.mxu0
      %v3338 = vadd.f32 0.0, %v3337
      %v3339 = vpop.f32.mrf.mxu0
      %v3340 = vpop.f32.mrf.mxu0
      %v3341 = vadd.f32 0.0, %v3340
      %v3342 = vpop.f32.mrf.mxu0
      %3343 = vdwg.mxu0
      %v3344 = vadd.f32 %v2897, %v3202
      %v3345 = vadd.f32 %v2898, %v3205
      %v3346 = vadd.f32 %v2899, %v3210
      %v3347 = vadd.f32 %v2900, %v3213
      %v3348 = vadd.f32 %v2901, %v3218
      %v3349 = vadd.f32 %v2902, %v3221
      %v3350 = vadd.f32 %v2903, %v3226
      %v3351 = vadd.f32 %v2904, %v3229
      %v3352 = vadd.f32 %v2905, %v3234
      %v3353 = vadd.f32 %v2906, %v3237
      %v3354 = vadd.f32 %v2907, %v3242
      %v3355 = vadd.f32 %v2908, %v3245
      %v3356 = vadd.f32 %v2909, %v3250
      %v3357 = vadd.f32 %v2910, %v3253
      %v3358 = vadd.f32 %v2911, %v3258
      %v3359 = vadd.f32 %v2912, %v3261
      %v3360 = vadd.f32 %v2913, %v3266
      %v3361 = vadd.f32 %v2914, %v3269
      %v3362 = vadd.f32 %v2915, %v3274
      %v3363 = vadd.f32 %v2916, %v3277
      %v3364 = vadd.f32 %v2917, %v3282
      %v3365 = vadd.f32 %v2918, %v3285
      %v3366 = vadd.f32 %v2919, %v3290
      %v3367 = vadd.f32 %v2920, %v3293
      %v3368 = vadd.f32 %v2921, %v3298
      %v3369 = vadd.f32 %v2922, %v3301
      %v3370 = vadd.f32 %v2923, %v3306
      %v3371 = vadd.f32 %v2924, %v3309
      %v3372 = vadd.f32 %v2925, %v3314
      %v3373 = vadd.f32 %v2926, %v3317
      %v3374 = vadd.f32 %v2927, %v3322
      %v3375 = vadd.f32 %v2928, %v3325
      %v3376 = vadd.f32 %v2929, %v3330
      %v3377 = vadd.f32 %v2930, %v3333
      %v3378 = vadd.f32 %v2931, %v3338
      %v3379 = vadd.f32 %v2932, %v3341
      %v3380 = vld [vmem:[%s234 + $0x10] sm:$0x8]
      %s3381 = scalar_lea.vmem %s1, 32
      %v3382 = vld [vmem:[%s3381] sm:$0xf]
      %v3384 = vunpack.c.l.b16 %v3380
      %v3385 = vpack.c.b16 %v2571, %v3384
      %vm3386 = vcmask 1044480
      %v3387 = vrot.slane %v3385, 3
      %v3388 = vrot.slane %v2608, 3
      %v3389 = vsel %vm3386, %v3387, %v3388
      %v3390 = vrot.slane %v2609, 3
      %v3391 = vsel %vm3386, %v3388, %v3390
      %v3392 = vrot.slane %v2610, 3
      %v3393 = vsel %vm3386, %v3390, %v3392
      %v3394 = vrot.slane %v2611, 3
      %v3395 = vsel %vm3386, %v3392, %v3394
      %v3396 = vrot.slane %v2612, 3
      %v3397 = vsel %vm3386, %v3394, %v3396
      %v3398 = vrot.slane %v2613, 3
      %v3399 = vsel %vm3386, %v3396, %v3398
      %v3400 = vrot.slane %v2614, 3
      %v3401 = vsel %vm3386, %v3398, %v3400
      %v3402 = vrot.slane %v2615, 3
      %v3403 = vsel %vm3386, %v3400, %v3402
      %v3404 = vrot.slane %v2616, 3
      %v3405 = vsel %vm3386, %v3402, %v3404
      %v3406 = vrot.slane %v2617, 3
      %v3407 = vsel %vm3386, %v3404, %v3406
      %v3408 = vrot.slane %v2618, 3
      %v3409 = vsel %vm3386, %v3406, %v3408
      %v3410 = vrot.slane %v2619, 3
      %v3411 = vsel %vm3386, %v3408, %v3410
      %v3412 = vrot.slane %v2620, 3
      %v3413 = vsel %vm3386, %v3410, %v3412
      %v3414 = vrot.slane %v2621, 3
      %v3415 = vsel %vm3386, %v3412, %v3414
      %v3416 = vrot.slane %v2622, 3
      %v3417 = vsel %vm3386, %v3414, %v3416
      %v3418 = vrot.slane %v2623, 3
      %v3419 = vsel %vm3386, %v3416, %v3418
      %v3420 = vrot.slane %v2624, 3
      %v3421 = vsel %vm3386, %v3418, %v3420
      %v3422 = vrot.slane %v2938, 3
      %v3423 = vsel %vm3386, %v3420, %v3422
      %v3425 = vsel %vm528, %v3389, 0
      %v3428 = vsel %vm528, %v3391, 0
      %v3431 = vsel %vm528, %v3393, 0
      %v3434 = vsel %vm528, %v3395, 0
      %v3437 = vsel %vm528, %v3397, 0
      %v3440 = vsel %vm528, %v3399, 0
      %v3443 = vsel %vm528, %v3401, 0
      %v3446 = vsel %vm528, %v3403, 0
      %v3449 = vsel %vm528, %v3405, 0
      %v3452 = vsel %vm528, %v3407, 0
      %v3455 = vsel %vm528, %v3409, 0
      %v3458 = vsel %vm528, %v3411, 0
      %v3461 = vsel %vm528, %v3413, 0
      %v3464 = vsel %vm528, %v3415, 0
      %v3467 = vsel %vm528, %v3417, 0
      %v3470 = vsel %vm528, %v3419, 0
      %v3473 = vsel %vm528, %v3421, 0
      %v3476 = vsel %vm528, %v3423, 0
      %v3479 = vsel %vm583, %v3382, 0
      %3481 = vmatprep.subr.bf16.mxu0 0
      %3482 = vmatpush1.bf16.msra.mxu0 0
      %3483 = vmatprep.subr.bf16.mxu0 0
      %3484 = vmatpush1.bf16.msra.mxu0 0
      %3485 = vmatprep.subr.bf16.mxu0 0
      %3486 = vmatpush1.bf16.msra.mxu0 0
      %3487 = vmatprep.subr.bf16.mxu0 0
      %3488 = vmatpush1.bf16.msra.mxu0 0
      %3489 = vmatprep.subr.bf16.mxu0 0
      %3490 = vmatpush1.bf16.msra.mxu0 0
      %3491 = vmatprep.subr.bf16.mxu0 0
      %3492 = vmatpush1.bf16.msra.mxu0 0
      %3493 = vmatprep.subr.bf16.mxu0 0
      %3494 = vmatpush1.bf16.msra.mxu0 0
      %3495 = vmatprep.subr.bf16.mxu0 0
      %3496 = vmatpush1.bf16.msra.mxu0 %v3479
      %3497 = vmatprep.subr.bf16.mxu0 0
      %3498 = vmatpush2.bf16.msra.mxu0 0
      %3499 = vmatprep.subr.bf16.mxu0 0
      %3500 = vmatpush2.bf16.msra.mxu0 0
      %3501 = vmatprep.subr.bf16.mxu0 0
      %3502 = vmatpush2.bf16.msra.mxu0 0
      %3503 = vmatprep.subr.bf16.mxu0 0
      %3504 = vmatpush2.bf16.msra.mxu0 0
      %3505 = vmatprep.subr.bf16.mxu0 0
      %3506 = vmatpush2.bf16.msra.mxu0 0
      %3507 = vmatprep.subr.bf16.mxu0 0
      %3508 = vmatpush2.bf16.msra.mxu0 0
      %3509 = vmatprep.subr.bf16.mxu0 0
      %3510 = vmatpush2.bf16.msra.mxu0 0
      %3511 = vmatprep.subr.bf16.mxu0 0
      %3512 = vmatpush2.bf16.msra.mxu0 0
      %3513 = vmatprep.mubr.bf16.mxu0 0
      %3514 = vmatmul.mubr.bf16.gmra.mxu0 %v3425
      %v3515 = vpop.f32.mrf.mxu0
      %v3516 = vadd.f32 0.0, %v3515
      %v3517 = vpop.f32.mrf.mxu0
      %v3518 = vpop.f32.mrf.mxu0
      %v3519 = vadd.f32 0.0, %v3518
      %v3520 = vpop.f32.mrf.mxu0
      %3521 = vmatprep.mubr.bf16.mxu0 0
      %3522 = vmatmul.mubr.bf16.gmra.mxu0 %v3428
      %v3523 = vpop.f32.mrf.mxu0
      %v3524 = vadd.f32 0.0, %v3523
      %v3525 = vpop.f32.mrf.mxu0
      %v3526 = vpop.f32.mrf.mxu0
      %v3527 = vadd.f32 0.0, %v3526
      %v3528 = vpop.f32.mrf.mxu0
      %3529 = vmatprep.mubr.bf16.mxu0 0
      %3530 = vmatmul.mubr.bf16.gmra.mxu0 %v3431
      %v3531 = vpop.f32.mrf.mxu0
      %v3532 = vadd.f32 0.0, %v3531
      %v3533 = vpop.f32.mrf.mxu0
      %v3534 = vpop.f32.mrf.mxu0
      %v3535 = vadd.f32 0.0, %v3534
      %v3536 = vpop.f32.mrf.mxu0
      %3537 = vmatprep.mubr.bf16.mxu0 0
      %3538 = vmatmul.mubr.bf16.gmra.mxu0 %v3434
      %v3539 = vpop.f32.mrf.mxu0
      %v3540 = vadd.f32 0.0, %v3539
      %v3541 = vpop.f32.mrf.mxu0
      %v3542 = vpop.f32.mrf.mxu0
      %v3543 = vadd.f32 0.0, %v3542
      %v3544 = vpop.f32.mrf.mxu0
      %3545 = vmatprep.mubr.bf16.mxu0 0
      %3546 = vmatmul.mubr.bf16.gmra.mxu0 %v3437
      %v3547 = vpop.f32.mrf.mxu0
      %v3548 = vadd.f32 0.0, %v3547
      %v3549 = vpop.f32.mrf.mxu0
      %v3550 = vpop.f32.mrf.mxu0
      %v3551 = vadd.f32 0.0, %v3550
      %v3552 = vpop.f32.mrf.mxu0
      %3553 = vmatprep.mubr.bf16.mxu0 0
      %3554 = vmatmul.mubr.bf16.gmra.mxu0 %v3440
      %v3555 = vpop.f32.mrf.mxu0
      %v3556 = vadd.f32 0.0, %v3555
      %v3557 = vpop.f32.mrf.mxu0
      %v3558 = vpop.f32.mrf.mxu0
      %v3559 = vadd.f32 0.0, %v3558
      %v3560 = vpop.f32.mrf.mxu0
      %3561 = vmatprep.mubr.bf16.mxu0 0
      %3562 = vmatmul.mubr.bf16.gmra.mxu0 %v3443
      %v3563 = vpop.f32.mrf.mxu0
      %v3564 = vadd.f32 0.0, %v3563
      %v3565 = vpop.f32.mrf.mxu0
      %v3566 = vpop.f32.mrf.mxu0
      %v3567 = vadd.f32 0.0, %v3566
      %v3568 = vpop.f32.mrf.mxu0
      %3569 = vmatprep.mubr.bf16.mxu0 0
      %3570 = vmatmul.mubr.bf16.gmra.mxu0 %v3446
      %v3571 = vpop.f32.mrf.mxu0
      %v3572 = vadd.f32 0.0, %v3571
      %v3573 = vpop.f32.mrf.mxu0
      %v3574 = vpop.f32.mrf.mxu0
      %v3575 = vadd.f32 0.0, %v3574
      %v3576 = vpop.f32.mrf.mxu0
      %3577 = vmatprep.mubr.bf16.mxu0 0
      %3578 = vmatmul.mubr.bf16.gmra.mxu0 %v3449
      %v3579 = vpop.f32.mrf.mxu0
      %v3580 = vadd.f32 0.0, %v3579
      %v3581 = vpop.f32.mrf.mxu0
      %v3582 = vpop.f32.mrf.mxu0
      %v3583 = vadd.f32 0.0, %v3582
      %v3584 = vpop.f32.mrf.mxu0
      %3585 = vmatprep.mubr.bf16.mxu0 0
      %3586 = vmatmul.mubr.bf16.gmra.mxu0 %v3452
      %v3587 = vpop.f32.mrf.mxu0
      %v3588 = vadd.f32 0.0, %v3587
      %v3589 = vpop.f32.mrf.mxu0
      %v3590 = vpop.f32.mrf.mxu0
      %v3591 = vadd.f32 0.0, %v3590
      %v3592 = vpop.f32.mrf.mxu0
      %3593 = vmatprep.mubr.bf16.mxu0 0
      %3594 = vmatmul.mubr.bf16.gmra.mxu0 %v3455
      %v3595 = vpop.f32.mrf.mxu0
      %v3596 = vadd.f32 0.0, %v3595
      %v3597 = vpop.f32.mrf.mxu0
      %v3598 = vpop.f32.mrf.mxu0
      %v3599 = vadd.f32 0.0, %v3598
      %v3600 = vpop.f32.mrf.mxu0
      %3601 = vmatprep.mubr.bf16.mxu0 0
      %3602 = vmatmul.mubr.bf16.gmra.mxu0 %v3458
      %v3603 = vpop.f32.mrf.mxu0
      %v3604 = vadd.f32 0.0, %v3603
      %v3605 = vpop.f32.mrf.mxu0
      %v3606 = vpop.f32.mrf.mxu0
      %v3607 = vadd.f32 0.0, %v3606
      %v3608 = vpop.f32.mrf.mxu0
      %3609 = vmatprep.mubr.bf16.mxu0 0
      %3610 = vmatmul.mubr.bf16.gmra.mxu0 %v3461
      %v3611 = vpop.f32.mrf.mxu0
      %v3612 = vadd.f32 0.0, %v3611
      %v3613 = vpop.f32.mrf.mxu0
      %v3614 = vpop.f32.mrf.mxu0
      %v3615 = vadd.f32 0.0, %v3614
      %v3616 = vpop.f32.mrf.mxu0
      %3617 = vmatprep.mubr.bf16.mxu0 0
      %3618 = vmatmul.mubr.bf16.gmra.mxu0 %v3464
      %v3619 = vpop.f32.mrf.mxu0
      %v3620 = vadd.f32 0.0, %v3619
      %v3621 = vpop.f32.mrf.mxu0
      %v3622 = vpop.f32.mrf.mxu0
      %v3623 = vadd.f32 0.0, %v3622
      %v3624 = vpop.f32.mrf.mxu0
      %3625 = vmatprep.mubr.bf16.mxu0 0
      %3626 = vmatmul.mubr.bf16.gmra.mxu0 %v3467
      %v3627 = vpop.f32.mrf.mxu0
      %v3628 = vadd.f32 0.0, %v3627
      %v3629 = vpop.f32.mrf.mxu0
      %v3630 = vpop.f32.mrf.mxu0
      %v3631 = vadd.f32 0.0, %v3630
      %v3632 = vpop.f32.mrf.mxu0
      %3633 = vmatprep.mubr.bf16.mxu0 0
      %3634 = vmatmul.mubr.bf16.gmra.mxu0 %v3470
      %v3635 = vpop.f32.mrf.mxu0
      %v3636 = vadd.f32 0.0, %v3635
      %v3637 = vpop.f32.mrf.mxu0
      %v3638 = vpop.f32.mrf.mxu0
      %v3639 = vadd.f32 0.0, %v3638
      %v3640 = vpop.f32.mrf.mxu0
      %3641 = vmatprep.mubr.bf16.mxu0 0
      %3642 = vmatmul.mubr.bf16.gmra.mxu0 %v3473
      %v3643 = vpop.f32.mrf.mxu0
      %v3644 = vadd.f32 0.0, %v3643
      %v3645 = vpop.f32.mrf.mxu0
      %v3646 = vpop.f32.mrf.mxu0
      %v3647 = vadd.f32 0.0, %v3646
      %v3648 = vpop.f32.mrf.mxu0
      %3649 = vmatprep.mubr.bf16.mxu0 0
      %3650 = vmatmul.mubr.bf16.gmra.mxu0 %v3476
      %v3651 = vpop.f32.mrf.mxu0
      %v3652 = vadd.f32 0.0, %v3651
      %v3653 = vpop.f32.mrf.mxu0
      %v3654 = vpop.f32.mrf.mxu0
      %v3655 = vadd.f32 0.0, %v3654
      %v3656 = vpop.f32.mrf.mxu0
      %3657 = vdwg.mxu0
      %v3658 = vadd.f32 %v3344, %v3516
      %v3659 = vadd.f32 %v3345, %v3519
      %v3660 = vadd.f32 %v3346, %v3524
      %v3661 = vadd.f32 %v3347, %v3527
      %v3662 = vadd.f32 %v3348, %v3532
      %v3663 = vadd.f32 %v3349, %v3535
      %v3664 = vadd.f32 %v3350, %v3540
      %v3665 = vadd.f32 %v3351, %v3543
      %v3666 = vadd.f32 %v3352, %v3548
      %v3667 = vadd.f32 %v3353, %v3551
      %v3668 = vadd.f32 %v3354, %v3556
      %v3669 = vadd.f32 %v3355, %v3559
      %v3670 = vadd.f32 %v3356, %v3564
      %v3671 = vadd.f32 %v3357, %v3567
      %v3672 = vadd.f32 %v3358, %v3572
      %v3673 = vadd.f32 %v3359, %v3575
      %v3674 = vadd.f32 %v3360, %v3580
      %v3675 = vadd.f32 %v3361, %v3583
      %v3676 = vadd.f32 %v3362, %v3588
      %v3677 = vadd.f32 %v3363, %v3591
      %v3678 = vadd.f32 %v3364, %v3596
      %v3679 = vadd.f32 %v3365, %v3599
      %v3680 = vadd.f32 %v3366, %v3604
      %v3681 = vadd.f32 %v3367, %v3607
      %v3682 = vadd.f32 %v3368, %v3612
      %v3683 = vadd.f32 %v3369, %v3615
      %v3684 = vadd.f32 %v3370, %v3620
      %v3685 = vadd.f32 %v3371, %v3623
      %v3686 = vadd.f32 %v3372, %v3628
      %v3687 = vadd.f32 %v3373, %v3631
      %v3688 = vadd.f32 %v3374, %v3636
      %v3689 = vadd.f32 %v3375, %v3639
      %v3690 = vadd.f32 %v3376, %v3644
      %v3691 = vadd.f32 %v3377, %v3647
      %v3692 = vadd.f32 %v3378, %v3652
      %v3693 = vadd.f32 %v3379, %v3655
      %v3694 = vld [vmem:[%s2] sm:$0x1]
      %v3696 = vlaneseq
      %v3697 = vshrl.u32 %v3696, 7
      %v3698 = vsub.s32 0, %v3697
      %v3699 = vrot.slane %v3694, %v3698
      %v3701 = vadd.f32 %v3658, %v3699
      %v3702 = vadd.f32 %v3659, %v3699
      %v3703 = vadd.f32 %v3660, %v3699
      %v3704 = vadd.f32 %v3661, %v3699
      %v3705 = vadd.f32 %v3662, %v3699
      %v3706 = vadd.f32 %v3663, %v3699
      %v3707 = vadd.f32 %v3664, %v3699
      %v3708 = vadd.f32 %v3665, %v3699
      %v3709 = vadd.f32 %v3666, %v3699
      %v3710 = vadd.f32 %v3667, %v3699
      %v3711 = vadd.f32 %v3668, %v3699
      %v3712 = vadd.f32 %v3669, %v3699
      %v3713 = vadd.f32 %v3670, %v3699
      %v3714 = vadd.f32 %v3671, %v3699
      %v3715 = vadd.f32 %v3672, %v3699
      %v3716 = vadd.f32 %v3673, %v3699
      %v3717 = vadd.f32 %v3674, %v3699
      %v3718 = vadd.f32 %v3675, %v3699
      %v3719 = vadd.f32 %v3676, %v3699
      %v3720 = vadd.f32 %v3677, %v3699
      %v3721 = vadd.f32 %v3678, %v3699
      %v3722 = vadd.f32 %v3679, %v3699
      %v3723 = vadd.f32 %v3680, %v3699
      %v3724 = vadd.f32 %v3681, %v3699
      %v3725 = vadd.f32 %v3682, %v3699
      %v3726 = vadd.f32 %v3683, %v3699
      %v3727 = vadd.f32 %v3684, %v3699
      %v3728 = vadd.f32 %v3685, %v3699
      %v3729 = vadd.f32 %v3686, %v3699
      %v3730 = vadd.f32 %v3687, %v3699
      %v3731 = vadd.f32 %v3688, %v3699
      %v3732 = vadd.f32 %v3689, %v3699
      %v3733 = vadd.f32 %v3690, %v3699
      %v3734 = vadd.f32 %v3691, %v3699
      %v3735 = vadd.f32 %v3692, %v3699
      %v3736 = vadd.f32 %v3693, %v3699
      %v3737 = vld [vmem:[%s239] sm:$0xf]
      %v3738 = vld [vmem:[%s239 + $0x4] sm:$0xf]
      %v3739 = vld [vmem:[%s239 + $0x8] sm:$0xf]
      %v3740 = vld [vmem:[%s239 + $0xc] sm:$0xf]
      %v3741 = vld [vmem:[%s239 + $0x10] sm:$0xf]
      %v3742 = vld [vmem:[%s239 + $0x14] sm:$0xf]
      %v3743 = vld [vmem:[%s239 + $0x18] sm:$0xf]
      %v3744 = vld [vmem:[%s239 + $0x1c] sm:$0xf]
      %v3745 = vld [vmem:[%s239 + $0x20] sm:$0xf]
      %v3746 = vld [vmem:[%s239 + $0x24] sm:$0xf]
      %v3747 = vld [vmem:[%s239 + $0x28] sm:$0xf]
      %v3748 = vld [vmem:[%s239 + $0x2c] sm:$0xf]
      %v3749 = vld [vmem:[%s239 + $0x30] sm:$0xf]
      %v3750 = vld [vmem:[%s239 + $0x34] sm:$0xf]
      %v3751 = vld [vmem:[%s239 + $0x38] sm:$0xf]
      %v3752 = vld [vmem:[%s239 + $0x3c] sm:$0xf]
      %v3753 = vld [vmem:[%s239 + $0x40] sm:$0xf]
      %v3754 = vld [vmem:[%s239 + $0x44] sm:$0xf]
      %v3755 = vld [vmem:[%s239 + $0x48] sm:$0xf]
      %v3756 = vld [vmem:[%s239 + $0x4c] sm:$0xf]
      %v3757 = vld [vmem:[%s239 + $0x50] sm:$0xf]
      %v3758 = vld [vmem:[%s239 + $0x54] sm:$0xf]
      %v3759 = vld [vmem:[%s239 + $0x58] sm:$0xf]
      %v3760 = vld [vmem:[%s239 + $0x5c] sm:$0xf]
      %v3761 = vld [vmem:[%s239 + $0x60] sm:$0xf]
      %v3762 = vld [vmem:[%s239 + $0x64] sm:$0xf]
      %v3763 = vld [vmem:[%s239 + $0x68] sm:$0xf]
      %v3764 = vld [vmem:[%s239 + $0x6c] sm:$0xf]
      %v3765 = vld [vmem:[%s239 + $0x70] sm:$0xf]
      %v3766 = vld [vmem:[%s239 + $0x74] sm:$0xf]
      %v3767 = vld [vmem:[%s239 + $0x78] sm:$0xf]
      %v3768 = vld [vmem:[%s239 + $0x7c] sm:$0xf]
      %v3769 = vld [vmem:[%s239 + $0x80] sm:$0xf]
      %v3770 = vld [vmem:[%s239 + $0x84] sm:$0xf]
      %v3771 = vld [vmem:[%s239 + $0x88] sm:$0xf]
      %v3772 = vld [vmem:[%s239 + $0x8c] sm:$0xf]
      %v3773 = vld [vmem:[%s4] sm:$0x3]
      %v3810 = vunpack.c.l.b16 %v3737
      %v3811 = vunpack.c.l.b16 %v3738
      %v3812 = vunpack.c.l.b16 %v3739
      %v3813 = vunpack.c.l.b16 %v3740
      %v3814 = vunpack.c.l.b16 %v3741
      %v3815 = vunpack.c.l.b16 %v3742
      %v3816 = vunpack.c.l.b16 %v3743
      %v3817 = vunpack.c.l.b16 %v3744
      %v3818 = vunpack.c.l.b16 %v3745
      %v3819 = vunpack.c.l.b16 %v3746
      %v3820 = vunpack.c.l.b16 %v3747
      %v3821 = vunpack.c.l.b16 %v3748
      %v3822 = vunpack.c.l.b16 %v3749
      %v3823 = vunpack.c.l.b16 %v3750
      %v3824 = vunpack.c.l.b16 %v3751
      %v3825 = vunpack.c.l.b16 %v3752
      %v3826 = vunpack.c.l.b16 %v3753
      %v3827 = vunpack.c.l.b16 %v3754
      %v3828 = vunpack.c.l.b16 %v3755
      %v3829 = vunpack.c.l.b16 %v3756
      %v3830 = vunpack.c.l.b16 %v3757
      %v3831 = vunpack.c.l.b16 %v3758
      %v3832 = vunpack.c.l.b16 %v3759
      %v3833 = vunpack.c.l.b16 %v3760
      %v3834 = vunpack.c.l.b16 %v3761
      %v3835 = vunpack.c.l.b16 %v3762
      %v3836 = vunpack.c.l.b16 %v3763
      %v3837 = vunpack.c.l.b16 %v3764
      %v3838 = vunpack.c.l.b16 %v3765
      %v3839 = vunpack.c.l.b16 %v3766
      %v3840 = vunpack.c.l.b16 %v3767
      %v3841 = vunpack.c.l.b16 %v3768
      %v3842 = vunpack.c.l.b16 %v3769
      %v3843 = vunpack.c.l.b16 %v3770
      %v3844 = vunpack.c.l.b16 %v3771
      %v3845 = vunpack.c.l.b16 %v3772
      %v3846 = vpack.c.b16 %v3811, %v3810
      %v3847 = vpack.c.b16 %v3813, %v3812
      %v3848 = vpack.c.b16 %v3815, %v3814
      %v3849 = vpack.c.b16 %v3817, %v3816
      %v3850 = vpack.c.b16 %v3819, %v3818
      %v3851 = vpack.c.b16 %v3821, %v3820
      %v3852 = vpack.c.b16 %v3823, %v3822
      %v3853 = vpack.c.b16 %v3825, %v3824
      %v3854 = vpack.c.b16 %v3827, %v3826
      %v3855 = vpack.c.b16 %v3829, %v3828
      %v3856 = vpack.c.b16 %v3831, %v3830
      %v3857 = vpack.c.b16 %v3833, %v3832
      %v3858 = vpack.c.b16 %v3835, %v3834
      %v3859 = vpack.c.b16 %v3837, %v3836
      %v3860 = vpack.c.b16 %v3839, %v3838
      %v3861 = vpack.c.b16 %v3841, %v3840
      %v3862 = vpack.c.b16 %v3843, %v3842
      %v3863 = vpack.c.b16 %v3845, %v3844
      %vm3864 = vcmask 31744
      %v3866 = vsel %vm3864, %v3846, 0
      %v3869 = vsel %vm3864, %v3847, 0
      %v3872 = vsel %vm3864, %v3848, 0
      %v3875 = vsel %vm3864, %v3849, 0
      %v3878 = vsel %vm3864, %v3850, 0
      %v3881 = vsel %vm3864, %v3851, 0
      %v3884 = vsel %vm3864, %v3852, 0
      %v3887 = vsel %vm3864, %v3853, 0
      %v3890 = vsel %vm3864, %v3854, 0
      %v3893 = vsel %vm3864, %v3855, 0
      %v3896 = vsel %vm3864, %v3856, 0
      %v3899 = vsel %vm3864, %v3857, 0
      %v3902 = vsel %vm3864, %v3858, 0
      %v3905 = vsel %vm3864, %v3859, 0
      %v3908 = vsel %vm3864, %v3860, 0
      %v3911 = vsel %vm3864, %v3861, 0
      %v3914 = vsel %vm3864, %v3862, 0
      %v3917 = vsel %vm3864, %v3863, 0
      %vm3919 = vcmask 1041408
      %v3921 = vsel %vm3919, %v3773, 0
      %3923 = vmatprep.subr.bf16.mxu0 0
      %3924 = vmatpush1.bf16.msra.mxu0 0
      %3925 = vmatprep.subr.bf16.mxu0 0
      %3926 = vmatpush1.bf16.msra.mxu0 0
      %3927 = vmatprep.subr.bf16.mxu0 0
      %3928 = vmatpush1.bf16.msra.mxu0 0
      %3929 = vmatprep.subr.bf16.mxu0 0
      %3930 = vmatpush1.bf16.msra.mxu0 0
      %3931 = vmatprep.subr.bf16.mxu0 0
      %3932 = vmatpush1.bf16.msra.mxu0 0
      %3933 = vmatprep.subr.bf16.mxu0 0
      %3934 = vmatpush1.bf16.msra.mxu0 0
      %3935 = vmatprep.subr.bf16.mxu0 0
      %3936 = vmatpush1.bf16.msra.mxu0 0
      %3937 = vmatprep.subr.bf16.mxu0 0
      %3938 = vmatpush1.bf16.msra.mxu0 %v3921
      %3939 = vmatprep.subr.bf16.mxu0 0
      %3940 = vmatpush2.bf16.msra.mxu0 0
      %3941 = vmatprep.subr.bf16.mxu0 0
      %3942 = vmatpush2.bf16.msra.mxu0 0
      %3943 = vmatprep.subr.bf16.mxu0 0
      %3944 = vmatpush2.bf16.msra.mxu0 0
      %3945 = vmatprep.subr.bf16.mxu0 0
      %3946 = vmatpush2.bf16.msra.mxu0 0
      %3947 = vmatprep.subr.bf16.mxu0 0
      %3948 = vmatpush2.bf16.msra.mxu0 0
      %3949 = vmatprep.subr.bf16.mxu0 0
      %3950 = vmatpush2.bf16.msra.mxu0 0
      %3951 = vmatprep.subr.bf16.mxu0 0
      %3952 = vmatpush2.bf16.msra.mxu0 0
      %3953 = vmatprep.subr.bf16.mxu0 0
      %3954 = vmatpush2.bf16.msra.mxu0 0
      %3955 = vmatprep.mubr.bf16.mxu0 0
      %3956 = vmatmul.mubr.bf16.gmra.mxu0 %v3866
      %v3957 = vpop.f32.mrf.mxu0
      %v3958 = vadd.f32 0.0, %v3957
      %v3959 = vpop.f32.mrf.mxu0
      %v3960 = vpop.f32.mrf.mxu0
      %v3961 = vadd.f32 0.0, %v3960
      %v3962 = vpop.f32.mrf.mxu0
      %3963 = vmatprep.mubr.bf16.mxu0 0
      %3964 = vmatmul.mubr.bf16.gmra.mxu0 %v3869
      %v3965 = vpop.f32.mrf.mxu0
      %v3966 = vadd.f32 0.0, %v3965
      %v3967 = vpop.f32.mrf.mxu0
      %v3968 = vpop.f32.mrf.mxu0
      %v3969 = vadd.f32 0.0, %v3968
      %v3970 = vpop.f32.mrf.mxu0
      %3971 = vmatprep.mubr.bf16.mxu0 0
      %3972 = vmatmul.mubr.bf16.gmra.mxu0 %v3872
      %v3973 = vpop.f32.mrf.mxu0
      %v3974 = vadd.f32 0.0, %v3973
      %v3975 = vpop.f32.mrf.mxu0
      %v3976 = vpop.f32.mrf.mxu0
      %v3977 = vadd.f32 0.0, %v3976
      %v3978 = vpop.f32.mrf.mxu0
      %3979 = vmatprep.mubr.bf16.mxu0 0
      %3980 = vmatmul.mubr.bf16.gmra.mxu0 %v3875
      %v3981 = vpop.f32.mrf.mxu0
      %v3982 = vadd.f32 0.0, %v3981
      %v3983 = vpop.f32.mrf.mxu0
      %v3984 = vpop.f32.mrf.mxu0
      %v3985 = vadd.f32 0.0, %v3984
      %v3986 = vpop.f32.mrf.mxu0
      %3987 = vmatprep.mubr.bf16.mxu0 0
      %3988 = vmatmul.mubr.bf16.gmra.mxu0 %v3878
      %v3989 = vpop.f32.mrf.mxu0
      %v3990 = vadd.f32 0.0, %v3989
      %v3991 = vpop.f32.mrf.mxu0
      %v3992 = vpop.f32.mrf.mxu0
      %v3993 = vadd.f32 0.0, %v3992
      %v3994 = vpop.f32.mrf.mxu0
      %3995 = vmatprep.mubr.bf16.mxu0 0
      %3996 = vmatmul.mubr.bf16.gmra.mxu0 %v3881
      %v3997 = vpop.f32.mrf.mxu0
      %v3998 = vadd.f32 0.0, %v3997
      %v3999 = vpop.f32.mrf.mxu0
      %v4000 = vpop.f32.mrf.mxu0
      %v4001 = vadd.f32 0.0, %v4000
      %v4002 = vpop.f32.mrf.mxu0
      %4003 = vmatprep.mubr.bf16.mxu0 0
      %4004 = vmatmul.mubr.bf16.gmra.mxu0 %v3884
      %v4005 = vpop.f32.mrf.mxu0
      %v4006 = vadd.f32 0.0, %v4005
      %v4007 = vpop.f32.mrf.mxu0
      %v4008 = vpop.f32.mrf.mxu0
      %v4009 = vadd.f32 0.0, %v4008
      %v4010 = vpop.f32.mrf.mxu0
      %4011 = vmatprep.mubr.bf16.mxu0 0
      %4012 = vmatmul.mubr.bf16.gmra.mxu0 %v3887
      %v4013 = vpop.f32.mrf.mxu0
      %v4014 = vadd.f32 0.0, %v4013
      %v4015 = vpop.f32.mrf.mxu0
      %v4016 = vpop.f32.mrf.mxu0
      %v4017 = vadd.f32 0.0, %v4016
      %v4018 = vpop.f32.mrf.mxu0
      %4019 = vmatprep.mubr.bf16.mxu0 0
      %4020 = vmatmul.mubr.bf16.gmra.mxu0 %v3890
      %v4021 = vpop.f32.mrf.mxu0
      %v4022 = vadd.f32 0.0, %v4021
      %v4023 = vpop.f32.mrf.mxu0
      %v4024 = vpop.f32.mrf.mxu0
      %v4025 = vadd.f32 0.0, %v4024
      %v4026 = vpop.f32.mrf.mxu0
      %4027 = vmatprep.mubr.bf16.mxu0 0
      %4028 = vmatmul.mubr.bf16.gmra.mxu0 %v3893
      %v4029 = vpop.f32.mrf.mxu0
      %v4030 = vadd.f32 0.0, %v4029
      %v4031 = vpop.f32.mrf.mxu0
      %v4032 = vpop.f32.mrf.mxu0
      %v4033 = vadd.f32 0.0, %v4032
      %v4034 = vpop.f32.mrf.mxu0
      %4035 = vmatprep.mubr.bf16.mxu0 0
      %4036 = vmatmul.mubr.bf16.gmra.mxu0 %v3896
      %v4037 = vpop.f32.mrf.mxu0
      %v4038 = vadd.f32 0.0, %v4037
      %v4039 = vpop.f32.mrf.mxu0
      %v4040 = vpop.f32.mrf.mxu0
      %v4041 = vadd.f32 0.0, %v4040
      %v4042 = vpop.f32.mrf.mxu0
      %4043 = vmatprep.mubr.bf16.mxu0 0
      %4044 = vmatmul.mubr.bf16.gmra.mxu0 %v3899
      %v4045 = vpop.f32.mrf.mxu0
      %v4046 = vadd.f32 0.0, %v4045
      %v4047 = vpop.f32.mrf.mxu0
      %v4048 = vpop.f32.mrf.mxu0
      %v4049 = vadd.f32 0.0, %v4048
      %v4050 = vpop.f32.mrf.mxu0
      %4051 = vmatprep.mubr.bf16.mxu0 0
      %4052 = vmatmul.mubr.bf16.gmra.mxu0 %v3902
      %v4053 = vpop.f32.mrf.mxu0
      %v4054 = vadd.f32 0.0, %v4053
      %v4055 = vpop.f32.mrf.mxu0
      %v4056 = vpop.f32.mrf.mxu0
      %v4057 = vadd.f32 0.0, %v4056
      %v4058 = vpop.f32.mrf.mxu0
      %4059 = vmatprep.mubr.bf16.mxu0 0
      %4060 = vmatmul.mubr.bf16.gmra.mxu0 %v3905
      %v4061 = vpop.f32.mrf.mxu0
      %v4062 = vadd.f32 0.0, %v4061
      %v4063 = vpop.f32.mrf.mxu0
      %v4064 = vpop.f32.mrf.mxu0
      %v4065 = vadd.f32 0.0, %v4064
      %v4066 = vpop.f32.mrf.mxu0
      %4067 = vmatprep.mubr.bf16.mxu0 0
      %4068 = vmatmul.mubr.bf16.gmra.mxu0 %v3908
      %v4069 = vpop.f32.mrf.mxu0
      %v4070 = vadd.f32 0.0, %v4069
      %v4071 = vpop.f32.mrf.mxu0
      %v4072 = vpop.f32.mrf.mxu0
      %v4073 = vadd.f32 0.0, %v4072
      %v4074 = vpop.f32.mrf.mxu0
      %4075 = vmatprep.mubr.bf16.mxu0 0
      %4076 = vmatmul.mubr.bf16.gmra.mxu0 %v3911
      %v4077 = vpop.f32.mrf.mxu0
      %v4078 = vadd.f32 0.0, %v4077
      %v4079 = vpop.f32.mrf.mxu0
      %v4080 = vpop.f32.mrf.mxu0
      %v4081 = vadd.f32 0.0, %v4080
      %v4082 = vpop.f32.mrf.mxu0
      %4083 = vmatprep.mubr.bf16.mxu0 0
      %4084 = vmatmul.mubr.bf16.gmra.mxu0 %v3914
      %v4085 = vpop.f32.mrf.mxu0
      %v4086 = vadd.f32 0.0, %v4085
      %v4087 = vpop.f32.mrf.mxu0
      %v4088 = vpop.f32.mrf.mxu0
      %v4089 = vadd.f32 0.0, %v4088
      %v4090 = vpop.f32.mrf.mxu0
      %4091 = vmatprep.mubr.bf16.mxu0 0
      %4092 = vmatmul.mubr.bf16.gmra.mxu0 %v3917
      %v4093 = vpop.f32.mrf.mxu0
      %v4094 = vadd.f32 0.0, %v4093
      %v4095 = vpop.f32.mrf.mxu0
      %v4096 = vpop.f32.mrf.mxu0
      %v4097 = vadd.f32 0.0, %v4096
      %v4098 = vpop.f32.mrf.mxu0
      %4099 = vdwg.mxu0
      %v4100 = vadd.f32 %v3701, %v3958
      %v4101 = vadd.f32 %v3702, %v3961
      %v4102 = vadd.f32 %v3703, %v3966
      %v4103 = vadd.f32 %v3704, %v3969
      %v4104 = vadd.f32 %v3705, %v3974
      %v4105 = vadd.f32 %v3706, %v3977
      %v4106 = vadd.f32 %v3707, %v3982
      %v4107 = vadd.f32 %v3708, %v3985
      %v4108 = vadd.f32 %v3709, %v3990
      %v4109 = vadd.f32 %v3710, %v3993
      %v4110 = vadd.f32 %v3711, %v3998
      %v4111 = vadd.f32 %v3712, %v4001
      %v4112 = vadd.f32 %v3713, %v4006
      %v4113 = vadd.f32 %v3714, %v4009
      %v4114 = vadd.f32 %v3715, %v4014
      %v4115 = vadd.f32 %v3716, %v4017
      %v4116 = vadd.f32 %v3717, %v4022
      %v4117 = vadd.f32 %v3718, %v4025
      %v4118 = vadd.f32 %v3719, %v4030
      %v4119 = vadd.f32 %v3720, %v4033
      %v4120 = vadd.f32 %v3721, %v4038
      %v4121 = vadd.f32 %v3722, %v4041
      %v4122 = vadd.f32 %v3723, %v4046
      %v4123 = vadd.f32 %v3724, %v4049
      %v4124 = vadd.f32 %v3725, %v4054
      %v4125 = vadd.f32 %v3726, %v4057
      %v4126 = vadd.f32 %v3727, %v4062
      %v4127 = vadd.f32 %v3728, %v4065
      %v4128 = vadd.f32 %v3729, %v4070
      %v4129 = vadd.f32 %v3730, %v4073
      %v4130 = vadd.f32 %v3731, %v4078
      %v4131 = vadd.f32 %v3732, %v4081
      %v4132 = vadd.f32 %v3733, %v4086
      %v4133 = vadd.f32 %v3734, %v4089
      %v4134 = vadd.f32 %v3735, %v4094
      %v4135 = vadd.f32 %v3736, %v4097
      %v4136 = vmax.f32 %v4100, 0.0
      %v4137 = vmax.f32 %v4101, 0.0
      %v4138 = vmax.f32 %v4102, 0.0
      %v4139 = vmax.f32 %v4103, 0.0
      %v4140 = vmax.f32 %v4104, 0.0
      %v4141 = vmax.f32 %v4105, 0.0
      %v4142 = vmax.f32 %v4106, 0.0
      %v4143 = vmax.f32 %v4107, 0.0
      %v4144 = vmax.f32 %v4108, 0.0
      %v4145 = vmax.f32 %v4109, 0.0
      %v4146 = vmax.f32 %v4110, 0.0
      %v4147 = vmax.f32 %v4111, 0.0
      %v4148 = vmax.f32 %v4112, 0.0
      %v4149 = vmax.f32 %v4113, 0.0
      %v4150 = vmax.f32 %v4114, 0.0
      %v4151 = vmax.f32 %v4115, 0.0
      %v4152 = vmax.f32 %v4116, 0.0
      %v4153 = vmax.f32 %v4117, 0.0
      %v4154 = vmax.f32 %v4118, 0.0
      %v4155 = vmax.f32 %v4119, 0.0
      %v4156 = vmax.f32 %v4120, 0.0
      %v4157 = vmax.f32 %v4121, 0.0
      %v4158 = vmax.f32 %v4122, 0.0
      %v4159 = vmax.f32 %v4123, 0.0
      %v4160 = vmax.f32 %v4124, 0.0
      %v4161 = vmax.f32 %v4125, 0.0
      %v4162 = vmax.f32 %v4126, 0.0
      %v4163 = vmax.f32 %v4127, 0.0
      %v4164 = vmax.f32 %v4128, 0.0
      %v4165 = vmax.f32 %v4129, 0.0
      %v4166 = vmax.f32 %v4130, 0.0
      %v4167 = vmax.f32 %v4131, 0.0
      %v4168 = vmax.f32 %v4132, 0.0
      %v4169 = vmax.f32 %v4133, 0.0
      %v4170 = vmax.f32 %v4134, 0.0
      %v4171 = vmax.f32 %v4135, 0.0
      %4172 = vst.msk [vmem:[%s244] sm:$0xff] %vm528, %v4136
      %4173 = vst.msk [vmem:[%s244 + $0x8] sm:$0xff] %vm528, %v4137
      %4174 = vst.msk [vmem:[%s244 + $0x10] sm:$0xff] %vm528, %v4138
      %4175 = vst.msk [vmem:[%s244 + $0x18] sm:$0xff] %vm528, %v4139
      %4176 = vst.msk [vmem:[%s244 + $0x20] sm:$0xff] %vm528, %v4140
      %4177 = vst.msk [vmem:[%s244 + $0x28] sm:$0xff] %vm528, %v4141
      %4178 = vst.msk [vmem:[%s244 + $0x30] sm:$0xff] %vm528, %v4142
      %4179 = vst.msk [vmem:[%s244 + $0x38] sm:$0xff] %vm528, %v4143
      %4180 = vst.msk [vmem:[%s244 + $0x40] sm:$0xff] %vm528, %v4144
      %4181 = vst.msk [vmem:[%s244 + $0x48] sm:$0xff] %vm528, %v4145
      %4182 = vst.msk [vmem:[%s244 + $0x50] sm:$0xff] %vm528, %v4146
      %4183 = vst.msk [vmem:[%s244 + $0x58] sm:$0xff] %vm528, %v4147
      %4184 = vst.msk [vmem:[%s244 + $0x60] sm:$0xff] %vm528, %v4148
      %4185 = vst.msk [vmem:[%s244 + $0x68] sm:$0xff] %vm528, %v4149
      %4186 = vst.msk [vmem:[%s244 + $0x70] sm:$0xff] %vm528, %v4150
      %4187 = vst.msk [vmem:[%s244 + $0x78] sm:$0xff] %vm528, %v4151
      %4188 = vst.msk [vmem:[%s244 + $0x80] sm:$0xff] %vm528, %v4152
      %4189 = vst.msk [vmem:[%s244 + $0x88] sm:$0xff] %vm528, %v4153
      %4190 = vst.msk [vmem:[%s244 + $0x90] sm:$0xff] %vm528, %v4154
      %4191 = vst.msk [vmem:[%s244 + $0x98] sm:$0xff] %vm528, %v4155
      %4192 = vst.msk [vmem:[%s244 + $0xa0] sm:$0xff] %vm528, %v4156
      %4193 = vst.msk [vmem:[%s244 + $0xa8] sm:$0xff] %vm528, %v4157
      %4194 = vst.msk [vmem:[%s244 + $0xb0] sm:$0xff] %vm528, %v4158
      %4195 = vst.msk [vmem:[%s244 + $0xb8] sm:$0xff] %vm528, %v4159
      %4196 = vst.msk [vmem:[%s244 + $0xc0] sm:$0xff] %vm528, %v4160
      %4197 = vst.msk [vmem:[%s244 + $0xc8] sm:$0xff] %vm528, %v4161
      %4198 = vst.msk [vmem:[%s244 + $0xd0] sm:$0xff] %vm528, %v4162
      %4199 = vst.msk [vmem:[%s244 + $0xd8] sm:$0xff] %vm528, %v4163
      %4200 = vst.msk [vmem:[%s244 + $0xe0] sm:$0xff] %vm528, %v4164
      %4201 = vst.msk [vmem:[%s244 + $0xe8] sm:$0xff] %vm528, %v4165
      %4202 = vst.msk [vmem:[%s244 + $0xf0] sm:$0xff] %vm528, %v4166
      %4203 = vst.msk [vmem:[%s244 + $0xf8] sm:$0xff] %vm528, %v4167
      %4204 = vst.msk [vmem:[%s244 + $0x100] sm:$0xff] %vm528, %v4168
      %4205 = vst.msk [vmem:[%s244 + $0x108] sm:$0xff] %vm528, %v4169
      %4206 = vst.msk [vmem:[%s244 + $0x110] sm:$0xff] %vm528, %v4170
      %4207 = vst.msk [vmem:[%s244 + $0x118] sm:$0xff] %vm528, %v4171
      %p4208 = scmp.lt.s32.totalorder %s16, 1
      %s4209 = scalar_select %p4208, %s16, 1
      %s4210 = smul.addr %s4209, 36
      %s4211 = smul.addr %s4210, 8
      %s4212 = scalar_lea.vmem %s5, %s4211
      // Predicated region
      $region41: #{basic_block_tbn_forward.3} parent=39 // pred_check
        %p4213 = pneg %p149
      $region42: #{basic_block_tbn_forward.3} parent=39 // pred_check_branch
        %4215 = sbr.rel (%p4213) target = $region44
      $region43: #{basic_block_tbn_forward.3} parent=39 // pred_region
        _
      $region44: #{basic_block_tbn_forward.3} parent=39 // pred_fallthru
        _
    $region40: #{basic_block_tbn_forward.3} parent=5 // pred_fallthru
      _
    %p4216 = scmp.le.s32.totalorder 2, %s11
    // Predicated region
    $region45: #{basic_block_tbn_forward.3} parent=5 // pred_check
      %p4217 = pneg %p4216
    $region46: #{basic_block_tbn_forward.3} parent=5 // pred_check_branch
      %4219 = sbr.rel (%p4217) target = $region48
    $region47: #{basic_block_tbn_forward.3} parent=5 // pred_region
      %s4220 = ssub.s32 %s11, 2
      // Predicated region
      $region49: #{basic_block_tbn_forward.3} parent=47 // pred_check
        %p4221 = pneg %p155
      $region50: #{basic_block_tbn_forward.3} parent=47 // pred_check_branch
        %4223 = sbr.rel (%p4221) target = $region52
      $region51: #{basic_block_tbn_forward.3} parent=47 // pred_region
        %p4224 = scmp.lt.s32.totalorder %s17, 1
        %s4225 = scalar_select %p4224, %s17, 1
        %s4226 = smul.addr %s4225, 36
        %s4227 = smul.addr %s4226, 8
        %s4228 = scalar_lea.vmem %s5, %s4227
      $region52: #{basic_block_tbn_forward.3} parent=47 // pred_fallthru
        _
    $region48: #{basic_block_tbn_forward.3} parent=5 // pred_fallthru
      _
  $region6: #{basic_block_tbn_forward.3} parent=0 // loop_footer
    %s15 = sadd.s32 1, %s11
  $region7: #{basic_block_tbn_forward.3} parent=0 // loop_footer_branch
    %10 = sbr.rel target = $region3
  $region8: #{basic_block_tbn_forward.3} parent=0 // loop_exit
    _

</llo_original>
